<compile_context>
chip_gen: v5e
topology: v5e:2x2
jax: 0.10.0
libtpu: 0.0.40
codegen_flags: <defaults>
</compile_context>

<pallas_src>
import functools

import jax
import jax.numpy as jnp
from jax.experimental import pallas as pl
from jax.experimental.pallas import tpu as pltpu


# ----------------------------------------------------------------------------- fused kernel

def _student_cnn_kernel(x_ref, w1_ref, b1_ref, w2_ref, b2_ref, wfc_ref, bfc_ref,
                        o_ref,
                        xp1, y1s, h1s, xp2, y2s, h2s, *, bb):
    """Whole StudentCNN forward for `bb` batch elements, fully VMEM-resident.

    x_ref   : (bb, 32, 32, 3)  NHWC input block
    w1_ref  : (27, 16)         conv1 weights, im2col rows (dy*3+dx)*3  + cin
    w2_ref  : (144, 32)        conv2 weights, im2col rows (dy*3+dx)*16 + cin
    b1_ref  : (1, 16)   b2_ref : (1, 32)   bfc_ref : (1, 10)
    wfc_ref : (10, 64, 32)     FC weights permuted to [class, h*8+w, c]
    o_ref   : (bb, 1, 10)      logits
    xp1/xp2 : zero-padded conv inputs (interior at [1:H+1, 8:W+8, :])
    y1s/y2s : conv+ReLU outputs;  h1s/h2s : horizontally pooled outputs
    """
    H1, W1, C1, K1 = 32, 32, 3, 16
    H2, W2, C2, K2 = 16, 16, 16, 32

    def conv3x3_relu_into(xp_ref, wf_ref, b_ref, y_ref, H, W, Cin, Cout):
        # 'same' 3x3 conv as one im2col MXU dot per ~256-pixel band:
        #   patch[(y-r0)*W + x, (dy*3+dx)*Cin + c] = xp[y+dy, 7+dx+x, c]
        # The zero halo of xp_ref provides the padding for free.
        wf = wf_ref[...]                       # (9*Cin, Cout)
        b = b_ref[...]                         # (1, Cout)
        band = max(1, 256 // W)                # M-block: ~256 output pixels per dot
        for r0 in range(0, H, band):
            taps = [xp_ref[dy + r0: dy + r0 + band, 7 + dx: 7 + dx + W, :]
                    for dy in range(3) for dx in range(3)]
            patch = jnp.concatenate(taps, axis=-1).reshape(band * W, 9 * Cin)
            acc = jnp.dot(patch, wf, preferred_element_type=jnp.float32)
            y_ref[r0:r0 + band] = jnp.maximum(acc + b, 0.0).reshape(band, W, Cout)

    def pool2x2(y_ref, h_ref, H, W):
        # 2x2/2 max-pool: horizontal pairs via strided sublane reads, then vertical pairs.
        h_ref[...] = jnp.maximum(y_ref[:, pl.ds(0, W // 2, stride=2), :],
                                 y_ref[:, pl.ds(1, W // 2, stride=2), :])
        return jnp.maximum(h_ref[pl.ds(0, H // 2, stride=2), :, :],
                           h_ref[pl.ds(1, H // 2, stride=2), :, :])

    # Zero the padded-halo scratches ONCE per grid step.  Only the interiors are rewritten in
    # the per-image loop below, so the zero border persists; with the batch folded into <= 2
    # grid steps the total zeroing work is bounded regardless of B, and doing it on every step
    # keeps each core's private scratch valid under v7x megacore sharding.
    xp1[...] = jnp.zeros_like(xp1)
    xp2[...] = jnp.zeros_like(xp2)

    for i in range(bb):
        # --------------------- layer 1: conv(3->16) + ReLU + pool ---------------------
        xp1[1:1 + H1, 8:8 + W1, :] = x_ref[i]          # sublane-aligned interior write
        conv3x3_relu_into(xp1, w1_ref, b1_ref, y1s, H1, W1, C1, K1)
        f1 = pool2x2(y1s, h1s, H1, W1)                 # (16, 16, 16)

        # --------------------- layer 2: conv(16->32) + ReLU + pool --------------------
        xp2[1:1 + H2, 8:8 + W2, :] = f1
        conv3x3_relu_into(xp2, w2_ref, b2_ref, y2s, H2, W2, C2, K2)
        f2 = pool2x2(y2s, h2s, H2, W2)                 # (8, 8, 32)

        # --------------------- classifier head (per-class VPU loop) -------------------
        # out[n] = sum_{h,w,c} f2[h,w,c] * wfc[c*64 + h*8 + w, n]  (PyTorch NCHW flatten),
        # with wfc pre-permuted to [n, h*8+w, c]; max live intermediate is (64, 10).
        feat = f2.reshape(64, K2)                      # (64, 32): rows h*8+w, channels on lanes
        cols = [jnp.sum(feat * wfc_ref[n], axis=-1, keepdims=True)   # (64, 1) per class
                for n in range(10)]
        g = jnp.concatenate(cols, axis=-1)             # (64, 10)
        o_ref[i] = jnp.sum(g, axis=0, keepdims=True) + bfc_ref[...]  # (1, 10)


# ----------------------------------------------------------------------------- wrapper

def student_cnn_forward(x_nchw, params):
    B = x_nchw.shape[0]
    # At most two 'parallel' grid steps (keeps both v7x TensorCores busy); the rest of the
    # batch is folded into each step so single-TC v5e/v6e pay the per-step launch + scratch
    # overhead at most twice instead of B times.  (bb stays small for demo-sized batches.)
    G = 2 if (B >= 2 and B % 2 == 0) else 1
    bb = B // G

    x = jnp.transpose(x_nchw, (0, 2, 3, 1)).astype(jnp.float32)       # NCHW -> NHWC (tiny, once)

    # im2col weight layout: row index (dy*3+dx)*Cin + cin  ==  plain HWIO reshape.
    w1f = params["w1"].reshape(27, 16).astype(jnp.float32)
    w2f = params["w2"].reshape(144, 32).astype(jnp.float32)
    # FC weights permuted from PyTorch's (c, h, w) flatten order to [class, h*8+w, c]:
    # wfc_k[n, h*8+w, c] = wfc[c*64 + h*8 + w, n].  Static permutation -> numerically identical.
    wfc_k = params["wfc"].reshape(32, 8, 8, 10).transpose(3, 1, 2, 0).reshape(10, 64, 32)
    wfc_k = wfc_k.astype(jnp.float32)

    kernel = functools.partial(_student_cnn_kernel, bb=bb)
    out3 = pl.pallas_call(
        kernel,
        out_shape=jax.ShapeDtypeStruct((B, 1, 10), jnp.float32),
        grid_spec=pltpu.PrefetchScalarGridSpec(
            num_scalar_prefetch=0,
            grid=(G,),
            in_specs=[
                pl.BlockSpec((bb, 32, 32, 3), lambda g: (g, 0, 0, 0)),   # input images
                pl.BlockSpec((27, 16), lambda g: (0, 0)),                # w1 (im2col)
                pl.BlockSpec((1, 16), lambda g: (0, 0)),                 # b1
                pl.BlockSpec((144, 32), lambda g: (0, 0)),               # w2 (im2col)
                pl.BlockSpec((1, 32), lambda g: (0, 0)),                 # b2
                pl.BlockSpec((10, 64, 32), lambda g: (0, 0, 0)),         # wfc (permuted)
                pl.BlockSpec((1, 10), lambda g: (0, 0)),                 # bfc
            ],
            out_specs=pl.BlockSpec((bb, 1, 10), lambda g: (g, 0, 0)),
            scratch_shapes=[
                pltpu.VMEM((34, 48, 3), jnp.float32),    # xp1: zero-padded layer-1 input
                pltpu.VMEM((32, 32, 16), jnp.float32),   # y1 : conv1 + ReLU
                pltpu.VMEM((32, 16, 16), jnp.float32),   # h1 : conv1 h-pooled
                pltpu.VMEM((18, 32, 16), jnp.float32),   # xp2: zero-padded layer-2 input
                pltpu.VMEM((16, 16, 32), jnp.float32),   # y2 : conv2 + ReLU
                pltpu.VMEM((16, 8, 32), jnp.float32),    # h2 : conv2 h-pooled
            ],
        ),
        compiler_params=pltpu.CompilerParams(dimension_semantics=("parallel",)),
    )(x,
      w1f, params["b1"].reshape(1, 16),
      w2f, params["b2"].reshape(1, 32),
      wfc_k, params["bfc"].reshape(1, 10))
    return out3.reshape(B, 10)


# ----------------------------------------------------------------------------- params / reference

def init_params(key):
    ks = jax.random.split(key, 6)
    w1 = jax.random.normal(ks[0], (3, 3, 3, 16), jnp.float32) / jnp.sqrt(27.0)
    b1 = jax.random.normal(ks[1], (16,), jnp.float32) * 0.01
    w2 = jax.random.normal(ks[2], (3, 3, 16, 32), jnp.float32) / jnp.sqrt(144.0)
    b2 = jax.random.normal(ks[3], (32,), jnp.float32) * 0.01
    wfc = jax.random.normal(ks[4], (32 * 8 * 8, 10), jnp.float32) / jnp.sqrt(2048.0)
    bfc = jax.random.normal(ks[5], (10,), jnp.float32) * 0.01
    return dict(w1=w1, b1=b1, w2=w2, b2=b2, wfc=wfc, bfc=bfc)


def _ref_forward(x_nchw, params):
    x = jnp.transpose(x_nchw, (0, 2, 3, 1)).astype(jnp.float32)

    def block(h, w, b):
        y = jax.lax.conv_general_dilated(
            h, w, window_strides=(1, 1), padding="SAME",
            dimension_numbers=("NHWC", "HWIO", "NHWC"))
        y = jnp.maximum(y + b, 0.0)
        return jax.lax.reduce_window(y, -jnp.inf, jax.lax.max,
                                     (1, 2, 2, 1), (1, 2, 2, 1), "VALID")

    f = block(block(x, params["w1"], params["b1"]), params["w2"], params["b2"])
    feat = jnp.transpose(f, (0, 3, 1, 2)).reshape(x.shape[0], -1)   # PyTorch NCHW flatten
    return feat @ params["wfc"] + params["bfc"]


# ----------------------------------------------------------------------------- main

if __name__ == "__main__":
    key = jax.random.PRNGKey(0)
    k_x, k_p = jax.random.split(key)

    # NCHW input, batch=2, 3 channels, 32x32 spatial (required by Linear(32*8*8, 10)).
    x = jax.random.normal(k_x, (2, 3, 32, 32), jnp.float32)
    params = init_params(k_p)

    fwd = jax.jit(student_cnn_forward)
    out = jax.block_until_ready(fwd(x, params))
    ref = jax.block_until_ready(_ref_forward(x, params))

    assert out.shape == (2, 10), out.shape
    assert jnp.allclose(out, ref, atol=1e-4, rtol=1e-4), \
        f"max abs err = {float(jnp.max(jnp.abs(out - ref)))}"
    print("KERNEL_OK")
</pallas_src>

<mosaic_0001>
module attributes {stable_mosaic.version = 11 : i64} {
  func.func @_student_cnn_kernel(%arg0: i32, %arg1: memref<1x32x32x3xf32, #tpu.memory_space<vmem>>, %arg2: memref<27x16xf32, #tpu.memory_space<vmem>>, %arg3: memref<1x16xf32, #tpu.memory_space<vmem>>, %arg4: memref<144x32xf32, #tpu.memory_space<vmem>>, %arg5: memref<1x32xf32, #tpu.memory_space<vmem>>, %arg6: memref<10x64x32xf32, #tpu.memory_space<vmem>>, %arg7: memref<1x10xf32, #tpu.memory_space<vmem>>, %arg8: memref<1x1x10xf32, #tpu.memory_space<vmem>>, %arg9: memref<34x48x3xf32, #tpu.memory_space<vmem>>, %arg10: memref<32x32x16xf32, #tpu.memory_space<vmem>>, %arg11: memref<32x16x16xf32, #tpu.memory_space<vmem>>, %arg12: memref<18x32x16xf32, #tpu.memory_space<vmem>>, %arg13: memref<16x16x32xf32, #tpu.memory_space<vmem>>, %arg14: memref<16x8x32xf32, #tpu.memory_space<vmem>>) attributes {dimension_semantics = [#tpu.dimension_semantics<parallel>], iteration_bounds = array<i64: 2>, scalar_prefetch = 0 : i64, scratch_operands = 6 : i64, tpu.core_type = #tpu.core_type<tc>, window_params = [{transform_indices = @transform_0, window_bounds = array<i64: 1, 32, 32, 3>}, {pipeline_mode = #tpu.pipeline_mode<synchronous>, transform_indices = @transform_1, window_bounds = array<i64: 27, 16>}, {pipeline_mode = #tpu.pipeline_mode<synchronous>, transform_indices = @transform_2, window_bounds = array<i64: 1, 16>}, {pipeline_mode = #tpu.pipeline_mode<synchronous>, transform_indices = @transform_3, window_bounds = array<i64: 144, 32>}, {pipeline_mode = #tpu.pipeline_mode<synchronous>, transform_indices = @transform_4, window_bounds = array<i64: 1, 32>}, {pipeline_mode = #tpu.pipeline_mode<synchronous>, transform_indices = @transform_5, window_bounds = array<i64: 10, 64, 32>}, {pipeline_mode = #tpu.pipeline_mode<synchronous>, transform_indices = @transform_6, window_bounds = array<i64: 1, 10>}, {transform_indices = @transform_7, window_bounds = array<i64: 1, 1, 10>}]} {
    %cst = arith.constant 0.000000e+00 : f32
    %0 = vector.broadcast %cst : f32 to vector<34x48x3xf32>
    %c0 = arith.constant 0 : index
    %c0_0 = arith.constant 0 : index
    %c0_1 = arith.constant 0 : index
    %1 = vector.load %arg9[%c0, %c0_0, %c0_1] : memref<34x48x3xf32, #tpu.memory_space<vmem>>, vector<34x48x3xf32>
    tpu.vector_store %arg9[%c0, %c0_0, %c0_1], %0 {strides = array<i32>} : memref<34x48x3xf32, #tpu.memory_space<vmem>>, vector<34x48x3xf32>,
    %cst_2 = arith.constant 0.000000e+00 : f32
    %2 = vector.broadcast %cst_2 : f32 to vector<18x32x16xf32>
    %c0_3 = arith.constant 0 : index
    %c0_4 = arith.constant 0 : index
    %c0_5 = arith.constant 0 : index
    %3 = vector.load %arg12[%c0_3, %c0_4, %c0_5] : memref<18x32x16xf32, #tpu.memory_space<vmem>>, vector<18x32x16xf32>
    tpu.vector_store %arg12[%c0_3, %c0_4, %c0_5], %2 {strides = array<i32>} : memref<18x32x16xf32, #tpu.memory_space<vmem>>, vector<18x32x16xf32>,
    %c0_6 = arith.constant 0 : index
    %c0_7 = arith.constant 0 : index
    %c0_8 = arith.constant 0 : index
    %c0_9 = arith.constant 0 : index
    %4 = vector.load %arg1[%c0_6, %c0_7, %c0_8, %c0_9] : memref<1x32x32x3xf32, #tpu.memory_space<vmem>>, vector<1x32x32x3xf32>
    %5 = vector.shape_cast %4 : vector<1x32x32x3xf32> to vector<32x32x3xf32>
    %c1 = arith.constant 1 : index
    %c8 = arith.constant 8 : index
    %c0_10 = arith.constant 0 : index
    %6 = vector.load %arg9[%c1, %c8, %c0_10] : memref<34x48x3xf32, #tpu.memory_space<vmem>>, vector<32x32x3xf32>
    tpu.vector_store %arg9[%c1, %c8, %c0_10], %5 {strides = array<i32>} : memref<34x48x3xf32, #tpu.memory_space<vmem>>, vector<32x32x3xf32>,
    %c0_11 = arith.constant 0 : index
    %c0_12 = arith.constant 0 : index
    %7 = vector.load %arg2[%c0_11, %c0_12] : memref<27x16xf32, #tpu.memory_space<vmem>>, vector<27x16xf32>
    %c0_13 = arith.constant 0 : index
    %c0_14 = arith.constant 0 : index
    %8 = vector.load %arg3[%c0_13, %c0_14] : memref<1x16xf32, #tpu.memory_space<vmem>>, vector<1x16xf32>
    %c0_15 = arith.constant 0 : index
    %c7 = arith.constant 7 : index
    %c0_16 = arith.constant 0 : index
    %9 = vector.load %arg9[%c0_15, %c7, %c0_16] : memref<34x48x3xf32, #tpu.memory_space<vmem>>, vector<8x32x3xf32>
    %c0_17 = arith.constant 0 : index
    %c8_18 = arith.constant 8 : index
    %c0_19 = arith.constant 0 : index
    %10 = vector.load %arg9[%c0_17, %c8_18, %c0_19] : memref<34x48x3xf32, #tpu.memory_space<vmem>>, vector<8x32x3xf32>
    %c0_20 = arith.constant 0 : index
    %c9 = arith.constant 9 : index
    %c0_21 = arith.constant 0 : index
    %11 = vector.load %arg9[%c0_20, %c9, %c0_21] : memref<34x48x3xf32, #tpu.memory_space<vmem>>, vector<8x32x3xf32>
    %c1_22 = arith.constant 1 : index
    %c7_23 = arith.constant 7 : index
    %c0_24 = arith.constant 0 : index
    %12 = vector.load %arg9[%c1_22, %c7_23, %c0_24] : memref<34x48x3xf32, #tpu.memory_space<vmem>>, vector<8x32x3xf32>
    %c1_25 = arith.constant 1 : index
    %c8_26 = arith.constant 8 : index
    %c0_27 = arith.constant 0 : index
    %13 = vector.load %arg9[%c1_25, %c8_26, %c0_27] : memref<34x48x3xf32, #tpu.memory_space<vmem>>, vector<8x32x3xf32>
    %c1_28 = arith.constant 1 : index
    %c9_29 = arith.constant 9 : index
    %c0_30 = arith.constant 0 : index
    %14 = vector.load %arg9[%c1_28, %c9_29, %c0_30] : memref<34x48x3xf32, #tpu.memory_space<vmem>>, vector<8x32x3xf32>
    %c2 = arith.constant 2 : index
    %c7_31 = arith.constant 7 : index
    %c0_32 = arith.constant 0 : index
    %15 = vector.load %arg9[%c2, %c7_31, %c0_32] : memref<34x48x3xf32, #tpu.memory_space<vmem>>, vector<8x32x3xf32>
    %c2_33 = arith.constant 2 : index
    %c8_34 = arith.constant 8 : index
    %c0_35 = arith.constant 0 : index
    %16 = vector.load %arg9[%c2_33, %c8_34, %c0_35] : memref<34x48x3xf32, #tpu.memory_space<vmem>>, vector<8x32x3xf32>
    %c2_36 = arith.constant 2 : index
    %c9_37 = arith.constant 9 : index
    %c0_38 = arith.constant 0 : index
    %17 = vector.load %arg9[%c2_36, %c9_37, %c0_38] : memref<34x48x3xf32, #tpu.memory_space<vmem>>, vector<8x32x3xf32>
    %18 = tpu.concatenate %9, %10, %11, %12, %13, %14, %15, %16, %17 in 2 : vector<8x32x3xf32>, vector<8x32x3xf32>, vector<8x32x3xf32>, vector<8x32x3xf32>, vector<8x32x3xf32>, vector<8x32x3xf32>, vector<8x32x3xf32>, vector<8x32x3xf32>, vector<8x32x3xf32> -> vector<8x32x27xf32>
    %19 = vector.shape_cast %18 : vector<8x32x27xf32> to vector<256x27xf32>
    %cst_39 = arith.constant dense<0.000000e+00> : vector<256x16xf32>
    %20 = tpu.matmul %19, %7, %cst_39 {dimension_numbers = #tpu.dot_dimension_numbers<[1], [0], [0], [1], [0, 0, 1, 1], [], []>} : vector<256x27xf32>, vector<27x16xf32>, vector<256x16xf32> -> vector<256x16xf32>
    %21 = vector.broadcast %8 : vector<1x16xf32> to vector<256x16xf32>
    %22 = arith.addf %20, %21 : vector<256x16xf32>
    %cst_40 = arith.constant 0.000000e+00 : f32
    %23 = vector.broadcast %cst_40 : f32 to vector<256x16xf32>
    %24 = arith.maximumf %22, %23 : vector<256x16xf32>
    %25 = vector.shape_cast %24 : vector<256x16xf32> to vector<8x32x16xf32>
    %c0_41 = arith.constant 0 : index
    %c0_42 = arith.constant 0 : index
    %c0_43 = arith.constant 0 : index
    %26 = vector.load %arg10[%c0_41, %c0_42, %c0_43] : memref<32x32x16xf32, #tpu.memory_space<vmem>>, vector<8x32x16xf32>
    tpu.vector_store %arg10[%c0_41, %c0_42, %c0_43], %25 {strides = array<i32>} : memref<32x32x16xf32, #tpu.memory_space<vmem>>, vector<8x32x16xf32>,
    %c8_44 = arith.constant 8 : index
    %c7_45 = arith.constant 7 : index
    %c0_46 = arith.constant 0 : index
    %27 = vector.load %arg9[%c8_44, %c7_45, %c0_46] : memref<34x48x3xf32, #tpu.memory_space<vmem>>, vector<8x32x3xf32>
    %c8_47 = arith.constant 8 : index
    %c8_48 = arith.constant 8 : index
    %c0_49 = arith.constant 0 : index
    %28 = vector.load %arg9[%c8_47, %c8_48, %c0_49] : memref<34x48x3xf32, #tpu.memory_space<vmem>>, vector<8x32x3xf32>
    %c8_50 = arith.constant 8 : index
    %c9_51 = arith.constant 9 : index
    %c0_52 = arith.constant 0 : index
    %29 = vector.load %arg9[%c8_50, %c9_51, %c0_52] : memref<34x48x3xf32, #tpu.memory_space<vmem>>, vector<8x32x3xf32>
    %c9_53 = arith.constant 9 : index
    %c7_54 = arith.constant 7 : index
    %c0_55 = arith.constant 0 : index
    %30 = vector.load %arg9[%c9_53, %c7_54, %c0_55] : memref<34x48x3xf32, #tpu.memory_space<vmem>>, vector<8x32x3xf32>
    %c9_56 = arith.constant 9 : index
    %c8_57 = arith.constant 8 : index
    %c0_58 = arith.constant 0 : index
    %31 = vector.load %arg9[%c9_56, %c8_57, %c0_58] : memref<34x48x3xf32, #tpu.memory_space<vmem>>, vector<8x32x3xf32>
    %c9_59 = arith.constant 9 : index
    %c9_60 = arith.constant 9 : index
    %c0_61 = arith.constant 0 : index
    %32 = vector.load %arg9[%c9_59, %c9_60, %c0_61] : memref<34x48x3xf32, #tpu.memory_space<vmem>>, vector<8x32x3xf32>
    %c10 = arith.constant 10 : index
    %c7_62 = arith.constant 7 : index
    %c0_63 = arith.constant 0 : index
    %33 = vector.load %arg9[%c10, %c7_62, %c0_63] : memref<34x48x3xf32, #tpu.memory_space<vmem>>, vector<8x32x3xf32>
    %c10_64 = arith.constant 10 : index
    %c8_65 = arith.constant 8 : index
    %c0_66 = arith.constant 0 : index
    %34 = vector.load %arg9[%c10_64, %c8_65, %c0_66] : memref<34x48x3xf32, #tpu.memory_space<vmem>>, vector<8x32x3xf32>
    %c10_67 = arith.constant 10 : index
    %c9_68 = arith.constant 9 : index
    %c0_69 = arith.constant 0 : index
    %35 = vector.load %arg9[%c10_67, %c9_68, %c0_69] : memref<34x48x3xf32, #tpu.memory_space<vmem>>, vector<8x32x3xf32>
    %36 = tpu.concatenate %27, %28, %29, %30, %31, %32, %33, %34, %35 in 2 : vector<8x32x3xf32>, vector<8x32x3xf32>, vector<8x32x3xf32>, vector<8x32x3xf32>, vector<8x32x3xf32>, vector<8x32x3xf32>, vector<8x32x3xf32>, vector<8x32x3xf32>, vector<8x32x3xf32> -> vector<8x32x27xf32>
    %37 = vector.shape_cast %36 : vector<8x32x27xf32> to vector<256x27xf32>
    %cst_70 = arith.constant dense<0.000000e+00> : vector<256x16xf32>
    %38 = tpu.matmul %37, %7, %cst_70 {dimension_numbers = #tpu.dot_dimension_numbers<[1], [0], [0], [1], [0, 0, 1, 1], [], []>} : vector<256x27xf32>, vector<27x16xf32>, vector<256x16xf32> -> vector<256x16xf32>
    %39 = vector.broadcast %8 : vector<1x16xf32> to vector<256x16xf32>
    %40 = arith.addf %38, %39 : vector<256x16xf32>
    %cst_71 = arith.constant 0.000000e+00 : f32
    %41 = vector.broadcast %cst_71 : f32 to vector<256x16xf32>
    %42 = arith.maximumf %40, %41 : vector<256x16xf32>
    %43 = vector.shape_cast %42 : vector<256x16xf32> to vector<8x32x16xf32>
    %c8_72 = arith.constant 8 : index
    %c0_73 = arith.constant 0 : index
    %c0_74 = arith.constant 0 : index
    %44 = vector.load %arg10[%c8_72, %c0_73, %c0_74] : memref<32x32x16xf32, #tpu.memory_space<vmem>>, vector<8x32x16xf32>
    tpu.vector_store %arg10[%c8_72, %c0_73, %c0_74], %43 {strides = array<i32>} : memref<32x32x16xf32, #tpu.memory_space<vmem>>, vector<8x32x16xf32>,
    %c16 = arith.constant 16 : index
    %c7_75 = arith.constant 7 : index
    %c0_76 = arith.constant 0 : index
    %45 = vector.load %arg9[%c16, %c7_75, %c0_76] : memref<34x48x3xf32, #tpu.memory_space<vmem>>, vector<8x32x3xf32>
    %c16_77 = arith.constant 16 : index
    %c8_78 = arith.constant 8 : index
    %c0_79 = arith.constant 0 : index
    %46 = vector.load %arg9[%c16_77, %c8_78, %c0_79] : memref<34x48x3xf32, #tpu.memory_space<vmem>>, vector<8x32x3xf32>
    %c16_80 = arith.constant 16 : index
    %c9_81 = arith.constant 9 : index
    %c0_82 = arith.constant 0 : index
    %47 = vector.load %arg9[%c16_80, %c9_81, %c0_82] : memref<34x48x3xf32, #tpu.memory_space<vmem>>, vector<8x32x3xf32>
    %c17 = arith.constant 17 : index
    %c7_83 = arith.constant 7 : index
    %c0_84 = arith.constant 0 : index
    %48 = vector.load %arg9[%c17, %c7_83, %c0_84] : memref<34x48x3xf32, #tpu.memory_space<vmem>>, vector<8x32x3xf32>
    %c17_85 = arith.constant 17 : index
    %c8_86 = arith.constant 8 : index
    %c0_87 = arith.constant 0 : index
    %49 = vector.load %arg9[%c17_85, %c8_86, %c0_87] : memref<34x48x3xf32, #tpu.memory_space<vmem>>, vector<8x32x3xf32>
    %c17_88 = arith.constant 17 : index
    %c9_89 = arith.constant 9 : index
    %c0_90 = arith.constant 0 : index
    %50 = vector.load %arg9[%c17_88, %c9_89, %c0_90] : memref<34x48x3xf32, #tpu.memory_space<vmem>>, vector<8x32x3xf32>
    %c18 = arith.constant 18 : index
    %c7_91 = arith.constant 7 : index
    %c0_92 = arith.constant 0 : index
    %51 = vector.load %arg9[%c18, %c7_91, %c0_92] : memref<34x48x3xf32, #tpu.memory_space<vmem>>, vector<8x32x3xf32>
    %c18_93 = arith.constant 18 : index
    %c8_94 = arith.constant 8 : index
    %c0_95 = arith.constant 0 : index
    %52 = vector.load %arg9[%c18_93, %c8_94, %c0_95] : memref<34x48x3xf32, #tpu.memory_space<vmem>>, vector<8x32x3xf32>
    %c18_96 = arith.constant 18 : index
    %c9_97 = arith.constant 9 : index
    %c0_98 = arith.constant 0 : index
    %53 = vector.load %arg9[%c18_96, %c9_97, %c0_98] : memref<34x48x3xf32, #tpu.memory_space<vmem>>, vector<8x32x3xf32>
    %54 = tpu.concatenate %45, %46, %47, %48, %49, %50, %51, %52, %53 in 2 : vector<8x32x3xf32>, vector<8x32x3xf32>, vector<8x32x3xf32>, vector<8x32x3xf32>, vector<8x32x3xf32>, vector<8x32x3xf32>, vector<8x32x3xf32>, vector<8x32x3xf32>, vector<8x32x3xf32> -> vector<8x32x27xf32>
    %55 = vector.shape_cast %54 : vector<8x32x27xf32> to vector<256x27xf32>
    %cst_99 = arith.constant dense<0.000000e+00> : vector<256x16xf32>
    %56 = tpu.matmul %55, %7, %cst_99 {dimension_numbers = #tpu.dot_dimension_numbers<[1], [0], [0], [1], [0, 0, 1, 1], [], []>} : vector<256x27xf32>, vector<27x16xf32>, vector<256x16xf32> -> vector<256x16xf32>
    %57 = vector.broadcast %8 : vector<1x16xf32> to vector<256x16xf32>
    %58 = arith.addf %56, %57 : vector<256x16xf32>
    %cst_100 = arith.constant 0.000000e+00 : f32
    %59 = vector.broadcast %cst_100 : f32 to vector<256x16xf32>
    %60 = arith.maximumf %58, %59 : vector<256x16xf32>
    %61 = vector.shape_cast %60 : vector<256x16xf32> to vector<8x32x16xf32>
    %c16_101 = arith.constant 16 : index
    %c0_102 = arith.constant 0 : index
    %c0_103 = arith.constant 0 : index
    %62 = vector.load %arg10[%c16_101, %c0_102, %c0_103] : memref<32x32x16xf32, #tpu.memory_space<vmem>>, vector<8x32x16xf32>
    tpu.vector_store %arg10[%c16_101, %c0_102, %c0_103], %61 {strides = array<i32>} : memref<32x32x16xf32, #tpu.memory_space<vmem>>, vector<8x32x16xf32>,
    %c24 = arith.constant 24 : index
    %c7_104 = arith.constant 7 : index
    %c0_105 = arith.constant 0 : index
    %63 = vector.load %arg9[%c24, %c7_104, %c0_105] : memref<34x48x3xf32, #tpu.memory_space<vmem>>, vector<8x32x3xf32>
    %c24_106 = arith.constant 24 : index
    %c8_107 = arith.constant 8 : index
    %c0_108 = arith.constant 0 : index
    %64 = vector.load %arg9[%c24_106, %c8_107, %c0_108] : memref<34x48x3xf32, #tpu.memory_space<vmem>>, vector<8x32x3xf32>
    %c24_109 = arith.constant 24 : index
    %c9_110 = arith.constant 9 : index
    %c0_111 = arith.constant 0 : index
    %65 = vector.load %arg9[%c24_109, %c9_110, %c0_111] : memref<34x48x3xf32, #tpu.memory_space<vmem>>, vector<8x32x3xf32>
    %c25 = arith.constant 25 : index
    %c7_112 = arith.constant 7 : index
    %c0_113 = arith.constant 0 : index
    %66 = vector.load %arg9[%c25, %c7_112, %c0_113] : memref<34x48x3xf32, #tpu.memory_space<vmem>>, vector<8x32x3xf32>
    %c25_114 = arith.constant 25 : index
    %c8_115 = arith.constant 8 : index
    %c0_116 = arith.constant 0 : index
    %67 = vector.load %arg9[%c25_114, %c8_115, %c0_116] : memref<34x48x3xf32, #tpu.memory_space<vmem>>, vector<8x32x3xf32>
    %c25_117 = arith.constant 25 : index
    %c9_118 = arith.constant 9 : index
    %c0_119 = arith.constant 0 : index
    %68 = vector.load %arg9[%c25_117, %c9_118, %c0_119] : memref<34x48x3xf32, #tpu.memory_space<vmem>>, vector<8x32x3xf32>
    %c26 = arith.constant 26 : index
    %c7_120 = arith.constant 7 : index
    %c0_121 = arith.constant 0 : index
    %69 = vector.load %arg9[%c26, %c7_120, %c0_121] : memref<34x48x3xf32, #tpu.memory_space<vmem>>, vector<8x32x3xf32>
    %c26_122 = arith.constant 26 : index
    %c8_123 = arith.constant 8 : index
    %c0_124 = arith.constant 0 : index
    %70 = vector.load %arg9[%c26_122, %c8_123, %c0_124] : memref<34x48x3xf32, #tpu.memory_space<vmem>>, vector<8x32x3xf32>
    %c26_125 = arith.constant 26 : index
    %c9_126 = arith.constant 9 : index
    %c0_127 = arith.constant 0 : index
    %71 = vector.load %arg9[%c26_125, %c9_126, %c0_127] : memref<34x48x3xf32, #tpu.memory_space<vmem>>, vector<8x32x3xf32>
    %72 = tpu.concatenate %63, %64, %65, %66, %67, %68, %69, %70, %71 in 2 : vector<8x32x3xf32>, vector<8x32x3xf32>, vector<8x32x3xf32>, vector<8x32x3xf32>, vector<8x32x3xf32>, vector<8x32x3xf32>, vector<8x32x3xf32>, vector<8x32x3xf32>, vector<8x32x3xf32> -> vector<8x32x27xf32>
    %73 = vector.shape_cast %72 : vector<8x32x27xf32> to vector<256x27xf32>
    %cst_128 = arith.constant dense<0.000000e+00> : vector<256x16xf32>
    %74 = tpu.matmul %73, %7, %cst_128 {dimension_numbers = #tpu.dot_dimension_numbers<[1], [0], [0], [1], [0, 0, 1, 1], [], []>} : vector<256x27xf32>, vector<27x16xf32>, vector<256x16xf32> -> vector<256x16xf32>
    %75 = vector.broadcast %8 : vector<1x16xf32> to vector<256x16xf32>
    %76 = arith.addf %74, %75 : vector<256x16xf32>
    %cst_129 = arith.constant 0.000000e+00 : f32
    %77 = vector.broadcast %cst_129 : f32 to vector<256x16xf32>
    %78 = arith.maximumf %76, %77 : vector<256x16xf32>
    %79 = vector.shape_cast %78 : vector<256x16xf32> to vector<8x32x16xf32>
    %c24_130 = arith.constant 24 : index
    %c0_131 = arith.constant 0 : index
    %c0_132 = arith.constant 0 : index
    %80 = vector.load %arg10[%c24_130, %c0_131, %c0_132] : memref<32x32x16xf32, #tpu.memory_space<vmem>>, vector<8x32x16xf32>
    tpu.vector_store %arg10[%c24_130, %c0_131, %c0_132], %79 {strides = array<i32>} : memref<32x32x16xf32, #tpu.memory_space<vmem>>, vector<8x32x16xf32>,
    %c0_133 = arith.constant 0 : index
    %c0_134 = arith.constant 0 : index
    %c0_135 = arith.constant 0 : index
    %81 = tpu.strided_load %arg10[%c0_133, %c0_134, %c0_135] {strides = array<i32: 1, 2, 1>} : memref<32x32x16xf32, #tpu.memory_space<vmem>>, vector<32x16x16xf32>
    %c0_136 = arith.constant 0 : index
    %c1_137 = arith.constant 1 : index
    %c0_138 = arith.constant 0 : index
    %82 = tpu.strided_load %arg10[%c0_136, %c1_137, %c0_138] {strides = array<i32: 1, 2, 1>} : memref<32x32x16xf32, #tpu.memory_space<vmem>>, vector<32x16x16xf32>
    %83 = arith.maximumf %81, %82 : vector<32x16x16xf32>
    %c0_139 = arith.constant 0 : index
    %c0_140 = arith.constant 0 : index
    %c0_141 = arith.constant 0 : index
    %84 = vector.load %arg11[%c0_139, %c0_140, %c0_141] : memref<32x16x16xf32, #tpu.memory_space<vmem>>, vector<32x16x16xf32>
    tpu.vector_store %arg11[%c0_139, %c0_140, %c0_141], %83 {strides = array<i32>} : memref<32x16x16xf32, #tpu.memory_space<vmem>>, vector<32x16x16xf32>,
    %c0_142 = arith.constant 0 : index
    %c0_143 = arith.constant 0 : index
    %c0_144 = arith.constant 0 : index
    %85 = tpu.strided_load %arg11[%c0_142, %c0_143, %c0_144] {strides = array<i32: 2, 1, 1>} : memref<32x16x16xf32, #tpu.memory_space<vmem>>, vector<16x16x16xf32>
    %c1_145 = arith.constant 1 : index
    %c0_146 = arith.constant 0 : index
    %c0_147 = arith.constant 0 : index
    %86 = tpu.strided_load %arg11[%c1_145, %c0_146, %c0_147] {strides = array<i32: 2, 1, 1>} : memref<32x16x16xf32, #tpu.memory_space<vmem>>, vector<16x16x16xf32>
    %87 = arith.maximumf %85, %86 : vector<16x16x16xf32>
    %c1_148 = arith.constant 1 : index
    %c8_149 = arith.constant 8 : index
    %c0_150 = arith.constant 0 : index
    %88 = vector.load %arg12[%c1_148, %c8_149, %c0_150] : memref<18x32x16xf32, #tpu.memory_space<vmem>>, vector<16x16x16xf32>
    tpu.vector_store %arg12[%c1_148, %c8_149, %c0_150], %87 {strides = array<i32>} : memref<18x32x16xf32, #tpu.memory_space<vmem>>, vector<16x16x16xf32>,
    %c0_151 = arith.constant 0 : index
    %c0_152 = arith.constant 0 : index
    %89 = vector.load %arg4[%c0_151, %c0_152] : memref<144x32xf32, #tpu.memory_space<vmem>>, vector<144x32xf32>
    %c0_153 = arith.constant 0 : index
    %c0_154 = arith.constant 0 : index
    %90 = vector.load %arg5[%c0_153, %c0_154] : memref<1x32xf32, #tpu.memory_space<vmem>>, vector<1x32xf32>
    %c0_155 = arith.constant 0 : index
    %c7_156 = arith.constant 7 : index
    %c0_157 = arith.constant 0 : index
    %91 = vector.load %arg12[%c0_155, %c7_156, %c0_157] : memref<18x32x16xf32, #tpu.memory_space<vmem>>, vector<16x16x16xf32>
    %c0_158 = arith.constant 0 : index
    %c8_159 = arith.constant 8 : index
    %c0_160 = arith.constant 0 : index
    %92 = vector.load %arg12[%c0_158, %c8_159, %c0_160] : memref<18x32x16xf32, #tpu.memory_space<vmem>>, vector<16x16x16xf32>
    %c0_161 = arith.constant 0 : index
    %c9_162 = arith.constant 9 : index
    %c0_163 = arith.constant 0 : index
    %93 = vector.load %arg12[%c0_161, %c9_162, %c0_163] : memref<18x32x16xf32, #tpu.memory_space<vmem>>, vector<16x16x16xf32>
    %c1_164 = arith.constant 1 : index
    %c7_165 = arith.constant 7 : index
    %c0_166 = arith.constant 0 : index
    %94 = vector.load %arg12[%c1_164, %c7_165, %c0_166] : memref<18x32x16xf32, #tpu.memory_space<vmem>>, vector<16x16x16xf32>
    %c1_167 = arith.constant 1 : index
    %c8_168 = arith.constant 8 : index
    %c0_169 = arith.constant 0 : index
    %95 = vector.load %arg12[%c1_167, %c8_168, %c0_169] : memref<18x32x16xf32, #tpu.memory_space<vmem>>, vector<16x16x16xf32>
    %c1_170 = arith.constant 1 : index
    %c9_171 = arith.constant 9 : index
    %c0_172 = arith.constant 0 : index
    %96 = vector.load %arg12[%c1_170, %c9_171, %c0_172] : memref<18x32x16xf32, #tpu.memory_space<vmem>>, vector<16x16x16xf32>
    %c2_173 = arith.constant 2 : index
    %c7_174 = arith.constant 7 : index
    %c0_175 = arith.constant 0 : index
    %97 = vector.load %arg12[%c2_173, %c7_174, %c0_175] : memref<18x32x16xf32, #tpu.memory_space<vmem>>, vector<16x16x16xf32>
    %c2_176 = arith.constant 2 : index
    %c8_177 = arith.constant 8 : index
    %c0_178 = arith.constant 0 : index
    %98 = vector.load %arg12[%c2_176, %c8_177, %c0_178] : memref<18x32x16xf32, #tpu.memory_space<vmem>>, vector<16x16x16xf32>
    %c2_179 = arith.constant 2 : index
    %c9_180 = arith.constant 9 : index
    %c0_181 = arith.constant 0 : index
    %99 = vector.load %arg12[%c2_179, %c9_180, %c0_181] : memref<18x32x16xf32, #tpu.memory_space<vmem>>, vector<16x16x16xf32>
    %100 = tpu.concatenate %91, %92, %93, %94, %95, %96, %97, %98, %99 in 2 : vector<16x16x16xf32>, vector<16x16x16xf32>, vector<16x16x16xf32>, vector<16x16x16xf32>, vector<16x16x16xf32>, vector<16x16x16xf32>, vector<16x16x16xf32>, vector<16x16x16xf32>, vector<16x16x16xf32> -> vector<16x16x144xf32>
    %101 = vector.shape_cast %100 : vector<16x16x144xf32> to vector<256x144xf32>
    %cst_182 = arith.constant dense<0.000000e+00> : vector<256x32xf32>
    %102 = tpu.matmul %101, %89, %cst_182 {dimension_numbers = #tpu.dot_dimension_numbers<[1], [0], [0], [1], [0, 0, 1, 1], [], []>} : vector<256x144xf32>, vector<144x32xf32>, vector<256x32xf32> -> vector<256x32xf32>
    %103 = vector.broadcast %90 : vector<1x32xf32> to vector<256x32xf32>
    %104 = arith.addf %102, %103 : vector<256x32xf32>
    %cst_183 = arith.constant 0.000000e+00 : f32
    %105 = vector.broadcast %cst_183 : f32 to vector<256x32xf32>
    %106 = arith.maximumf %104, %105 : vector<256x32xf32>
    %107 = vector.shape_cast %106 : vector<256x32xf32> to vector<16x16x32xf32>
    %c0_184 = arith.constant 0 : index
    %c0_185 = arith.constant 0 : index
    %c0_186 = arith.constant 0 : index
    %108 = vector.load %arg13[%c0_184, %c0_185, %c0_186] : memref<16x16x32xf32, #tpu.memory_space<vmem>>, vector<16x16x32xf32>
    tpu.vector_store %arg13[%c0_184, %c0_185, %c0_186], %107 {strides = array<i32>} : memref<16x16x32xf32, #tpu.memory_space<vmem>>, vector<16x16x32xf32>,
    %c0_187 = arith.constant 0 : index
    %c0_188 = arith.constant 0 : index
    %c0_189 = arith.constant 0 : index
    %109 = tpu.strided_load %arg13[%c0_187, %c0_188, %c0_189] {strides = array<i32: 1, 2, 1>} : memref<16x16x32xf32, #tpu.memory_space<vmem>>, vector<16x8x32xf32>
    %c0_190 = arith.constant 0 : index
    %c1_191 = arith.constant 1 : index
    %c0_192 = arith.constant 0 : index
    %110 = tpu.strided_load %arg13[%c0_190, %c1_191, %c0_192] {strides = array<i32: 1, 2, 1>} : memref<16x16x32xf32, #tpu.memory_space<vmem>>, vector<16x8x32xf32>
    %111 = arith.maximumf %109, %110 : vector<16x8x32xf32>
    %c0_193 = arith.constant 0 : index
    %c0_194 = arith.constant 0 : index
    %c0_195 = arith.constant 0 : index
    %112 = vector.load %arg14[%c0_193, %c0_194, %c0_195] : memref<16x8x32xf32, #tpu.memory_space<vmem>>, vector<16x8x32xf32>
    tpu.vector_store %arg14[%c0_193, %c0_194, %c0_195], %111 {strides = array<i32>} : memref<16x8x32xf32, #tpu.memory_space<vmem>>, vector<16x8x32xf32>,
    %c0_196 = arith.constant 0 : index
    %c0_197 = arith.constant 0 : index
    %c0_198 = arith.constant 0 : index
    %113 = tpu.strided_load %arg14[%c0_196, %c0_197, %c0_198] {strides = array<i32: 2, 1, 1>} : memref<16x8x32xf32, #tpu.memory_space<vmem>>, vector<8x8x32xf32>
    %c1_199 = arith.constant 1 : index
    %c0_200 = arith.constant 0 : index
    %c0_201 = arith.constant 0 : index
    %114 = tpu.strided_load %arg14[%c1_199, %c0_200, %c0_201] {strides = array<i32: 2, 1, 1>} : memref<16x8x32xf32, #tpu.memory_space<vmem>>, vector<8x8x32xf32>
    %115 = arith.maximumf %113, %114 : vector<8x8x32xf32>
    %116 = vector.shape_cast %115 : vector<8x8x32xf32> to vector<64x32xf32>
    %c0_202 = arith.constant 0 : index
    %c0_203 = arith.constant 0 : index
    %c0_204 = arith.constant 0 : index
    %117 = vector.load %arg6[%c0_202, %c0_203, %c0_204] : memref<10x64x32xf32, #tpu.memory_space<vmem>>, vector<1x64x32xf32>
    %118 = vector.shape_cast %117 : vector<1x64x32xf32> to vector<64x32xf32>
    %119 = arith.mulf %116, %118 : vector<64x32xf32>
    %cst_205 = arith.constant dense<0.000000e+00> : vector<64xf32>
    %120 = vector.multi_reduction <add>, %119, %cst_205 [1] : vector<64x32xf32> to vector<64xf32>
    %121 = vector.shape_cast %120 : vector<64xf32> to vector<64x1xf32>
    %c1_206 = arith.constant 1 : index
    %c0_207 = arith.constant 0 : index
    %c0_208 = arith.constant 0 : index
    %122 = vector.load %arg6[%c1_206, %c0_207, %c0_208] : memref<10x64x32xf32, #tpu.memory_space<vmem>>, vector<1x64x32xf32>
    %123 = vector.shape_cast %122 : vector<1x64x32xf32> to vector<64x32xf32>
    %124 = arith.mulf %116, %123 : vector<64x32xf32>
    %cst_209 = arith.constant dense<0.000000e+00> : vector<64xf32>
    %125 = vector.multi_reduction <add>, %124, %cst_209 [1] : vector<64x32xf32> to vector<64xf32>
    %126 = vector.shape_cast %125 : vector<64xf32> to vector<64x1xf32>
    %c2_210 = arith.constant 2 : index
    %c0_211 = arith.constant 0 : index
    %c0_212 = arith.constant 0 : index
    %127 = vector.load %arg6[%c2_210, %c0_211, %c0_212] : memref<10x64x32xf32, #tpu.memory_space<vmem>>, vector<1x64x32xf32>
    %128 = vector.shape_cast %127 : vector<1x64x32xf32> to vector<64x32xf32>
    %129 = arith.mulf %116, %128 : vector<64x32xf32>
    %cst_213 = arith.constant dense<0.000000e+00> : vector<64xf32>
    %130 = vector.multi_reduction <add>, %129, %cst_213 [1] : vector<64x32xf32> to vector<64xf32>
    %131 = vector.shape_cast %130 : vector<64xf32> to vector<64x1xf32>
    %c3 = arith.constant 3 : index
    %c0_214 = arith.constant 0 : index
    %c0_215 = arith.constant 0 : index
    %132 = vector.load %arg6[%c3, %c0_214, %c0_215] : memref<10x64x32xf32, #tpu.memory_space<vmem>>, vector<1x64x32xf32>
    %133 = vector.shape_cast %132 : vector<1x64x32xf32> to vector<64x32xf32>
    %134 = arith.mulf %116, %133 : vector<64x32xf32>
    %cst_216 = arith.constant dense<0.000000e+00> : vector<64xf32>
    %135 = vector.multi_reduction <add>, %134, %cst_216 [1] : vector<64x32xf32> to vector<64xf32>
    %136 = vector.shape_cast %135 : vector<64xf32> to vector<64x1xf32>
    %c4 = arith.constant 4 : index
    %c0_217 = arith.constant 0 : index
    %c0_218 = arith.constant 0 : index
    %137 = vector.load %arg6[%c4, %c0_217, %c0_218] : memref<10x64x32xf32, #tpu.memory_space<vmem>>, vector<1x64x32xf32>
    %138 = vector.shape_cast %137 : vector<1x64x32xf32> to vector<64x32xf32>
    %139 = arith.mulf %116, %138 : vector<64x32xf32>
    %cst_219 = arith.constant dense<0.000000e+00> : vector<64xf32>
    %140 = vector.multi_reduction <add>, %139, %cst_219 [1] : vector<64x32xf32> to vector<64xf32>
    %141 = vector.shape_cast %140 : vector<64xf32> to vector<64x1xf32>
    %c5 = arith.constant 5 : index
    %c0_220 = arith.constant 0 : index
    %c0_221 = arith.constant 0 : index
    %142 = vector.load %arg6[%c5, %c0_220, %c0_221] : memref<10x64x32xf32, #tpu.memory_space<vmem>>, vector<1x64x32xf32>
    %143 = vector.shape_cast %142 : vector<1x64x32xf32> to vector<64x32xf32>
    %144 = arith.mulf %116, %143 : vector<64x32xf32>
    %cst_222 = arith.constant dense<0.000000e+00> : vector<64xf32>
    %145 = vector.multi_reduction <add>, %144, %cst_222 [1] : vector<64x32xf32> to vector<64xf32>
    %146 = vector.shape_cast %145 : vector<64xf32> to vector<64x1xf32>
    %c6 = arith.constant 6 : index
    %c0_223 = arith.constant 0 : index
    %c0_224 = arith.constant 0 : index
    %147 = vector.load %arg6[%c6, %c0_223, %c0_224] : memref<10x64x32xf32, #tpu.memory_space<vmem>>, vector<1x64x32xf32>
    %148 = vector.shape_cast %147 : vector<1x64x32xf32> to vector<64x32xf32>
    %149 = arith.mulf %116, %148 : vector<64x32xf32>
    %cst_225 = arith.constant dense<0.000000e+00> : vector<64xf32>
    %150 = vector.multi_reduction <add>, %149, %cst_225 [1] : vector<64x32xf32> to vector<64xf32>
    %151 = vector.shape_cast %150 : vector<64xf32> to vector<64x1xf32>
    %c7_226 = arith.constant 7 : index
    %c0_227 = arith.constant 0 : index
    %c0_228 = arith.constant 0 : index
    %152 = vector.load %arg6[%c7_226, %c0_227, %c0_228] : memref<10x64x32xf32, #tpu.memory_space<vmem>>, vector<1x64x32xf32>
    %153 = vector.shape_cast %152 : vector<1x64x32xf32> to vector<64x32xf32>
    %154 = arith.mulf %116, %153 : vector<64x32xf32>
    %cst_229 = arith.constant dense<0.000000e+00> : vector<64xf32>
    %155 = vector.multi_reduction <add>, %154, %cst_229 [1] : vector<64x32xf32> to vector<64xf32>
    %156 = vector.shape_cast %155 : vector<64xf32> to vector<64x1xf32>
    %c8_230 = arith.constant 8 : index
    %c0_231 = arith.constant 0 : index
    %c0_232 = arith.constant 0 : index
    %157 = vector.load %arg6[%c8_230, %c0_231, %c0_232] : memref<10x64x32xf32, #tpu.memory_space<vmem>>, vector<1x64x32xf32>
    %158 = vector.shape_cast %157 : vector<1x64x32xf32> to vector<64x32xf32>
    %159 = arith.mulf %116, %158 : vector<64x32xf32>
    %cst_233 = arith.constant dense<0.000000e+00> : vector<64xf32>
    %160 = vector.multi_reduction <add>, %159, %cst_233 [1] : vector<64x32xf32> to vector<64xf32>
    %161 = vector.shape_cast %160 : vector<64xf32> to vector<64x1xf32>
    %c9_234 = arith.constant 9 : index
    %c0_235 = arith.constant 0 : index
    %c0_236 = arith.constant 0 : index
    %162 = vector.load %arg6[%c9_234, %c0_235, %c0_236] : memref<10x64x32xf32, #tpu.memory_space<vmem>>, vector<1x64x32xf32>
    %163 = vector.shape_cast %162 : vector<1x64x32xf32> to vector<64x32xf32>
    %164 = arith.mulf %116, %163 : vector<64x32xf32>
    %cst_237 = arith.constant dense<0.000000e+00> : vector<64xf32>
    %165 = vector.multi_reduction <add>, %164, %cst_237 [1] : vector<64x32xf32> to vector<64xf32>
    %166 = vector.shape_cast %165 : vector<64xf32> to vector<64x1xf32>
    %167 = tpu.concatenate %121, %126, %131, %136, %141, %146, %151, %156, %161, %166 in 1 : vector<64x1xf32>, vector<64x1xf32>, vector<64x1xf32>, vector<64x1xf32>, vector<64x1xf32>, vector<64x1xf32>, vector<64x1xf32>, vector<64x1xf32>, vector<64x1xf32>, vector<64x1xf32> -> vector<64x10xf32>
    %cst_238 = arith.constant dense<0.000000e+00> : vector<10xf32>
    %168 = vector.multi_reduction <add>, %167, %cst_238 [0] : vector<64x10xf32> to vector<10xf32>
    %169 = vector.shape_cast %168 : vector<10xf32> to vector<1x10xf32>
    %c0_239 = arith.constant 0 : index
    %c0_240 = arith.constant 0 : index
    %170 = vector.load %arg7[%c0_239, %c0_240] : memref<1x10xf32, #tpu.memory_space<vmem>>, vector<1x10xf32>
    %171 = arith.addf %169, %170 : vector<1x10xf32>
    %c0_241 = arith.constant 0 : index
    %c0_242 = arith.constant 0 : index
    %c0_243 = arith.constant 0 : index
    %172 = vector.load %arg8[%c0_241, %c0_242, %c0_243] : memref<1x1x10xf32, #tpu.memory_space<vmem>>, vector<1x1x10xf32>
    %173 = vector.shape_cast %172 : vector<1x1x10xf32> to vector<1x10xf32>
    %174 = vector.shape_cast %171 : vector<1x10xf32> to vector<1x1x10xf32>
    tpu.vector_store %arg8[%c0_241, %c0_242, %c0_243], %174 {strides = array<i32>} : memref<1x1x10xf32, #tpu.memory_space<vmem>>, vector<1x1x10xf32>,
    return
  }
  func.func @transform_0(%arg0: i32) -> (i32, i32, i32, i32) {
    %c0_i32 = arith.constant 0 : i32
    %c0_i32_0 = arith.constant 0 : i32
    %c0_i32_1 = arith.constant 0 : i32
    %c0_i32_2 = arith.constant 0 : i32
    return %arg0, %c0_i32, %c0_i32_0, %c0_i32_1 : i32, i32, i32, i32
  }
  func.func @transform_1(%arg0: i32) -> (i32, i32) {
    %c0_i32 = arith.constant 0 : i32
    %c0_i32_0 = arith.constant 0 : i32
    %c0_i32_1 = arith.constant 0 : i32
    return %c0_i32, %c0_i32_0 : i32, i32
  }
  func.func @transform_2(%arg0: i32) -> (i32, i32) {
    %c0_i32 = arith.constant 0 : i32
    %c0_i32_0 = arith.constant 0 : i32
    %c0_i32_1 = arith.constant 0 : i32
    return %c0_i32, %c0_i32_0 : i32, i32
  }
  func.func @transform_3(%arg0: i32) -> (i32, i32) {
    %c0_i32 = arith.constant 0 : i32
    %c0_i32_0 = arith.constant 0 : i32
    %c0_i32_1 = arith.constant 0 : i32
    return %c0_i32, %c0_i32_0 : i32, i32
  }
  func.func @transform_4(%arg0: i32) -> (i32, i32) {
    %c0_i32 = arith.constant 0 : i32
    %c0_i32_0 = arith.constant 0 : i32
    %c0_i32_1 = arith.constant 0 : i32
    return %c0_i32, %c0_i32_0 : i32, i32
  }
  func.func @transform_5(%arg0: i32) -> (i32, i32, i32) {
    %c0_i32 = arith.constant 0 : i32
    %c0_i32_0 = arith.constant 0 : i32
    %c0_i32_1 = arith.constant 0 : i32
    %c0_i32_2 = arith.constant 0 : i32
    return %c0_i32, %c0_i32_0, %c0_i32_1 : i32, i32, i32
  }
  func.func @transform_6(%arg0: i32) -> (i32, i32) {
    %c0_i32 = arith.constant 0 : i32
    %c0_i32_0 = arith.constant 0 : i32
    %c0_i32_1 = arith.constant 0 : i32
    return %c0_i32, %c0_i32_0 : i32, i32
  }
  func.func @transform_7(%arg0: i32) -> (i32, i32, i32) {
    %c0_i32 = arith.constant 0 : i32
    %c0_i32_0 = arith.constant 0 : i32
    %c0_i32_1 = arith.constant 0 : i32
    return %arg0, %c0_i32, %c0_i32_0 : i32, i32, i32
  }
}

</mosaic_0001>

<llo_original>
// kernel: student_cnn_forward.1
$region0: #{student_cnn_forward.1}
  #allocation0 [shape = 'u32[]', space=smem, size = 0x4, offset = 0x4, fixed_abs, tag = 'smem constant byte address 0x4 - core index']
  #allocation1 [shape = 'u32[72,128]{1,0:T(1,128)}', space=vmem, size = 0x9000, scoped, tag = 'internal scratch']
  #allocation2 [shape = 'f32[34,48,3]{2,1,0:T(8,128)}', space=vmem, size = 0xcc000, scoped, tag = 'scratch operand']
  #allocation3 [shape = 'f32[32,32,16]{2,1,0:T(8,128)}', space=vmem, size = 0x80000, scoped, tag = 'scratch operand']
  #allocation4 [shape = 'f32[32,16,16]{2,1,0:T(8,128)}', space=vmem, size = 0x40000, scoped, tag = 'scratch operand']
  #allocation5 [shape = 'f32[18,32,16]{2,1,0:T(8,128)}', space=vmem, size = 0x48000, scoped, tag = 'scratch operand']
  #allocation6 [shape = 'f32[16,16,32]{2,1,0:T(8,128)}', space=vmem, size = 0x20000, scoped, tag = 'scratch operand']
  #allocation7 [shape = 'f32[16,8,32]{2,1,0:T(8,128)}', space=vmem, size = 0x10000, scoped, tag = 'scratch operand']
  %s0 = inlined_call_operand.vmem [shape: f32[2,32,32,3], index: 0, kind: input, shape index: {}]
  %s1 = inlined_call_operand.vmem [shape: f32[27,16], index: 1, kind: input, shape index: {}]
  %s2 = inlined_call_operand.vmem [shape: f32[1,16], index: 2, kind: input, shape index: {}]
  %s3 = inlined_call_operand.vmem [shape: f32[144,32], index: 3, kind: input, shape index: {}]
  %s4 = inlined_call_operand.vmem [shape: f32[1,32], index: 4, kind: input, shape index: {}]
  %s5 = inlined_call_operand.vmem [shape: f32[10,64,32], index: 5, kind: input, shape index: {}]
  %s6 = inlined_call_operand.vmem [shape: f32[1,10], index: 6, kind: input, shape index: {}]
  %s7 = inlined_call_operand.hbm [shape: f32[2,1,10], index: 7, kind: output, shape index: {}]
  %s8 = sld [smem:[#allocation0]]
  $region61: #{student_cnn_forward.1} parent=0
    _
  %s10 = ssub.s32 1, %s8
  %s11 = scalar_select 0, %s10, %s8
  $region1: #{student_cnn_forward.1} parent=0
    #allocation8 [shape = 'u8[1024]{0}', space=vmem, size = 0x400, scoped, tag = 'output window, operand 0']
    #allocation9 [shape = 's32[2]{0}', space=sflag, size = 0x8, scoped, tag = 'scoped memory for student_cnn_forward.1']
    %12 = vsyncpa [#allocation9], 0
    %s13 = scalar_lea.sflag [#allocation9], 1
    %14 = vsyncpa %s13, 0
    loop: start=0, step=1, limit=4
    $region2: #{student_cnn_forward.1} parent=1 // loop_pre_header
      _
    $region3: #{student_cnn_forward.1} parent=1 // loop_header
      %s16 = sphi 0, %s20
      %p17 = scmp.ge.s32.totalorder %s16, 4
      %s26 = sphi 0, %s28
      %s29 = sphi 0, %s26
      %s30 = sphi 0, %s29
      %s46 = sphi 0, %s30
      %s50 = sphi 0, %s50
      %s52 = sphi 0, %s50
      %s53 = sphi 0, %s52
      %s67 = sphi 0, %s53
      %s71 = sphi 0, %s71
      %s73 = sphi 0, %s71
      %s74 = sphi 0, %s73
      %s88 = sphi 0, %s74
      %s92 = sphi 0, %s92
      %s94 = sphi 0, %s92
      %s95 = sphi 0, %s94
      %s109 = sphi 0, %s95
      %s113 = sphi 0, %s113
      %s115 = sphi 0, %s113
      %s116 = sphi 0, %s115
      %s130 = sphi 0, %s116
      %s134 = sphi 0, %s134
      %s136 = sphi 0, %s134
      %s137 = sphi 0, %s136
      %s151 = sphi 0, %s137
      %s155 = sphi 0, %s155
      %s157 = sphi 0, %s155
      %s158 = sphi 0, %s157
      %s172 = sphi 0, %s158
      %s178 = sphi 0, %s180
      %s181 = sphi 0, %s178
      %s182 = sphi 0, %s181
      %s198 = sphi 0, %s182
    $region4: #{student_cnn_forward.1} parent=1 // loop_header_branch
      %19 = sbr.rel (%p17) target = $region8
    $region5: #{student_cnn_forward.1} parent=1 // loop_body
      %s21 = ssub.s32 %s16, 1
      %s22 = ssub.s32 %s16, 2
      %s23 = sadd.s32 %s16, 1
      %s24 = ssub.s32 %s16, %s23
      %p25 = scmp.eq.s32.totalorder %s24, 0
      %s27 = sadd.s32 %s26, 1
      %s28 = scalar_select %p25, %s26, %s27
      %p31 = pneg %p25
      %p32 = scmp.eq.s32.totalorder %s16, 1
      %p33 = por %p31, %p32
      %p34 = scmp.ne.s32.totalorder %s26, %s29
      %p35 = scmp.eq.s32.totalorder %s16, 0
      %p36 = por %p34, %p35
      %p37 = scmp.ne.s32.totalorder %s26, %s29
      %p38 = scmp.eq.s32.totalorder %s21, 1
      %p39 = por %p37, %p38
      %p40 = scmp.ne.s32.totalorder %s29, %s30
      %p41 = scmp.eq.s32.totalorder %s21, 0
      %p42 = por %p40, %p41
      %p43 = scmp.ne.s32.totalorder %s29, %s30
      %p44 = scmp.eq.s32.totalorder %s22, 1
      %p45 = por %p43, %p44
      %p47 = scmp.ne.s32.totalorder %s30, %s46
      %p48 = scmp.eq.s32.totalorder %s22, 0
      %p49 = por %p47, %p48
      %s51 = sadd.s32 %s50, 1
      %p54 = scmp.eq.s32.totalorder %s16, 1
      %p55 = scmp.ne.s32.totalorder %s50, %s52
      %p56 = scmp.eq.s32.totalorder %s16, 0
      %p57 = por %p55, %p56
      %p58 = scmp.ne.s32.totalorder %s50, %s52
      %p59 = scmp.eq.s32.totalorder %s21, 1
      %p60 = por %p58, %p59
      %p61 = scmp.ne.s32.totalorder %s52, %s53
      %p62 = scmp.eq.s32.totalorder %s21, 0
      %p63 = por %p61, %p62
      %p64 = scmp.ne.s32.totalorder %s52, %s53
      %p65 = scmp.eq.s32.totalorder %s22, 1
      %p66 = por %p64, %p65
      %p68 = scmp.ne.s32.totalorder %s53, %s67
      %p69 = scmp.eq.s32.totalorder %s22, 0
      %p70 = por %p68, %p69
      %s72 = sadd.s32 %s71, 1
      %p75 = scmp.eq.s32.totalorder %s16, 1
      %p76 = scmp.ne.s32.totalorder %s71, %s73
      %p77 = scmp.eq.s32.totalorder %s16, 0
      %p78 = por %p76, %p77
      %p79 = scmp.ne.s32.totalorder %s71, %s73
      %p80 = scmp.eq.s32.totalorder %s21, 1
      %p81 = por %p79, %p80
      %p82 = scmp.ne.s32.totalorder %s73, %s74
      %p83 = scmp.eq.s32.totalorder %s21, 0
      %p84 = por %p82, %p83
      %p85 = scmp.ne.s32.totalorder %s73, %s74
      %p86 = scmp.eq.s32.totalorder %s22, 1
      %p87 = por %p85, %p86
      %p89 = scmp.ne.s32.totalorder %s74, %s88
      %p90 = scmp.eq.s32.totalorder %s22, 0
      %p91 = por %p89, %p90
      %s93 = sadd.s32 %s92, 1
      %p96 = scmp.eq.s32.totalorder %s16, 1
      %p97 = scmp.ne.s32.totalorder %s92, %s94
      %p98 = scmp.eq.s32.totalorder %s16, 0
      %p99 = por %p97, %p98
      %p100 = scmp.ne.s32.totalorder %s92, %s94
      %p101 = scmp.eq.s32.totalorder %s21, 1
      %p102 = por %p100, %p101
      %p103 = scmp.ne.s32.totalorder %s94, %s95
      %p104 = scmp.eq.s32.totalorder %s21, 0
      %p105 = por %p103, %p104
      %p106 = scmp.ne.s32.totalorder %s94, %s95
      %p107 = scmp.eq.s32.totalorder %s22, 1
      %p108 = por %p106, %p107
      %p110 = scmp.ne.s32.totalorder %s95, %s109
      %p111 = scmp.eq.s32.totalorder %s22, 0
      %p112 = por %p110, %p111
      %s114 = sadd.s32 %s113, 1
      %p117 = scmp.eq.s32.totalorder %s16, 1
      %p118 = scmp.ne.s32.totalorder %s113, %s115
      %p119 = scmp.eq.s32.totalorder %s16, 0
      %p120 = por %p118, %p119
      %p121 = scmp.ne.s32.totalorder %s113, %s115
      %p122 = scmp.eq.s32.totalorder %s21, 1
      %p123 = por %p121, %p122
      %p124 = scmp.ne.s32.totalorder %s115, %s116
      %p125 = scmp.eq.s32.totalorder %s21, 0
      %p126 = por %p124, %p125
      %p127 = scmp.ne.s32.totalorder %s115, %s116
      %p128 = scmp.eq.s32.totalorder %s22, 1
      %p129 = por %p127, %p128
      %p131 = scmp.ne.s32.totalorder %s116, %s130
      %p132 = scmp.eq.s32.totalorder %s22, 0
      %p133 = por %p131, %p132
      %s135 = sadd.s32 %s134, 1
      %p138 = scmp.eq.s32.totalorder %s16, 1
      %p139 = scmp.ne.s32.totalorder %s134, %s136
      %p140 = scmp.eq.s32.totalorder %s16, 0
      %p141 = por %p139, %p140
      %p142 = scmp.ne.s32.totalorder %s134, %s136
      %p143 = scmp.eq.s32.totalorder %s21, 1
      %p144 = por %p142, %p143
      %p145 = scmp.ne.s32.totalorder %s136, %s137
      %p146 = scmp.eq.s32.totalorder %s21, 0
      %p147 = por %p145, %p146
      %p148 = scmp.ne.s32.totalorder %s136, %s137
      %p149 = scmp.eq.s32.totalorder %s22, 1
      %p150 = por %p148, %p149
      %p152 = scmp.ne.s32.totalorder %s137, %s151
      %p153 = scmp.eq.s32.totalorder %s22, 0
      %p154 = por %p152, %p153
      %s156 = sadd.s32 %s155, 1
      %p159 = scmp.eq.s32.totalorder %s16, 1
      %p160 = scmp.ne.s32.totalorder %s155, %s157
      %p161 = scmp.eq.s32.totalorder %s16, 0
      %p162 = por %p160, %p161
      %p163 = scmp.ne.s32.totalorder %s155, %s157
      %p164 = scmp.eq.s32.totalorder %s21, 1
      %p165 = por %p163, %p164
      %p166 = scmp.ne.s32.totalorder %s157, %s158
      %p167 = scmp.eq.s32.totalorder %s21, 0
      %p168 = por %p166, %p167
      %p169 = scmp.ne.s32.totalorder %s157, %s158
      %p170 = scmp.eq.s32.totalorder %s22, 1
      %p171 = por %p169, %p170
      %p173 = scmp.ne.s32.totalorder %s158, %s172
      %p174 = scmp.eq.s32.totalorder %s22, 0
      %p175 = por %p173, %p174
      %s176 = ssub.s32 %s16, %s23
      %p177 = scmp.eq.s32.totalorder %s176, 0
      %s179 = sadd.s32 %s178, 1
      %s180 = scalar_select %p177, %s178, %s179
      %p183 = pneg %p177
      %p184 = scmp.eq.s32.totalorder %s16, 1
      %p185 = por %p183, %p184
      %p186 = scmp.ne.s32.totalorder %s178, %s181
      %p187 = scmp.eq.s32.totalorder %s16, 0
      %p188 = por %p186, %p187
      %p189 = scmp.ne.s32.totalorder %s178, %s181
      %p190 = scmp.eq.s32.totalorder %s21, 1
      %p191 = por %p189, %p190
      %p192 = scmp.ne.s32.totalorder %s181, %s182
      %p193 = scmp.eq.s32.totalorder %s21, 0
      %p194 = por %p192, %p193
      %p195 = scmp.ne.s32.totalorder %s181, %s182
      %p196 = scmp.eq.s32.totalorder %s22, 1
      %p197 = por %p195, %p196
      %p199 = scmp.ne.s32.totalorder %s182, %s198
      %p200 = scmp.eq.s32.totalorder %s22, 0
      %p201 = por %p199, %p200
      %p202 = scmp.le.s32.totalorder 1, %s16
      %p203 = scmp.lt.s32.totalorder %s16, 3
      %p204 = pnand %p202, %p203
      %p205 = pneg %p204
      // Predicated region
      $region9: #{student_cnn_forward.1} parent=5 // pred_check
        _
      $region10: #{student_cnn_forward.1} parent=5 // pred_check_branch
        %207 = sbr.rel (%p204) target = $region12
      $region11: #{student_cnn_forward.1} parent=5 // pred_region
        %s208 = ssub.s32 %s16, 1
        // Predicated region
        $region13: #{student_cnn_forward.1} parent=11 // pred_check
          %p209 = pneg %p63
        $region14: #{student_cnn_forward.1} parent=11 // pred_check_branch
          %211 = sbr.rel (%p209) target = $region16
        $region15: #{student_cnn_forward.1} parent=11 // pred_region
          _
        $region16: #{student_cnn_forward.1} parent=11 // pred_fallthru
          _
        // Predicated region
        $region17: #{student_cnn_forward.1} parent=11 // pred_check
          %p212 = pneg %p84
        $region18: #{student_cnn_forward.1} parent=11 // pred_check_branch
          %214 = sbr.rel (%p212) target = $region20
        $region19: #{student_cnn_forward.1} parent=11 // pred_region
          _
        $region20: #{student_cnn_forward.1} parent=11 // pred_fallthru
          _
        // Predicated region
        $region21: #{student_cnn_forward.1} parent=11 // pred_check
          %p215 = pneg %p105
        $region22: #{student_cnn_forward.1} parent=11 // pred_check_branch
          %217 = sbr.rel (%p215) target = $region24
        $region23: #{student_cnn_forward.1} parent=11 // pred_region
          _
        $region24: #{student_cnn_forward.1} parent=11 // pred_fallthru
          _
        // Predicated region
        $region25: #{student_cnn_forward.1} parent=11 // pred_check
          %p218 = pneg %p126
        $region26: #{student_cnn_forward.1} parent=11 // pred_check_branch
          %220 = sbr.rel (%p218) target = $region28
        $region27: #{student_cnn_forward.1} parent=11 // pred_region
          _
        $region28: #{student_cnn_forward.1} parent=11 // pred_fallthru
          _
        // Predicated region
        $region29: #{student_cnn_forward.1} parent=11 // pred_check
          %p221 = pneg %p147
        $region30: #{student_cnn_forward.1} parent=11 // pred_check_branch
          %223 = sbr.rel (%p221) target = $region32
        $region31: #{student_cnn_forward.1} parent=11 // pred_region
          _
        $region32: #{student_cnn_forward.1} parent=11 // pred_fallthru
          _
        // Predicated region
        $region33: #{student_cnn_forward.1} parent=11 // pred_check
          %p224 = pneg %p168
        $region34: #{student_cnn_forward.1} parent=11 // pred_check_branch
          %226 = sbr.rel (%p224) target = $region36
        $region35: #{student_cnn_forward.1} parent=11 // pred_region
          _
        $region36: #{student_cnn_forward.1} parent=11 // pred_fallthru
          _
      $region12: #{student_cnn_forward.1} parent=5 // pred_fallthru
        _
      %p227 = scmp.lt.s32.totalorder %s16, 2
      // Predicated region
      $region37: #{student_cnn_forward.1} parent=5 // pred_check
        %p228 = pneg %p227
      $region38: #{student_cnn_forward.1} parent=5 // pred_check_branch
        %230 = sbr.rel (%p228) target = $region40
      $region39: #{student_cnn_forward.1} parent=5 // pred_region
        // Predicated region
        $region41: #{student_cnn_forward.1} parent=39 // pred_check
          %p231 = pneg %p36
        $region42: #{student_cnn_forward.1} parent=39 // pred_check_branch
          %233 = sbr.rel (%p231) target = $region44
        $region43: #{student_cnn_forward.1} parent=39 // pred_region
          %p234 = scmp.lt.s32.totalorder %s16, 1
          %s235 = scalar_select %p234, %s16, 1
          %s236 = smul.addr %s235, 128
          %s237 = smul.addr %s236, 8
          %s238 = scalar_lea.vmem %s0, %s237
        $region44: #{student_cnn_forward.1} parent=39 // pred_fallthru
          _
      $region40: #{student_cnn_forward.1} parent=5 // pred_fallthru
        _
      %p239 = scmp.le.s32.totalorder 1, %s16
      %p240 = scmp.lt.s32.totalorder %s16, 3
      %p241 = pnand %p239, %p240
      %p242 = pneg %p241
      // Predicated region
      $region45: #{student_cnn_forward.1} parent=5 // pred_check
        _
      $region46: #{student_cnn_forward.1} parent=5 // pred_check_branch
        %244 = sbr.rel (%p241) target = $region48
      $region47: #{student_cnn_forward.1} parent=5 // pred_region
        %s245 = ssub.s32 %s16, 1
        %p246 = scmp.lt.s32.totalorder %s21, 1
        %s247 = scalar_select %p246, %s21, 1
        %s248 = smul.addr %s247, 128
        %s249 = smul.addr %s248, 8
        %s250 = scalar_lea.vmem %s0, %s249
        %p251 = pneg %p42
        %p252 = pneg %p39
        %p253 = pneg %p63
        %p254 = pneg %p60
        %p255 = pneg %p84
        %p256 = pneg %p81
        %p257 = pneg %p105
        %p258 = pneg %p102
        %p259 = pneg %p126
        %p260 = pneg %p123
        %p261 = pneg %p147
        %p262 = pneg %p144
        %p263 = pneg %p168
        %p264 = pneg %p165
        %p265 = pneg %p194
        %p266 = pneg %p191
        %s267 = sand.u32 %s181, 1
        %s268 = scalar_lea.sflag [#allocation9], %s267
        %s269 = sand.u32 %s181, 1
        %s270 = scalar_lea.vmem [#allocation8], %s269
        %p271 = scmp.lt.s32.totalorder %s21, 1
        %s272 = scalar_select %p271, %s21, 1
        %s273 = smul.addr %s272, 128
        %s274 = smul.addr %s273, 8
        %s275 = scalar_lea.vmem %s0, %s274
        %vm276 = vcmask 23552
        %277 = vst.msk [vmem:[#allocation2] sm:$0xff] %vm276, 0.0
        %278 = vst.msk [vmem:[#allocation2 + $0x8] sm:$0xff] %vm276, 0.0
        %279 = vst.msk [vmem:[#allocation2 + $0x10] sm:$0xff] %vm276, 0.0
        %280 = vst.msk [vmem:[#allocation2 + $0x18] sm:$0xff] %vm276, 0.0
        %281 = vst.msk [vmem:[#allocation2 + $0x20] sm:$0xff] %vm276, 0.0
        %282 = vst.msk [vmem:[#allocation2 + $0x28] sm:$0xff] %vm276, 0.0
        %283 = vst.msk [vmem:[#allocation2 + $0x30] sm:$0xff] %vm276, 0.0
        %284 = vst.msk [vmem:[#allocation2 + $0x38] sm:$0xff] %vm276, 0.0
        %285 = vst.msk [vmem:[#allocation2 + $0x40] sm:$0xff] %vm276, 0.0
        %286 = vst.msk [vmem:[#allocation2 + $0x48] sm:$0xff] %vm276, 0.0
        %287 = vst.msk [vmem:[#allocation2 + $0x50] sm:$0xff] %vm276, 0.0
        %288 = vst.msk [vmem:[#allocation2 + $0x58] sm:$0xff] %vm276, 0.0
        %289 = vst.msk [vmem:[#allocation2 + $0x60] sm:$0xff] %vm276, 0.0
        %290 = vst.msk [vmem:[#allocation2 + $0x68] sm:$0xff] %vm276, 0.0
        %291 = vst.msk [vmem:[#allocation2 + $0x70] sm:$0xff] %vm276, 0.0
        %292 = vst.msk [vmem:[#allocation2 + $0x78] sm:$0xff] %vm276, 0.0
        %293 = vst.msk [vmem:[#allocation2 + $0x80] sm:$0xff] %vm276, 0.0
        %294 = vst.msk [vmem:[#allocation2 + $0x88] sm:$0xff] %vm276, 0.0
        %295 = vst.msk [vmem:[#allocation2 + $0x90] sm:$0xff] %vm276, 0.0
        %296 = vst.msk [vmem:[#allocation2 + $0x98] sm:$0xff] %vm276, 0.0
        %297 = vst.msk [vmem:[#allocation2 + $0xa0] sm:$0xff] %vm276, 0.0
        %298 = vst.msk [vmem:[#allocation2 + $0xa8] sm:$0xff] %vm276, 0.0
        %299 = vst.msk [vmem:[#allocation2 + $0xb0] sm:$0xff] %vm276, 0.0
        %300 = vst.msk [vmem:[#allocation2 + $0xb8] sm:$0xff] %vm276, 0.0
        %301 = vst.msk [vmem:[#allocation2 + $0xc0] sm:$0xff] %vm276, 0.0
        %302 = vst.msk [vmem:[#allocation2 + $0xc8] sm:$0xff] %vm276, 0.0
        %303 = vst.msk [vmem:[#allocation2 + $0xd0] sm:$0xff] %vm276, 0.0
        %304 = vst.msk [vmem:[#allocation2 + $0xd8] sm:$0xff] %vm276, 0.0
        %305 = vst.msk [vmem:[#allocation2 + $0xe0] sm:$0xff] %vm276, 0.0
        %306 = vst.msk [vmem:[#allocation2 + $0xe8] sm:$0xff] %vm276, 0.0
        %307 = vst.msk [vmem:[#allocation2 + $0xf0] sm:$0xff] %vm276, 0.0
        %308 = vst.msk [vmem:[#allocation2 + $0xf8] sm:$0xff] %vm276, 0.0
        %309 = vst.msk [vmem:[#allocation2 + $0x100] sm:$0xff] %vm276, 0.0
        %310 = vst.msk [vmem:[#allocation2 + $0x108] sm:$0xff] %vm276, 0.0
        %311 = vst.msk [vmem:[#allocation2 + $0x110] sm:$0xff] %vm276, 0.0
        %312 = vst.msk [vmem:[#allocation2 + $0x118] sm:$0xff] %vm276, 0.0
        %313 = vst.msk [vmem:[#allocation2 + $0x120] sm:$0xff] %vm276, 0.0
        %314 = vst.msk [vmem:[#allocation2 + $0x128] sm:$0xff] %vm276, 0.0
        %315 = vst.msk [vmem:[#allocation2 + $0x130] sm:$0xff] %vm276, 0.0
        %316 = vst.msk [vmem:[#allocation2 + $0x138] sm:$0xff] %vm276, 0.0
        %317 = vst.msk [vmem:[#allocation2 + $0x140] sm:$0xff] %vm276, 0.0
        %318 = vst.msk [vmem:[#allocation2 + $0x148] sm:$0xff] %vm276, 0.0
        %319 = vst.msk [vmem:[#allocation2 + $0x150] sm:$0xff] %vm276, 0.0
        %320 = vst.msk [vmem:[#allocation2 + $0x158] sm:$0xff] %vm276, 0.0
        %321 = vst.msk [vmem:[#allocation2 + $0x160] sm:$0xff] %vm276, 0.0
        %322 = vst.msk [vmem:[#allocation2 + $0x168] sm:$0xff] %vm276, 0.0
        %323 = vst.msk [vmem:[#allocation2 + $0x170] sm:$0xff] %vm276, 0.0
        %324 = vst.msk [vmem:[#allocation2 + $0x178] sm:$0xff] %vm276, 0.0
        %325 = vst.msk [vmem:[#allocation2 + $0x180] sm:$0xff] %vm276, 0.0
        %326 = vst.msk [vmem:[#allocation2 + $0x188] sm:$0xff] %vm276, 0.0
        %327 = vst.msk [vmem:[#allocation2 + $0x190] sm:$0xff] %vm276, 0.0
        %328 = vst.msk [vmem:[#allocation2 + $0x198] sm:$0xff] %vm276, 0.0
        %329 = vst.msk [vmem:[#allocation2 + $0x1a0] sm:$0xff] %vm276, 0.0
        %330 = vst.msk [vmem:[#allocation2 + $0x1a8] sm:$0xff] %vm276, 0.0
        %331 = vst.msk [vmem:[#allocation2 + $0x1b0] sm:$0xff] %vm276, 0.0
        %332 = vst.msk [vmem:[#allocation2 + $0x1b8] sm:$0xff] %vm276, 0.0
        %333 = vst.msk [vmem:[#allocation2 + $0x1c0] sm:$0xff] %vm276, 0.0
        %334 = vst.msk [vmem:[#allocation2 + $0x1c8] sm:$0xff] %vm276, 0.0
        %335 = vst.msk [vmem:[#allocation2 + $0x1d0] sm:$0xff] %vm276, 0.0
        %336 = vst.msk [vmem:[#allocation2 + $0x1d8] sm:$0xff] %vm276, 0.0
        %337 = vst.msk [vmem:[#allocation2 + $0x1e0] sm:$0xff] %vm276, 0.0
        %338 = vst.msk [vmem:[#allocation2 + $0x1e8] sm:$0xff] %vm276, 0.0
        %339 = vst.msk [vmem:[#allocation2 + $0x1f0] sm:$0xff] %vm276, 0.0
        %340 = vst.msk [vmem:[#allocation2 + $0x1f8] sm:$0xff] %vm276, 0.0
        %341 = vst.msk [vmem:[#allocation2 + $0x200] sm:$0xff] %vm276, 0.0
        %342 = vst.msk [vmem:[#allocation2 + $0x208] sm:$0xff] %vm276, 0.0
        %343 = vst.msk [vmem:[#allocation2 + $0x210] sm:$0xff] %vm276, 0.0
        %344 = vst.msk [vmem:[#allocation2 + $0x218] sm:$0xff] %vm276, 0.0
        %345 = vst.msk [vmem:[#allocation2 + $0x220] sm:$0xff] %vm276, 0.0
        %346 = vst.msk [vmem:[#allocation2 + $0x228] sm:$0xff] %vm276, 0.0
        %347 = vst.msk [vmem:[#allocation2 + $0x230] sm:$0xff] %vm276, 0.0
        %348 = vst.msk [vmem:[#allocation2 + $0x238] sm:$0xff] %vm276, 0.0
        %349 = vst.msk [vmem:[#allocation2 + $0x240] sm:$0xff] %vm276, 0.0
        %350 = vst.msk [vmem:[#allocation2 + $0x248] sm:$0xff] %vm276, 0.0
        %351 = vst.msk [vmem:[#allocation2 + $0x250] sm:$0xff] %vm276, 0.0
        %352 = vst.msk [vmem:[#allocation2 + $0x258] sm:$0xff] %vm276, 0.0
        %353 = vst.msk [vmem:[#allocation2 + $0x260] sm:$0xff] %vm276, 0.0
        %354 = vst.msk [vmem:[#allocation2 + $0x268] sm:$0xff] %vm276, 0.0
        %355 = vst.msk [vmem:[#allocation2 + $0x270] sm:$0xff] %vm276, 0.0
        %356 = vst.msk [vmem:[#allocation2 + $0x278] sm:$0xff] %vm276, 0.0
        %357 = vst.msk [vmem:[#allocation2 + $0x280] sm:$0xff] %vm276, 0.0
        %358 = vst.msk [vmem:[#allocation2 + $0x288] sm:$0xff] %vm276, 0.0
        %359 = vst.msk [vmem:[#allocation2 + $0x290] sm:$0xff] %vm276, 0.0
        %360 = vst.msk [vmem:[#allocation2 + $0x298] sm:$0xff] %vm276, 0.0
        %361 = vst.msk [vmem:[#allocation2 + $0x2a0] sm:$0xff] %vm276, 0.0
        %362 = vst.msk [vmem:[#allocation2 + $0x2a8] sm:$0xff] %vm276, 0.0
        %363 = vst.msk [vmem:[#allocation2 + $0x2b0] sm:$0xff] %vm276, 0.0
        %364 = vst.msk [vmem:[#allocation2 + $0x2b8] sm:$0xff] %vm276, 0.0
        %365 = vst.msk [vmem:[#allocation2 + $0x2c0] sm:$0xff] %vm276, 0.0
        %366 = vst.msk [vmem:[#allocation2 + $0x2c8] sm:$0xff] %vm276, 0.0
        %367 = vst.msk [vmem:[#allocation2 + $0x2d0] sm:$0xff] %vm276, 0.0
        %368 = vst.msk [vmem:[#allocation2 + $0x2d8] sm:$0xff] %vm276, 0.0
        %369 = vst.msk [vmem:[#allocation2 + $0x2e0] sm:$0xff] %vm276, 0.0
        %370 = vst.msk [vmem:[#allocation2 + $0x2e8] sm:$0xff] %vm276, 0.0
        %371 = vst.msk [vmem:[#allocation2 + $0x2f0] sm:$0xff] %vm276, 0.0
        %372 = vst.msk [vmem:[#allocation2 + $0x2f8] sm:$0xff] %vm276, 0.0
        %373 = vst.msk [vmem:[#allocation2 + $0x300] sm:$0xff] %vm276, 0.0
        %374 = vst.msk [vmem:[#allocation2 + $0x308] sm:$0xff] %vm276, 0.0
        %375 = vst.msk [vmem:[#allocation2 + $0x310] sm:$0xff] %vm276, 0.0
        %376 = vst.msk [vmem:[#allocation2 + $0x318] sm:$0xff] %vm276, 0.0
        %377 = vst.msk [vmem:[#allocation2 + $0x320] sm:$0xff] %vm276, 0.0
        %378 = vst.msk [vmem:[#allocation2 + $0x328] sm:$0xff] %vm276, 0.0
        %379 = vst.msk [vmem:[#allocation2 + $0x330] sm:$0xff] %vm276, 0.0
        %380 = vst.msk [vmem:[#allocation2 + $0x338] sm:$0xff] %vm276, 0.0
        %381 = vst.msk [vmem:[#allocation2 + $0x340] sm:$0xff] %vm276, 0.0
        %382 = vst.msk [vmem:[#allocation2 + $0x348] sm:$0xff] %vm276, 0.0
        %383 = vst.msk [vmem:[#allocation2 + $0x350] sm:$0xff] %vm276, 0.0
        %384 = vst.msk [vmem:[#allocation2 + $0x358] sm:$0xff] %vm276, 0.0
        %385 = vst.msk [vmem:[#allocation2 + $0x360] sm:$0xff] %vm276, 0.0
        %386 = vst.msk [vmem:[#allocation2 + $0x368] sm:$0xff] %vm276, 0.0
        %387 = vst.msk [vmem:[#allocation2 + $0x370] sm:$0xff] %vm276, 0.0
        %388 = vst.msk [vmem:[#allocation2 + $0x378] sm:$0xff] %vm276, 0.0
        %389 = vst.msk [vmem:[#allocation2 + $0x380] sm:$0xff] %vm276, 0.0
        %390 = vst.msk [vmem:[#allocation2 + $0x388] sm:$0xff] %vm276, 0.0
        %391 = vst.msk [vmem:[#allocation2 + $0x390] sm:$0xff] %vm276, 0.0
        %392 = vst.msk [vmem:[#allocation2 + $0x398] sm:$0xff] %vm276, 0.0
        %393 = vst.msk [vmem:[#allocation2 + $0x3a0] sm:$0xff] %vm276, 0.0
        %394 = vst.msk [vmem:[#allocation2 + $0x3a8] sm:$0xff] %vm276, 0.0
        %395 = vst.msk [vmem:[#allocation2 + $0x3b0] sm:$0xff] %vm276, 0.0
        %396 = vst.msk [vmem:[#allocation2 + $0x3b8] sm:$0xff] %vm276, 0.0
        %397 = vst.msk [vmem:[#allocation2 + $0x3c0] sm:$0xff] %vm276, 0.0
        %398 = vst.msk [vmem:[#allocation2 + $0x3c8] sm:$0xff] %vm276, 0.0
        %399 = vst.msk [vmem:[#allocation2 + $0x3d0] sm:$0xff] %vm276, 0.0
        %400 = vst.msk [vmem:[#allocation2 + $0x3d8] sm:$0xff] %vm276, 0.0
        %401 = vst.msk [vmem:[#allocation2 + $0x3e0] sm:$0xff] %vm276, 0.0
        %402 = vst.msk [vmem:[#allocation2 + $0x3e8] sm:$0xff] %vm276, 0.0
        %403 = vst.msk [vmem:[#allocation2 + $0x3f0] sm:$0xff] %vm276, 0.0
        %404 = vst.msk [vmem:[#allocation2 + $0x3f8] sm:$0xff] %vm276, 0.0
        %405 = vst.msk [vmem:[#allocation2 + $0x400] sm:$0xff] %vm276, 0.0
        %406 = vst.msk [vmem:[#allocation2 + $0x408] sm:$0xff] %vm276, 0.0
        %407 = vst.msk [vmem:[#allocation2 + $0x410] sm:$0xff] %vm276, 0.0
        %408 = vst.msk [vmem:[#allocation2 + $0x418] sm:$0xff] %vm276, 0.0
        %409 = vst.msk [vmem:[#allocation2 + $0x420] sm:$0xff] %vm276, 0.0
        %410 = vst.msk [vmem:[#allocation2 + $0x428] sm:$0xff] %vm276, 0.0
        %411 = vst.msk [vmem:[#allocation2 + $0x430] sm:$0xff] %vm276, 0.0
        %412 = vst.msk [vmem:[#allocation2 + $0x438] sm:$0xff] %vm276, 0.0
        %413 = vst.msk [vmem:[#allocation2 + $0x440] sm:$0xff] %vm276, 0.0
        %414 = vst.msk [vmem:[#allocation2 + $0x448] sm:$0xff] %vm276, 0.0
        %415 = vst.msk [vmem:[#allocation2 + $0x450] sm:$0xff] %vm276, 0.0
        %416 = vst.msk [vmem:[#allocation2 + $0x458] sm:$0xff] %vm276, 0.0
        %417 = vst.msk [vmem:[#allocation2 + $0x460] sm:$0xff] %vm276, 0.0
        %418 = vst.msk [vmem:[#allocation2 + $0x468] sm:$0xff] %vm276, 0.0
        %419 = vst.msk [vmem:[#allocation2 + $0x470] sm:$0xff] %vm276, 0.0
        %420 = vst.msk [vmem:[#allocation2 + $0x478] sm:$0xff] %vm276, 0.0
        %421 = vst.msk [vmem:[#allocation2 + $0x480] sm:$0xff] %vm276, 0.0
        %422 = vst.msk [vmem:[#allocation2 + $0x488] sm:$0xff] %vm276, 0.0
        %423 = vst.msk [vmem:[#allocation2 + $0x490] sm:$0xff] %vm276, 0.0
        %424 = vst.msk [vmem:[#allocation2 + $0x498] sm:$0xff] %vm276, 0.0
        %425 = vst.msk [vmem:[#allocation2 + $0x4a0] sm:$0xff] %vm276, 0.0
        %426 = vst.msk [vmem:[#allocation2 + $0x4a8] sm:$0xff] %vm276, 0.0
        %427 = vst.msk [vmem:[#allocation2 + $0x4b0] sm:$0xff] %vm276, 0.0
        %428 = vst.msk [vmem:[#allocation2 + $0x4b8] sm:$0xff] %vm276, 0.0
        %429 = vst.msk [vmem:[#allocation2 + $0x4c0] sm:$0xff] %vm276, 0.0
        %430 = vst.msk [vmem:[#allocation2 + $0x4c8] sm:$0xff] %vm276, 0.0
        %431 = vst.msk [vmem:[#allocation2 + $0x4d0] sm:$0xff] %vm276, 0.0
        %432 = vst.msk [vmem:[#allocation2 + $0x4d8] sm:$0xff] %vm276, 0.0
        %433 = vst.msk [vmem:[#allocation2 + $0x4e0] sm:$0xff] %vm276, 0.0
        %434 = vst.msk [vmem:[#allocation2 + $0x4e8] sm:$0xff] %vm276, 0.0
        %435 = vst.msk [vmem:[#allocation2 + $0x4f0] sm:$0xff] %vm276, 0.0
        %436 = vst.msk [vmem:[#allocation2 + $0x4f8] sm:$0xff] %vm276, 0.0
        %437 = vst.msk [vmem:[#allocation2 + $0x500] sm:$0xff] %vm276, 0.0
        %438 = vst.msk [vmem:[#allocation2 + $0x508] sm:$0xff] %vm276, 0.0
        %439 = vst.msk [vmem:[#allocation2 + $0x510] sm:$0xff] %vm276, 0.0
        %440 = vst.msk [vmem:[#allocation2 + $0x518] sm:$0xff] %vm276, 0.0
        %441 = vst.msk [vmem:[#allocation2 + $0x520] sm:$0xff] %vm276, 0.0
        %442 = vst.msk [vmem:[#allocation2 + $0x528] sm:$0xff] %vm276, 0.0
        %443 = vst.msk [vmem:[#allocation2 + $0x530] sm:$0xff] %vm276, 0.0
        %444 = vst.msk [vmem:[#allocation2 + $0x538] sm:$0xff] %vm276, 0.0
        %445 = vst.msk [vmem:[#allocation2 + $0x540] sm:$0xff] %vm276, 0.0
        %446 = vst.msk [vmem:[#allocation2 + $0x548] sm:$0xff] %vm276, 0.0
        %447 = vst.msk [vmem:[#allocation2 + $0x550] sm:$0xff] %vm276, 0.0
        %448 = vst.msk [vmem:[#allocation2 + $0x558] sm:$0xff] %vm276, 0.0
        %449 = vst.msk [vmem:[#allocation2 + $0x560] sm:$0xff] %vm276, 0.0
        %450 = vst.msk [vmem:[#allocation2 + $0x568] sm:$0xff] %vm276, 0.0
        %451 = vst.msk [vmem:[#allocation2 + $0x570] sm:$0xff] %vm276, 0.0
        %452 = vst.msk [vmem:[#allocation2 + $0x578] sm:$0xff] %vm276, 0.0
        %453 = vst.msk [vmem:[#allocation2 + $0x580] sm:$0xff] %vm276, 0.0
        %454 = vst.msk [vmem:[#allocation2 + $0x588] sm:$0xff] %vm276, 0.0
        %455 = vst.msk [vmem:[#allocation2 + $0x590] sm:$0xff] %vm276, 0.0
        %456 = vst.msk [vmem:[#allocation2 + $0x598] sm:$0xff] %vm276, 0.0
        %457 = vst.msk [vmem:[#allocation2 + $0x5a0] sm:$0xff] %vm276, 0.0
        %458 = vst.msk [vmem:[#allocation2 + $0x5a8] sm:$0xff] %vm276, 0.0
        %459 = vst.msk [vmem:[#allocation2 + $0x5b0] sm:$0xff] %vm276, 0.0
        %460 = vst.msk [vmem:[#allocation2 + $0x5b8] sm:$0xff] %vm276, 0.0
        %461 = vst.msk [vmem:[#allocation2 + $0x5c0] sm:$0xff] %vm276, 0.0
        %462 = vst.msk [vmem:[#allocation2 + $0x5c8] sm:$0xff] %vm276, 0.0
        %463 = vst.msk [vmem:[#allocation2 + $0x5d0] sm:$0xff] %vm276, 0.0
        %464 = vst.msk [vmem:[#allocation2 + $0x5d8] sm:$0xff] %vm276, 0.0
        %465 = vst.msk [vmem:[#allocation2 + $0x5e0] sm:$0xff] %vm276, 0.0
        %466 = vst.msk [vmem:[#allocation2 + $0x5e8] sm:$0xff] %vm276, 0.0
        %467 = vst.msk [vmem:[#allocation2 + $0x5f0] sm:$0xff] %vm276, 0.0
        %468 = vst.msk [vmem:[#allocation2 + $0x5f8] sm:$0xff] %vm276, 0.0
        %469 = vst.msk [vmem:[#allocation2 + $0x600] sm:$0xff] %vm276, 0.0
        %470 = vst.msk [vmem:[#allocation2 + $0x608] sm:$0xff] %vm276, 0.0
        %471 = vst.msk [vmem:[#allocation2 + $0x610] sm:$0xff] %vm276, 0.0
        %472 = vst.msk [vmem:[#allocation2 + $0x618] sm:$0xff] %vm276, 0.0
        %473 = vst.msk [vmem:[#allocation2 + $0x620] sm:$0xff] %vm276, 0.0
        %474 = vst.msk [vmem:[#allocation2 + $0x628] sm:$0xff] %vm276, 0.0
        %475 = vst.msk [vmem:[#allocation2 + $0x630] sm:$0xff] %vm276, 0.0
        %476 = vst.msk [vmem:[#allocation2 + $0x638] sm:$0xff] %vm276, 0.0
        %477 = vst.msk [vmem:[#allocation2 + $0x640] sm:$0xff] %vm276, 0.0
        %478 = vst.msk [vmem:[#allocation2 + $0x648] sm:$0xff] %vm276, 0.0
        %479 = vst.msk [vmem:[#allocation2 + $0x650] sm:$0xff] %vm276, 0.0
        %480 = vst.msk [vmem:[#allocation2 + $0x658] sm:$0xff] %vm276, 0.0
        %vm481 = vcmask 130048
        %482 = vst.msk [vmem:[#allocation5] sm:$0xff] %vm481, 0.0
        %483 = vst.msk [vmem:[#allocation5 + $0x8] sm:$0xff] %vm481, 0.0
        %484 = vst.msk [vmem:[#allocation5 + $0x10] sm:$0xff] %vm481, 0.0
        %485 = vst.msk [vmem:[#allocation5 + $0x18] sm:$0xff] %vm481, 0.0
        %486 = vst.msk [vmem:[#allocation5 + $0x20] sm:$0xff] %vm481, 0.0
        %487 = vst.msk [vmem:[#allocation5 + $0x28] sm:$0xff] %vm481, 0.0
        %488 = vst.msk [vmem:[#allocation5 + $0x30] sm:$0xff] %vm481, 0.0
        %489 = vst.msk [vmem:[#allocation5 + $0x38] sm:$0xff] %vm481, 0.0
        %490 = vst.msk [vmem:[#allocation5 + $0x40] sm:$0xff] %vm481, 0.0
        %491 = vst.msk [vmem:[#allocation5 + $0x48] sm:$0xff] %vm481, 0.0
        %492 = vst.msk [vmem:[#allocation5 + $0x50] sm:$0xff] %vm481, 0.0
        %493 = vst.msk [vmem:[#allocation5 + $0x58] sm:$0xff] %vm481, 0.0
        %494 = vst.msk [vmem:[#allocation5 + $0x60] sm:$0xff] %vm481, 0.0
        %495 = vst.msk [vmem:[#allocation5 + $0x68] sm:$0xff] %vm481, 0.0
        %496 = vst.msk [vmem:[#allocation5 + $0x70] sm:$0xff] %vm481, 0.0
        %497 = vst.msk [vmem:[#allocation5 + $0x78] sm:$0xff] %vm481, 0.0
        %498 = vst.msk [vmem:[#allocation5 + $0x80] sm:$0xff] %vm481, 0.0
        %499 = vst.msk [vmem:[#allocation5 + $0x88] sm:$0xff] %vm481, 0.0
        %500 = vst.msk [vmem:[#allocation5 + $0x90] sm:$0xff] %vm481, 0.0
        %501 = vst.msk [vmem:[#allocation5 + $0x98] sm:$0xff] %vm481, 0.0
        %502 = vst.msk [vmem:[#allocation5 + $0xa0] sm:$0xff] %vm481, 0.0
        %503 = vst.msk [vmem:[#allocation5 + $0xa8] sm:$0xff] %vm481, 0.0
        %504 = vst.msk [vmem:[#allocation5 + $0xb0] sm:$0xff] %vm481, 0.0
        %505 = vst.msk [vmem:[#allocation5 + $0xb8] sm:$0xff] %vm481, 0.0
        %506 = vst.msk [vmem:[#allocation5 + $0xc0] sm:$0xff] %vm481, 0.0
        %507 = vst.msk [vmem:[#allocation5 + $0xc8] sm:$0xff] %vm481, 0.0
        %508 = vst.msk [vmem:[#allocation5 + $0xd0] sm:$0xff] %vm481, 0.0
        %509 = vst.msk [vmem:[#allocation5 + $0xd8] sm:$0xff] %vm481, 0.0
        %510 = vst.msk [vmem:[#allocation5 + $0xe0] sm:$0xff] %vm481, 0.0
        %511 = vst.msk [vmem:[#allocation5 + $0xe8] sm:$0xff] %vm481, 0.0
        %512 = vst.msk [vmem:[#allocation5 + $0xf0] sm:$0xff] %vm481, 0.0
        %513 = vst.msk [vmem:[#allocation5 + $0xf8] sm:$0xff] %vm481, 0.0
        %514 = vst.msk [vmem:[#allocation5 + $0x100] sm:$0xff] %vm481, 0.0
        %515 = vst.msk [vmem:[#allocation5 + $0x108] sm:$0xff] %vm481, 0.0
        %516 = vst.msk [vmem:[#allocation5 + $0x110] sm:$0xff] %vm481, 0.0
        %517 = vst.msk [vmem:[#allocation5 + $0x118] sm:$0xff] %vm481, 0.0
        %518 = vst.msk [vmem:[#allocation5 + $0x120] sm:$0xff] %vm481, 0.0
        %519 = vst.msk [vmem:[#allocation5 + $0x128] sm:$0xff] %vm481, 0.0
        %520 = vst.msk [vmem:[#allocation5 + $0x130] sm:$0xff] %vm481, 0.0
        %521 = vst.msk [vmem:[#allocation5 + $0x138] sm:$0xff] %vm481, 0.0
        %522 = vst.msk [vmem:[#allocation5 + $0x140] sm:$0xff] %vm481, 0.0
        %523 = vst.msk [vmem:[#allocation5 + $0x148] sm:$0xff] %vm481, 0.0
        %524 = vst.msk [vmem:[#allocation5 + $0x150] sm:$0xff] %vm481, 0.0
        %525 = vst.msk [vmem:[#allocation5 + $0x158] sm:$0xff] %vm481, 0.0
        %526 = vst.msk [vmem:[#allocation5 + $0x160] sm:$0xff] %vm481, 0.0
        %527 = vst.msk [vmem:[#allocation5 + $0x168] sm:$0xff] %vm481, 0.0
        %528 = vst.msk [vmem:[#allocation5 + $0x170] sm:$0xff] %vm481, 0.0
        %529 = vst.msk [vmem:[#allocation5 + $0x178] sm:$0xff] %vm481, 0.0
        %530 = vst.msk [vmem:[#allocation5 + $0x180] sm:$0xff] %vm481, 0.0
        %531 = vst.msk [vmem:[#allocation5 + $0x188] sm:$0xff] %vm481, 0.0
        %532 = vst.msk [vmem:[#allocation5 + $0x190] sm:$0xff] %vm481, 0.0
        %533 = vst.msk [vmem:[#allocation5 + $0x198] sm:$0xff] %vm481, 0.0
        %534 = vst.msk [vmem:[#allocation5 + $0x1a0] sm:$0xff] %vm481, 0.0
        %535 = vst.msk [vmem:[#allocation5 + $0x1a8] sm:$0xff] %vm481, 0.0
        %536 = vst.msk [vmem:[#allocation5 + $0x1b0] sm:$0xff] %vm481, 0.0
        %537 = vst.msk [vmem:[#allocation5 + $0x1b8] sm:$0xff] %vm481, 0.0
        %538 = vst.msk [vmem:[#allocation5 + $0x1c0] sm:$0xff] %vm481, 0.0
        %539 = vst.msk [vmem:[#allocation5 + $0x1c8] sm:$0xff] %vm481, 0.0
        %540 = vst.msk [vmem:[#allocation5 + $0x1d0] sm:$0xff] %vm481, 0.0
        %541 = vst.msk [vmem:[#allocation5 + $0x1d8] sm:$0xff] %vm481, 0.0
        %542 = vst.msk [vmem:[#allocation5 + $0x1e0] sm:$0xff] %vm481, 0.0
        %543 = vst.msk [vmem:[#allocation5 + $0x1e8] sm:$0xff] %vm481, 0.0
        %544 = vst.msk [vmem:[#allocation5 + $0x1f0] sm:$0xff] %vm481, 0.0
        %545 = vst.msk [vmem:[#allocation5 + $0x1f8] sm:$0xff] %vm481, 0.0
        %546 = vst.msk [vmem:[#allocation5 + $0x200] sm:$0xff] %vm481, 0.0
        %547 = vst.msk [vmem:[#allocation5 + $0x208] sm:$0xff] %vm481, 0.0
        %548 = vst.msk [vmem:[#allocation5 + $0x210] sm:$0xff] %vm481, 0.0
        %549 = vst.msk [vmem:[#allocation5 + $0x218] sm:$0xff] %vm481, 0.0
        %550 = vst.msk [vmem:[#allocation5 + $0x220] sm:$0xff] %vm481, 0.0
        %551 = vst.msk [vmem:[#allocation5 + $0x228] sm:$0xff] %vm481, 0.0
        %552 = vst.msk [vmem:[#allocation5 + $0x230] sm:$0xff] %vm481, 0.0
        %553 = vst.msk [vmem:[#allocation5 + $0x238] sm:$0xff] %vm481, 0.0
        %v554 = vld [vmem:[%s275] sm:$0xff]
        %v555 = vld [vmem:[%s275 + $0x8] sm:$0xff]
        %v556 = vld [vmem:[%s275 + $0x10] sm:$0xff]
        %v557 = vld [vmem:[%s275 + $0x18] sm:$0xff]
        %v558 = vld [vmem:[%s275 + $0x20] sm:$0xff]
        %v559 = vld [vmem:[%s275 + $0x28] sm:$0xff]
        %v560 = vld [vmem:[%s275 + $0x30] sm:$0xff]
        %v561 = vld [vmem:[%s275 + $0x38] sm:$0xff]
        %v562 = vld [vmem:[%s275 + $0x40] sm:$0xff]
        %v563 = vld [vmem:[%s275 + $0x48] sm:$0xff]
        %v564 = vld [vmem:[%s275 + $0x50] sm:$0xff]
        %v565 = vld [vmem:[%s275 + $0x58] sm:$0xff]
        %v566 = vld [vmem:[%s275 + $0x60] sm:$0xff]
        %v567 = vld [vmem:[%s275 + $0x68] sm:$0xff]
        %v568 = vld [vmem:[%s275 + $0x70] sm:$0xff]
        %v569 = vld [vmem:[%s275 + $0x78] sm:$0xff]
        %v570 = vld [vmem:[%s275 + $0x80] sm:$0xff]
        %v571 = vld [vmem:[%s275 + $0x88] sm:$0xff]
        %v572 = vld [vmem:[%s275 + $0x90] sm:$0xff]
        %v573 = vld [vmem:[%s275 + $0x98] sm:$0xff]
        %v574 = vld [vmem:[%s275 + $0xa0] sm:$0xff]
        %v575 = vld [vmem:[%s275 + $0xa8] sm:$0xff]
        %v576 = vld [vmem:[%s275 + $0xb0] sm:$0xff]
        %v577 = vld [vmem:[%s275 + $0xb8] sm:$0xff]
        %v578 = vld [vmem:[%s275 + $0xc0] sm:$0xff]
        %v579 = vld [vmem:[%s275 + $0xc8] sm:$0xff]
        %v580 = vld [vmem:[%s275 + $0xd0] sm:$0xff]
        %v581 = vld [vmem:[%s275 + $0xd8] sm:$0xff]
        %v582 = vld [vmem:[%s275 + $0xe0] sm:$0xff]
        %v583 = vld [vmem:[%s275 + $0xe8] sm:$0xff]
        %v584 = vld [vmem:[%s275 + $0xf0] sm:$0xff]
        %v585 = vld [vmem:[%s275 + $0xf8] sm:$0xff]
        %v586 = vld [vmem:[%s275 + $0x100] sm:$0xff]
        %v587 = vld [vmem:[%s275 + $0x108] sm:$0xff]
        %v588 = vld [vmem:[%s275 + $0x110] sm:$0xff]
        %v589 = vld [vmem:[%s275 + $0x118] sm:$0xff]
        %v590 = vld [vmem:[%s275 + $0x120] sm:$0xff]
        %v591 = vld [vmem:[%s275 + $0x128] sm:$0xff]
        %v592 = vld [vmem:[%s275 + $0x130] sm:$0xff]
        %v593 = vld [vmem:[%s275 + $0x138] sm:$0xff]
        %v594 = vld [vmem:[%s275 + $0x140] sm:$0xff]
        %v595 = vld [vmem:[%s275 + $0x148] sm:$0xff]
        %v596 = vld [vmem:[%s275 + $0x150] sm:$0xff]
        %v597 = vld [vmem:[%s275 + $0x158] sm:$0xff]
        %v598 = vld [vmem:[%s275 + $0x160] sm:$0xff]
        %v599 = vld [vmem:[%s275 + $0x168] sm:$0xff]
        %v600 = vld [vmem:[%s275 + $0x170] sm:$0xff]
        %v601 = vld [vmem:[%s275 + $0x178] sm:$0xff]
        %v602 = vld [vmem:[%s275 + $0x180] sm:$0xff]
        %v603 = vld [vmem:[%s275 + $0x188] sm:$0xff]
        %v604 = vld [vmem:[%s275 + $0x190] sm:$0xff]
        %v605 = vld [vmem:[%s275 + $0x198] sm:$0xff]
        %v606 = vld [vmem:[%s275 + $0x1a0] sm:$0xff]
        %v607 = vld [vmem:[%s275 + $0x1a8] sm:$0xff]
        %v608 = vld [vmem:[%s275 + $0x1b0] sm:$0xff]
        %v609 = vld [vmem:[%s275 + $0x1b8] sm:$0xff]
        %v610 = vld [vmem:[%s275 + $0x1c0] sm:$0xff]
        %v611 = vld [vmem:[%s275 + $0x1c8] sm:$0xff]
        %v612 = vld [vmem:[%s275 + $0x1d0] sm:$0xff]
        %v613 = vld [vmem:[%s275 + $0x1d8] sm:$0xff]
        %v614 = vld [vmem:[%s275 + $0x1e0] sm:$0xff]
        %v615 = vld [vmem:[%s275 + $0x1e8] sm:$0xff]
        %v616 = vld [vmem:[%s275 + $0x1f0] sm:$0xff]
        %v617 = vld [vmem:[%s275 + $0x1f8] sm:$0xff]
        %v618 = vld [vmem:[%s275 + $0x200] sm:$0xff]
        %v619 = vld [vmem:[%s275 + $0x208] sm:$0xff]
        %v620 = vld [vmem:[%s275 + $0x210] sm:$0xff]
        %v621 = vld [vmem:[%s275 + $0x218] sm:$0xff]
        %v622 = vld [vmem:[%s275 + $0x220] sm:$0xff]
        %v623 = vld [vmem:[%s275 + $0x228] sm:$0xff]
        %v624 = vld [vmem:[%s275 + $0x230] sm:$0xff]
        %v625 = vld [vmem:[%s275 + $0x238] sm:$0xff]
        %v626 = vld [vmem:[%s275 + $0x240] sm:$0xff]
        %v627 = vld [vmem:[%s275 + $0x248] sm:$0xff]
        %v628 = vld [vmem:[%s275 + $0x250] sm:$0xff]
        %v629 = vld [vmem:[%s275 + $0x258] sm:$0xff]
        %v630 = vld [vmem:[%s275 + $0x260] sm:$0xff]
        %v631 = vld [vmem:[%s275 + $0x268] sm:$0xff]
        %v632 = vld [vmem:[%s275 + $0x270] sm:$0xff]
        %v633 = vld [vmem:[%s275 + $0x278] sm:$0xff]
        %v634 = vld [vmem:[%s275 + $0x280] sm:$0xff]
        %v635 = vld [vmem:[%s275 + $0x288] sm:$0xff]
        %v636 = vld [vmem:[%s275 + $0x290] sm:$0xff]
        %v637 = vld [vmem:[%s275 + $0x298] sm:$0xff]
        %v638 = vld [vmem:[%s275 + $0x2a0] sm:$0xff]
        %v639 = vld [vmem:[%s275 + $0x2a8] sm:$0xff]
        %v640 = vld [vmem:[%s275 + $0x2b0] sm:$0xff]
        %v641 = vld [vmem:[%s275 + $0x2b8] sm:$0xff]
        %v642 = vld [vmem:[%s275 + $0x2c0] sm:$0xff]
        %v643 = vld [vmem:[%s275 + $0x2c8] sm:$0xff]
        %v644 = vld [vmem:[%s275 + $0x2d0] sm:$0xff]
        %v645 = vld [vmem:[%s275 + $0x2d8] sm:$0xff]
        %v646 = vld [vmem:[%s275 + $0x2e0] sm:$0xff]
        %v647 = vld [vmem:[%s275 + $0x2e8] sm:$0xff]
        %v648 = vld [vmem:[%s275 + $0x2f0] sm:$0xff]
        %v649 = vld [vmem:[%s275 + $0x2f8] sm:$0xff]
        %v650 = vld [vmem:[%s275 + $0x300] sm:$0xff]
        %v651 = vld [vmem:[%s275 + $0x308] sm:$0xff]
        %v652 = vld [vmem:[%s275 + $0x310] sm:$0xff]
        %v653 = vld [vmem:[%s275 + $0x318] sm:$0xff]
        %v654 = vld [vmem:[%s275 + $0x320] sm:$0xff]
        %v655 = vld [vmem:[%s275 + $0x328] sm:$0xff]
        %v656 = vld [vmem:[%s275 + $0x330] sm:$0xff]
        %v657 = vld [vmem:[%s275 + $0x338] sm:$0xff]
        %v658 = vld [vmem:[%s275 + $0x340] sm:$0xff]
        %v659 = vld [vmem:[%s275 + $0x348] sm:$0xff]
        %v660 = vld [vmem:[%s275 + $0x350] sm:$0xff]
        %v661 = vld [vmem:[%s275 + $0x358] sm:$0xff]
        %v662 = vld [vmem:[%s275 + $0x360] sm:$0xff]
        %v663 = vld [vmem:[%s275 + $0x368] sm:$0xff]
        %v664 = vld [vmem:[%s275 + $0x370] sm:$0xff]
        %v665 = vld [vmem:[%s275 + $0x378] sm:$0xff]
        %v666 = vld [vmem:[%s275 + $0x380] sm:$0xff]
        %v667 = vld [vmem:[%s275 + $0x388] sm:$0xff]
        %v668 = vld [vmem:[%s275 + $0x390] sm:$0xff]
        %v669 = vld [vmem:[%s275 + $0x398] sm:$0xff]
        %v670 = vld [vmem:[%s275 + $0x3a0] sm:$0xff]
        %v671 = vld [vmem:[%s275 + $0x3a8] sm:$0xff]
        %v672 = vld [vmem:[%s275 + $0x3b0] sm:$0xff]
        %v673 = vld [vmem:[%s275 + $0x3b8] sm:$0xff]
        %v674 = vld [vmem:[%s275 + $0x3c0] sm:$0xff]
        %v675 = vld [vmem:[%s275 + $0x3c8] sm:$0xff]
        %v676 = vld [vmem:[%s275 + $0x3d0] sm:$0xff]
        %v677 = vld [vmem:[%s275 + $0x3d8] sm:$0xff]
        %v678 = vld [vmem:[%s275 + $0x3e0] sm:$0xff]
        %v679 = vld [vmem:[%s275 + $0x3e8] sm:$0xff]
        %v680 = vld [vmem:[%s275 + $0x3f0] sm:$0xff]
        %v681 = vld [vmem:[%s275 + $0x3f8] sm:$0xff]
        %s682 = scalar_lea.vmem [#allocation2], 48
        %683 = vst.msk [vmem:[%s682 + $0x8] sm:$0xff] %vm276, %v554
        %684 = vst.msk [vmem:[%s682 + $0x10] sm:$0xff] %vm276, %v555
        %685 = vst.msk [vmem:[%s682 + $0x18] sm:$0xff] %vm276, %v556
        %686 = vst.msk [vmem:[%s682 + $0x20] sm:$0xff] %vm276, %v557
        %687 = vst.msk [vmem:[%s682 + $0x38] sm:$0xff] %vm276, %v558
        %688 = vst.msk [vmem:[%s682 + $0x40] sm:$0xff] %vm276, %v559
        %689 = vst.msk [vmem:[%s682 + $0x48] sm:$0xff] %vm276, %v560
        %690 = vst.msk [vmem:[%s682 + $0x50] sm:$0xff] %vm276, %v561
        %691 = vst.msk [vmem:[%s682 + $0x68] sm:$0xff] %vm276, %v562
        %692 = vst.msk [vmem:[%s682 + $0x70] sm:$0xff] %vm276, %v563
        %693 = vst.msk [vmem:[%s682 + $0x78] sm:$0xff] %vm276, %v564
        %694 = vst.msk [vmem:[%s682 + $0x80] sm:$0xff] %vm276, %v565
        %695 = vst.msk [vmem:[%s682 + $0x98] sm:$0xff] %vm276, %v566
        %696 = vst.msk [vmem:[%s682 + $0xa0] sm:$0xff] %vm276, %v567
        %697 = vst.msk [vmem:[%s682 + $0xa8] sm:$0xff] %vm276, %v568
        %698 = vst.msk [vmem:[%s682 + $0xb0] sm:$0xff] %vm276, %v569
        %699 = vst.msk [vmem:[%s682 + $0xc8] sm:$0xff] %vm276, %v570
        %700 = vst.msk [vmem:[%s682 + $0xd0] sm:$0xff] %vm276, %v571
        %701 = vst.msk [vmem:[%s682 + $0xd8] sm:$0xff] %vm276, %v572
        %702 = vst.msk [vmem:[%s682 + $0xe0] sm:$0xff] %vm276, %v573
        %703 = vst.msk [vmem:[%s682 + $0xf8] sm:$0xff] %vm276, %v574
        %704 = vst.msk [vmem:[%s682 + $0x100] sm:$0xff] %vm276, %v575
        %705 = vst.msk [vmem:[%s682 + $0x108] sm:$0xff] %vm276, %v576
        %706 = vst.msk [vmem:[%s682 + $0x110] sm:$0xff] %vm276, %v577
        %707 = vst.msk [vmem:[%s682 + $0x128] sm:$0xff] %vm276, %v578
        %708 = vst.msk [vmem:[%s682 + $0x130] sm:$0xff] %vm276, %v579
        %709 = vst.msk [vmem:[%s682 + $0x138] sm:$0xff] %vm276, %v580
        %710 = vst.msk [vmem:[%s682 + $0x140] sm:$0xff] %vm276, %v581
        %711 = vst.msk [vmem:[%s682 + $0x158] sm:$0xff] %vm276, %v582
        %712 = vst.msk [vmem:[%s682 + $0x160] sm:$0xff] %vm276, %v583
        %713 = vst.msk [vmem:[%s682 + $0x168] sm:$0xff] %vm276, %v584
        %714 = vst.msk [vmem:[%s682 + $0x170] sm:$0xff] %vm276, %v585
        %715 = vst.msk [vmem:[%s682 + $0x188] sm:$0xff] %vm276, %v586
        %716 = vst.msk [vmem:[%s682 + $0x190] sm:$0xff] %vm276, %v587
        %717 = vst.msk [vmem:[%s682 + $0x198] sm:$0xff] %vm276, %v588
        %718 = vst.msk [vmem:[%s682 + $0x1a0] sm:$0xff] %vm276, %v589
        %719 = vst.msk [vmem:[%s682 + $0x1b8] sm:$0xff] %vm276, %v590
        %720 = vst.msk [vmem:[%s682 + $0x1c0] sm:$0xff] %vm276, %v591
        %721 = vst.msk [vmem:[%s682 + $0x1c8] sm:$0xff] %vm276, %v592
        %722 = vst.msk [vmem:[%s682 + $0x1d0] sm:$0xff] %vm276, %v593
        %723 = vst.msk [vmem:[%s682 + $0x1e8] sm:$0xff] %vm276, %v594
        %724 = vst.msk [vmem:[%s682 + $0x1f0] sm:$0xff] %vm276, %v595
        %725 = vst.msk [vmem:[%s682 + $0x1f8] sm:$0xff] %vm276, %v596
        %726 = vst.msk [vmem:[%s682 + $0x200] sm:$0xff] %vm276, %v597
        %727 = vst.msk [vmem:[%s682 + $0x218] sm:$0xff] %vm276, %v598
        %728 = vst.msk [vmem:[%s682 + $0x220] sm:$0xff] %vm276, %v599
        %729 = vst.msk [vmem:[%s682 + $0x228] sm:$0xff] %vm276, %v600
        %730 = vst.msk [vmem:[%s682 + $0x230] sm:$0xff] %vm276, %v601
        %731 = vst.msk [vmem:[%s682 + $0x248] sm:$0xff] %vm276, %v602
        %732 = vst.msk [vmem:[%s682 + $0x250] sm:$0xff] %vm276, %v603
        %733 = vst.msk [vmem:[%s682 + $0x258] sm:$0xff] %vm276, %v604
        %734 = vst.msk [vmem:[%s682 + $0x260] sm:$0xff] %vm276, %v605
        %735 = vst.msk [vmem:[%s682 + $0x278] sm:$0xff] %vm276, %v606
        %736 = vst.msk [vmem:[%s682 + $0x280] sm:$0xff] %vm276, %v607
        %737 = vst.msk [vmem:[%s682 + $0x288] sm:$0xff] %vm276, %v608
        %738 = vst.msk [vmem:[%s682 + $0x290] sm:$0xff] %vm276, %v609
        %739 = vst.msk [vmem:[%s682 + $0x2a8] sm:$0xff] %vm276, %v610
        %740 = vst.msk [vmem:[%s682 + $0x2b0] sm:$0xff] %vm276, %v611
        %741 = vst.msk [vmem:[%s682 + $0x2b8] sm:$0xff] %vm276, %v612
        %742 = vst.msk [vmem:[%s682 + $0x2c0] sm:$0xff] %vm276, %v613
        %743 = vst.msk [vmem:[%s682 + $0x2d8] sm:$0xff] %vm276, %v614
        %744 = vst.msk [vmem:[%s682 + $0x2e0] sm:$0xff] %vm276, %v615
        %745 = vst.msk [vmem:[%s682 + $0x2e8] sm:$0xff] %vm276, %v616
        %746 = vst.msk [vmem:[%s682 + $0x2f0] sm:$0xff] %vm276, %v617
        %747 = vst.msk [vmem:[%s682 + $0x308] sm:$0xff] %vm276, %v618
        %748 = vst.msk [vmem:[%s682 + $0x310] sm:$0xff] %vm276, %v619
        %749 = vst.msk [vmem:[%s682 + $0x318] sm:$0xff] %vm276, %v620
        %750 = vst.msk [vmem:[%s682 + $0x320] sm:$0xff] %vm276, %v621
        %751 = vst.msk [vmem:[%s682 + $0x338] sm:$0xff] %vm276, %v622
        %752 = vst.msk [vmem:[%s682 + $0x340] sm:$0xff] %vm276, %v623
        %753 = vst.msk [vmem:[%s682 + $0x348] sm:$0xff] %vm276, %v624
        %754 = vst.msk [vmem:[%s682 + $0x350] sm:$0xff] %vm276, %v625
        %755 = vst.msk [vmem:[%s682 + $0x368] sm:$0xff] %vm276, %v626
        %756 = vst.msk [vmem:[%s682 + $0x370] sm:$0xff] %vm276, %v627
        %757 = vst.msk [vmem:[%s682 + $0x378] sm:$0xff] %vm276, %v628
        %758 = vst.msk [vmem:[%s682 + $0x380] sm:$0xff] %vm276, %v629
        %759 = vst.msk [vmem:[%s682 + $0x398] sm:$0xff] %vm276, %v630
        %760 = vst.msk [vmem:[%s682 + $0x3a0] sm:$0xff] %vm276, %v631
        %761 = vst.msk [vmem:[%s682 + $0x3a8] sm:$0xff] %vm276, %v632
        %762 = vst.msk [vmem:[%s682 + $0x3b0] sm:$0xff] %vm276, %v633
        %763 = vst.msk [vmem:[%s682 + $0x3c8] sm:$0xff] %vm276, %v634
        %764 = vst.msk [vmem:[%s682 + $0x3d0] sm:$0xff] %vm276, %v635
        %765 = vst.msk [vmem:[%s682 + $0x3d8] sm:$0xff] %vm276, %v636
        %766 = vst.msk [vmem:[%s682 + $0x3e0] sm:$0xff] %vm276, %v637
        %767 = vst.msk [vmem:[%s682 + $0x3f8] sm:$0xff] %vm276, %v638
        %768 = vst.msk [vmem:[%s682 + $0x400] sm:$0xff] %vm276, %v639
        %769 = vst.msk [vmem:[%s682 + $0x408] sm:$0xff] %vm276, %v640
        %770 = vst.msk [vmem:[%s682 + $0x410] sm:$0xff] %vm276, %v641
        %771 = vst.msk [vmem:[%s682 + $0x428] sm:$0xff] %vm276, %v642
        %772 = vst.msk [vmem:[%s682 + $0x430] sm:$0xff] %vm276, %v643
        %773 = vst.msk [vmem:[%s682 + $0x438] sm:$0xff] %vm276, %v644
        %774 = vst.msk [vmem:[%s682 + $0x440] sm:$0xff] %vm276, %v645
        %775 = vst.msk [vmem:[%s682 + $0x458] sm:$0xff] %vm276, %v646
        %776 = vst.msk [vmem:[%s682 + $0x460] sm:$0xff] %vm276, %v647
        %777 = vst.msk [vmem:[%s682 + $0x468] sm:$0xff] %vm276, %v648
        %778 = vst.msk [vmem:[%s682 + $0x470] sm:$0xff] %vm276, %v649
        %779 = vst.msk [vmem:[%s682 + $0x488] sm:$0xff] %vm276, %v650
        %780 = vst.msk [vmem:[%s682 + $0x490] sm:$0xff] %vm276, %v651
        %781 = vst.msk [vmem:[%s682 + $0x498] sm:$0xff] %vm276, %v652
        %782 = vst.msk [vmem:[%s682 + $0x4a0] sm:$0xff] %vm276, %v653
        %783 = vst.msk [vmem:[%s682 + $0x4b8] sm:$0xff] %vm276, %v654
        %784 = vst.msk [vmem:[%s682 + $0x4c0] sm:$0xff] %vm276, %v655
        %785 = vst.msk [vmem:[%s682 + $0x4c8] sm:$0xff] %vm276, %v656
        %786 = vst.msk [vmem:[%s682 + $0x4d0] sm:$0xff] %vm276, %v657
        %787 = vst.msk [vmem:[%s682 + $0x4e8] sm:$0xff] %vm276, %v658
        %788 = vst.msk [vmem:[%s682 + $0x4f0] sm:$0xff] %vm276, %v659
        %789 = vst.msk [vmem:[%s682 + $0x4f8] sm:$0xff] %vm276, %v660
        %790 = vst.msk [vmem:[%s682 + $0x500] sm:$0xff] %vm276, %v661
        %791 = vst.msk [vmem:[%s682 + $0x518] sm:$0xff] %vm276, %v662
        %792 = vst.msk [vmem:[%s682 + $0x520] sm:$0xff] %vm276, %v663
        %793 = vst.msk [vmem:[%s682 + $0x528] sm:$0xff] %vm276, %v664
        %794 = vst.msk [vmem:[%s682 + $0x530] sm:$0xff] %vm276, %v665
        %795 = vst.msk [vmem:[%s682 + $0x548] sm:$0xff] %vm276, %v666
        %796 = vst.msk [vmem:[%s682 + $0x550] sm:$0xff] %vm276, %v667
        %797 = vst.msk [vmem:[%s682 + $0x558] sm:$0xff] %vm276, %v668
        %798 = vst.msk [vmem:[%s682 + $0x560] sm:$0xff] %vm276, %v669
        %799 = vst.msk [vmem:[%s682 + $0x578] sm:$0xff] %vm276, %v670
        %800 = vst.msk [vmem:[%s682 + $0x580] sm:$0xff] %vm276, %v671
        %801 = vst.msk [vmem:[%s682 + $0x588] sm:$0xff] %vm276, %v672
        %802 = vst.msk [vmem:[%s682 + $0x590] sm:$0xff] %vm276, %v673
        %803 = vst.msk [vmem:[%s682 + $0x5a8] sm:$0xff] %vm276, %v674
        %804 = vst.msk [vmem:[%s682 + $0x5b0] sm:$0xff] %vm276, %v675
        %805 = vst.msk [vmem:[%s682 + $0x5b8] sm:$0xff] %vm276, %v676
        %806 = vst.msk [vmem:[%s682 + $0x5c0] sm:$0xff] %vm276, %v677
        %807 = vst.msk [vmem:[%s682 + $0x5d8] sm:$0xff] %vm276, %v678
        %808 = vst.msk [vmem:[%s682 + $0x5e0] sm:$0xff] %vm276, %v679
        %809 = vst.msk [vmem:[%s682 + $0x5e8] sm:$0xff] %vm276, %v680
        %810 = vst.msk [vmem:[%s682 + $0x5f0] sm:$0xff] %vm276, %v681
        %v811 = vld [vmem:[%s1] sm:$0xff]
        %v812 = vld [vmem:[%s1 + $0x8] sm:$0xff]
        %v813 = vld [vmem:[%s1 + $0x10] sm:$0xff]
        %v814 = vld [vmem:[%s1 + $0x18] sm:$0x7]
        %v815 = vld [vmem:[%s2] sm:$0x1]
        %v816 = vld [vmem:[#allocation2 + $0x7] sm:$0xff]
        %v817 = vld [vmem:[#allocation2 + $0xf] sm:$0xff]
        %v818 = vld [vmem:[#allocation2 + $0x17] sm:$0xff]
        %v819 = vld [vmem:[#allocation2 + $0x1f] sm:$0xff]
        %v820 = vld [vmem:[#allocation2 + $0x37] sm:$0xff]
        %v821 = vld [vmem:[#allocation2 + $0x3f] sm:$0xff]
        %v822 = vld [vmem:[#allocation2 + $0x47] sm:$0xff]
        %v823 = vld [vmem:[#allocation2 + $0x4f] sm:$0xff]
        %v824 = vld [vmem:[#allocation2 + $0x67] sm:$0xff]
        %v825 = vld [vmem:[#allocation2 + $0x6f] sm:$0xff]
        %v826 = vld [vmem:[#allocation2 + $0x77] sm:$0xff]
        %v827 = vld [vmem:[#allocation2 + $0x7f] sm:$0xff]
        %v828 = vld [vmem:[#allocation2 + $0x97] sm:$0xff]
        %v829 = vld [vmem:[#allocation2 + $0x9f] sm:$0xff]
        %v830 = vld [vmem:[#allocation2 + $0xa7] sm:$0xff]
        %v831 = vld [vmem:[#allocation2 + $0xaf] sm:$0xff]
        %v832 = vld [vmem:[#allocation2 + $0xc7] sm:$0xff]
        %v833 = vld [vmem:[#allocation2 + $0xcf] sm:$0xff]
        %v834 = vld [vmem:[#allocation2 + $0xd7] sm:$0xff]
        %v835 = vld [vmem:[#allocation2 + $0xdf] sm:$0xff]
        %v836 = vld [vmem:[#allocation2 + $0xf7] sm:$0xff]
        %v837 = vld [vmem:[#allocation2 + $0xff] sm:$0xff]
        %v838 = vld [vmem:[#allocation2 + $0x107] sm:$0xff]
        %v839 = vld [vmem:[#allocation2 + $0x10f] sm:$0xff]
        %v840 = vld [vmem:[#allocation2 + $0x127] sm:$0xff]
        %v841 = vld [vmem:[#allocation2 + $0x12f] sm:$0xff]
        %v842 = vld [vmem:[#allocation2 + $0x137] sm:$0xff]
        %v843 = vld [vmem:[#allocation2 + $0x13f] sm:$0xff]
        %v844 = vld [vmem:[#allocation2 + $0x157] sm:$0xff]
        %v845 = vld [vmem:[#allocation2 + $0x15f] sm:$0xff]
        %v846 = vld [vmem:[#allocation2 + $0x167] sm:$0xff]
        %v847 = vld [vmem:[#allocation2 + $0x16f] sm:$0xff]
        %v848 = vld [vmem:[#allocation2 + $0x8] sm:$0xff]
        %v849 = vld [vmem:[#allocation2 + $0x10] sm:$0xff]
        %v850 = vld [vmem:[#allocation2 + $0x18] sm:$0xff]
        %v851 = vld [vmem:[#allocation2 + $0x20] sm:$0xff]
        %v852 = vld [vmem:[#allocation2 + $0x38] sm:$0xff]
        %v853 = vld [vmem:[#allocation2 + $0x40] sm:$0xff]
        %v854 = vld [vmem:[#allocation2 + $0x48] sm:$0xff]
        %v855 = vld [vmem:[#allocation2 + $0x50] sm:$0xff]
        %v856 = vld [vmem:[#allocation2 + $0x68] sm:$0xff]
        %v857 = vld [vmem:[#allocation2 + $0x70] sm:$0xff]
        %v858 = vld [vmem:[#allocation2 + $0x78] sm:$0xff]
        %v859 = vld [vmem:[#allocation2 + $0x80] sm:$0xff]
        %v860 = vld [vmem:[#allocation2 + $0x98] sm:$0xff]
        %v861 = vld [vmem:[#allocation2 + $0xa0] sm:$0xff]
        %v862 = vld [vmem:[#allocation2 + $0xa8] sm:$0xff]
        %v863 = vld [vmem:[#allocation2 + $0xb0] sm:$0xff]
        %v864 = vld [vmem:[#allocation2 + $0xc8] sm:$0xff]
        %v865 = vld [vmem:[#allocation2 + $0xd0] sm:$0xff]
        %v866 = vld [vmem:[#allocation2 + $0xd8] sm:$0xff]
        %v867 = vld [vmem:[#allocation2 + $0xe0] sm:$0xff]
        %v868 = vld [vmem:[#allocation2 + $0xf8] sm:$0xff]
        %v869 = vld [vmem:[#allocation2 + $0x100] sm:$0xff]
        %v870 = vld [vmem:[#allocation2 + $0x108] sm:$0xff]
        %v871 = vld [vmem:[#allocation2 + $0x110] sm:$0xff]
        %v872 = vld [vmem:[#allocation2 + $0x128] sm:$0xff]
        %v873 = vld [vmem:[#allocation2 + $0x130] sm:$0xff]
        %v874 = vld [vmem:[#allocation2 + $0x138] sm:$0xff]
        %v875 = vld [vmem:[#allocation2 + $0x140] sm:$0xff]
        %v876 = vld [vmem:[#allocation2 + $0x158] sm:$0xff]
        %v877 = vld [vmem:[#allocation2 + $0x160] sm:$0xff]
        %v878 = vld [vmem:[#allocation2 + $0x168] sm:$0xff]
        %v879 = vld [vmem:[#allocation2 + $0x170] sm:$0xff]
        %v880 = vld [vmem:[#allocation2 + $0x9] sm:$0xff]
        %v881 = vld [vmem:[#allocation2 + $0x11] sm:$0xff]
        %v882 = vld [vmem:[#allocation2 + $0x19] sm:$0xff]
        %v883 = vld [vmem:[#allocation2 + $0x21] sm:$0xff]
        %v884 = vld [vmem:[#allocation2 + $0x39] sm:$0xff]
        %v885 = vld [vmem:[#allocation2 + $0x41] sm:$0xff]
        %v886 = vld [vmem:[#allocation2 + $0x49] sm:$0xff]
        %v887 = vld [vmem:[#allocation2 + $0x51] sm:$0xff]
        %v888 = vld [vmem:[#allocation2 + $0x69] sm:$0xff]
        %v889 = vld [vmem:[#allocation2 + $0x71] sm:$0xff]
        %v890 = vld [vmem:[#allocation2 + $0x79] sm:$0xff]
        %v891 = vld [vmem:[#allocation2 + $0x81] sm:$0xff]
        %v892 = vld [vmem:[#allocation2 + $0x99] sm:$0xff]
        %v893 = vld [vmem:[#allocation2 + $0xa1] sm:$0xff]
        %v894 = vld [vmem:[#allocation2 + $0xa9] sm:$0xff]
        %v895 = vld [vmem:[#allocation2 + $0xb1] sm:$0xff]
        %v896 = vld [vmem:[#allocation2 + $0xc9] sm:$0xff]
        %v897 = vld [vmem:[#allocation2 + $0xd1] sm:$0xff]
        %v898 = vld [vmem:[#allocation2 + $0xd9] sm:$0xff]
        %v899 = vld [vmem:[#allocation2 + $0xe1] sm:$0xff]
        %v900 = vld [vmem:[#allocation2 + $0xf9] sm:$0xff]
        %v901 = vld [vmem:[#allocation2 + $0x101] sm:$0xff]
        %v902 = vld [vmem:[#allocation2 + $0x109] sm:$0xff]
        %v903 = vld [vmem:[#allocation2 + $0x111] sm:$0xff]
        %v904 = vld [vmem:[#allocation2 + $0x129] sm:$0xff]
        %v905 = vld [vmem:[#allocation2 + $0x131] sm:$0xff]
        %v906 = vld [vmem:[#allocation2 + $0x139] sm:$0xff]
        %v907 = vld [vmem:[#allocation2 + $0x141] sm:$0xff]
        %v908 = vld [vmem:[#allocation2 + $0x159] sm:$0xff]
        %v909 = vld [vmem:[#allocation2 + $0x161] sm:$0xff]
        %v910 = vld [vmem:[#allocation2 + $0x169] sm:$0xff]
        %v911 = vld [vmem:[#allocation2 + $0x171] sm:$0xff]
        %v912 = vld [vmem:[%s682 + $0x7] sm:$0xff]
        %v913 = vld [vmem:[%s682 + $0xf] sm:$0xff]
        %v914 = vld [vmem:[%s682 + $0x17] sm:$0xff]
        %v915 = vld [vmem:[%s682 + $0x1f] sm:$0xff]
        %v916 = vld [vmem:[%s682 + $0x37] sm:$0xff]
        %v917 = vld [vmem:[%s682 + $0x3f] sm:$0xff]
        %v918 = vld [vmem:[%s682 + $0x47] sm:$0xff]
        %v919 = vld [vmem:[%s682 + $0x4f] sm:$0xff]
        %v920 = vld [vmem:[%s682 + $0x67] sm:$0xff]
        %v921 = vld [vmem:[%s682 + $0x6f] sm:$0xff]
        %v922 = vld [vmem:[%s682 + $0x77] sm:$0xff]
        %v923 = vld [vmem:[%s682 + $0x7f] sm:$0xff]
        %v924 = vld [vmem:[%s682 + $0x97] sm:$0xff]
        %v925 = vld [vmem:[%s682 + $0x9f] sm:$0xff]
        %v926 = vld [vmem:[%s682 + $0xa7] sm:$0xff]
        %v927 = vld [vmem:[%s682 + $0xaf] sm:$0xff]
        %v928 = vld [vmem:[%s682 + $0xc7] sm:$0xff]
        %v929 = vld [vmem:[%s682 + $0xcf] sm:$0xff]
        %v930 = vld [vmem:[%s682 + $0xd7] sm:$0xff]
        %v931 = vld [vmem:[%s682 + $0xdf] sm:$0xff]
        %v932 = vld [vmem:[%s682 + $0xf7] sm:$0xff]
        %v933 = vld [vmem:[%s682 + $0xff] sm:$0xff]
        %v934 = vld [vmem:[%s682 + $0x107] sm:$0xff]
        %v935 = vld [vmem:[%s682 + $0x10f] sm:$0xff]
        %v936 = vld [vmem:[%s682 + $0x127] sm:$0xff]
        %v937 = vld [vmem:[%s682 + $0x12f] sm:$0xff]
        %v938 = vld [vmem:[%s682 + $0x137] sm:$0xff]
        %v939 = vld [vmem:[%s682 + $0x13f] sm:$0xff]
        %v940 = vld [vmem:[%s682 + $0x157] sm:$0xff]
        %v941 = vld [vmem:[%s682 + $0x15f] sm:$0xff]
        %v942 = vld [vmem:[%s682 + $0x167] sm:$0xff]
        %v943 = vld [vmem:[%s682 + $0x16f] sm:$0xff]
        %v944 = vld [vmem:[%s682 + $0x8] sm:$0xff]
        %v945 = vld [vmem:[%s682 + $0x10] sm:$0xff]
        %v946 = vld [vmem:[%s682 + $0x18] sm:$0xff]
        %v947 = vld [vmem:[%s682 + $0x20] sm:$0xff]
        %v948 = vld [vmem:[%s682 + $0x38] sm:$0xff]
        %v949 = vld [vmem:[%s682 + $0x40] sm:$0xff]
        %v950 = vld [vmem:[%s682 + $0x48] sm:$0xff]
        %v951 = vld [vmem:[%s682 + $0x50] sm:$0xff]
        %v952 = vld [vmem:[%s682 + $0x68] sm:$0xff]
        %v953 = vld [vmem:[%s682 + $0x70] sm:$0xff]
        %v954 = vld [vmem:[%s682 + $0x78] sm:$0xff]
        %v955 = vld [vmem:[%s682 + $0x80] sm:$0xff]
        %v956 = vld [vmem:[%s682 + $0x98] sm:$0xff]
        %v957 = vld [vmem:[%s682 + $0xa0] sm:$0xff]
        %v958 = vld [vmem:[%s682 + $0xa8] sm:$0xff]
        %v959 = vld [vmem:[%s682 + $0xb0] sm:$0xff]
        %v960 = vld [vmem:[%s682 + $0xc8] sm:$0xff]
        %v961 = vld [vmem:[%s682 + $0xd0] sm:$0xff]
        %v962 = vld [vmem:[%s682 + $0xd8] sm:$0xff]
        %v963 = vld [vmem:[%s682 + $0xe0] sm:$0xff]
        %v964 = vld [vmem:[%s682 + $0xf8] sm:$0xff]
        %v965 = vld [vmem:[%s682 + $0x100] sm:$0xff]
        %v966 = vld [vmem:[%s682 + $0x108] sm:$0xff]
        %v967 = vld [vmem:[%s682 + $0x110] sm:$0xff]
        %v968 = vld [vmem:[%s682 + $0x128] sm:$0xff]
        %v969 = vld [vmem:[%s682 + $0x130] sm:$0xff]
        %v970 = vld [vmem:[%s682 + $0x138] sm:$0xff]
        %v971 = vld [vmem:[%s682 + $0x140] sm:$0xff]
        %v972 = vld [vmem:[%s682 + $0x158] sm:$0xff]
        %v973 = vld [vmem:[%s682 + $0x160] sm:$0xff]
        %v974 = vld [vmem:[%s682 + $0x168] sm:$0xff]
        %v975 = vld [vmem:[%s682 + $0x170] sm:$0xff]
        %v976 = vld [vmem:[%s682 + $0x9] sm:$0xff]
        %v977 = vld [vmem:[%s682 + $0x11] sm:$0xff]
        %v978 = vld [vmem:[%s682 + $0x19] sm:$0xff]
        %v979 = vld [vmem:[%s682 + $0x21] sm:$0xff]
        %v980 = vld [vmem:[%s682 + $0x39] sm:$0xff]
        %v981 = vld [vmem:[%s682 + $0x41] sm:$0xff]
        %v982 = vld [vmem:[%s682 + $0x49] sm:$0xff]
        %v983 = vld [vmem:[%s682 + $0x51] sm:$0xff]
        %v984 = vld [vmem:[%s682 + $0x69] sm:$0xff]
        %v985 = vld [vmem:[%s682 + $0x71] sm:$0xff]
        %v986 = vld [vmem:[%s682 + $0x79] sm:$0xff]
        %v987 = vld [vmem:[%s682 + $0x81] sm:$0xff]
        %v988 = vld [vmem:[%s682 + $0x99] sm:$0xff]
        %v989 = vld [vmem:[%s682 + $0xa1] sm:$0xff]
        %v990 = vld [vmem:[%s682 + $0xa9] sm:$0xff]
        %v991 = vld [vmem:[%s682 + $0xb1] sm:$0xff]
        %v992 = vld [vmem:[%s682 + $0xc9] sm:$0xff]
        %v993 = vld [vmem:[%s682 + $0xd1] sm:$0xff]
        %v994 = vld [vmem:[%s682 + $0xd9] sm:$0xff]
        %v995 = vld [vmem:[%s682 + $0xe1] sm:$0xff]
        %v996 = vld [vmem:[%s682 + $0xf9] sm:$0xff]
        %v997 = vld [vmem:[%s682 + $0x101] sm:$0xff]
        %v998 = vld [vmem:[%s682 + $0x109] sm:$0xff]
        %v999 = vld [vmem:[%s682 + $0x111] sm:$0xff]
        %v1000 = vld [vmem:[%s682 + $0x129] sm:$0xff]
        %v1001 = vld [vmem:[%s682 + $0x131] sm:$0xff]
        %v1002 = vld [vmem:[%s682 + $0x139] sm:$0xff]
        %v1003 = vld [vmem:[%s682 + $0x141] sm:$0xff]
        %v1004 = vld [vmem:[%s682 + $0x159] sm:$0xff]
        %v1005 = vld [vmem:[%s682 + $0x161] sm:$0xff]
        %v1006 = vld [vmem:[%s682 + $0x169] sm:$0xff]
        %v1007 = vld [vmem:[%s682 + $0x171] sm:$0xff]
        %s1008 = scalar_lea.vmem [#allocation2], 96
        %v1009 = vld [vmem:[%s1008 + $0x7] sm:$0xff]
        %v1010 = vld [vmem:[%s1008 + $0xf] sm:$0xff]
        %v1011 = vld [vmem:[%s1008 + $0x17] sm:$0xff]
        %v1012 = vld [vmem:[%s1008 + $0x1f] sm:$0xff]
        %v1013 = vld [vmem:[%s1008 + $0x37] sm:$0xff]
        %v1014 = vld [vmem:[%s1008 + $0x3f] sm:$0xff]
        %v1015 = vld [vmem:[%s1008 + $0x47] sm:$0xff]
        %v1016 = vld [vmem:[%s1008 + $0x4f] sm:$0xff]
        %v1017 = vld [vmem:[%s1008 + $0x67] sm:$0xff]
        %v1018 = vld [vmem:[%s1008 + $0x6f] sm:$0xff]
        %v1019 = vld [vmem:[%s1008 + $0x77] sm:$0xff]
        %v1020 = vld [vmem:[%s1008 + $0x7f] sm:$0xff]
        %v1021 = vld [vmem:[%s1008 + $0x97] sm:$0xff]
        %v1022 = vld [vmem:[%s1008 + $0x9f] sm:$0xff]
        %v1023 = vld [vmem:[%s1008 + $0xa7] sm:$0xff]
        %v1024 = vld [vmem:[%s1008 + $0xaf] sm:$0xff]
        %v1025 = vld [vmem:[%s1008 + $0xc7] sm:$0xff]
        %v1026 = vld [vmem:[%s1008 + $0xcf] sm:$0xff]
        %v1027 = vld [vmem:[%s1008 + $0xd7] sm:$0xff]
        %v1028 = vld [vmem:[%s1008 + $0xdf] sm:$0xff]
        %v1029 = vld [vmem:[%s1008 + $0xf7] sm:$0xff]
        %v1030 = vld [vmem:[%s1008 + $0xff] sm:$0xff]
        %v1031 = vld [vmem:[%s1008 + $0x107] sm:$0xff]
        %v1032 = vld [vmem:[%s1008 + $0x10f] sm:$0xff]
        %v1033 = vld [vmem:[%s1008 + $0x127] sm:$0xff]
        %v1034 = vld [vmem:[%s1008 + $0x12f] sm:$0xff]
        %v1035 = vld [vmem:[%s1008 + $0x137] sm:$0xff]
        %v1036 = vld [vmem:[%s1008 + $0x13f] sm:$0xff]
        %v1037 = vld [vmem:[%s1008 + $0x157] sm:$0xff]
        %v1038 = vld [vmem:[%s1008 + $0x15f] sm:$0xff]
        %v1039 = vld [vmem:[%s1008 + $0x167] sm:$0xff]
        %v1040 = vld [vmem:[%s1008 + $0x16f] sm:$0xff]
        %v1041 = vld [vmem:[%s1008 + $0x8] sm:$0xff]
        %v1042 = vld [vmem:[%s1008 + $0x10] sm:$0xff]
        %v1043 = vld [vmem:[%s1008 + $0x18] sm:$0xff]
        %v1044 = vld [vmem:[%s1008 + $0x20] sm:$0xff]
        %v1045 = vld [vmem:[%s1008 + $0x38] sm:$0xff]
        %v1046 = vld [vmem:[%s1008 + $0x40] sm:$0xff]
        %v1047 = vld [vmem:[%s1008 + $0x48] sm:$0xff]
        %v1048 = vld [vmem:[%s1008 + $0x50] sm:$0xff]
        %v1049 = vld [vmem:[%s1008 + $0x68] sm:$0xff]
        %v1050 = vld [vmem:[%s1008 + $0x70] sm:$0xff]
        %v1051 = vld [vmem:[%s1008 + $0x78] sm:$0xff]
        %v1052 = vld [vmem:[%s1008 + $0x80] sm:$0xff]
        %v1053 = vld [vmem:[%s1008 + $0x98] sm:$0xff]
        %v1054 = vld [vmem:[%s1008 + $0xa0] sm:$0xff]
        %v1055 = vld [vmem:[%s1008 + $0xa8] sm:$0xff]
        %v1056 = vld [vmem:[%s1008 + $0xb0] sm:$0xff]
        %v1057 = vld [vmem:[%s1008 + $0xc8] sm:$0xff]
        %v1058 = vld [vmem:[%s1008 + $0xd0] sm:$0xff]
        %v1059 = vld [vmem:[%s1008 + $0xd8] sm:$0xff]
        %v1060 = vld [vmem:[%s1008 + $0xe0] sm:$0xff]
        %v1061 = vld [vmem:[%s1008 + $0xf8] sm:$0xff]
        %v1062 = vld [vmem:[%s1008 + $0x100] sm:$0xff]
        %v1063 = vld [vmem:[%s1008 + $0x108] sm:$0xff]
        %v1064 = vld [vmem:[%s1008 + $0x110] sm:$0xff]
        %v1065 = vld [vmem:[%s1008 + $0x128] sm:$0xff]
        %v1066 = vld [vmem:[%s1008 + $0x130] sm:$0xff]
        %v1067 = vld [vmem:[%s1008 + $0x138] sm:$0xff]
        %v1068 = vld [vmem:[%s1008 + $0x140] sm:$0xff]
        %v1069 = vld [vmem:[%s1008 + $0x158] sm:$0xff]
        %v1070 = vld [vmem:[%s1008 + $0x160] sm:$0xff]
        %v1071 = vld [vmem:[%s1008 + $0x168] sm:$0xff]
        %v1072 = vld [vmem:[%s1008 + $0x170] sm:$0xff]
        %v1073 = vld [vmem:[%s1008 + $0x9] sm:$0xff]
        %v1074 = vld [vmem:[%s1008 + $0x11] sm:$0xff]
        %v1075 = vld [vmem:[%s1008 + $0x19] sm:$0xff]
        %v1076 = vld [vmem:[%s1008 + $0x21] sm:$0xff]
        %v1077 = vld [vmem:[%s1008 + $0x39] sm:$0xff]
        %v1078 = vld [vmem:[%s1008 + $0x41] sm:$0xff]
        %v1079 = vld [vmem:[%s1008 + $0x49] sm:$0xff]
        %v1080 = vld [vmem:[%s1008 + $0x51] sm:$0xff]
        %v1081 = vld [vmem:[%s1008 + $0x69] sm:$0xff]
        %v1082 = vld [vmem:[%s1008 + $0x71] sm:$0xff]
        %v1083 = vld [vmem:[%s1008 + $0x79] sm:$0xff]
        %v1084 = vld [vmem:[%s1008 + $0x81] sm:$0xff]
        %v1085 = vld [vmem:[%s1008 + $0x99] sm:$0xff]
        %v1086 = vld [vmem:[%s1008 + $0xa1] sm:$0xff]
        %v1087 = vld [vmem:[%s1008 + $0xa9] sm:$0xff]
        %v1088 = vld [vmem:[%s1008 + $0xb1] sm:$0xff]
        %v1089 = vld [vmem:[%s1008 + $0xc9] sm:$0xff]
        %v1090 = vld [vmem:[%s1008 + $0xd1] sm:$0xff]
        %v1091 = vld [vmem:[%s1008 + $0xd9] sm:$0xff]
        %v1092 = vld [vmem:[%s1008 + $0xe1] sm:$0xff]
        %v1093 = vld [vmem:[%s1008 + $0xf9] sm:$0xff]
        %v1094 = vld [vmem:[%s1008 + $0x101] sm:$0xff]
        %v1095 = vld [vmem:[%s1008 + $0x109] sm:$0xff]
        %v1096 = vld [vmem:[%s1008 + $0x111] sm:$0xff]
        %v1097 = vld [vmem:[%s1008 + $0x129] sm:$0xff]
        %v1098 = vld [vmem:[%s1008 + $0x131] sm:$0xff]
        %v1099 = vld [vmem:[%s1008 + $0x139] sm:$0xff]
        %v1100 = vld [vmem:[%s1008 + $0x141] sm:$0xff]
        %v1101 = vld [vmem:[%s1008 + $0x159] sm:$0xff]
        %v1102 = vld [vmem:[%s1008 + $0x161] sm:$0xff]
        %v1103 = vld [vmem:[%s1008 + $0x169] sm:$0xff]
        %v1104 = vld [vmem:[%s1008 + $0x171] sm:$0xff]
        %1137 = vrot.lane.b32.xlu0 %v848, 3
        %v1138 = vpop.permute.xlu0 %1137
        %1139 = vrot.lane.b32.xlu0 %v849, 3
        %v1140 = vpop.permute.xlu0 %1139
        %1141 = vrot.lane.b32.xlu0 %v850, 3
        %v1142 = vpop.permute.xlu0 %1141
        %1143 = vrot.lane.b32.xlu0 %v851, 3
        %v1144 = vpop.permute.xlu0 %1143
        %1145 = vrot.lane.b32.xlu0 %v852, 3
        %v1146 = vpop.permute.xlu0 %1145
        %1147 = vrot.lane.b32.xlu0 %v853, 3
        %v1148 = vpop.permute.xlu0 %1147
        %1149 = vrot.lane.b32.xlu0 %v854, 3
        %v1150 = vpop.permute.xlu0 %1149
        %1151 = vrot.lane.b32.xlu0 %v855, 3
        %v1152 = vpop.permute.xlu0 %1151
        %1153 = vrot.lane.b32.xlu0 %v856, 3
        %v1154 = vpop.permute.xlu0 %1153
        %1155 = vrot.lane.b32.xlu0 %v857, 3
        %v1156 = vpop.permute.xlu0 %1155
        %1157 = vrot.lane.b32.xlu0 %v858, 3
        %v1158 = vpop.permute.xlu0 %1157
        %1159 = vrot.lane.b32.xlu0 %v859, 3
        %v1160 = vpop.permute.xlu0 %1159
        %1161 = vrot.lane.b32.xlu0 %v860, 3
        %v1162 = vpop.permute.xlu0 %1161
        %1163 = vrot.lane.b32.xlu0 %v861, 3
        %v1164 = vpop.permute.xlu0 %1163
        %1165 = vrot.lane.b32.xlu0 %v862, 3
        %v1166 = vpop.permute.xlu0 %1165
        %1167 = vrot.lane.b32.xlu0 %v863, 3
        %v1168 = vpop.permute.xlu0 %1167
        %1169 = vrot.lane.b32.xlu0 %v864, 3
        %v1170 = vpop.permute.xlu0 %1169
        %1171 = vrot.lane.b32.xlu0 %v865, 3
        %v1172 = vpop.permute.xlu0 %1171
        %1173 = vrot.lane.b32.xlu0 %v866, 3
        %v1174 = vpop.permute.xlu0 %1173
        %1175 = vrot.lane.b32.xlu0 %v867, 3
        %v1176 = vpop.permute.xlu0 %1175
        %1177 = vrot.lane.b32.xlu0 %v868, 3
        %v1178 = vpop.permute.xlu0 %1177
        %1179 = vrot.lane.b32.xlu0 %v869, 3
        %v1180 = vpop.permute.xlu0 %1179
        %1181 = vrot.lane.b32.xlu0 %v870, 3
        %v1182 = vpop.permute.xlu0 %1181
        %1183 = vrot.lane.b32.xlu0 %v871, 3
        %v1184 = vpop.permute.xlu0 %1183
        %1185 = vrot.lane.b32.xlu0 %v872, 3
        %v1186 = vpop.permute.xlu0 %1185
        %1187 = vrot.lane.b32.xlu0 %v873, 3
        %v1188 = vpop.permute.xlu0 %1187
        %1189 = vrot.lane.b32.xlu0 %v874, 3
        %v1190 = vpop.permute.xlu0 %1189
        %1191 = vrot.lane.b32.xlu0 %v875, 3
        %v1192 = vpop.permute.xlu0 %1191
        %1193 = vrot.lane.b32.xlu0 %v876, 3
        %v1194 = vpop.permute.xlu0 %1193
        %1195 = vrot.lane.b32.xlu0 %v877, 3
        %v1196 = vpop.permute.xlu0 %1195
        %1197 = vrot.lane.b32.xlu0 %v878, 3
        %v1198 = vpop.permute.xlu0 %1197
        %1199 = vrot.lane.b32.xlu0 %v879, 3
        %v1200 = vpop.permute.xlu0 %1199
        %1265 = vrot.lane.b32.xlu0 %v880, 6
        %v1266 = vpop.permute.xlu0 %1265
        %1267 = vrot.lane.b32.xlu0 %v881, 6
        %v1268 = vpop.permute.xlu0 %1267
        %1269 = vrot.lane.b32.xlu0 %v882, 6
        %v1270 = vpop.permute.xlu0 %1269
        %1271 = vrot.lane.b32.xlu0 %v883, 6
        %v1272 = vpop.permute.xlu0 %1271
        %1273 = vrot.lane.b32.xlu0 %v884, 6
        %v1274 = vpop.permute.xlu0 %1273
        %1275 = vrot.lane.b32.xlu0 %v885, 6
        %v1276 = vpop.permute.xlu0 %1275
        %1277 = vrot.lane.b32.xlu0 %v886, 6
        %v1278 = vpop.permute.xlu0 %1277
        %1279 = vrot.lane.b32.xlu0 %v887, 6
        %v1280 = vpop.permute.xlu0 %1279
        %1281 = vrot.lane.b32.xlu0 %v888, 6
        %v1282 = vpop.permute.xlu0 %1281
        %1283 = vrot.lane.b32.xlu0 %v889, 6
        %v1284 = vpop.permute.xlu0 %1283
        %1285 = vrot.lane.b32.xlu0 %v890, 6
        %v1286 = vpop.permute.xlu0 %1285
        %1287 = vrot.lane.b32.xlu0 %v891, 6
        %v1288 = vpop.permute.xlu0 %1287
        %1289 = vrot.lane.b32.xlu0 %v892, 6
        %v1290 = vpop.permute.xlu0 %1289
        %1291 = vrot.lane.b32.xlu0 %v893, 6
        %v1292 = vpop.permute.xlu0 %1291
        %1293 = vrot.lane.b32.xlu0 %v894, 6
        %v1294 = vpop.permute.xlu0 %1293
        %1295 = vrot.lane.b32.xlu0 %v895, 6
        %v1296 = vpop.permute.xlu0 %1295
        %1297 = vrot.lane.b32.xlu0 %v896, 6
        %v1298 = vpop.permute.xlu0 %1297
        %1299 = vrot.lane.b32.xlu0 %v897, 6
        %v1300 = vpop.permute.xlu0 %1299
        %1301 = vrot.lane.b32.xlu0 %v898, 6
        %v1302 = vpop.permute.xlu0 %1301
        %1303 = vrot.lane.b32.xlu0 %v899, 6
        %v1304 = vpop.permute.xlu0 %1303
        %1305 = vrot.lane.b32.xlu0 %v900, 6
        %v1306 = vpop.permute.xlu0 %1305
        %1307 = vrot.lane.b32.xlu0 %v901, 6
        %v1308 = vpop.permute.xlu0 %1307
        %1309 = vrot.lane.b32.xlu0 %v902, 6
        %v1310 = vpop.permute.xlu0 %1309
        %1311 = vrot.lane.b32.xlu0 %v903, 6
        %v1312 = vpop.permute.xlu0 %1311
        %1313 = vrot.lane.b32.xlu0 %v904, 6
        %v1314 = vpop.permute.xlu0 %1313
        %1315 = vrot.lane.b32.xlu0 %v905, 6
        %v1316 = vpop.permute.xlu0 %1315
        %1317 = vrot.lane.b32.xlu0 %v906, 6
        %v1318 = vpop.permute.xlu0 %1317
        %1319 = vrot.lane.b32.xlu0 %v907, 6
        %v1320 = vpop.permute.xlu0 %1319
        %1321 = vrot.lane.b32.xlu0 %v908, 6
        %v1322 = vpop.permute.xlu0 %1321
        %1323 = vrot.lane.b32.xlu0 %v909, 6
        %v1324 = vpop.permute.xlu0 %1323
        %1325 = vrot.lane.b32.xlu0 %v910, 6
        %v1326 = vpop.permute.xlu0 %1325
        %1327 = vrot.lane.b32.xlu0 %v911, 6
        %v1328 = vpop.permute.xlu0 %1327
        %1393 = vrot.lane.b32.xlu0 %v912, 9
        %v1394 = vpop.permute.xlu0 %1393
        %1395 = vrot.lane.b32.xlu0 %v913, 9
        %v1396 = vpop.permute.xlu0 %1395
        %1397 = vrot.lane.b32.xlu0 %v914, 9
        %v1398 = vpop.permute.xlu0 %1397
        %1399 = vrot.lane.b32.xlu0 %v915, 9
        %v1400 = vpop.permute.xlu0 %1399
        %1401 = vrot.lane.b32.xlu0 %v916, 9
        %v1402 = vpop.permute.xlu0 %1401
        %1403 = vrot.lane.b32.xlu0 %v917, 9
        %v1404 = vpop.permute.xlu0 %1403
        %1405 = vrot.lane.b32.xlu0 %v918, 9
        %v1406 = vpop.permute.xlu0 %1405
        %1407 = vrot.lane.b32.xlu0 %v919, 9
        %v1408 = vpop.permute.xlu0 %1407
        %1409 = vrot.lane.b32.xlu0 %v920, 9
        %v1410 = vpop.permute.xlu0 %1409
        %1411 = vrot.lane.b32.xlu0 %v921, 9
        %v1412 = vpop.permute.xlu0 %1411
        %1413 = vrot.lane.b32.xlu0 %v922, 9
        %v1414 = vpop.permute.xlu0 %1413
        %1415 = vrot.lane.b32.xlu0 %v923, 9
        %v1416 = vpop.permute.xlu0 %1415
        %1417 = vrot.lane.b32.xlu0 %v924, 9
        %v1418 = vpop.permute.xlu0 %1417
        %1419 = vrot.lane.b32.xlu0 %v925, 9
        %v1420 = vpop.permute.xlu0 %1419
        %1421 = vrot.lane.b32.xlu0 %v926, 9
        %v1422 = vpop.permute.xlu0 %1421
        %1423 = vrot.lane.b32.xlu0 %v927, 9
        %v1424 = vpop.permute.xlu0 %1423
        %1425 = vrot.lane.b32.xlu0 %v928, 9
        %v1426 = vpop.permute.xlu0 %1425
        %1427 = vrot.lane.b32.xlu0 %v929, 9
        %v1428 = vpop.permute.xlu0 %1427
        %1429 = vrot.lane.b32.xlu0 %v930, 9
        %v1430 = vpop.permute.xlu0 %1429
        %1431 = vrot.lane.b32.xlu0 %v931, 9
        %v1432 = vpop.permute.xlu0 %1431
        %1433 = vrot.lane.b32.xlu0 %v932, 9
        %v1434 = vpop.permute.xlu0 %1433
        %1435 = vrot.lane.b32.xlu0 %v933, 9
        %v1436 = vpop.permute.xlu0 %1435
        %1437 = vrot.lane.b32.xlu0 %v934, 9
        %v1438 = vpop.permute.xlu0 %1437
        %1439 = vrot.lane.b32.xlu0 %v935, 9
        %v1440 = vpop.permute.xlu0 %1439
        %1441 = vrot.lane.b32.xlu0 %v936, 9
        %v1442 = vpop.permute.xlu0 %1441
        %1443 = vrot.lane.b32.xlu0 %v937, 9
        %v1444 = vpop.permute.xlu0 %1443
        %1445 = vrot.lane.b32.xlu0 %v938, 9
        %v1446 = vpop.permute.xlu0 %1445
        %1447 = vrot.lane.b32.xlu0 %v939, 9
        %v1448 = vpop.permute.xlu0 %1447
        %1449 = vrot.lane.b32.xlu0 %v940, 9
        %v1450 = vpop.permute.xlu0 %1449
        %1451 = vrot.lane.b32.xlu0 %v941, 9
        %v1452 = vpop.permute.xlu0 %1451
        %1453 = vrot.lane.b32.xlu0 %v942, 9
        %v1454 = vpop.permute.xlu0 %1453
        %1455 = vrot.lane.b32.xlu0 %v943, 9
        %v1456 = vpop.permute.xlu0 %1455
        %1521 = vrot.lane.b32.xlu0 %v944, 12
        %v1522 = vpop.permute.xlu0 %1521
        %1523 = vrot.lane.b32.xlu0 %v945, 12
        %v1524 = vpop.permute.xlu0 %1523
        %1525 = vrot.lane.b32.xlu0 %v946, 12
        %v1526 = vpop.permute.xlu0 %1525
        %1527 = vrot.lane.b32.xlu0 %v947, 12
        %v1528 = vpop.permute.xlu0 %1527
        %1529 = vrot.lane.b32.xlu0 %v948, 12
        %v1530 = vpop.permute.xlu0 %1529
        %1531 = vrot.lane.b32.xlu0 %v949, 12
        %v1532 = vpop.permute.xlu0 %1531
        %1533 = vrot.lane.b32.xlu0 %v950, 12
        %v1534 = vpop.permute.xlu0 %1533
        %1535 = vrot.lane.b32.xlu0 %v951, 12
        %v1536 = vpop.permute.xlu0 %1535
        %1537 = vrot.lane.b32.xlu0 %v952, 12
        %v1538 = vpop.permute.xlu0 %1537
        %1539 = vrot.lane.b32.xlu0 %v953, 12
        %v1540 = vpop.permute.xlu0 %1539
        %1541 = vrot.lane.b32.xlu0 %v954, 12
        %v1542 = vpop.permute.xlu0 %1541
        %1543 = vrot.lane.b32.xlu0 %v955, 12
        %v1544 = vpop.permute.xlu0 %1543
        %1545 = vrot.lane.b32.xlu0 %v956, 12
        %v1546 = vpop.permute.xlu0 %1545
        %1547 = vrot.lane.b32.xlu0 %v957, 12
        %v1548 = vpop.permute.xlu0 %1547
        %1549 = vrot.lane.b32.xlu0 %v958, 12
        %v1550 = vpop.permute.xlu0 %1549
        %1551 = vrot.lane.b32.xlu0 %v959, 12
        %v1552 = vpop.permute.xlu0 %1551
        %1553 = vrot.lane.b32.xlu0 %v960, 12
        %v1554 = vpop.permute.xlu0 %1553
        %1555 = vrot.lane.b32.xlu0 %v961, 12
        %v1556 = vpop.permute.xlu0 %1555
        %1557 = vrot.lane.b32.xlu0 %v962, 12
        %v1558 = vpop.permute.xlu0 %1557
        %1559 = vrot.lane.b32.xlu0 %v963, 12
        %v1560 = vpop.permute.xlu0 %1559
        %1561 = vrot.lane.b32.xlu0 %v964, 12
        %v1562 = vpop.permute.xlu0 %1561
        %1563 = vrot.lane.b32.xlu0 %v965, 12
        %v1564 = vpop.permute.xlu0 %1563
        %1565 = vrot.lane.b32.xlu0 %v966, 12
        %v1566 = vpop.permute.xlu0 %1565
        %1567 = vrot.lane.b32.xlu0 %v967, 12
        %v1568 = vpop.permute.xlu0 %1567
        %1569 = vrot.lane.b32.xlu0 %v968, 12
        %v1570 = vpop.permute.xlu0 %1569
        %1571 = vrot.lane.b32.xlu0 %v969, 12
        %v1572 = vpop.permute.xlu0 %1571
        %1573 = vrot.lane.b32.xlu0 %v970, 12
        %v1574 = vpop.permute.xlu0 %1573
        %1575 = vrot.lane.b32.xlu0 %v971, 12
        %v1576 = vpop.permute.xlu0 %1575
        %1577 = vrot.lane.b32.xlu0 %v972, 12
        %v1578 = vpop.permute.xlu0 %1577
        %1579 = vrot.lane.b32.xlu0 %v973, 12
        %v1580 = vpop.permute.xlu0 %1579
        %1581 = vrot.lane.b32.xlu0 %v974, 12
        %v1582 = vpop.permute.xlu0 %1581
        %1583 = vrot.lane.b32.xlu0 %v975, 12
        %v1584 = vpop.permute.xlu0 %1583
        %1649 = vrot.lane.b32.xlu0 %v976, 15
        %v1650 = vpop.permute.xlu0 %1649
        %1651 = vrot.lane.b32.xlu0 %v977, 15
        %v1652 = vpop.permute.xlu0 %1651
        %1653 = vrot.lane.b32.xlu0 %v978, 15
        %v1654 = vpop.permute.xlu0 %1653
        %1655 = vrot.lane.b32.xlu0 %v979, 15
        %v1656 = vpop.permute.xlu0 %1655
        %1657 = vrot.lane.b32.xlu0 %v980, 15
        %v1658 = vpop.permute.xlu0 %1657
        %1659 = vrot.lane.b32.xlu0 %v981, 15
        %v1660 = vpop.permute.xlu0 %1659
        %1661 = vrot.lane.b32.xlu0 %v982, 15
        %v1662 = vpop.permute.xlu0 %1661
        %1663 = vrot.lane.b32.xlu0 %v983, 15
        %v1664 = vpop.permute.xlu0 %1663
        %1665 = vrot.lane.b32.xlu0 %v984, 15
        %v1666 = vpop.permute.xlu0 %1665
        %1667 = vrot.lane.b32.xlu0 %v985, 15
        %v1668 = vpop.permute.xlu0 %1667
        %1669 = vrot.lane.b32.xlu0 %v986, 15
        %v1670 = vpop.permute.xlu0 %1669
        %1671 = vrot.lane.b32.xlu0 %v987, 15
        %v1672 = vpop.permute.xlu0 %1671
        %1673 = vrot.lane.b32.xlu0 %v988, 15
        %v1674 = vpop.permute.xlu0 %1673
        %1675 = vrot.lane.b32.xlu0 %v989, 15
        %v1676 = vpop.permute.xlu0 %1675
        %1677 = vrot.lane.b32.xlu0 %v990, 15
        %v1678 = vpop.permute.xlu0 %1677
        %1679 = vrot.lane.b32.xlu0 %v991, 15
        %v1680 = vpop.permute.xlu0 %1679
        %1681 = vrot.lane.b32.xlu0 %v992, 15
        %v1682 = vpop.permute.xlu0 %1681
        %1683 = vrot.lane.b32.xlu0 %v993, 15
        %v1684 = vpop.permute.xlu0 %1683
        %1685 = vrot.lane.b32.xlu0 %v994, 15
        %v1686 = vpop.permute.xlu0 %1685
        %1687 = vrot.lane.b32.xlu0 %v995, 15
        %v1688 = vpop.permute.xlu0 %1687
        %1689 = vrot.lane.b32.xlu0 %v996, 15
        %v1690 = vpop.permute.xlu0 %1689
        %1691 = vrot.lane.b32.xlu0 %v997, 15
        %v1692 = vpop.permute.xlu0 %1691
        %1693 = vrot.lane.b32.xlu0 %v998, 15
        %v1694 = vpop.permute.xlu0 %1693
        %1695 = vrot.lane.b32.xlu0 %v999, 15
        %v1696 = vpop.permute.xlu0 %1695
        %1697 = vrot.lane.b32.xlu0 %v1000, 15
        %v1698 = vpop.permute.xlu0 %1697
        %1699 = vrot.lane.b32.xlu0 %v1001, 15
        %v1700 = vpop.permute.xlu0 %1699
        %1701 = vrot.lane.b32.xlu0 %v1002, 15
        %v1702 = vpop.permute.xlu0 %1701
        %1703 = vrot.lane.b32.xlu0 %v1003, 15
        %v1704 = vpop.permute.xlu0 %1703
        %1705 = vrot.lane.b32.xlu0 %v1004, 15
        %v1706 = vpop.permute.xlu0 %1705
        %1707 = vrot.lane.b32.xlu0 %v1005, 15
        %v1708 = vpop.permute.xlu0 %1707
        %1709 = vrot.lane.b32.xlu0 %v1006, 15
        %v1710 = vpop.permute.xlu0 %1709
        %1711 = vrot.lane.b32.xlu0 %v1007, 15
        %v1712 = vpop.permute.xlu0 %1711
        %1777 = vrot.lane.b32.xlu0 %v1009, 18
        %v1778 = vpop.permute.xlu0 %1777
        %1779 = vrot.lane.b32.xlu0 %v1010, 18
        %v1780 = vpop.permute.xlu0 %1779
        %1781 = vrot.lane.b32.xlu0 %v1011, 18
        %v1782 = vpop.permute.xlu0 %1781
        %1783 = vrot.lane.b32.xlu0 %v1012, 18
        %v1784 = vpop.permute.xlu0 %1783
        %1785 = vrot.lane.b32.xlu0 %v1013, 18
        %v1786 = vpop.permute.xlu0 %1785
        %1787 = vrot.lane.b32.xlu0 %v1014, 18
        %v1788 = vpop.permute.xlu0 %1787
        %1789 = vrot.lane.b32.xlu0 %v1015, 18
        %v1790 = vpop.permute.xlu0 %1789
        %1791 = vrot.lane.b32.xlu0 %v1016, 18
        %v1792 = vpop.permute.xlu0 %1791
        %1793 = vrot.lane.b32.xlu0 %v1017, 18
        %v1794 = vpop.permute.xlu0 %1793
        %1795 = vrot.lane.b32.xlu0 %v1018, 18
        %v1796 = vpop.permute.xlu0 %1795
        %1797 = vrot.lane.b32.xlu0 %v1019, 18
        %v1798 = vpop.permute.xlu0 %1797
        %1799 = vrot.lane.b32.xlu0 %v1020, 18
        %v1800 = vpop.permute.xlu0 %1799
        %1801 = vrot.lane.b32.xlu0 %v1021, 18
        %v1802 = vpop.permute.xlu0 %1801
        %1803 = vrot.lane.b32.xlu0 %v1022, 18
        %v1804 = vpop.permute.xlu0 %1803
        %1805 = vrot.lane.b32.xlu0 %v1023, 18
        %v1806 = vpop.permute.xlu0 %1805
        %1807 = vrot.lane.b32.xlu0 %v1024, 18
        %v1808 = vpop.permute.xlu0 %1807
        %1809 = vrot.lane.b32.xlu0 %v1025, 18
        %v1810 = vpop.permute.xlu0 %1809
        %1811 = vrot.lane.b32.xlu0 %v1026, 18
        %v1812 = vpop.permute.xlu0 %1811
        %1813 = vrot.lane.b32.xlu0 %v1027, 18
        %v1814 = vpop.permute.xlu0 %1813
        %1815 = vrot.lane.b32.xlu0 %v1028, 18
        %v1816 = vpop.permute.xlu0 %1815
        %1817 = vrot.lane.b32.xlu0 %v1029, 18
        %v1818 = vpop.permute.xlu0 %1817
        %1819 = vrot.lane.b32.xlu0 %v1030, 18
        %v1820 = vpop.permute.xlu0 %1819
        %1821 = vrot.lane.b32.xlu0 %v1031, 18
        %v1822 = vpop.permute.xlu0 %1821
        %1823 = vrot.lane.b32.xlu0 %v1032, 18
        %v1824 = vpop.permute.xlu0 %1823
        %1825 = vrot.lane.b32.xlu0 %v1033, 18
        %v1826 = vpop.permute.xlu0 %1825
        %1827 = vrot.lane.b32.xlu0 %v1034, 18
        %v1828 = vpop.permute.xlu0 %1827
        %1829 = vrot.lane.b32.xlu0 %v1035, 18
        %v1830 = vpop.permute.xlu0 %1829
        %1831 = vrot.lane.b32.xlu0 %v1036, 18
        %v1832 = vpop.permute.xlu0 %1831
        %1833 = vrot.lane.b32.xlu0 %v1037, 18
        %v1834 = vpop.permute.xlu0 %1833
        %1835 = vrot.lane.b32.xlu0 %v1038, 18
        %v1836 = vpop.permute.xlu0 %1835
        %1837 = vrot.lane.b32.xlu0 %v1039, 18
        %v1838 = vpop.permute.xlu0 %1837
        %1839 = vrot.lane.b32.xlu0 %v1040, 18
        %v1840 = vpop.permute.xlu0 %1839
        %1905 = vrot.lane.b32.xlu0 %v1041, 21
        %v1906 = vpop.permute.xlu0 %1905
        %1907 = vrot.lane.b32.xlu0 %v1042, 21
        %v1908 = vpop.permute.xlu0 %1907
        %1909 = vrot.lane.b32.xlu0 %v1043, 21
        %v1910 = vpop.permute.xlu0 %1909
        %1911 = vrot.lane.b32.xlu0 %v1044, 21
        %v1912 = vpop.permute.xlu0 %1911
        %1913 = vrot.lane.b32.xlu0 %v1045, 21
        %v1914 = vpop.permute.xlu0 %1913
        %1915 = vrot.lane.b32.xlu0 %v1046, 21
        %v1916 = vpop.permute.xlu0 %1915
        %1917 = vrot.lane.b32.xlu0 %v1047, 21
        %v1918 = vpop.permute.xlu0 %1917
        %1919 = vrot.lane.b32.xlu0 %v1048, 21
        %v1920 = vpop.permute.xlu0 %1919
        %1921 = vrot.lane.b32.xlu0 %v1049, 21
        %v1922 = vpop.permute.xlu0 %1921
        %1923 = vrot.lane.b32.xlu0 %v1050, 21
        %v1924 = vpop.permute.xlu0 %1923
        %1925 = vrot.lane.b32.xlu0 %v1051, 21
        %v1926 = vpop.permute.xlu0 %1925
        %1927 = vrot.lane.b32.xlu0 %v1052, 21
        %v1928 = vpop.permute.xlu0 %1927
        %1929 = vrot.lane.b32.xlu0 %v1053, 21
        %v1930 = vpop.permute.xlu0 %1929
        %1931 = vrot.lane.b32.xlu0 %v1054, 21
        %v1932 = vpop.permute.xlu0 %1931
        %1933 = vrot.lane.b32.xlu0 %v1055, 21
        %v1934 = vpop.permute.xlu0 %1933
        %1935 = vrot.lane.b32.xlu0 %v1056, 21
        %v1936 = vpop.permute.xlu0 %1935
        %1937 = vrot.lane.b32.xlu0 %v1057, 21
        %v1938 = vpop.permute.xlu0 %1937
        %1939 = vrot.lane.b32.xlu0 %v1058, 21
        %v1940 = vpop.permute.xlu0 %1939
        %1941 = vrot.lane.b32.xlu0 %v1059, 21
        %v1942 = vpop.permute.xlu0 %1941
        %1943 = vrot.lane.b32.xlu0 %v1060, 21
        %v1944 = vpop.permute.xlu0 %1943
        %1945 = vrot.lane.b32.xlu0 %v1061, 21
        %v1946 = vpop.permute.xlu0 %1945
        %1947 = vrot.lane.b32.xlu0 %v1062, 21
        %v1948 = vpop.permute.xlu0 %1947
        %1949 = vrot.lane.b32.xlu0 %v1063, 21
        %v1950 = vpop.permute.xlu0 %1949
        %1951 = vrot.lane.b32.xlu0 %v1064, 21
        %v1952 = vpop.permute.xlu0 %1951
        %1953 = vrot.lane.b32.xlu0 %v1065, 21
        %v1954 = vpop.permute.xlu0 %1953
        %1955 = vrot.lane.b32.xlu0 %v1066, 21
        %v1956 = vpop.permute.xlu0 %1955
        %1957 = vrot.lane.b32.xlu0 %v1067, 21
        %v1958 = vpop.permute.xlu0 %1957
        %1959 = vrot.lane.b32.xlu0 %v1068, 21
        %v1960 = vpop.permute.xlu0 %1959
        %1961 = vrot.lane.b32.xlu0 %v1069, 21
        %v1962 = vpop.permute.xlu0 %1961
        %1963 = vrot.lane.b32.xlu0 %v1070, 21
        %v1964 = vpop.permute.xlu0 %1963
        %1965 = vrot.lane.b32.xlu0 %v1071, 21
        %v1966 = vpop.permute.xlu0 %1965
        %1967 = vrot.lane.b32.xlu0 %v1072, 21
        %v1968 = vpop.permute.xlu0 %1967
        %2033 = vrot.lane.b32.xlu0 %v1073, 24
        %v2034 = vpop.permute.xlu0 %2033
        %2035 = vrot.lane.b32.xlu0 %v1074, 24
        %v2036 = vpop.permute.xlu0 %2035
        %2037 = vrot.lane.b32.xlu0 %v1075, 24
        %v2038 = vpop.permute.xlu0 %2037
        %2039 = vrot.lane.b32.xlu0 %v1076, 24
        %v2040 = vpop.permute.xlu0 %2039
        %2041 = vrot.lane.b32.xlu0 %v1077, 24
        %v2042 = vpop.permute.xlu0 %2041
        %2043 = vrot.lane.b32.xlu0 %v1078, 24
        %v2044 = vpop.permute.xlu0 %2043
        %2045 = vrot.lane.b32.xlu0 %v1079, 24
        %v2046 = vpop.permute.xlu0 %2045
        %2047 = vrot.lane.b32.xlu0 %v1080, 24
        %v2048 = vpop.permute.xlu0 %2047
        %2049 = vrot.lane.b32.xlu0 %v1081, 24
        %v2050 = vpop.permute.xlu0 %2049
        %2051 = vrot.lane.b32.xlu0 %v1082, 24
        %v2052 = vpop.permute.xlu0 %2051
        %2053 = vrot.lane.b32.xlu0 %v1083, 24
        %v2054 = vpop.permute.xlu0 %2053
        %2055 = vrot.lane.b32.xlu0 %v1084, 24
        %v2056 = vpop.permute.xlu0 %2055
        %2057 = vrot.lane.b32.xlu0 %v1085, 24
        %v2058 = vpop.permute.xlu0 %2057
        %2059 = vrot.lane.b32.xlu0 %v1086, 24
        %v2060 = vpop.permute.xlu0 %2059
        %2061 = vrot.lane.b32.xlu0 %v1087, 24
        %v2062 = vpop.permute.xlu0 %2061
        %2063 = vrot.lane.b32.xlu0 %v1088, 24
        %v2064 = vpop.permute.xlu0 %2063
        %2065 = vrot.lane.b32.xlu0 %v1089, 24
        %v2066 = vpop.permute.xlu0 %2065
        %2067 = vrot.lane.b32.xlu0 %v1090, 24
        %v2068 = vpop.permute.xlu0 %2067
        %2069 = vrot.lane.b32.xlu0 %v1091, 24
        %v2070 = vpop.permute.xlu0 %2069
        %2071 = vrot.lane.b32.xlu0 %v1092, 24
        %v2072 = vpop.permute.xlu0 %2071
        %2073 = vrot.lane.b32.xlu0 %v1093, 24
        %v2074 = vpop.permute.xlu0 %2073
        %2075 = vrot.lane.b32.xlu0 %v1094, 24
        %v2076 = vpop.permute.xlu0 %2075
        %2077 = vrot.lane.b32.xlu0 %v1095, 24
        %v2078 = vpop.permute.xlu0 %2077
        %2079 = vrot.lane.b32.xlu0 %v1096, 24
        %v2080 = vpop.permute.xlu0 %2079
        %2081 = vrot.lane.b32.xlu0 %v1097, 24
        %v2082 = vpop.permute.xlu0 %2081
        %2083 = vrot.lane.b32.xlu0 %v1098, 24
        %v2084 = vpop.permute.xlu0 %2083
        %2085 = vrot.lane.b32.xlu0 %v1099, 24
        %v2086 = vpop.permute.xlu0 %2085
        %2087 = vrot.lane.b32.xlu0 %v1100, 24
        %v2088 = vpop.permute.xlu0 %2087
        %2089 = vrot.lane.b32.xlu0 %v1101, 24
        %v2090 = vpop.permute.xlu0 %2089
        %2091 = vrot.lane.b32.xlu0 %v1102, 24
        %v2092 = vpop.permute.xlu0 %2091
        %2093 = vrot.lane.b32.xlu0 %v1103, 24
        %v2094 = vpop.permute.xlu0 %2093
        %2095 = vrot.lane.b32.xlu0 %v1104, 24
        %v2096 = vpop.permute.xlu0 %2095
        %v2129 = vsel %vm276, %v816, %v1138
        %v2130 = vsel %vm276, %v817, %v1140
        %v2131 = vsel %vm276, %v818, %v1142
        %v2132 = vsel %vm276, %v819, %v1144
        %v2133 = vsel %vm276, %v820, %v1146
        %v2134 = vsel %vm276, %v821, %v1148
        %v2135 = vsel %vm276, %v822, %v1150
        %v2136 = vsel %vm276, %v823, %v1152
        %v2137 = vsel %vm276, %v824, %v1154
        %v2138 = vsel %vm276, %v825, %v1156
        %v2139 = vsel %vm276, %v826, %v1158
        %v2140 = vsel %vm276, %v827, %v1160
        %v2141 = vsel %vm276, %v828, %v1162
        %v2142 = vsel %vm276, %v829, %v1164
        %v2143 = vsel %vm276, %v830, %v1166
        %v2144 = vsel %vm276, %v831, %v1168
        %v2145 = vsel %vm276, %v832, %v1170
        %v2146 = vsel %vm276, %v833, %v1172
        %v2147 = vsel %vm276, %v834, %v1174
        %v2148 = vsel %vm276, %v835, %v1176
        %v2149 = vsel %vm276, %v836, %v1178
        %v2150 = vsel %vm276, %v837, %v1180
        %v2151 = vsel %vm276, %v838, %v1182
        %v2152 = vsel %vm276, %v839, %v1184
        %v2153 = vsel %vm276, %v840, %v1186
        %v2154 = vsel %vm276, %v841, %v1188
        %v2155 = vsel %vm276, %v842, %v1190
        %v2156 = vsel %vm276, %v843, %v1192
        %v2157 = vsel %vm276, %v844, %v1194
        %v2158 = vsel %vm276, %v845, %v1196
        %v2159 = vsel %vm276, %v846, %v1198
        %v2160 = vsel %vm276, %v847, %v1200
        %vm2161 = vcmask 48128
        %v2162 = vsel %vm2161, %v2129, %v1266
        %v2163 = vsel %vm2161, %v2130, %v1268
        %v2164 = vsel %vm2161, %v2131, %v1270
        %v2165 = vsel %vm2161, %v2132, %v1272
        %v2166 = vsel %vm2161, %v2133, %v1274
        %v2167 = vsel %vm2161, %v2134, %v1276
        %v2168 = vsel %vm2161, %v2135, %v1278
        %v2169 = vsel %vm2161, %v2136, %v1280
        %v2170 = vsel %vm2161, %v2137, %v1282
        %v2171 = vsel %vm2161, %v2138, %v1284
        %v2172 = vsel %vm2161, %v2139, %v1286
        %v2173 = vsel %vm2161, %v2140, %v1288
        %v2174 = vsel %vm2161, %v2141, %v1290
        %v2175 = vsel %vm2161, %v2142, %v1292
        %v2176 = vsel %vm2161, %v2143, %v1294
        %v2177 = vsel %vm2161, %v2144, %v1296
        %v2178 = vsel %vm2161, %v2145, %v1298
        %v2179 = vsel %vm2161, %v2146, %v1300
        %v2180 = vsel %vm2161, %v2147, %v1302
        %v2181 = vsel %vm2161, %v2148, %v1304
        %v2182 = vsel %vm2161, %v2149, %v1306
        %v2183 = vsel %vm2161, %v2150, %v1308
        %v2184 = vsel %vm2161, %v2151, %v1310
        %v2185 = vsel %vm2161, %v2152, %v1312
        %v2186 = vsel %vm2161, %v2153, %v1314
        %v2187 = vsel %vm2161, %v2154, %v1316
        %v2188 = vsel %vm2161, %v2155, %v1318
        %v2189 = vsel %vm2161, %v2156, %v1320
        %v2190 = vsel %vm2161, %v2157, %v1322
        %v2191 = vsel %vm2161, %v2158, %v1324
        %v2192 = vsel %vm2161, %v2159, %v1326
        %v2193 = vsel %vm2161, %v2160, %v1328
        %vm2194 = vcmask 72704
        %v2195 = vsel %vm2194, %v2162, %v1394
        %v2196 = vsel %vm2194, %v2163, %v1396
        %v2197 = vsel %vm2194, %v2164, %v1398
        %v2198 = vsel %vm2194, %v2165, %v1400
        %v2199 = vsel %vm2194, %v2166, %v1402
        %v2200 = vsel %vm2194, %v2167, %v1404
        %v2201 = vsel %vm2194, %v2168, %v1406
        %v2202 = vsel %vm2194, %v2169, %v1408
        %v2203 = vsel %vm2194, %v2170, %v1410
        %v2204 = vsel %vm2194, %v2171, %v1412
        %v2205 = vsel %vm2194, %v2172, %v1414
        %v2206 = vsel %vm2194, %v2173, %v1416
        %v2207 = vsel %vm2194, %v2174, %v1418
        %v2208 = vsel %vm2194, %v2175, %v1420
        %v2209 = vsel %vm2194, %v2176, %v1422
        %v2210 = vsel %vm2194, %v2177, %v1424
        %v2211 = vsel %vm2194, %v2178, %v1426
        %v2212 = vsel %vm2194, %v2179, %v1428
        %v2213 = vsel %vm2194, %v2180, %v1430
        %v2214 = vsel %vm2194, %v2181, %v1432
        %v2215 = vsel %vm2194, %v2182, %v1434
        %v2216 = vsel %vm2194, %v2183, %v1436
        %v2217 = vsel %vm2194, %v2184, %v1438
        %v2218 = vsel %vm2194, %v2185, %v1440
        %v2219 = vsel %vm2194, %v2186, %v1442
        %v2220 = vsel %vm2194, %v2187, %v1444
        %v2221 = vsel %vm2194, %v2188, %v1446
        %v2222 = vsel %vm2194, %v2189, %v1448
        %v2223 = vsel %vm2194, %v2190, %v1450
        %v2224 = vsel %vm2194, %v2191, %v1452
        %v2225 = vsel %vm2194, %v2192, %v1454
        %v2226 = vsel %vm2194, %v2193, %v1456
        %vm2227 = vcmask 97280
        %v2228 = vsel %vm2227, %v2195, %v1522
        %v2229 = vsel %vm2227, %v2196, %v1524
        %v2230 = vsel %vm2227, %v2197, %v1526
        %v2231 = vsel %vm2227, %v2198, %v1528
        %v2232 = vsel %vm2227, %v2199, %v1530
        %v2233 = vsel %vm2227, %v2200, %v1532
        %v2234 = vsel %vm2227, %v2201, %v1534
        %v2235 = vsel %vm2227, %v2202, %v1536
        %v2236 = vsel %vm2227, %v2203, %v1538
        %v2237 = vsel %vm2227, %v2204, %v1540
        %v2238 = vsel %vm2227, %v2205, %v1542
        %v2239 = vsel %vm2227, %v2206, %v1544
        %v2240 = vsel %vm2227, %v2207, %v1546
        %v2241 = vsel %vm2227, %v2208, %v1548
        %v2242 = vsel %vm2227, %v2209, %v1550
        %v2243 = vsel %vm2227, %v2210, %v1552
        %v2244 = vsel %vm2227, %v2211, %v1554
        %v2245 = vsel %vm2227, %v2212, %v1556
        %v2246 = vsel %vm2227, %v2213, %v1558
        %v2247 = vsel %vm2227, %v2214, %v1560
        %v2248 = vsel %vm2227, %v2215, %v1562
        %v2249 = vsel %vm2227, %v2216, %v1564
        %v2250 = vsel %vm2227, %v2217, %v1566
        %v2251 = vsel %vm2227, %v2218, %v1568
        %v2252 = vsel %vm2227, %v2219, %v1570
        %v2253 = vsel %vm2227, %v2220, %v1572
        %v2254 = vsel %vm2227, %v2221, %v1574
        %v2255 = vsel %vm2227, %v2222, %v1576
        %v2256 = vsel %vm2227, %v2223, %v1578
        %v2257 = vsel %vm2227, %v2224, %v1580
        %v2258 = vsel %vm2227, %v2225, %v1582
        %v2259 = vsel %vm2227, %v2226, %v1584
        %vm2260 = vcmask 121856
        %v2261 = vsel %vm2260, %v2228, %v1650
        %v2262 = vsel %vm2260, %v2229, %v1652
        %v2263 = vsel %vm2260, %v2230, %v1654
        %v2264 = vsel %vm2260, %v2231, %v1656
        %v2265 = vsel %vm2260, %v2232, %v1658
        %v2266 = vsel %vm2260, %v2233, %v1660
        %v2267 = vsel %vm2260, %v2234, %v1662
        %v2268 = vsel %vm2260, %v2235, %v1664
        %v2269 = vsel %vm2260, %v2236, %v1666
        %v2270 = vsel %vm2260, %v2237, %v1668
        %v2271 = vsel %vm2260, %v2238, %v1670
        %v2272 = vsel %vm2260, %v2239, %v1672
        %v2273 = vsel %vm2260, %v2240, %v1674
        %v2274 = vsel %vm2260, %v2241, %v1676
        %v2275 = vsel %vm2260, %v2242, %v1678
        %v2276 = vsel %vm2260, %v2243, %v1680
        %v2277 = vsel %vm2260, %v2244, %v1682
        %v2278 = vsel %vm2260, %v2245, %v1684
        %v2279 = vsel %vm2260, %v2246, %v1686
        %v2280 = vsel %vm2260, %v2247, %v1688
        %v2281 = vsel %vm2260, %v2248, %v1690
        %v2282 = vsel %vm2260, %v2249, %v1692
        %v2283 = vsel %vm2260, %v2250, %v1694
        %v2284 = vsel %vm2260, %v2251, %v1696
        %v2285 = vsel %vm2260, %v2252, %v1698
        %v2286 = vsel %vm2260, %v2253, %v1700
        %v2287 = vsel %vm2260, %v2254, %v1702
        %v2288 = vsel %vm2260, %v2255, %v1704
        %v2289 = vsel %vm2260, %v2256, %v1706
        %v2290 = vsel %vm2260, %v2257, %v1708
        %v2291 = vsel %vm2260, %v2258, %v1710
        %v2292 = vsel %vm2260, %v2259, %v1712
        %vm2293 = vcmask 146432
        %v2294 = vsel %vm2293, %v2261, %v1778
        %v2295 = vsel %vm2293, %v2262, %v1780
        %v2296 = vsel %vm2293, %v2263, %v1782
        %v2297 = vsel %vm2293, %v2264, %v1784
        %v2298 = vsel %vm2293, %v2265, %v1786
        %v2299 = vsel %vm2293, %v2266, %v1788
        %v2300 = vsel %vm2293, %v2267, %v1790
        %v2301 = vsel %vm2293, %v2268, %v1792
        %v2302 = vsel %vm2293, %v2269, %v1794
        %v2303 = vsel %vm2293, %v2270, %v1796
        %v2304 = vsel %vm2293, %v2271, %v1798
        %v2305 = vsel %vm2293, %v2272, %v1800
        %v2306 = vsel %vm2293, %v2273, %v1802
        %v2307 = vsel %vm2293, %v2274, %v1804
        %v2308 = vsel %vm2293, %v2275, %v1806
        %v2309 = vsel %vm2293, %v2276, %v1808
        %v2310 = vsel %vm2293, %v2277, %v1810
        %v2311 = vsel %vm2293, %v2278, %v1812
        %v2312 = vsel %vm2293, %v2279, %v1814
        %v2313 = vsel %vm2293, %v2280, %v1816
        %v2314 = vsel %vm2293, %v2281, %v1818
        %v2315 = vsel %vm2293, %v2282, %v1820
        %v2316 = vsel %vm2293, %v2283, %v1822
        %v2317 = vsel %vm2293, %v2284, %v1824
        %v2318 = vsel %vm2293, %v2285, %v1826
        %v2319 = vsel %vm2293, %v2286, %v1828
        %v2320 = vsel %vm2293, %v2287, %v1830
        %v2321 = vsel %vm2293, %v2288, %v1832
        %v2322 = vsel %vm2293, %v2289, %v1834
        %v2323 = vsel %vm2293, %v2290, %v1836
        %v2324 = vsel %vm2293, %v2291, %v1838
        %v2325 = vsel %vm2293, %v2292, %v1840
        %vm2326 = vcmask 171008
        %v2327 = vsel %vm2326, %v2294, %v1906
        %v2328 = vsel %vm2326, %v2295, %v1908
        %v2329 = vsel %vm2326, %v2296, %v1910
        %v2330 = vsel %vm2326, %v2297, %v1912
        %v2331 = vsel %vm2326, %v2298, %v1914
        %v2332 = vsel %vm2326, %v2299, %v1916
        %v2333 = vsel %vm2326, %v2300, %v1918
        %v2334 = vsel %vm2326, %v2301, %v1920
        %v2335 = vsel %vm2326, %v2302, %v1922
        %v2336 = vsel %vm2326, %v2303, %v1924
        %v2337 = vsel %vm2326, %v2304, %v1926
        %v2338 = vsel %vm2326, %v2305, %v1928
        %v2339 = vsel %vm2326, %v2306, %v1930
        %v2340 = vsel %vm2326, %v2307, %v1932
        %v2341 = vsel %vm2326, %v2308, %v1934
        %v2342 = vsel %vm2326, %v2309, %v1936
        %v2343 = vsel %vm2326, %v2310, %v1938
        %v2344 = vsel %vm2326, %v2311, %v1940
        %v2345 = vsel %vm2326, %v2312, %v1942
        %v2346 = vsel %vm2326, %v2313, %v1944
        %v2347 = vsel %vm2326, %v2314, %v1946
        %v2348 = vsel %vm2326, %v2315, %v1948
        %v2349 = vsel %vm2326, %v2316, %v1950
        %v2350 = vsel %vm2326, %v2317, %v1952
        %v2351 = vsel %vm2326, %v2318, %v1954
        %v2352 = vsel %vm2326, %v2319, %v1956
        %v2353 = vsel %vm2326, %v2320, %v1958
        %v2354 = vsel %vm2326, %v2321, %v1960
        %v2355 = vsel %vm2326, %v2322, %v1962
        %v2356 = vsel %vm2326, %v2323, %v1964
        %v2357 = vsel %vm2326, %v2324, %v1966
        %v2358 = vsel %vm2326, %v2325, %v1968
        %vm2359 = vcmask 195584
        %v2360 = vsel %vm2359, %v2327, %v2034
        %v2361 = vsel %vm2359, %v2328, %v2036
        %v2362 = vsel %vm2359, %v2329, %v2038
        %v2363 = vsel %vm2359, %v2330, %v2040
        %v2364 = vsel %vm2359, %v2331, %v2042
        %v2365 = vsel %vm2359, %v2332, %v2044
        %v2366 = vsel %vm2359, %v2333, %v2046
        %v2367 = vsel %vm2359, %v2334, %v2048
        %v2368 = vsel %vm2359, %v2335, %v2050
        %v2369 = vsel %vm2359, %v2336, %v2052
        %v2370 = vsel %vm2359, %v2337, %v2054
        %v2371 = vsel %vm2359, %v2338, %v2056
        %v2372 = vsel %vm2359, %v2339, %v2058
        %v2373 = vsel %vm2359, %v2340, %v2060
        %v2374 = vsel %vm2359, %v2341, %v2062
        %v2375 = vsel %vm2359, %v2342, %v2064
        %v2376 = vsel %vm2359, %v2343, %v2066
        %v2377 = vsel %vm2359, %v2344, %v2068
        %v2378 = vsel %vm2359, %v2345, %v2070
        %v2379 = vsel %vm2359, %v2346, %v2072
        %v2380 = vsel %vm2359, %v2347, %v2074
        %v2381 = vsel %vm2359, %v2348, %v2076
        %v2382 = vsel %vm2359, %v2349, %v2078
        %v2383 = vsel %vm2359, %v2350, %v2080
        %v2384 = vsel %vm2359, %v2351, %v2082
        %v2385 = vsel %vm2359, %v2352, %v2084
        %v2386 = vsel %vm2359, %v2353, %v2086
        %v2387 = vsel %vm2359, %v2354, %v2088
        %v2388 = vsel %vm2359, %v2355, %v2090
        %v2389 = vsel %vm2359, %v2356, %v2092
        %v2390 = vsel %vm2359, %v2357, %v2094
        %v2391 = vsel %vm2359, %v2358, %v2096
        %v2393 = vperm.slane %v815, 0
        %vm2395 = vcmask 220160
        %v2397 = vsel %vm2395, %v2360, 0
        %v2400 = vsel %vm2395, %v2361, 0
        %v2403 = vsel %vm2395, %v2362, 0
        %v2406 = vsel %vm2395, %v2363, 0
        %v2409 = vsel %vm2395, %v2364, 0
        %v2412 = vsel %vm2395, %v2365, 0
        %v2415 = vsel %vm2395, %v2366, 0
        %v2418 = vsel %vm2395, %v2367, 0
        %v2421 = vsel %vm2395, %v2368, 0
        %v2424 = vsel %vm2395, %v2369, 0
        %v2427 = vsel %vm2395, %v2370, 0
        %v2430 = vsel %vm2395, %v2371, 0
        %v2433 = vsel %vm2395, %v2372, 0
        %v2436 = vsel %vm2395, %v2373, 0
        %v2439 = vsel %vm2395, %v2374, 0
        %v2442 = vsel %vm2395, %v2375, 0
        %v2445 = vsel %vm2395, %v2376, 0
        %v2448 = vsel %vm2395, %v2377, 0
        %v2451 = vsel %vm2395, %v2378, 0
        %v2454 = vsel %vm2395, %v2379, 0
        %v2457 = vsel %vm2395, %v2380, 0
        %v2460 = vsel %vm2395, %v2381, 0
        %v2463 = vsel %vm2395, %v2382, 0
        %v2466 = vsel %vm2395, %v2383, 0
        %v2469 = vsel %vm2395, %v2384, 0
        %v2472 = vsel %vm2395, %v2385, 0
        %v2475 = vsel %vm2395, %v2386, 0
        %v2478 = vsel %vm2395, %v2387, 0
        %v2481 = vsel %vm2395, %v2388, 0
        %v2484 = vsel %vm2395, %v2389, 0
        %v2487 = vsel %vm2395, %v2390, 0
        %v2490 = vsel %vm2395, %v2391, 0
        %vm2492 = vcmask 1042432
        %v2494 = vsel %vm2492, %v814, 0
        %2496 = vmatpush.msra.mxu0 0.0
        %2497 = vmatpush.msra.mxu0 0.0
        %2498 = vmatpush.msra.mxu0 0.0
        %2499 = vmatpush.msra.mxu0 0.0
        %2500 = vmatpush.msra.mxu0 0.0
        %2501 = vmatpush.msra.mxu0 0.0
        %2502 = vmatpush.msra.mxu0 0.0
        %2503 = vmatpush.msra.mxu0 0.0
        %2504 = vmatpush.msra.mxu0 0.0
        %2505 = vmatpush.msra.mxu0 0.0
        %2506 = vmatpush.msra.mxu0 0.0
        %2507 = vmatpush.msra.mxu0 0.0
        %2508 = vmatpush.msra.mxu0 %v2494
        %2509 = vmatpush.msra.mxu0 %v813
        %2510 = vmatpush.msra.mxu0 %v812
        %2511 = vmatpush.msra.mxu0 %v811
        %2512 = vmatmul.f32.gmra.mxu0 %v2397
        %v2513 = vpop.f32.mrf.mxu0
        %v2514 = vadd.f32 %v2393, %v2513
        %2515 = vmatmul.f32.gmra.mxu0 %v2400
        %v2516 = vpop.f32.mrf.mxu0
        %v2517 = vadd.f32 %v2393, %v2516
        %2518 = vmatmul.f32.gmra.mxu0 %v2403
        %v2519 = vpop.f32.mrf.mxu0
        %v2520 = vadd.f32 %v2393, %v2519
        %2521 = vmatmul.f32.gmra.mxu0 %v2406
        %v2522 = vpop.f32.mrf.mxu0
        %v2523 = vadd.f32 %v2393, %v2522
        %2524 = vmatmul.f32.gmra.mxu0 %v2409
        %v2525 = vpop.f32.mrf.mxu0
        %v2526 = vadd.f32 %v2393, %v2525
        %2527 = vmatmul.f32.gmra.mxu0 %v2412
        %v2528 = vpop.f32.mrf.mxu0
        %v2529 = vadd.f32 %v2393, %v2528
        %2530 = vmatmul.f32.gmra.mxu0 %v2415
        %v2531 = vpop.f32.mrf.mxu0
        %v2532 = vadd.f32 %v2393, %v2531
        %2533 = vmatmul.f32.gmra.mxu0 %v2418
        %v2534 = vpop.f32.mrf.mxu0
        %v2535 = vadd.f32 %v2393, %v2534
        %2536 = vmatmul.f32.gmra.mxu0 %v2421
        %v2537 = vpop.f32.mrf.mxu0
        %v2538 = vadd.f32 %v2393, %v2537
        %2539 = vmatmul.f32.gmra.mxu0 %v2424
        %v2540 = vpop.f32.mrf.mxu0
        %v2541 = vadd.f32 %v2393, %v2540
        %2542 = vmatmul.f32.gmra.mxu0 %v2427
        %v2543 = vpop.f32.mrf.mxu0
        %v2544 = vadd.f32 %v2393, %v2543
        %2545 = vmatmul.f32.gmra.mxu0 %v2430
        %v2546 = vpop.f32.mrf.mxu0
        %v2547 = vadd.f32 %v2393, %v2546
        %2548 = vmatmul.f32.gmra.mxu0 %v2433
        %v2549 = vpop.f32.mrf.mxu0
        %v2550 = vadd.f32 %v2393, %v2549
        %2551 = vmatmul.f32.gmra.mxu0 %v2436
        %v2552 = vpop.f32.mrf.mxu0
        %v2553 = vadd.f32 %v2393, %v2552
        %2554 = vmatmul.f32.gmra.mxu0 %v2439
        %v2555 = vpop.f32.mrf.mxu0
        %v2556 = vadd.f32 %v2393, %v2555
        %2557 = vmatmul.f32.gmra.mxu0 %v2442
        %v2558 = vpop.f32.mrf.mxu0
        %v2559 = vadd.f32 %v2393, %v2558
        %2560 = vmatmul.f32.gmra.mxu0 %v2445
        %v2561 = vpop.f32.mrf.mxu0
        %v2562 = vadd.f32 %v2393, %v2561
        %2563 = vmatmul.f32.gmra.mxu0 %v2448
        %v2564 = vpop.f32.mrf.mxu0
        %v2565 = vadd.f32 %v2393, %v2564
        %2566 = vmatmul.f32.gmra.mxu0 %v2451
        %v2567 = vpop.f32.mrf.mxu0
        %v2568 = vadd.f32 %v2393, %v2567
        %2569 = vmatmul.f32.gmra.mxu0 %v2454
        %v2570 = vpop.f32.mrf.mxu0
        %v2571 = vadd.f32 %v2393, %v2570
        %2572 = vmatmul.f32.gmra.mxu0 %v2457
        %v2573 = vpop.f32.mrf.mxu0
        %v2574 = vadd.f32 %v2393, %v2573
        %2575 = vmatmul.f32.gmra.mxu0 %v2460
        %v2576 = vpop.f32.mrf.mxu0
        %v2577 = vadd.f32 %v2393, %v2576
        %2578 = vmatmul.f32.gmra.mxu0 %v2463
        %v2579 = vpop.f32.mrf.mxu0
        %v2580 = vadd.f32 %v2393, %v2579
        %2581 = vmatmul.f32.gmra.mxu0 %v2466
        %v2582 = vpop.f32.mrf.mxu0
        %v2583 = vadd.f32 %v2393, %v2582
        %2584 = vmatmul.f32.gmra.mxu0 %v2469
        %v2585 = vpop.f32.mrf.mxu0
        %v2586 = vadd.f32 %v2393, %v2585
        %2587 = vmatmul.f32.gmra.mxu0 %v2472
        %v2588 = vpop.f32.mrf.mxu0
        %v2589 = vadd.f32 %v2393, %v2588
        %2590 = vmatmul.f32.gmra.mxu0 %v2475
        %v2591 = vpop.f32.mrf.mxu0
        %v2592 = vadd.f32 %v2393, %v2591
        %2593 = vmatmul.f32.gmra.mxu0 %v2478
        %v2594 = vpop.f32.mrf.mxu0
        %v2595 = vadd.f32 %v2393, %v2594
        %2596 = vmatmul.f32.gmra.mxu0 %v2481
        %v2597 = vpop.f32.mrf.mxu0
        %v2598 = vadd.f32 %v2393, %v2597
        %2599 = vmatmul.f32.gmra.mxu0 %v2484
        %v2600 = vpop.f32.mrf.mxu0
        %v2601 = vadd.f32 %v2393, %v2600
        %2602 = vmatmul.f32.gmra.mxu0 %v2487
        %v2603 = vpop.f32.mrf.mxu0
        %v2604 = vadd.f32 %v2393, %v2603
        %2605 = vmatmul.f32.gmra.mxu0 %v2490
        %v2606 = vpop.f32.mrf.mxu0
        %v2607 = vadd.f32 %v2393, %v2606
        %2608 = vdwg.mxu0
        %v2609 = vmax.f32 %v2514, 0.0
        %v2610 = vmax.f32 %v2517, 0.0
        %v2611 = vmax.f32 %v2520, 0.0
        %v2612 = vmax.f32 %v2523, 0.0
        %v2613 = vmax.f32 %v2526, 0.0
        %v2614 = vmax.f32 %v2529, 0.0
        %v2615 = vmax.f32 %v2532, 0.0
        %v2616 = vmax.f32 %v2535, 0.0
        %v2617 = vmax.f32 %v2538, 0.0
        %v2618 = vmax.f32 %v2541, 0.0
        %v2619 = vmax.f32 %v2544, 0.0
        %v2620 = vmax.f32 %v2547, 0.0
        %v2621 = vmax.f32 %v2550, 0.0
        %v2622 = vmax.f32 %v2553, 0.0
        %v2623 = vmax.f32 %v2556, 0.0
        %v2624 = vmax.f32 %v2559, 0.0
        %v2625 = vmax.f32 %v2562, 0.0
        %v2626 = vmax.f32 %v2565, 0.0
        %v2627 = vmax.f32 %v2568, 0.0
        %v2628 = vmax.f32 %v2571, 0.0
        %v2629 = vmax.f32 %v2574, 0.0
        %v2630 = vmax.f32 %v2577, 0.0
        %v2631 = vmax.f32 %v2580, 0.0
        %v2632 = vmax.f32 %v2583, 0.0
        %v2633 = vmax.f32 %v2586, 0.0
        %v2634 = vmax.f32 %v2589, 0.0
        %v2635 = vmax.f32 %v2592, 0.0
        %v2636 = vmax.f32 %v2595, 0.0
        %v2637 = vmax.f32 %v2598, 0.0
        %v2638 = vmax.f32 %v2601, 0.0
        %v2639 = vmax.f32 %v2604, 0.0
        %v2640 = vmax.f32 %v2607, 0.0
        %2641 = vst.msk [vmem:[#allocation3] sm:$0xff] %vm481, %v2609
        %2642 = vst.msk [vmem:[#allocation3 + $0x8] sm:$0xff] %vm481, %v2610
        %2643 = vst.msk [vmem:[#allocation3 + $0x10] sm:$0xff] %vm481, %v2611
        %2644 = vst.msk [vmem:[#allocation3 + $0x18] sm:$0xff] %vm481, %v2612
        %2645 = vst.msk [vmem:[#allocation3 + $0x20] sm:$0xff] %vm481, %v2613
        %2646 = vst.msk [vmem:[#allocation3 + $0x28] sm:$0xff] %vm481, %v2614
        %2647 = vst.msk [vmem:[#allocation3 + $0x30] sm:$0xff] %vm481, %v2615
        %2648 = vst.msk [vmem:[#allocation3 + $0x38] sm:$0xff] %vm481, %v2616
        %2649 = vst.msk [vmem:[#allocation3 + $0x40] sm:$0xff] %vm481, %v2617
        %2650 = vst.msk [vmem:[#allocation3 + $0x48] sm:$0xff] %vm481, %v2618
        %2651 = vst.msk [vmem:[#allocation3 + $0x50] sm:$0xff] %vm481, %v2619
        %2652 = vst.msk [vmem:[#allocation3 + $0x58] sm:$0xff] %vm481, %v2620
        %2653 = vst.msk [vmem:[#allocation3 + $0x60] sm:$0xff] %vm481, %v2621
        %2654 = vst.msk [vmem:[#allocation3 + $0x68] sm:$0xff] %vm481, %v2622
        %2655 = vst.msk [vmem:[#allocation3 + $0x70] sm:$0xff] %vm481, %v2623
        %2656 = vst.msk [vmem:[#allocation3 + $0x78] sm:$0xff] %vm481, %v2624
        %2657 = vst.msk [vmem:[#allocation3 + $0x80] sm:$0xff] %vm481, %v2625
        %2658 = vst.msk [vmem:[#allocation3 + $0x88] sm:$0xff] %vm481, %v2626
        %2659 = vst.msk [vmem:[#allocation3 + $0x90] sm:$0xff] %vm481, %v2627
        %2660 = vst.msk [vmem:[#allocation3 + $0x98] sm:$0xff] %vm481, %v2628
        %2661 = vst.msk [vmem:[#allocation3 + $0xa0] sm:$0xff] %vm481, %v2629
        %2662 = vst.msk [vmem:[#allocation3 + $0xa8] sm:$0xff] %vm481, %v2630
        %2663 = vst.msk [vmem:[#allocation3 + $0xb0] sm:$0xff] %vm481, %v2631
        %2664 = vst.msk [vmem:[#allocation3 + $0xb8] sm:$0xff] %vm481, %v2632
        %2665 = vst.msk [vmem:[#allocation3 + $0xc0] sm:$0xff] %vm481, %v2633
        %2666 = vst.msk [vmem:[#allocation3 + $0xc8] sm:$0xff] %vm481, %v2634
        %2667 = vst.msk [vmem:[#allocation3 + $0xd0] sm:$0xff] %vm481, %v2635
        %2668 = vst.msk [vmem:[#allocation3 + $0xd8] sm:$0xff] %vm481, %v2636
        %2669 = vst.msk [vmem:[#allocation3 + $0xe0] sm:$0xff] %vm481, %v2637
        %2670 = vst.msk [vmem:[#allocation3 + $0xe8] sm:$0xff] %vm481, %v2638
        %2671 = vst.msk [vmem:[#allocation3 + $0xf0] sm:$0xff] %vm481, %v2639
        %2672 = vst.msk [vmem:[#allocation3 + $0xf8] sm:$0xff] %vm481, %v2640
        %s2673 = scalar_lea.vmem [#allocation2], 384
        %v2674 = vld [vmem:[%s2673 + $0x7] sm:$0xff]
        %v2675 = vld [vmem:[%s2673 + $0xf] sm:$0xff]
        %v2676 = vld [vmem:[%s2673 + $0x17] sm:$0xff]
        %v2677 = vld [vmem:[%s2673 + $0x1f] sm:$0xff]
        %v2678 = vld [vmem:[%s2673 + $0x37] sm:$0xff]
        %v2679 = vld [vmem:[%s2673 + $0x3f] sm:$0xff]
        %v2680 = vld [vmem:[%s2673 + $0x47] sm:$0xff]
        %v2681 = vld [vmem:[%s2673 + $0x4f] sm:$0xff]
        %v2682 = vld [vmem:[%s2673 + $0x67] sm:$0xff]
        %v2683 = vld [vmem:[%s2673 + $0x6f] sm:$0xff]
        %v2684 = vld [vmem:[%s2673 + $0x77] sm:$0xff]
        %v2685 = vld [vmem:[%s2673 + $0x7f] sm:$0xff]
        %v2686 = vld [vmem:[%s2673 + $0x97] sm:$0xff]
        %v2687 = vld [vmem:[%s2673 + $0x9f] sm:$0xff]
        %v2688 = vld [vmem:[%s2673 + $0xa7] sm:$0xff]
        %v2689 = vld [vmem:[%s2673 + $0xaf] sm:$0xff]
        %v2690 = vld [vmem:[%s2673 + $0xc7] sm:$0xff]
        %v2691 = vld [vmem:[%s2673 + $0xcf] sm:$0xff]
        %v2692 = vld [vmem:[%s2673 + $0xd7] sm:$0xff]
        %v2693 = vld [vmem:[%s2673 + $0xdf] sm:$0xff]
        %v2694 = vld [vmem:[%s2673 + $0xf7] sm:$0xff]
        %v2695 = vld [vmem:[%s2673 + $0xff] sm:$0xff]
        %v2696 = vld [vmem:[%s2673 + $0x107] sm:$0xff]
        %v2697 = vld [vmem:[%s2673 + $0x10f] sm:$0xff]
        %v2698 = vld [vmem:[%s2673 + $0x127] sm:$0xff]
        %v2699 = vld [vmem:[%s2673 + $0x12f] sm:$0xff]
        %v2700 = vld [vmem:[%s2673 + $0x137] sm:$0xff]
        %v2701 = vld [vmem:[%s2673 + $0x13f] sm:$0xff]
        %v2702 = vld [vmem:[%s2673 + $0x157] sm:$0xff]
        %v2703 = vld [vmem:[%s2673 + $0x15f] sm:$0xff]
        %v2704 = vld [vmem:[%s2673 + $0x167] sm:$0xff]
        %v2705 = vld [vmem:[%s2673 + $0x16f] sm:$0xff]
        %v2706 = vld [vmem:[%s2673 + $0x8] sm:$0xff]
        %v2707 = vld [vmem:[%s2673 + $0x10] sm:$0xff]
        %v2708 = vld [vmem:[%s2673 + $0x18] sm:$0xff]
        %v2709 = vld [vmem:[%s2673 + $0x20] sm:$0xff]
        %v2710 = vld [vmem:[%s2673 + $0x38] sm:$0xff]
        %v2711 = vld [vmem:[%s2673 + $0x40] sm:$0xff]
        %v2712 = vld [vmem:[%s2673 + $0x48] sm:$0xff]
        %v2713 = vld [vmem:[%s2673 + $0x50] sm:$0xff]
        %v2714 = vld [vmem:[%s2673 + $0x68] sm:$0xff]
        %v2715 = vld [vmem:[%s2673 + $0x70] sm:$0xff]
        %v2716 = vld [vmem:[%s2673 + $0x78] sm:$0xff]
        %v2717 = vld [vmem:[%s2673 + $0x80] sm:$0xff]
        %v2718 = vld [vmem:[%s2673 + $0x98] sm:$0xff]
        %v2719 = vld [vmem:[%s2673 + $0xa0] sm:$0xff]
        %v2720 = vld [vmem:[%s2673 + $0xa8] sm:$0xff]
        %v2721 = vld [vmem:[%s2673 + $0xb0] sm:$0xff]
        %v2722 = vld [vmem:[%s2673 + $0xc8] sm:$0xff]
        %v2723 = vld [vmem:[%s2673 + $0xd0] sm:$0xff]
        %v2724 = vld [vmem:[%s2673 + $0xd8] sm:$0xff]
        %v2725 = vld [vmem:[%s2673 + $0xe0] sm:$0xff]
        %v2726 = vld [vmem:[%s2673 + $0xf8] sm:$0xff]
        %v2727 = vld [vmem:[%s2673 + $0x100] sm:$0xff]
        %v2728 = vld [vmem:[%s2673 + $0x108] sm:$0xff]
        %v2729 = vld [vmem:[%s2673 + $0x110] sm:$0xff]
        %v2730 = vld [vmem:[%s2673 + $0x128] sm:$0xff]
        %v2731 = vld [vmem:[%s2673 + $0x130] sm:$0xff]
        %v2732 = vld [vmem:[%s2673 + $0x138] sm:$0xff]
        %v2733 = vld [vmem:[%s2673 + $0x140] sm:$0xff]
        %v2734 = vld [vmem:[%s2673 + $0x158] sm:$0xff]
        %v2735 = vld [vmem:[%s2673 + $0x160] sm:$0xff]
        %v2736 = vld [vmem:[%s2673 + $0x168] sm:$0xff]
        %v2737 = vld [vmem:[%s2673 + $0x170] sm:$0xff]
        %v2738 = vld [vmem:[%s2673 + $0x9] sm:$0xff]
        %v2739 = vld [vmem:[%s2673 + $0x11] sm:$0xff]
        %v2740 = vld [vmem:[%s2673 + $0x19] sm:$0xff]
        %v2741 = vld [vmem:[%s2673 + $0x21] sm:$0xff]
        %v2742 = vld [vmem:[%s2673 + $0x39] sm:$0xff]
        %v2743 = vld [vmem:[%s2673 + $0x41] sm:$0xff]
        %v2744 = vld [vmem:[%s2673 + $0x49] sm:$0xff]
        %v2745 = vld [vmem:[%s2673 + $0x51] sm:$0xff]
        %v2746 = vld [vmem:[%s2673 + $0x69] sm:$0xff]
        %v2747 = vld [vmem:[%s2673 + $0x71] sm:$0xff]
        %v2748 = vld [vmem:[%s2673 + $0x79] sm:$0xff]
        %v2749 = vld [vmem:[%s2673 + $0x81] sm:$0xff]
        %v2750 = vld [vmem:[%s2673 + $0x99] sm:$0xff]
        %v2751 = vld [vmem:[%s2673 + $0xa1] sm:$0xff]
        %v2752 = vld [vmem:[%s2673 + $0xa9] sm:$0xff]
        %v2753 = vld [vmem:[%s2673 + $0xb1] sm:$0xff]
        %v2754 = vld [vmem:[%s2673 + $0xc9] sm:$0xff]
        %v2755 = vld [vmem:[%s2673 + $0xd1] sm:$0xff]
        %v2756 = vld [vmem:[%s2673 + $0xd9] sm:$0xff]
        %v2757 = vld [vmem:[%s2673 + $0xe1] sm:$0xff]
        %v2758 = vld [vmem:[%s2673 + $0xf9] sm:$0xff]
        %v2759 = vld [vmem:[%s2673 + $0x101] sm:$0xff]
        %v2760 = vld [vmem:[%s2673 + $0x109] sm:$0xff]
        %v2761 = vld [vmem:[%s2673 + $0x111] sm:$0xff]
        %v2762 = vld [vmem:[%s2673 + $0x129] sm:$0xff]
        %v2763 = vld [vmem:[%s2673 + $0x131] sm:$0xff]
        %v2764 = vld [vmem:[%s2673 + $0x139] sm:$0xff]
        %v2765 = vld [vmem:[%s2673 + $0x141] sm:$0xff]
        %v2766 = vld [vmem:[%s2673 + $0x159] sm:$0xff]
        %v2767 = vld [vmem:[%s2673 + $0x161] sm:$0xff]
        %v2768 = vld [vmem:[%s2673 + $0x169] sm:$0xff]
        %v2769 = vld [vmem:[%s2673 + $0x171] sm:$0xff]
        %s2770 = scalar_lea.vmem [#allocation2], 432
        %v2771 = vld [vmem:[%s2770 + $0x7] sm:$0xff]
        %v2772 = vld [vmem:[%s2770 + $0xf] sm:$0xff]
        %v2773 = vld [vmem:[%s2770 + $0x17] sm:$0xff]
        %v2774 = vld [vmem:[%s2770 + $0x1f] sm:$0xff]
        %v2775 = vld [vmem:[%s2770 + $0x37] sm:$0xff]
        %v2776 = vld [vmem:[%s2770 + $0x3f] sm:$0xff]
        %v2777 = vld [vmem:[%s2770 + $0x47] sm:$0xff]
        %v2778 = vld [vmem:[%s2770 + $0x4f] sm:$0xff]
        %v2779 = vld [vmem:[%s2770 + $0x67] sm:$0xff]
        %v2780 = vld [vmem:[%s2770 + $0x6f] sm:$0xff]
        %v2781 = vld [vmem:[%s2770 + $0x77] sm:$0xff]
        %v2782 = vld [vmem:[%s2770 + $0x7f] sm:$0xff]
        %v2783 = vld [vmem:[%s2770 + $0x97] sm:$0xff]
        %v2784 = vld [vmem:[%s2770 + $0x9f] sm:$0xff]
        %v2785 = vld [vmem:[%s2770 + $0xa7] sm:$0xff]
        %v2786 = vld [vmem:[%s2770 + $0xaf] sm:$0xff]
        %v2787 = vld [vmem:[%s2770 + $0xc7] sm:$0xff]
        %v2788 = vld [vmem:[%s2770 + $0xcf] sm:$0xff]
        %v2789 = vld [vmem:[%s2770 + $0xd7] sm:$0xff]
        %v2790 = vld [vmem:[%s2770 + $0xdf] sm:$0xff]
        %v2791 = vld [vmem:[%s2770 + $0xf7] sm:$0xff]
        %v2792 = vld [vmem:[%s2770 + $0xff] sm:$0xff]
        %v2793 = vld [vmem:[%s2770 + $0x107] sm:$0xff]
        %v2794 = vld [vmem:[%s2770 + $0x10f] sm:$0xff]
        %v2795 = vld [vmem:[%s2770 + $0x127] sm:$0xff]
        %v2796 = vld [vmem:[%s2770 + $0x12f] sm:$0xff]
        %v2797 = vld [vmem:[%s2770 + $0x137] sm:$0xff]
        %v2798 = vld [vmem:[%s2770 + $0x13f] sm:$0xff]
        %v2799 = vld [vmem:[%s2770 + $0x157] sm:$0xff]
        %v2800 = vld [vmem:[%s2770 + $0x15f] sm:$0xff]
        %v2801 = vld [vmem:[%s2770 + $0x167] sm:$0xff]
        %v2802 = vld [vmem:[%s2770 + $0x16f] sm:$0xff]
        %v2803 = vld [vmem:[%s2770 + $0x8] sm:$0xff]
        %v2804 = vld [vmem:[%s2770 + $0x10] sm:$0xff]
        %v2805 = vld [vmem:[%s2770 + $0x18] sm:$0xff]
        %v2806 = vld [vmem:[%s2770 + $0x20] sm:$0xff]
        %v2807 = vld [vmem:[%s2770 + $0x38] sm:$0xff]
        %v2808 = vld [vmem:[%s2770 + $0x40] sm:$0xff]
        %v2809 = vld [vmem:[%s2770 + $0x48] sm:$0xff]
        %v2810 = vld [vmem:[%s2770 + $0x50] sm:$0xff]
        %v2811 = vld [vmem:[%s2770 + $0x68] sm:$0xff]
        %v2812 = vld [vmem:[%s2770 + $0x70] sm:$0xff]
        %v2813 = vld [vmem:[%s2770 + $0x78] sm:$0xff]
        %v2814 = vld [vmem:[%s2770 + $0x80] sm:$0xff]
        %v2815 = vld [vmem:[%s2770 + $0x98] sm:$0xff]
        %v2816 = vld [vmem:[%s2770 + $0xa0] sm:$0xff]
        %v2817 = vld [vmem:[%s2770 + $0xa8] sm:$0xff]
        %v2818 = vld [vmem:[%s2770 + $0xb0] sm:$0xff]
        %v2819 = vld [vmem:[%s2770 + $0xc8] sm:$0xff]
        %v2820 = vld [vmem:[%s2770 + $0xd0] sm:$0xff]
        %v2821 = vld [vmem:[%s2770 + $0xd8] sm:$0xff]
        %v2822 = vld [vmem:[%s2770 + $0xe0] sm:$0xff]
        %v2823 = vld [vmem:[%s2770 + $0xf8] sm:$0xff]
        %v2824 = vld [vmem:[%s2770 + $0x100] sm:$0xff]
        %v2825 = vld [vmem:[%s2770 + $0x108] sm:$0xff]
        %v2826 = vld [vmem:[%s2770 + $0x110] sm:$0xff]
        %v2827 = vld [vmem:[%s2770 + $0x128] sm:$0xff]
        %v2828 = vld [vmem:[%s2770 + $0x130] sm:$0xff]
        %v2829 = vld [vmem:[%s2770 + $0x138] sm:$0xff]
        %v2830 = vld [vmem:[%s2770 + $0x140] sm:$0xff]
        %v2831 = vld [vmem:[%s2770 + $0x158] sm:$0xff]
        %v2832 = vld [vmem:[%s2770 + $0x160] sm:$0xff]
        %v2833 = vld [vmem:[%s2770 + $0x168] sm:$0xff]
        %v2834 = vld [vmem:[%s2770 + $0x170] sm:$0xff]
        %v2835 = vld [vmem:[%s2770 + $0x9] sm:$0xff]
        %v2836 = vld [vmem:[%s2770 + $0x11] sm:$0xff]
        %v2837 = vld [vmem:[%s2770 + $0x19] sm:$0xff]
        %v2838 = vld [vmem:[%s2770 + $0x21] sm:$0xff]
        %v2839 = vld [vmem:[%s2770 + $0x39] sm:$0xff]
        %v2840 = vld [vmem:[%s2770 + $0x41] sm:$0xff]
        %v2841 = vld [vmem:[%s2770 + $0x49] sm:$0xff]
        %v2842 = vld [vmem:[%s2770 + $0x51] sm:$0xff]
        %v2843 = vld [vmem:[%s2770 + $0x69] sm:$0xff]
        %v2844 = vld [vmem:[%s2770 + $0x71] sm:$0xff]
        %v2845 = vld [vmem:[%s2770 + $0x79] sm:$0xff]
        %v2846 = vld [vmem:[%s2770 + $0x81] sm:$0xff]
        %v2847 = vld [vmem:[%s2770 + $0x99] sm:$0xff]
        %v2848 = vld [vmem:[%s2770 + $0xa1] sm:$0xff]
        %v2849 = vld [vmem:[%s2770 + $0xa9] sm:$0xff]
        %v2850 = vld [vmem:[%s2770 + $0xb1] sm:$0xff]
        %v2851 = vld [vmem:[%s2770 + $0xc9] sm:$0xff]
        %v2852 = vld [vmem:[%s2770 + $0xd1] sm:$0xff]
        %v2853 = vld [vmem:[%s2770 + $0xd9] sm:$0xff]
        %v2854 = vld [vmem:[%s2770 + $0xe1] sm:$0xff]
        %v2855 = vld [vmem:[%s2770 + $0xf9] sm:$0xff]
        %v2856 = vld [vmem:[%s2770 + $0x101] sm:$0xff]
        %v2857 = vld [vmem:[%s2770 + $0x109] sm:$0xff]
        %v2858 = vld [vmem:[%s2770 + $0x111] sm:$0xff]
        %v2859 = vld [vmem:[%s2770 + $0x129] sm:$0xff]
        %v2860 = vld [vmem:[%s2770 + $0x131] sm:$0xff]
        %v2861 = vld [vmem:[%s2770 + $0x139] sm:$0xff]
        %v2862 = vld [vmem:[%s2770 + $0x141] sm:$0xff]
        %v2863 = vld [vmem:[%s2770 + $0x159] sm:$0xff]
        %v2864 = vld [vmem:[%s2770 + $0x161] sm:$0xff]
        %v2865 = vld [vmem:[%s2770 + $0x169] sm:$0xff]
        %v2866 = vld [vmem:[%s2770 + $0x171] sm:$0xff]
        %s2867 = scalar_lea.vmem [#allocation2], 480
        %v2868 = vld [vmem:[%s2867 + $0x7] sm:$0xff]
        %v2869 = vld [vmem:[%s2867 + $0xf] sm:$0xff]
        %v2870 = vld [vmem:[%s2867 + $0x17] sm:$0xff]
        %v2871 = vld [vmem:[%s2867 + $0x1f] sm:$0xff]
        %v2872 = vld [vmem:[%s2867 + $0x37] sm:$0xff]
        %v2873 = vld [vmem:[%s2867 + $0x3f] sm:$0xff]
        %v2874 = vld [vmem:[%s2867 + $0x47] sm:$0xff]
        %v2875 = vld [vmem:[%s2867 + $0x4f] sm:$0xff]
        %v2876 = vld [vmem:[%s2867 + $0x67] sm:$0xff]
        %v2877 = vld [vmem:[%s2867 + $0x6f] sm:$0xff]
        %v2878 = vld [vmem:[%s2867 + $0x77] sm:$0xff]
        %v2879 = vld [vmem:[%s2867 + $0x7f] sm:$0xff]
        %v2880 = vld [vmem:[%s2867 + $0x97] sm:$0xff]
        %v2881 = vld [vmem:[%s2867 + $0x9f] sm:$0xff]
        %v2882 = vld [vmem:[%s2867 + $0xa7] sm:$0xff]
        %v2883 = vld [vmem:[%s2867 + $0xaf] sm:$0xff]
        %v2884 = vld [vmem:[%s2867 + $0xc7] sm:$0xff]
        %v2885 = vld [vmem:[%s2867 + $0xcf] sm:$0xff]
        %v2886 = vld [vmem:[%s2867 + $0xd7] sm:$0xff]
        %v2887 = vld [vmem:[%s2867 + $0xdf] sm:$0xff]
        %v2888 = vld [vmem:[%s2867 + $0xf7] sm:$0xff]
        %v2889 = vld [vmem:[%s2867 + $0xff] sm:$0xff]
        %v2890 = vld [vmem:[%s2867 + $0x107] sm:$0xff]
        %v2891 = vld [vmem:[%s2867 + $0x10f] sm:$0xff]
        %v2892 = vld [vmem:[%s2867 + $0x127] sm:$0xff]
        %v2893 = vld [vmem:[%s2867 + $0x12f] sm:$0xff]
        %v2894 = vld [vmem:[%s2867 + $0x137] sm:$0xff]
        %v2895 = vld [vmem:[%s2867 + $0x13f] sm:$0xff]
        %v2896 = vld [vmem:[%s2867 + $0x157] sm:$0xff]
        %v2897 = vld [vmem:[%s2867 + $0x15f] sm:$0xff]
        %v2898 = vld [vmem:[%s2867 + $0x167] sm:$0xff]
        %v2899 = vld [vmem:[%s2867 + $0x16f] sm:$0xff]
        %v2900 = vld [vmem:[%s2867 + $0x8] sm:$0xff]
        %v2901 = vld [vmem:[%s2867 + $0x10] sm:$0xff]
        %v2902 = vld [vmem:[%s2867 + $0x18] sm:$0xff]
        %v2903 = vld [vmem:[%s2867 + $0x20] sm:$0xff]
        %v2904 = vld [vmem:[%s2867 + $0x38] sm:$0xff]
        %v2905 = vld [vmem:[%s2867 + $0x40] sm:$0xff]
        %v2906 = vld [vmem:[%s2867 + $0x48] sm:$0xff]
        %v2907 = vld [vmem:[%s2867 + $0x50] sm:$0xff]
        %v2908 = vld [vmem:[%s2867 + $0x68] sm:$0xff]
        %v2909 = vld [vmem:[%s2867 + $0x70] sm:$0xff]
        %v2910 = vld [vmem:[%s2867 + $0x78] sm:$0xff]
        %v2911 = vld [vmem:[%s2867 + $0x80] sm:$0xff]
        %v2912 = vld [vmem:[%s2867 + $0x98] sm:$0xff]
        %v2913 = vld [vmem:[%s2867 + $0xa0] sm:$0xff]
        %v2914 = vld [vmem:[%s2867 + $0xa8] sm:$0xff]
        %v2915 = vld [vmem:[%s2867 + $0xb0] sm:$0xff]
        %v2916 = vld [vmem:[%s2867 + $0xc8] sm:$0xff]
        %v2917 = vld [vmem:[%s2867 + $0xd0] sm:$0xff]
        %v2918 = vld [vmem:[%s2867 + $0xd8] sm:$0xff]
        %v2919 = vld [vmem:[%s2867 + $0xe0] sm:$0xff]
        %v2920 = vld [vmem:[%s2867 + $0xf8] sm:$0xff]
        %v2921 = vld [vmem:[%s2867 + $0x100] sm:$0xff]
        %v2922 = vld [vmem:[%s2867 + $0x108] sm:$0xff]
        %v2923 = vld [vmem:[%s2867 + $0x110] sm:$0xff]
        %v2924 = vld [vmem:[%s2867 + $0x128] sm:$0xff]
        %v2925 = vld [vmem:[%s2867 + $0x130] sm:$0xff]
        %v2926 = vld [vmem:[%s2867 + $0x138] sm:$0xff]
        %v2927 = vld [vmem:[%s2867 + $0x140] sm:$0xff]
        %v2928 = vld [vmem:[%s2867 + $0x158] sm:$0xff]
        %v2929 = vld [vmem:[%s2867 + $0x160] sm:$0xff]
        %v2930 = vld [vmem:[%s2867 + $0x168] sm:$0xff]
        %v2931 = vld [vmem:[%s2867 + $0x170] sm:$0xff]
        %v2932 = vld [vmem:[%s2867 + $0x9] sm:$0xff]
        %v2933 = vld [vmem:[%s2867 + $0x11] sm:$0xff]
        %v2934 = vld [vmem:[%s2867 + $0x19] sm:$0xff]
        %v2935 = vld [vmem:[%s2867 + $0x21] sm:$0xff]
        %v2936 = vld [vmem:[%s2867 + $0x39] sm:$0xff]
        %v2937 = vld [vmem:[%s2867 + $0x41] sm:$0xff]
        %v2938 = vld [vmem:[%s2867 + $0x49] sm:$0xff]
        %v2939 = vld [vmem:[%s2867 + $0x51] sm:$0xff]
        %v2940 = vld [vmem:[%s2867 + $0x69] sm:$0xff]
        %v2941 = vld [vmem:[%s2867 + $0x71] sm:$0xff]
        %v2942 = vld [vmem:[%s2867 + $0x79] sm:$0xff]
        %v2943 = vld [vmem:[%s2867 + $0x81] sm:$0xff]
        %v2944 = vld [vmem:[%s2867 + $0x99] sm:$0xff]
        %v2945 = vld [vmem:[%s2867 + $0xa1] sm:$0xff]
        %v2946 = vld [vmem:[%s2867 + $0xa9] sm:$0xff]
        %v2947 = vld [vmem:[%s2867 + $0xb1] sm:$0xff]
        %v2948 = vld [vmem:[%s2867 + $0xc9] sm:$0xff]
        %v2949 = vld [vmem:[%s2867 + $0xd1] sm:$0xff]
        %v2950 = vld [vmem:[%s2867 + $0xd9] sm:$0xff]
        %v2951 = vld [vmem:[%s2867 + $0xe1] sm:$0xff]
        %v2952 = vld [vmem:[%s2867 + $0xf9] sm:$0xff]
        %v2953 = vld [vmem:[%s2867 + $0x101] sm:$0xff]
        %v2954 = vld [vmem:[%s2867 + $0x109] sm:$0xff]
        %v2955 = vld [vmem:[%s2867 + $0x111] sm:$0xff]
        %v2956 = vld [vmem:[%s2867 + $0x129] sm:$0xff]
        %v2957 = vld [vmem:[%s2867 + $0x131] sm:$0xff]
        %v2958 = vld [vmem:[%s2867 + $0x139] sm:$0xff]
        %v2959 = vld [vmem:[%s2867 + $0x141] sm:$0xff]
        %v2960 = vld [vmem:[%s2867 + $0x159] sm:$0xff]
        %v2961 = vld [vmem:[%s2867 + $0x161] sm:$0xff]
        %v2962 = vld [vmem:[%s2867 + $0x169] sm:$0xff]
        %v2963 = vld [vmem:[%s2867 + $0x171] sm:$0xff]
        %2996 = vrot.lane.b32.xlu0 %v2706, 3
        %v2997 = vpop.permute.xlu0 %2996
        %2998 = vrot.lane.b32.xlu0 %v2707, 3
        %v2999 = vpop.permute.xlu0 %2998
        %3000 = vrot.lane.b32.xlu0 %v2708, 3
        %v3001 = vpop.permute.xlu0 %3000
        %3002 = vrot.lane.b32.xlu0 %v2709, 3
        %v3003 = vpop.permute.xlu0 %3002
        %3004 = vrot.lane.b32.xlu0 %v2710, 3
        %v3005 = vpop.permute.xlu0 %3004
        %3006 = vrot.lane.b32.xlu0 %v2711, 3
        %v3007 = vpop.permute.xlu0 %3006
        %3008 = vrot.lane.b32.xlu0 %v2712, 3
        %v3009 = vpop.permute.xlu0 %3008
        %3010 = vrot.lane.b32.xlu0 %v2713, 3
        %v3011 = vpop.permute.xlu0 %3010
        %3012 = vrot.lane.b32.xlu0 %v2714, 3
        %v3013 = vpop.permute.xlu0 %3012
        %3014 = vrot.lane.b32.xlu0 %v2715, 3
        %v3015 = vpop.permute.xlu0 %3014
        %3016 = vrot.lane.b32.xlu0 %v2716, 3
        %v3017 = vpop.permute.xlu0 %3016
        %3018 = vrot.lane.b32.xlu0 %v2717, 3
        %v3019 = vpop.permute.xlu0 %3018
        %3020 = vrot.lane.b32.xlu0 %v2718, 3
        %v3021 = vpop.permute.xlu0 %3020
        %3022 = vrot.lane.b32.xlu0 %v2719, 3
        %v3023 = vpop.permute.xlu0 %3022
        %3024 = vrot.lane.b32.xlu0 %v2720, 3
        %v3025 = vpop.permute.xlu0 %3024
        %3026 = vrot.lane.b32.xlu0 %v2721, 3
        %v3027 = vpop.permute.xlu0 %3026
        %3028 = vrot.lane.b32.xlu0 %v2722, 3
        %v3029 = vpop.permute.xlu0 %3028
        %3030 = vrot.lane.b32.xlu0 %v2723, 3
        %v3031 = vpop.permute.xlu0 %3030
        %3032 = vrot.lane.b32.xlu0 %v2724, 3
        %v3033 = vpop.permute.xlu0 %3032
        %3034 = vrot.lane.b32.xlu0 %v2725, 3
        %v3035 = vpop.permute.xlu0 %3034
        %3036 = vrot.lane.b32.xlu0 %v2726, 3
        %v3037 = vpop.permute.xlu0 %3036
        %3038 = vrot.lane.b32.xlu0 %v2727, 3
        %v3039 = vpop.permute.xlu0 %3038
        %3040 = vrot.lane.b32.xlu0 %v2728, 3
        %v3041 = vpop.permute.xlu0 %3040
        %3042 = vrot.lane.b32.xlu0 %v2729, 3
        %v3043 = vpop.permute.xlu0 %3042
        %3044 = vrot.lane.b32.xlu0 %v2730, 3
        %v3045 = vpop.permute.xlu0 %3044
        %3046 = vrot.lane.b32.xlu0 %v2731, 3
        %v3047 = vpop.permute.xlu0 %3046
        %3048 = vrot.lane.b32.xlu0 %v2732, 3
        %v3049 = vpop.permute.xlu0 %3048
        %3050 = vrot.lane.b32.xlu0 %v2733, 3
        %v3051 = vpop.permute.xlu0 %3050
        %3052 = vrot.lane.b32.xlu0 %v2734, 3
        %v3053 = vpop.permute.xlu0 %3052
        %3054 = vrot.lane.b32.xlu0 %v2735, 3
        %v3055 = vpop.permute.xlu0 %3054
        %3056 = vrot.lane.b32.xlu0 %v2736, 3
        %v3057 = vpop.permute.xlu0 %3056
        %3058 = vrot.lane.b32.xlu0 %v2737, 3
        %v3059 = vpop.permute.xlu0 %3058
        %3124 = vrot.lane.b32.xlu0 %v2738, 6
        %v3125 = vpop.permute.xlu0 %3124
        %3126 = vrot.lane.b32.xlu0 %v2739, 6
        %v3127 = vpop.permute.xlu0 %3126
        %3128 = vrot.lane.b32.xlu0 %v2740, 6
        %v3129 = vpop.permute.xlu0 %3128
        %3130 = vrot.lane.b32.xlu0 %v2741, 6
        %v3131 = vpop.permute.xlu0 %3130
        %3132 = vrot.lane.b32.xlu0 %v2742, 6
        %v3133 = vpop.permute.xlu0 %3132
        %3134 = vrot.lane.b32.xlu0 %v2743, 6
        %v3135 = vpop.permute.xlu0 %3134
        %3136 = vrot.lane.b32.xlu0 %v2744, 6
        %v3137 = vpop.permute.xlu0 %3136
        %3138 = vrot.lane.b32.xlu0 %v2745, 6
        %v3139 = vpop.permute.xlu0 %3138
        %3140 = vrot.lane.b32.xlu0 %v2746, 6
        %v3141 = vpop.permute.xlu0 %3140
        %3142 = vrot.lane.b32.xlu0 %v2747, 6
        %v3143 = vpop.permute.xlu0 %3142
        %3144 = vrot.lane.b32.xlu0 %v2748, 6
        %v3145 = vpop.permute.xlu0 %3144
        %3146 = vrot.lane.b32.xlu0 %v2749, 6
        %v3147 = vpop.permute.xlu0 %3146
        %3148 = vrot.lane.b32.xlu0 %v2750, 6
        %v3149 = vpop.permute.xlu0 %3148
        %3150 = vrot.lane.b32.xlu0 %v2751, 6
        %v3151 = vpop.permute.xlu0 %3150
        %3152 = vrot.lane.b32.xlu0 %v2752, 6
        %v3153 = vpop.permute.xlu0 %3152
        %3154 = vrot.lane.b32.xlu0 %v2753, 6
        %v3155 = vpop.permute.xlu0 %3154
        %3156 = vrot.lane.b32.xlu0 %v2754, 6
        %v3157 = vpop.permute.xlu0 %3156
        %3158 = vrot.lane.b32.xlu0 %v2755, 6
        %v3159 = vpop.permute.xlu0 %3158
        %3160 = vrot.lane.b32.xlu0 %v2756, 6
        %v3161 = vpop.permute.xlu0 %3160
        %3162 = vrot.lane.b32.xlu0 %v2757, 6
        %v3163 = vpop.permute.xlu0 %3162
        %3164 = vrot.lane.b32.xlu0 %v2758, 6
        %v3165 = vpop.permute.xlu0 %3164
        %3166 = vrot.lane.b32.xlu0 %v2759, 6
        %v3167 = vpop.permute.xlu0 %3166
        %3168 = vrot.lane.b32.xlu0 %v2760, 6
        %v3169 = vpop.permute.xlu0 %3168
        %3170 = vrot.lane.b32.xlu0 %v2761, 6
        %v3171 = vpop.permute.xlu0 %3170
        %3172 = vrot.lane.b32.xlu0 %v2762, 6
        %v3173 = vpop.permute.xlu0 %3172
        %3174 = vrot.lane.b32.xlu0 %v2763, 6
        %v3175 = vpop.permute.xlu0 %3174
        %3176 = vrot.lane.b32.xlu0 %v2764, 6
        %v3177 = vpop.permute.xlu0 %3176
        %3178 = vrot.lane.b32.xlu0 %v2765, 6
        %v3179 = vpop.permute.xlu0 %3178
        %3180 = vrot.lane.b32.xlu0 %v2766, 6
        %v3181 = vpop.permute.xlu0 %3180
        %3182 = vrot.lane.b32.xlu0 %v2767, 6
        %v3183 = vpop.permute.xlu0 %3182
        %3184 = vrot.lane.b32.xlu0 %v2768, 6
        %v3185 = vpop.permute.xlu0 %3184
        %3186 = vrot.lane.b32.xlu0 %v2769, 6
        %v3187 = vpop.permute.xlu0 %3186
        %3252 = vrot.lane.b32.xlu0 %v2771, 9
        %v3253 = vpop.permute.xlu0 %3252
        %3254 = vrot.lane.b32.xlu0 %v2772, 9
        %v3255 = vpop.permute.xlu0 %3254
        %3256 = vrot.lane.b32.xlu0 %v2773, 9
        %v3257 = vpop.permute.xlu0 %3256
        %3258 = vrot.lane.b32.xlu0 %v2774, 9
        %v3259 = vpop.permute.xlu0 %3258
        %3260 = vrot.lane.b32.xlu0 %v2775, 9
        %v3261 = vpop.permute.xlu0 %3260
        %3262 = vrot.lane.b32.xlu0 %v2776, 9
        %v3263 = vpop.permute.xlu0 %3262
        %3264 = vrot.lane.b32.xlu0 %v2777, 9
        %v3265 = vpop.permute.xlu0 %3264
        %3266 = vrot.lane.b32.xlu0 %v2778, 9
        %v3267 = vpop.permute.xlu0 %3266
        %3268 = vrot.lane.b32.xlu0 %v2779, 9
        %v3269 = vpop.permute.xlu0 %3268
        %3270 = vrot.lane.b32.xlu0 %v2780, 9
        %v3271 = vpop.permute.xlu0 %3270
        %3272 = vrot.lane.b32.xlu0 %v2781, 9
        %v3273 = vpop.permute.xlu0 %3272
        %3274 = vrot.lane.b32.xlu0 %v2782, 9
        %v3275 = vpop.permute.xlu0 %3274
        %3276 = vrot.lane.b32.xlu0 %v2783, 9
        %v3277 = vpop.permute.xlu0 %3276
        %3278 = vrot.lane.b32.xlu0 %v2784, 9
        %v3279 = vpop.permute.xlu0 %3278
        %3280 = vrot.lane.b32.xlu0 %v2785, 9
        %v3281 = vpop.permute.xlu0 %3280
        %3282 = vrot.lane.b32.xlu0 %v2786, 9
        %v3283 = vpop.permute.xlu0 %3282
        %3284 = vrot.lane.b32.xlu0 %v2787, 9
        %v3285 = vpop.permute.xlu0 %3284
        %3286 = vrot.lane.b32.xlu0 %v2788, 9
        %v3287 = vpop.permute.xlu0 %3286
        %3288 = vrot.lane.b32.xlu0 %v2789, 9
        %v3289 = vpop.permute.xlu0 %3288
        %3290 = vrot.lane.b32.xlu0 %v2790, 9
        %v3291 = vpop.permute.xlu0 %3290
        %3292 = vrot.lane.b32.xlu0 %v2791, 9
        %v3293 = vpop.permute.xlu0 %3292
        %3294 = vrot.lane.b32.xlu0 %v2792, 9
        %v3295 = vpop.permute.xlu0 %3294
        %3296 = vrot.lane.b32.xlu0 %v2793, 9
        %v3297 = vpop.permute.xlu0 %3296
        %3298 = vrot.lane.b32.xlu0 %v2794, 9
        %v3299 = vpop.permute.xlu0 %3298
        %3300 = vrot.lane.b32.xlu0 %v2795, 9
        %v3301 = vpop.permute.xlu0 %3300
        %3302 = vrot.lane.b32.xlu0 %v2796, 9
        %v3303 = vpop.permute.xlu0 %3302
        %3304 = vrot.lane.b32.xlu0 %v2797, 9
        %v3305 = vpop.permute.xlu0 %3304
        %3306 = vrot.lane.b32.xlu0 %v2798, 9
        %v3307 = vpop.permute.xlu0 %3306
        %3308 = vrot.lane.b32.xlu0 %v2799, 9
        %v3309 = vpop.permute.xlu0 %3308
        %3310 = vrot.lane.b32.xlu0 %v2800, 9
        %v3311 = vpop.permute.xlu0 %3310
        %3312 = vrot.lane.b32.xlu0 %v2801, 9
        %v3313 = vpop.permute.xlu0 %3312
        %3314 = vrot.lane.b32.xlu0 %v2802, 9
        %v3315 = vpop.permute.xlu0 %3314
        %3380 = vrot.lane.b32.xlu0 %v2803, 12
        %v3381 = vpop.permute.xlu0 %3380
        %3382 = vrot.lane.b32.xlu0 %v2804, 12
        %v3383 = vpop.permute.xlu0 %3382
        %3384 = vrot.lane.b32.xlu0 %v2805, 12
        %v3385 = vpop.permute.xlu0 %3384
        %3386 = vrot.lane.b32.xlu0 %v2806, 12
        %v3387 = vpop.permute.xlu0 %3386
        %3388 = vrot.lane.b32.xlu0 %v2807, 12
        %v3389 = vpop.permute.xlu0 %3388
        %3390 = vrot.lane.b32.xlu0 %v2808, 12
        %v3391 = vpop.permute.xlu0 %3390
        %3392 = vrot.lane.b32.xlu0 %v2809, 12
        %v3393 = vpop.permute.xlu0 %3392
        %3394 = vrot.lane.b32.xlu0 %v2810, 12
        %v3395 = vpop.permute.xlu0 %3394
        %3396 = vrot.lane.b32.xlu0 %v2811, 12
        %v3397 = vpop.permute.xlu0 %3396
        %3398 = vrot.lane.b32.xlu0 %v2812, 12
        %v3399 = vpop.permute.xlu0 %3398
        %3400 = vrot.lane.b32.xlu0 %v2813, 12
        %v3401 = vpop.permute.xlu0 %3400
        %3402 = vrot.lane.b32.xlu0 %v2814, 12
        %v3403 = vpop.permute.xlu0 %3402
        %3404 = vrot.lane.b32.xlu0 %v2815, 12
        %v3405 = vpop.permute.xlu0 %3404
        %3406 = vrot.lane.b32.xlu0 %v2816, 12
        %v3407 = vpop.permute.xlu0 %3406
        %3408 = vrot.lane.b32.xlu0 %v2817, 12
        %v3409 = vpop.permute.xlu0 %3408
        %3410 = vrot.lane.b32.xlu0 %v2818, 12
        %v3411 = vpop.permute.xlu0 %3410
        %3412 = vrot.lane.b32.xlu0 %v2819, 12
        %v3413 = vpop.permute.xlu0 %3412
        %3414 = vrot.lane.b32.xlu0 %v2820, 12
        %v3415 = vpop.permute.xlu0 %3414
        %3416 = vrot.lane.b32.xlu0 %v2821, 12
        %v3417 = vpop.permute.xlu0 %3416
        %3418 = vrot.lane.b32.xlu0 %v2822, 12
        %v3419 = vpop.permute.xlu0 %3418
        %3420 = vrot.lane.b32.xlu0 %v2823, 12
        %v3421 = vpop.permute.xlu0 %3420
        %3422 = vrot.lane.b32.xlu0 %v2824, 12
        %v3423 = vpop.permute.xlu0 %3422
        %3424 = vrot.lane.b32.xlu0 %v2825, 12
        %v3425 = vpop.permute.xlu0 %3424
        %3426 = vrot.lane.b32.xlu0 %v2826, 12
        %v3427 = vpop.permute.xlu0 %3426
        %3428 = vrot.lane.b32.xlu0 %v2827, 12
        %v3429 = vpop.permute.xlu0 %3428
        %3430 = vrot.lane.b32.xlu0 %v2828, 12
        %v3431 = vpop.permute.xlu0 %3430
        %3432 = vrot.lane.b32.xlu0 %v2829, 12
        %v3433 = vpop.permute.xlu0 %3432
        %3434 = vrot.lane.b32.xlu0 %v2830, 12
        %v3435 = vpop.permute.xlu0 %3434
        %3436 = vrot.lane.b32.xlu0 %v2831, 12
        %v3437 = vpop.permute.xlu0 %3436
        %3438 = vrot.lane.b32.xlu0 %v2832, 12
        %v3439 = vpop.permute.xlu0 %3438
        %3440 = vrot.lane.b32.xlu0 %v2833, 12
        %v3441 = vpop.permute.xlu0 %3440
        %3442 = vrot.lane.b32.xlu0 %v2834, 12
        %v3443 = vpop.permute.xlu0 %3442
        %3508 = vrot.lane.b32.xlu0 %v2835, 15
        %v3509 = vpop.permute.xlu0 %3508
        %3510 = vrot.lane.b32.xlu0 %v2836, 15
        %v3511 = vpop.permute.xlu0 %3510
        %3512 = vrot.lane.b32.xlu0 %v2837, 15
        %v3513 = vpop.permute.xlu0 %3512
        %3514 = vrot.lane.b32.xlu0 %v2838, 15
        %v3515 = vpop.permute.xlu0 %3514
        %3516 = vrot.lane.b32.xlu0 %v2839, 15
        %v3517 = vpop.permute.xlu0 %3516
        %3518 = vrot.lane.b32.xlu0 %v2840, 15
        %v3519 = vpop.permute.xlu0 %3518
        %3520 = vrot.lane.b32.xlu0 %v2841, 15
        %v3521 = vpop.permute.xlu0 %3520
        %3522 = vrot.lane.b32.xlu0 %v2842, 15
        %v3523 = vpop.permute.xlu0 %3522
        %3524 = vrot.lane.b32.xlu0 %v2843, 15
        %v3525 = vpop.permute.xlu0 %3524
        %3526 = vrot.lane.b32.xlu0 %v2844, 15
        %v3527 = vpop.permute.xlu0 %3526
        %3528 = vrot.lane.b32.xlu0 %v2845, 15
        %v3529 = vpop.permute.xlu0 %3528
        %3530 = vrot.lane.b32.xlu0 %v2846, 15
        %v3531 = vpop.permute.xlu0 %3530
        %3532 = vrot.lane.b32.xlu0 %v2847, 15
        %v3533 = vpop.permute.xlu0 %3532
        %3534 = vrot.lane.b32.xlu0 %v2848, 15
        %v3535 = vpop.permute.xlu0 %3534
        %3536 = vrot.lane.b32.xlu0 %v2849, 15
        %v3537 = vpop.permute.xlu0 %3536
        %3538 = vrot.lane.b32.xlu0 %v2850, 15
        %v3539 = vpop.permute.xlu0 %3538
        %3540 = vrot.lane.b32.xlu0 %v2851, 15
        %v3541 = vpop.permute.xlu0 %3540
        %3542 = vrot.lane.b32.xlu0 %v2852, 15
        %v3543 = vpop.permute.xlu0 %3542
        %3544 = vrot.lane.b32.xlu0 %v2853, 15
        %v3545 = vpop.permute.xlu0 %3544
        %3546 = vrot.lane.b32.xlu0 %v2854, 15
        %v3547 = vpop.permute.xlu0 %3546
        %3548 = vrot.lane.b32.xlu0 %v2855, 15
        %v3549 = vpop.permute.xlu0 %3548
        %3550 = vrot.lane.b32.xlu0 %v2856, 15
        %v3551 = vpop.permute.xlu0 %3550
        %3552 = vrot.lane.b32.xlu0 %v2857, 15
        %v3553 = vpop.permute.xlu0 %3552
        %3554 = vrot.lane.b32.xlu0 %v2858, 15
        %v3555 = vpop.permute.xlu0 %3554
        %3556 = vrot.lane.b32.xlu0 %v2859, 15
        %v3557 = vpop.permute.xlu0 %3556
        %3558 = vrot.lane.b32.xlu0 %v2860, 15
        %v3559 = vpop.permute.xlu0 %3558
        %3560 = vrot.lane.b32.xlu0 %v2861, 15
        %v3561 = vpop.permute.xlu0 %3560
        %3562 = vrot.lane.b32.xlu0 %v2862, 15
        %v3563 = vpop.permute.xlu0 %3562
        %3564 = vrot.lane.b32.xlu0 %v2863, 15
        %v3565 = vpop.permute.xlu0 %3564
        %3566 = vrot.lane.b32.xlu0 %v2864, 15
        %v3567 = vpop.permute.xlu0 %3566
        %3568 = vrot.lane.b32.xlu0 %v2865, 15
        %v3569 = vpop.permute.xlu0 %3568
        %3570 = vrot.lane.b32.xlu0 %v2866, 15
        %v3571 = vpop.permute.xlu0 %3570
        %3636 = vrot.lane.b32.xlu0 %v2868, 18
        %v3637 = vpop.permute.xlu0 %3636
        %3638 = vrot.lane.b32.xlu0 %v2869, 18
        %v3639 = vpop.permute.xlu0 %3638
        %3640 = vrot.lane.b32.xlu0 %v2870, 18
        %v3641 = vpop.permute.xlu0 %3640
        %3642 = vrot.lane.b32.xlu0 %v2871, 18
        %v3643 = vpop.permute.xlu0 %3642
        %3644 = vrot.lane.b32.xlu0 %v2872, 18
        %v3645 = vpop.permute.xlu0 %3644
        %3646 = vrot.lane.b32.xlu0 %v2873, 18
        %v3647 = vpop.permute.xlu0 %3646
        %3648 = vrot.lane.b32.xlu0 %v2874, 18
        %v3649 = vpop.permute.xlu0 %3648
        %3650 = vrot.lane.b32.xlu0 %v2875, 18
        %v3651 = vpop.permute.xlu0 %3650
        %3652 = vrot.lane.b32.xlu0 %v2876, 18
        %v3653 = vpop.permute.xlu0 %3652
        %3654 = vrot.lane.b32.xlu0 %v2877, 18
        %v3655 = vpop.permute.xlu0 %3654
        %3656 = vrot.lane.b32.xlu0 %v2878, 18
        %v3657 = vpop.permute.xlu0 %3656
        %3658 = vrot.lane.b32.xlu0 %v2879, 18
        %v3659 = vpop.permute.xlu0 %3658
        %3660 = vrot.lane.b32.xlu0 %v2880, 18
        %v3661 = vpop.permute.xlu0 %3660
        %3662 = vrot.lane.b32.xlu0 %v2881, 18
        %v3663 = vpop.permute.xlu0 %3662
        %3664 = vrot.lane.b32.xlu0 %v2882, 18
        %v3665 = vpop.permute.xlu0 %3664
        %3666 = vrot.lane.b32.xlu0 %v2883, 18
        %v3667 = vpop.permute.xlu0 %3666
        %3668 = vrot.lane.b32.xlu0 %v2884, 18
        %v3669 = vpop.permute.xlu0 %3668
        %3670 = vrot.lane.b32.xlu0 %v2885, 18
        %v3671 = vpop.permute.xlu0 %3670
        %3672 = vrot.lane.b32.xlu0 %v2886, 18
        %v3673 = vpop.permute.xlu0 %3672
        %3674 = vrot.lane.b32.xlu0 %v2887, 18
        %v3675 = vpop.permute.xlu0 %3674
        %3676 = vrot.lane.b32.xlu0 %v2888, 18
        %v3677 = vpop.permute.xlu0 %3676
        %3678 = vrot.lane.b32.xlu0 %v2889, 18
        %v3679 = vpop.permute.xlu0 %3678
        %3680 = vrot.lane.b32.xlu0 %v2890, 18
        %v3681 = vpop.permute.xlu0 %3680
        %3682 = vrot.lane.b32.xlu0 %v2891, 18
        %v3683 = vpop.permute.xlu0 %3682
        %3684 = vrot.lane.b32.xlu0 %v2892, 18
        %v3685 = vpop.permute.xlu0 %3684
        %3686 = vrot.lane.b32.xlu0 %v2893, 18
        %v3687 = vpop.permute.xlu0 %3686
        %3688 = vrot.lane.b32.xlu0 %v2894, 18
        %v3689 = vpop.permute.xlu0 %3688
        %3690 = vrot.lane.b32.xlu0 %v2895, 18
        %v3691 = vpop.permute.xlu0 %3690
        %3692 = vrot.lane.b32.xlu0 %v2896, 18
        %v3693 = vpop.permute.xlu0 %3692
        %3694 = vrot.lane.b32.xlu0 %v2897, 18
        %v3695 = vpop.permute.xlu0 %3694
        %3696 = vrot.lane.b32.xlu0 %v2898, 18
        %v3697 = vpop.permute.xlu0 %3696
        %3698 = vrot.lane.b32.xlu0 %v2899, 18
        %v3699 = vpop.permute.xlu0 %3698
        %3764 = vrot.lane.b32.xlu0 %v2900, 21
        %v3765 = vpop.permute.xlu0 %3764
        %3766 = vrot.lane.b32.xlu0 %v2901, 21
        %v3767 = vpop.permute.xlu0 %3766
        %3768 = vrot.lane.b32.xlu0 %v2902, 21
        %v3769 = vpop.permute.xlu0 %3768
        %3770 = vrot.lane.b32.xlu0 %v2903, 21
        %v3771 = vpop.permute.xlu0 %3770
        %3772 = vrot.lane.b32.xlu0 %v2904, 21
        %v3773 = vpop.permute.xlu0 %3772
        %3774 = vrot.lane.b32.xlu0 %v2905, 21
        %v3775 = vpop.permute.xlu0 %3774
        %3776 = vrot.lane.b32.xlu0 %v2906, 21
        %v3777 = vpop.permute.xlu0 %3776
        %3778 = vrot.lane.b32.xlu0 %v2907, 21
        %v3779 = vpop.permute.xlu0 %3778
        %3780 = vrot.lane.b32.xlu0 %v2908, 21
        %v3781 = vpop.permute.xlu0 %3780
        %3782 = vrot.lane.b32.xlu0 %v2909, 21
        %v3783 = vpop.permute.xlu0 %3782
        %3784 = vrot.lane.b32.xlu0 %v2910, 21
        %v3785 = vpop.permute.xlu0 %3784
        %3786 = vrot.lane.b32.xlu0 %v2911, 21
        %v3787 = vpop.permute.xlu0 %3786
        %3788 = vrot.lane.b32.xlu0 %v2912, 21
        %v3789 = vpop.permute.xlu0 %3788
        %3790 = vrot.lane.b32.xlu0 %v2913, 21
        %v3791 = vpop.permute.xlu0 %3790
        %3792 = vrot.lane.b32.xlu0 %v2914, 21
        %v3793 = vpop.permute.xlu0 %3792
        %3794 = vrot.lane.b32.xlu0 %v2915, 21
        %v3795 = vpop.permute.xlu0 %3794
        %3796 = vrot.lane.b32.xlu0 %v2916, 21
        %v3797 = vpop.permute.xlu0 %3796
        %3798 = vrot.lane.b32.xlu0 %v2917, 21
        %v3799 = vpop.permute.xlu0 %3798
        %3800 = vrot.lane.b32.xlu0 %v2918, 21
        %v3801 = vpop.permute.xlu0 %3800
        %3802 = vrot.lane.b32.xlu0 %v2919, 21
        %v3803 = vpop.permute.xlu0 %3802
        %3804 = vrot.lane.b32.xlu0 %v2920, 21
        %v3805 = vpop.permute.xlu0 %3804
        %3806 = vrot.lane.b32.xlu0 %v2921, 21
        %v3807 = vpop.permute.xlu0 %3806
        %3808 = vrot.lane.b32.xlu0 %v2922, 21
        %v3809 = vpop.permute.xlu0 %3808
        %3810 = vrot.lane.b32.xlu0 %v2923, 21
        %v3811 = vpop.permute.xlu0 %3810
        %3812 = vrot.lane.b32.xlu0 %v2924, 21
        %v3813 = vpop.permute.xlu0 %3812
        %3814 = vrot.lane.b32.xlu0 %v2925, 21
        %v3815 = vpop.permute.xlu0 %3814
        %3816 = vrot.lane.b32.xlu0 %v2926, 21
        %v3817 = vpop.permute.xlu0 %3816
        %3818 = vrot.lane.b32.xlu0 %v2927, 21
        %v3819 = vpop.permute.xlu0 %3818
        %3820 = vrot.lane.b32.xlu0 %v2928, 21
        %v3821 = vpop.permute.xlu0 %3820
        %3822 = vrot.lane.b32.xlu0 %v2929, 21
        %v3823 = vpop.permute.xlu0 %3822
        %3824 = vrot.lane.b32.xlu0 %v2930, 21
        %v3825 = vpop.permute.xlu0 %3824
        %3826 = vrot.lane.b32.xlu0 %v2931, 21
        %v3827 = vpop.permute.xlu0 %3826
        %3892 = vrot.lane.b32.xlu0 %v2932, 24
        %v3893 = vpop.permute.xlu0 %3892
        %3894 = vrot.lane.b32.xlu0 %v2933, 24
        %v3895 = vpop.permute.xlu0 %3894
        %3896 = vrot.lane.b32.xlu0 %v2934, 24
        %v3897 = vpop.permute.xlu0 %3896
        %3898 = vrot.lane.b32.xlu0 %v2935, 24
        %v3899 = vpop.permute.xlu0 %3898
        %3900 = vrot.lane.b32.xlu0 %v2936, 24
        %v3901 = vpop.permute.xlu0 %3900
        %3902 = vrot.lane.b32.xlu0 %v2937, 24
        %v3903 = vpop.permute.xlu0 %3902
        %3904 = vrot.lane.b32.xlu0 %v2938, 24
        %v3905 = vpop.permute.xlu0 %3904
        %3906 = vrot.lane.b32.xlu0 %v2939, 24
        %v3907 = vpop.permute.xlu0 %3906
        %3908 = vrot.lane.b32.xlu0 %v2940, 24
        %v3909 = vpop.permute.xlu0 %3908
        %3910 = vrot.lane.b32.xlu0 %v2941, 24
        %v3911 = vpop.permute.xlu0 %3910
        %3912 = vrot.lane.b32.xlu0 %v2942, 24
        %v3913 = vpop.permute.xlu0 %3912
        %3914 = vrot.lane.b32.xlu0 %v2943, 24
        %v3915 = vpop.permute.xlu0 %3914
        %3916 = vrot.lane.b32.xlu0 %v2944, 24
        %v3917 = vpop.permute.xlu0 %3916
        %3918 = vrot.lane.b32.xlu0 %v2945, 24
        %v3919 = vpop.permute.xlu0 %3918
        %3920 = vrot.lane.b32.xlu0 %v2946, 24
        %v3921 = vpop.permute.xlu0 %3920
        %3922 = vrot.lane.b32.xlu0 %v2947, 24
        %v3923 = vpop.permute.xlu0 %3922
        %3924 = vrot.lane.b32.xlu0 %v2948, 24
        %v3925 = vpop.permute.xlu0 %3924
        %3926 = vrot.lane.b32.xlu0 %v2949, 24
        %v3927 = vpop.permute.xlu0 %3926
        %3928 = vrot.lane.b32.xlu0 %v2950, 24
        %v3929 = vpop.permute.xlu0 %3928
        %3930 = vrot.lane.b32.xlu0 %v2951, 24
        %v3931 = vpop.permute.xlu0 %3930
        %3932 = vrot.lane.b32.xlu0 %v2952, 24
        %v3933 = vpop.permute.xlu0 %3932
        %3934 = vrot.lane.b32.xlu0 %v2953, 24
        %v3935 = vpop.permute.xlu0 %3934
        %3936 = vrot.lane.b32.xlu0 %v2954, 24
        %v3937 = vpop.permute.xlu0 %3936
        %3938 = vrot.lane.b32.xlu0 %v2955, 24
        %v3939 = vpop.permute.xlu0 %3938
        %3940 = vrot.lane.b32.xlu0 %v2956, 24
        %v3941 = vpop.permute.xlu0 %3940
        %3942 = vrot.lane.b32.xlu0 %v2957, 24
        %v3943 = vpop.permute.xlu0 %3942
        %3944 = vrot.lane.b32.xlu0 %v2958, 24
        %v3945 = vpop.permute.xlu0 %3944
        %3946 = vrot.lane.b32.xlu0 %v2959, 24
        %v3947 = vpop.permute.xlu0 %3946
        %3948 = vrot.lane.b32.xlu0 %v2960, 24
        %v3949 = vpop.permute.xlu0 %3948
        %3950 = vrot.lane.b32.xlu0 %v2961, 24
        %v3951 = vpop.permute.xlu0 %3950
        %3952 = vrot.lane.b32.xlu0 %v2962, 24
        %v3953 = vpop.permute.xlu0 %3952
        %3954 = vrot.lane.b32.xlu0 %v2963, 24
        %v3955 = vpop.permute.xlu0 %3954
        %v3988 = vsel %vm276, %v2674, %v2997
        %v3989 = vsel %vm276, %v2675, %v2999
        %v3990 = vsel %vm276, %v2676, %v3001
        %v3991 = vsel %vm276, %v2677, %v3003
        %v3992 = vsel %vm276, %v2678, %v3005
        %v3993 = vsel %vm276, %v2679, %v3007
        %v3994 = vsel %vm276, %v2680, %v3009
        %v3995 = vsel %vm276, %v2681, %v3011
        %v3996 = vsel %vm276, %v2682, %v3013
        %v3997 = vsel %vm276, %v2683, %v3015
        %v3998 = vsel %vm276, %v2684, %v3017
        %v3999 = vsel %vm276, %v2685, %v3019
        %v4000 = vsel %vm276, %v2686, %v3021
        %v4001 = vsel %vm276, %v2687, %v3023
        %v4002 = vsel %vm276, %v2688, %v3025
        %v4003 = vsel %vm276, %v2689, %v3027
        %v4004 = vsel %vm276, %v2690, %v3029
        %v4005 = vsel %vm276, %v2691, %v3031
        %v4006 = vsel %vm276, %v2692, %v3033
        %v4007 = vsel %vm276, %v2693, %v3035
        %v4008 = vsel %vm276, %v2694, %v3037
        %v4009 = vsel %vm276, %v2695, %v3039
        %v4010 = vsel %vm276, %v2696, %v3041
        %v4011 = vsel %vm276, %v2697, %v3043
        %v4012 = vsel %vm276, %v2698, %v3045
        %v4013 = vsel %vm276, %v2699, %v3047
        %v4014 = vsel %vm276, %v2700, %v3049
        %v4015 = vsel %vm276, %v2701, %v3051
        %v4016 = vsel %vm276, %v2702, %v3053
        %v4017 = vsel %vm276, %v2703, %v3055
        %v4018 = vsel %vm276, %v2704, %v3057
        %v4019 = vsel %vm276, %v2705, %v3059
        %v4020 = vsel %vm2161, %v3988, %v3125
        %v4021 = vsel %vm2161, %v3989, %v3127
        %v4022 = vsel %vm2161, %v3990, %v3129
        %v4023 = vsel %vm2161, %v3991, %v3131
        %v4024 = vsel %vm2161, %v3992, %v3133
        %v4025 = vsel %vm2161, %v3993, %v3135
        %v4026 = vsel %vm2161, %v3994, %v3137
        %v4027 = vsel %vm2161, %v3995, %v3139
        %v4028 = vsel %vm2161, %v3996, %v3141
        %v4029 = vsel %vm2161, %v3997, %v3143
        %v4030 = vsel %vm2161, %v3998, %v3145
        %v4031 = vsel %vm2161, %v3999, %v3147
        %v4032 = vsel %vm2161, %v4000, %v3149
        %v4033 = vsel %vm2161, %v4001, %v3151
        %v4034 = vsel %vm2161, %v4002, %v3153
        %v4035 = vsel %vm2161, %v4003, %v3155
        %v4036 = vsel %vm2161, %v4004, %v3157
        %v4037 = vsel %vm2161, %v4005, %v3159
        %v4038 = vsel %vm2161, %v4006, %v3161
        %v4039 = vsel %vm2161, %v4007, %v3163
        %v4040 = vsel %vm2161, %v4008, %v3165
        %v4041 = vsel %vm2161, %v4009, %v3167
        %v4042 = vsel %vm2161, %v4010, %v3169
        %v4043 = vsel %vm2161, %v4011, %v3171
        %v4044 = vsel %vm2161, %v4012, %v3173
        %v4045 = vsel %vm2161, %v4013, %v3175
        %v4046 = vsel %vm2161, %v4014, %v3177
        %v4047 = vsel %vm2161, %v4015, %v3179
        %v4048 = vsel %vm2161, %v4016, %v3181
        %v4049 = vsel %vm2161, %v4017, %v3183
        %v4050 = vsel %vm2161, %v4018, %v3185
        %v4051 = vsel %vm2161, %v4019, %v3187
        %v4052 = vsel %vm2194, %v4020, %v3253
        %v4053 = vsel %vm2194, %v4021, %v3255
        %v4054 = vsel %vm2194, %v4022, %v3257
        %v4055 = vsel %vm2194, %v4023, %v3259
        %v4056 = vsel %vm2194, %v4024, %v3261
        %v4057 = vsel %vm2194, %v4025, %v3263
        %v4058 = vsel %vm2194, %v4026, %v3265
        %v4059 = vsel %vm2194, %v4027, %v3267
        %v4060 = vsel %vm2194, %v4028, %v3269
        %v4061 = vsel %vm2194, %v4029, %v3271
        %v4062 = vsel %vm2194, %v4030, %v3273
        %v4063 = vsel %vm2194, %v4031, %v3275
        %v4064 = vsel %vm2194, %v4032, %v3277
        %v4065 = vsel %vm2194, %v4033, %v3279
        %v4066 = vsel %vm2194, %v4034, %v3281
        %v4067 = vsel %vm2194, %v4035, %v3283
        %v4068 = vsel %vm2194, %v4036, %v3285
        %v4069 = vsel %vm2194, %v4037, %v3287
        %v4070 = vsel %vm2194, %v4038, %v3289
        %v4071 = vsel %vm2194, %v4039, %v3291
        %v4072 = vsel %vm2194, %v4040, %v3293
        %v4073 = vsel %vm2194, %v4041, %v3295
        %v4074 = vsel %vm2194, %v4042, %v3297
        %v4075 = vsel %vm2194, %v4043, %v3299
        %v4076 = vsel %vm2194, %v4044, %v3301
        %v4077 = vsel %vm2194, %v4045, %v3303
        %v4078 = vsel %vm2194, %v4046, %v3305
        %v4079 = vsel %vm2194, %v4047, %v3307
        %v4080 = vsel %vm2194, %v4048, %v3309
        %v4081 = vsel %vm2194, %v4049, %v3311
        %v4082 = vsel %vm2194, %v4050, %v3313
        %v4083 = vsel %vm2194, %v4051, %v3315
        %v4084 = vsel %vm2227, %v4052, %v3381
        %v4085 = vsel %vm2227, %v4053, %v3383
        %v4086 = vsel %vm2227, %v4054, %v3385
        %v4087 = vsel %vm2227, %v4055, %v3387
        %v4088 = vsel %vm2227, %v4056, %v3389
        %v4089 = vsel %vm2227, %v4057, %v3391
        %v4090 = vsel %vm2227, %v4058, %v3393
        %v4091 = vsel %vm2227, %v4059, %v3395
        %v4092 = vsel %vm2227, %v4060, %v3397
        %v4093 = vsel %vm2227, %v4061, %v3399
        %v4094 = vsel %vm2227, %v4062, %v3401
        %v4095 = vsel %vm2227, %v4063, %v3403
        %v4096 = vsel %vm2227, %v4064, %v3405
        %v4097 = vsel %vm2227, %v4065, %v3407
        %v4098 = vsel %vm2227, %v4066, %v3409
        %v4099 = vsel %vm2227, %v4067, %v3411
        %v4100 = vsel %vm2227, %v4068, %v3413
        %v4101 = vsel %vm2227, %v4069, %v3415
        %v4102 = vsel %vm2227, %v4070, %v3417
        %v4103 = vsel %vm2227, %v4071, %v3419
        %v4104 = vsel %vm2227, %v4072, %v3421
        %v4105 = vsel %vm2227, %v4073, %v3423
        %v4106 = vsel %vm2227, %v4074, %v3425
        %v4107 = vsel %vm2227, %v4075, %v3427
        %v4108 = vsel %vm2227, %v4076, %v3429
        %v4109 = vsel %vm2227, %v4077, %v3431
        %v4110 = vsel %vm2227, %v4078, %v3433
        %v4111 = vsel %vm2227, %v4079, %v3435
        %v4112 = vsel %vm2227, %v4080, %v3437
        %v4113 = vsel %vm2227, %v4081, %v3439
        %v4114 = vsel %vm2227, %v4082, %v3441
        %v4115 = vsel %vm2227, %v4083, %v3443
        %v4116 = vsel %vm2260, %v4084, %v3509
        %v4117 = vsel %vm2260, %v4085, %v3511
        %v4118 = vsel %vm2260, %v4086, %v3513
        %v4119 = vsel %vm2260, %v4087, %v3515
        %v4120 = vsel %vm2260, %v4088, %v3517
        %v4121 = vsel %vm2260, %v4089, %v3519
        %v4122 = vsel %vm2260, %v4090, %v3521
        %v4123 = vsel %vm2260, %v4091, %v3523
        %v4124 = vsel %vm2260, %v4092, %v3525
        %v4125 = vsel %vm2260, %v4093, %v3527
        %v4126 = vsel %vm2260, %v4094, %v3529
        %v4127 = vsel %vm2260, %v4095, %v3531
        %v4128 = vsel %vm2260, %v4096, %v3533
        %v4129 = vsel %vm2260, %v4097, %v3535
        %v4130 = vsel %vm2260, %v4098, %v3537
        %v4131 = vsel %vm2260, %v4099, %v3539
        %v4132 = vsel %vm2260, %v4100, %v3541
        %v4133 = vsel %vm2260, %v4101, %v3543
        %v4134 = vsel %vm2260, %v4102, %v3545
        %v4135 = vsel %vm2260, %v4103, %v3547
        %v4136 = vsel %vm2260, %v4104, %v3549
        %v4137 = vsel %vm2260, %v4105, %v3551
        %v4138 = vsel %vm2260, %v4106, %v3553
        %v4139 = vsel %vm2260, %v4107, %v3555
        %v4140 = vsel %vm2260, %v4108, %v3557
        %v4141 = vsel %vm2260, %v4109, %v3559
        %v4142 = vsel %vm2260, %v4110, %v3561
        %v4143 = vsel %vm2260, %v4111, %v3563
        %v4144 = vsel %vm2260, %v4112, %v3565
        %v4145 = vsel %vm2260, %v4113, %v3567
        %v4146 = vsel %vm2260, %v4114, %v3569
        %v4147 = vsel %vm2260, %v4115, %v3571
        %v4148 = vsel %vm2293, %v4116, %v3637
        %v4149 = vsel %vm2293, %v4117, %v3639
        %v4150 = vsel %vm2293, %v4118, %v3641
        %v4151 = vsel %vm2293, %v4119, %v3643
        %v4152 = vsel %vm2293, %v4120, %v3645
        %v4153 = vsel %vm2293, %v4121, %v3647
        %v4154 = vsel %vm2293, %v4122, %v3649
        %v4155 = vsel %vm2293, %v4123, %v3651
        %v4156 = vsel %vm2293, %v4124, %v3653
        %v4157 = vsel %vm2293, %v4125, %v3655
        %v4158 = vsel %vm2293, %v4126, %v3657
        %v4159 = vsel %vm2293, %v4127, %v3659
        %v4160 = vsel %vm2293, %v4128, %v3661
        %v4161 = vsel %vm2293, %v4129, %v3663
        %v4162 = vsel %vm2293, %v4130, %v3665
        %v4163 = vsel %vm2293, %v4131, %v3667
        %v4164 = vsel %vm2293, %v4132, %v3669
        %v4165 = vsel %vm2293, %v4133, %v3671
        %v4166 = vsel %vm2293, %v4134, %v3673
        %v4167 = vsel %vm2293, %v4135, %v3675
        %v4168 = vsel %vm2293, %v4136, %v3677
        %v4169 = vsel %vm2293, %v4137, %v3679
        %v4170 = vsel %vm2293, %v4138, %v3681
        %v4171 = vsel %vm2293, %v4139, %v3683
        %v4172 = vsel %vm2293, %v4140, %v3685
        %v4173 = vsel %vm2293, %v4141, %v3687
        %v4174 = vsel %vm2293, %v4142, %v3689
        %v4175 = vsel %vm2293, %v4143, %v3691
        %v4176 = vsel %vm2293, %v4144, %v3693
        %v4177 = vsel %vm2293, %v4145, %v3695
        %v4178 = vsel %vm2293, %v4146, %v3697
        %v4179 = vsel %vm2293, %v4147, %v3699
        %v4180 = vsel %vm2326, %v4148, %v3765
        %v4181 = vsel %vm2326, %v4149, %v3767
        %v4182 = vsel %vm2326, %v4150, %v3769
        %v4183 = vsel %vm2326, %v4151, %v3771
        %v4184 = vsel %vm2326, %v4152, %v3773
        %v4185 = vsel %vm2326, %v4153, %v3775
        %v4186 = vsel %vm2326, %v4154, %v3777
        %v4187 = vsel %vm2326, %v4155, %v3779
        %v4188 = vsel %vm2326, %v4156, %v3781
        %v4189 = vsel %vm2326, %v4157, %v3783
        %v4190 = vsel %vm2326, %v4158, %v3785
        %v4191 = vsel %vm2326, %v4159, %v3787
        %v4192 = vsel %vm2326, %v4160, %v3789
        %v4193 = vsel %vm2326, %v4161, %v3791
        %v4194 = vsel %vm2326, %v4162, %v3793
        %v4195 = vsel %vm2326, %v4163, %v3795
        %v4196 = vsel %vm2326, %v4164, %v3797
        %v4197 = vsel %vm2326, %v4165, %v3799
        %v4198 = vsel %vm2326, %v4166, %v3801
        %v4199 = vsel %vm2326, %v4167, %v3803
        %v4200 = vsel %vm2326, %v4168, %v3805
        %v4201 = vsel %vm2326, %v4169, %v3807
        %v4202 = vsel %vm2326, %v4170, %v3809
        %v4203 = vsel %vm2326, %v4171, %v3811
        %v4204 = vsel %vm2326, %v4172, %v3813
        %v4205 = vsel %vm2326, %v4173, %v3815
        %v4206 = vsel %vm2326, %v4174, %v3817
        %v4207 = vsel %vm2326, %v4175, %v3819
        %v4208 = vsel %vm2326, %v4176, %v3821
        %v4209 = vsel %vm2326, %v4177, %v3823
        %v4210 = vsel %vm2326, %v4178, %v3825
        %v4211 = vsel %vm2326, %v4179, %v3827
        %v4212 = vsel %vm2359, %v4180, %v3893
        %v4213 = vsel %vm2359, %v4181, %v3895
        %v4214 = vsel %vm2359, %v4182, %v3897
        %v4215 = vsel %vm2359, %v4183, %v3899
        %v4216 = vsel %vm2359, %v4184, %v3901
        %v4217 = vsel %vm2359, %v4185, %v3903
        %v4218 = vsel %vm2359, %v4186, %v3905
        %v4219 = vsel %vm2359, %v4187, %v3907
        %v4220 = vsel %vm2359, %v4188, %v3909
        %v4221 = vsel %vm2359, %v4189, %v3911
        %v4222 = vsel %vm2359, %v4190, %v3913
        %v4223 = vsel %vm2359, %v4191, %v3915
        %v4224 = vsel %vm2359, %v4192, %v3917
        %v4225 = vsel %vm2359, %v4193, %v3919
        %v4226 = vsel %vm2359, %v4194, %v3921
        %v4227 = vsel %vm2359, %v4195, %v3923
        %v4228 = vsel %vm2359, %v4196, %v3925
        %v4229 = vsel %vm2359, %v4197, %v3927
        %v4230 = vsel %vm2359, %v4198, %v3929
        %v4231 = vsel %vm2359, %v4199, %v3931
        %v4232 = vsel %vm2359, %v4200, %v3933
        %v4233 = vsel %vm2359, %v4201, %v3935
        %v4234 = vsel %vm2359, %v4202, %v3937
        %v4235 = vsel %vm2359, %v4203, %v3939
        %v4236 = vsel %vm2359, %v4204, %v3941
        %v4237 = vsel %vm2359, %v4205, %v3943
        %v4238 = vsel %vm2359, %v4206, %v3945
        %v4239 = vsel %vm2359, %v4207, %v3947
        %v4240 = vsel %vm2359, %v4208, %v3949
        %v4241 = vsel %vm2359, %v4209, %v3951
        %v4242 = vsel %vm2359, %v4210, %v3953
        %v4243 = vsel %vm2359, %v4211, %v3955
        %v4245 = vsel %vm2395, %v4212, 0
        %v4248 = vsel %vm2395, %v4213, 0
        %v4251 = vsel %vm2395, %v4214, 0
        %v4254 = vsel %vm2395, %v4215, 0
        %v4257 = vsel %vm2395, %v4216, 0
        %v4260 = vsel %vm2395, %v4217, 0
        %v4263 = vsel %vm2395, %v4218, 0
        %v4266 = vsel %vm2395, %v4219, 0
        %v4269 = vsel %vm2395, %v4220, 0
        %v4272 = vsel %vm2395, %v4221, 0
        %v4275 = vsel %vm2395, %v4222, 0
        %v4278 = vsel %vm2395, %v4223, 0
        %v4281 = vsel %vm2395, %v4224, 0
        %v4284 = vsel %vm2395, %v4225, 0
        %v4287 = vsel %vm2395, %v4226, 0
        %v4290 = vsel %vm2395, %v4227, 0
        %v4293 = vsel %vm2395, %v4228, 0
        %v4296 = vsel %vm2395, %v4229, 0
        %v4299 = vsel %vm2395, %v4230, 0
        %v4302 = vsel %vm2395, %v4231, 0
        %v4305 = vsel %vm2395, %v4232, 0
        %v4308 = vsel %vm2395, %v4233, 0
        %v4311 = vsel %vm2395, %v4234, 0
        %v4314 = vsel %vm2395, %v4235, 0
        %v4317 = vsel %vm2395, %v4236, 0
        %v4320 = vsel %vm2395, %v4237, 0
        %v4323 = vsel %vm2395, %v4238, 0
        %v4326 = vsel %vm2395, %v4239, 0
        %v4329 = vsel %vm2395, %v4240, 0
        %v4332 = vsel %vm2395, %v4241, 0
        %v4335 = vsel %vm2395, %v4242, 0
        %v4338 = vsel %vm2395, %v4243, 0
        %4340 = vmatpush.msra.mxu0 0.0
        %4341 = vmatpush.msra.mxu0 0.0
        %4342 = vmatpush.msra.mxu0 0.0
        %4343 = vmatpush.msra.mxu0 0.0
        %4344 = vmatpush.msra.mxu0 0.0
        %4345 = vmatpush.msra.mxu0 0.0
        %4346 = vmatpush.msra.mxu0 0.0
        %4347 = vmatpush.msra.mxu0 0.0
        %4348 = vmatpush.msra.mxu0 0.0
        %4349 = vmatpush.msra.mxu0 0.0
        %4350 = vmatpush.msra.mxu0 0.0
        %4351 = vmatpush.msra.mxu0 0.0
        %4352 = vmatpush.msra.mxu0 %v2494
        %4353 = vmatpush.msra.mxu0 %v813
        %4354 = vmatpush.msra.mxu0 %v812
        %4355 = vmatpush.msra.mxu0 %v811
        %4356 = vmatmul.f32.gmra.mxu0 %v4245
        %v4357 = vpop.f32.mrf.mxu0
        %v4358 = vadd.f32 %v2393, %v4357
        %4359 = vmatmul.f32.gmra.mxu0 %v4248
        %v4360 = vpop.f32.mrf.mxu0
        %v4361 = vadd.f32 %v2393, %v4360
        %4362 = vmatmul.f32.gmra.mxu0 %v4251
        %v4363 = vpop.f32.mrf.mxu0
        %v4364 = vadd.f32 %v2393, %v4363
        %4365 = vmatmul.f32.gmra.mxu0 %v4254
        %v4366 = vpop.f32.mrf.mxu0
        %v4367 = vadd.f32 %v2393, %v4366
        %4368 = vmatmul.f32.gmra.mxu0 %v4257
        %v4369 = vpop.f32.mrf.mxu0
        %v4370 = vadd.f32 %v2393, %v4369
        %4371 = vmatmul.f32.gmra.mxu0 %v4260
        %v4372 = vpop.f32.mrf.mxu0
        %v4373 = vadd.f32 %v2393, %v4372
        %4374 = vmatmul.f32.gmra.mxu0 %v4263
        %v4375 = vpop.f32.mrf.mxu0
        %v4376 = vadd.f32 %v2393, %v4375
        %4377 = vmatmul.f32.gmra.mxu0 %v4266
        %v4378 = vpop.f32.mrf.mxu0
        %v4379 = vadd.f32 %v2393, %v4378
        %4380 = vmatmul.f32.gmra.mxu0 %v4269
        %v4381 = vpop.f32.mrf.mxu0
        %v4382 = vadd.f32 %v2393, %v4381
        %4383 = vmatmul.f32.gmra.mxu0 %v4272
        %v4384 = vpop.f32.mrf.mxu0
        %v4385 = vadd.f32 %v2393, %v4384
        %4386 = vmatmul.f32.gmra.mxu0 %v4275
        %v4387 = vpop.f32.mrf.mxu0
        %v4388 = vadd.f32 %v2393, %v4387
        %4389 = vmatmul.f32.gmra.mxu0 %v4278
        %v4390 = vpop.f32.mrf.mxu0
        %v4391 = vadd.f32 %v2393, %v4390
        %4392 = vmatmul.f32.gmra.mxu0 %v4281
        %v4393 = vpop.f32.mrf.mxu0
        %v4394 = vadd.f32 %v2393, %v4393
        %4395 = vmatmul.f32.gmra.mxu0 %v4284
        %v4396 = vpop.f32.mrf.mxu0
        %v4397 = vadd.f32 %v2393, %v4396
        %4398 = vmatmul.f32.gmra.mxu0 %v4287
        %v4399 = vpop.f32.mrf.mxu0
        %v4400 = vadd.f32 %v2393, %v4399
        %4401 = vmatmul.f32.gmra.mxu0 %v4290
        %v4402 = vpop.f32.mrf.mxu0
        %v4403 = vadd.f32 %v2393, %v4402
        %4404 = vmatmul.f32.gmra.mxu0 %v4293
        %v4405 = vpop.f32.mrf.mxu0
        %v4406 = vadd.f32 %v2393, %v4405
        %4407 = vmatmul.f32.gmra.mxu0 %v4296
        %v4408 = vpop.f32.mrf.mxu0
        %v4409 = vadd.f32 %v2393, %v4408
        %4410 = vmatmul.f32.gmra.mxu0 %v4299
        %v4411 = vpop.f32.mrf.mxu0
        %v4412 = vadd.f32 %v2393, %v4411
        %4413 = vmatmul.f32.gmra.mxu0 %v4302
        %v4414 = vpop.f32.mrf.mxu0
        %v4415 = vadd.f32 %v2393, %v4414
        %4416 = vmatmul.f32.gmra.mxu0 %v4305
        %v4417 = vpop.f32.mrf.mxu0
        %v4418 = vadd.f32 %v2393, %v4417
        %4419 = vmatmul.f32.gmra.mxu0 %v4308
        %v4420 = vpop.f32.mrf.mxu0
        %v4421 = vadd.f32 %v2393, %v4420
        %4422 = vmatmul.f32.gmra.mxu0 %v4311
        %v4423 = vpop.f32.mrf.mxu0
        %v4424 = vadd.f32 %v2393, %v4423
        %4425 = vmatmul.f32.gmra.mxu0 %v4314
        %v4426 = vpop.f32.mrf.mxu0
        %v4427 = vadd.f32 %v2393, %v4426
        %4428 = vmatmul.f32.gmra.mxu0 %v4317
        %v4429 = vpop.f32.mrf.mxu0
        %v4430 = vadd.f32 %v2393, %v4429
        %4431 = vmatmul.f32.gmra.mxu0 %v4320
        %v4432 = vpop.f32.mrf.mxu0
        %v4433 = vadd.f32 %v2393, %v4432
        %4434 = vmatmul.f32.gmra.mxu0 %v4323
        %v4435 = vpop.f32.mrf.mxu0
        %v4436 = vadd.f32 %v2393, %v4435
        %4437 = vmatmul.f32.gmra.mxu0 %v4326
        %v4438 = vpop.f32.mrf.mxu0
        %v4439 = vadd.f32 %v2393, %v4438
        %4440 = vmatmul.f32.gmra.mxu0 %v4329
        %v4441 = vpop.f32.mrf.mxu0
        %v4442 = vadd.f32 %v2393, %v4441
        %4443 = vmatmul.f32.gmra.mxu0 %v4332
        %v4444 = vpop.f32.mrf.mxu0
        %v4445 = vadd.f32 %v2393, %v4444
        %4446 = vmatmul.f32.gmra.mxu0 %v4335
        %v4447 = vpop.f32.mrf.mxu0
        %v4448 = vadd.f32 %v2393, %v4447
        %4449 = vmatmul.f32.gmra.mxu0 %v4338
        %v4450 = vpop.f32.mrf.mxu0
        %v4451 = vadd.f32 %v2393, %v4450
        %4452 = vdwg.mxu0
        %v4453 = vmax.f32 %v4358, 0.0
        %v4454 = vmax.f32 %v4361, 0.0
        %v4455 = vmax.f32 %v4364, 0.0
        %v4456 = vmax.f32 %v4367, 0.0
        %v4457 = vmax.f32 %v4370, 0.0
        %v4458 = vmax.f32 %v4373, 0.0
        %v4459 = vmax.f32 %v4376, 0.0
        %v4460 = vmax.f32 %v4379, 0.0
        %v4461 = vmax.f32 %v4382, 0.0
        %v4462 = vmax.f32 %v4385, 0.0
        %v4463 = vmax.f32 %v4388, 0.0
        %v4464 = vmax.f32 %v4391, 0.0
        %v4465 = vmax.f32 %v4394, 0.0
        %v4466 = vmax.f32 %v4397, 0.0
        %v4467 = vmax.f32 %v4400, 0.0
        %v4468 = vmax.f32 %v4403, 0.0
        %v4469 = vmax.f32 %v4406, 0.0
        %v4470 = vmax.f32 %v4409, 0.0
        %v4471 = vmax.f32 %v4412, 0.0
        %v4472 = vmax.f32 %v4415, 0.0
        %v4473 = vmax.f32 %v4418, 0.0
        %v4474 = vmax.f32 %v4421, 0.0
        %v4475 = vmax.f32 %v4424, 0.0
        %v4476 = vmax.f32 %v4427, 0.0
        %v4477 = vmax.f32 %v4430, 0.0
        %v4478 = vmax.f32 %v4433, 0.0
        %v4479 = vmax.f32 %v4436, 0.0
        %v4480 = vmax.f32 %v4439, 0.0
        %v4481 = vmax.f32 %v4442, 0.0
        %v4482 = vmax.f32 %v4445, 0.0
        %v4483 = vmax.f32 %v4448, 0.0
        %v4484 = vmax.f32 %v4451, 0.0
        %s4485 = scalar_lea.vmem [#allocation3], 256
        %4486 = vst.msk [vmem:[%s4485] sm:$0xff] %vm481, %v4453
        %4487 = vst.msk [vmem:[%s4485 + $0x8] sm:$0xff] %vm481, %v4454
        %4488 = vst.msk [vmem:[%s4485 + $0x10] sm:$0xff] %vm481, %v4455
        %4489 = vst.msk [vmem:[%s4485 + $0x18] sm:$0xff] %vm481, %v4456
        %4490 = vst.msk [vmem:[%s4485 + $0x20] sm:$0xff] %vm481, %v4457
        %4491 = vst.msk [vmem:[%s4485 + $0x28] sm:$0xff] %vm481, %v4458
        %4492 = vst.msk [vmem:[%s4485 + $0x30] sm:$0xff] %vm481, %v4459
        %4493 = vst.msk [vmem:[%s4485 + $0x38] sm:$0xff] %vm481, %v4460
        %4494 = vst.msk [vmem:[%s4485 + $0x40] sm:$0xff] %vm481, %v4461
        %4495 = vst.msk [vmem:[%s4485 + $0x48] sm:$0xff] %vm481, %v4462
        %4496 = vst.msk [vmem:[%s4485 + $0x50] sm:$0xff] %vm481, %v4463
        %4497 = vst.msk [vmem:[%s4485 + $0x58] sm:$0xff] %vm481, %v4464
        %4498 = vst.msk [vmem:[%s4485 + $0x60] sm:$0xff] %vm481, %v4465
        %4499 = vst.msk [vmem:[%s4485 + $0x68] sm:$0xff] %vm481, %v4466
        %4500 = vst.msk [vmem:[%s4485 + $0x70] sm:$0xff] %vm481, %v4467
        %4501 = vst.msk [vmem:[%s4485 + $0x78] sm:$0xff] %vm481, %v4468
        %4502 = vst.msk [vmem:[%s4485 + $0x80] sm:$0xff] %vm481, %v4469
        %4503 = vst.msk [vmem:[%s4485 + $0x88] sm:$0xff] %vm481, %v4470
        %4504 = vst.msk [vmem:[%s4485 + $0x90] sm:$0xff] %vm481, %v4471
        %4505 = vst.msk [vmem:[%s4485 + $0x98] sm:$0xff] %vm481, %v4472
        %4506 = vst.msk [vmem:[%s4485 + $0xa0] sm:$0xff] %vm481, %v4473
        %4507 = vst.msk [vmem:[%s4485 + $0xa8] sm:$0xff] %vm481, %v4474
        %4508 = vst.msk [vmem:[%s4485 + $0xb0] sm:$0xff] %vm481, %v4475
        %4509 = vst.msk [vmem:[%s4485 + $0xb8] sm:$0xff] %vm481, %v4476
        %4510 = vst.msk [vmem:[%s4485 + $0xc0] sm:$0xff] %vm481, %v4477
        %4511 = vst.msk [vmem:[%s4485 + $0xc8] sm:$0xff] %vm481, %v4478
        %4512 = vst.msk [vmem:[%s4485 + $0xd0] sm:$0xff] %vm481, %v4479
        %4513 = vst.msk [vmem:[%s4485 + $0xd8] sm:$0xff] %vm481, %v4480
        %4514 = vst.msk [vmem:[%s4485 + $0xe0] sm:$0xff] %vm481, %v4481
        %4515 = vst.msk [vmem:[%s4485 + $0xe8] sm:$0xff] %vm481, %v4482
        %4516 = vst.msk [vmem:[%s4485 + $0xf0] sm:$0xff] %vm481, %v4483
        %4517 = vst.msk [vmem:[%s4485 + $0xf8] sm:$0xff] %vm481, %v4484
        %s4518 = scalar_lea.vmem [#allocation2], 768
        %v4519 = vld [vmem:[%s4518 + $0x7] sm:$0xff]
        %v4520 = vld [vmem:[%s4518 + $0xf] sm:$0xff]
        %v4521 = vld [vmem:[%s4518 + $0x17] sm:$0xff]
        %v4522 = vld [vmem:[%s4518 + $0x1f] sm:$0xff]
        %v4523 = vld [vmem:[%s4518 + $0x37] sm:$0xff]
        %v4524 = vld [vmem:[%s4518 + $0x3f] sm:$0xff]
        %v4525 = vld [vmem:[%s4518 + $0x47] sm:$0xff]
        %v4526 = vld [vmem:[%s4518 + $0x4f] sm:$0xff]
        %v4527 = vld [vmem:[%s4518 + $0x67] sm:$0xff]
        %v4528 = vld [vmem:[%s4518 + $0x6f] sm:$0xff]
        %v4529 = vld [vmem:[%s4518 + $0x77] sm:$0xff]
        %v4530 = vld [vmem:[%s4518 + $0x7f] sm:$0xff]
        %v4531 = vld [vmem:[%s4518 + $0x97] sm:$0xff]
        %v4532 = vld [vmem:[%s4518 + $0x9f] sm:$0xff]
        %v4533 = vld [vmem:[%s4518 + $0xa7] sm:$0xff]
        %v4534 = vld [vmem:[%s4518 + $0xaf] sm:$0xff]
        %v4535 = vld [vmem:[%s4518 + $0xc7] sm:$0xff]
        %v4536 = vld [vmem:[%s4518 + $0xcf] sm:$0xff]
        %v4537 = vld [vmem:[%s4518 + $0xd7] sm:$0xff]
        %v4538 = vld [vmem:[%s4518 + $0xdf] sm:$0xff]
        %v4539 = vld [vmem:[%s4518 + $0xf7] sm:$0xff]
        %v4540 = vld [vmem:[%s4518 + $0xff] sm:$0xff]
        %v4541 = vld [vmem:[%s4518 + $0x107] sm:$0xff]
        %v4542 = vld [vmem:[%s4518 + $0x10f] sm:$0xff]
        %v4543 = vld [vmem:[%s4518 + $0x127] sm:$0xff]
        %v4544 = vld [vmem:[%s4518 + $0x12f] sm:$0xff]
        %v4545 = vld [vmem:[%s4518 + $0x137] sm:$0xff]
        %v4546 = vld [vmem:[%s4518 + $0x13f] sm:$0xff]
        %v4547 = vld [vmem:[%s4518 + $0x157] sm:$0xff]
        %v4548 = vld [vmem:[%s4518 + $0x15f] sm:$0xff]
        %v4549 = vld [vmem:[%s4518 + $0x167] sm:$0xff]
        %v4550 = vld [vmem:[%s4518 + $0x16f] sm:$0xff]
        %v4551 = vld [vmem:[%s4518 + $0x8] sm:$0xff]
        %v4552 = vld [vmem:[%s4518 + $0x10] sm:$0xff]
        %v4553 = vld [vmem:[%s4518 + $0x18] sm:$0xff]
        %v4554 = vld [vmem:[%s4518 + $0x20] sm:$0xff]
        %v4555 = vld [vmem:[%s4518 + $0x38] sm:$0xff]
        %v4556 = vld [vmem:[%s4518 + $0x40] sm:$0xff]
        %v4557 = vld [vmem:[%s4518 + $0x48] sm:$0xff]
        %v4558 = vld [vmem:[%s4518 + $0x50] sm:$0xff]
        %v4559 = vld [vmem:[%s4518 + $0x68] sm:$0xff]
        %v4560 = vld [vmem:[%s4518 + $0x70] sm:$0xff]
        %v4561 = vld [vmem:[%s4518 + $0x78] sm:$0xff]
        %v4562 = vld [vmem:[%s4518 + $0x80] sm:$0xff]
        %v4563 = vld [vmem:[%s4518 + $0x98] sm:$0xff]
        %v4564 = vld [vmem:[%s4518 + $0xa0] sm:$0xff]
        %v4565 = vld [vmem:[%s4518 + $0xa8] sm:$0xff]
        %v4566 = vld [vmem:[%s4518 + $0xb0] sm:$0xff]
        %v4567 = vld [vmem:[%s4518 + $0xc8] sm:$0xff]
        %v4568 = vld [vmem:[%s4518 + $0xd0] sm:$0xff]
        %v4569 = vld [vmem:[%s4518 + $0xd8] sm:$0xff]
        %v4570 = vld [vmem:[%s4518 + $0xe0] sm:$0xff]
        %v4571 = vld [vmem:[%s4518 + $0xf8] sm:$0xff]
        %v4572 = vld [vmem:[%s4518 + $0x100] sm:$0xff]
        %v4573 = vld [vmem:[%s4518 + $0x108] sm:$0xff]
        %v4574 = vld [vmem:[%s4518 + $0x110] sm:$0xff]
        %v4575 = vld [vmem:[%s4518 + $0x128] sm:$0xff]
        %v4576 = vld [vmem:[%s4518 + $0x130] sm:$0xff]
        %v4577 = vld [vmem:[%s4518 + $0x138] sm:$0xff]
        %v4578 = vld [vmem:[%s4518 + $0x140] sm:$0xff]
        %v4579 = vld [vmem:[%s4518 + $0x158] sm:$0xff]
        %v4580 = vld [vmem:[%s4518 + $0x160] sm:$0xff]
        %v4581 = vld [vmem:[%s4518 + $0x168] sm:$0xff]
        %v4582 = vld [vmem:[%s4518 + $0x170] sm:$0xff]
        %v4583 = vld [vmem:[%s4518 + $0x9] sm:$0xff]
        %v4584 = vld [vmem:[%s4518 + $0x11] sm:$0xff]
        %v4585 = vld [vmem:[%s4518 + $0x19] sm:$0xff]
        %v4586 = vld [vmem:[%s4518 + $0x21] sm:$0xff]
        %v4587 = vld [vmem:[%s4518 + $0x39] sm:$0xff]
        %v4588 = vld [vmem:[%s4518 + $0x41] sm:$0xff]
        %v4589 = vld [vmem:[%s4518 + $0x49] sm:$0xff]
        %v4590 = vld [vmem:[%s4518 + $0x51] sm:$0xff]
        %v4591 = vld [vmem:[%s4518 + $0x69] sm:$0xff]
        %v4592 = vld [vmem:[%s4518 + $0x71] sm:$0xff]
        %v4593 = vld [vmem:[%s4518 + $0x79] sm:$0xff]
        %v4594 = vld [vmem:[%s4518 + $0x81] sm:$0xff]
        %v4595 = vld [vmem:[%s4518 + $0x99] sm:$0xff]
        %v4596 = vld [vmem:[%s4518 + $0xa1] sm:$0xff]
        %v4597 = vld [vmem:[%s4518 + $0xa9] sm:$0xff]
        %v4598 = vld [vmem:[%s4518 + $0xb1] sm:$0xff]
        %v4599 = vld [vmem:[%s4518 + $0xc9] sm:$0xff]
        %v4600 = vld [vmem:[%s4518 + $0xd1] sm:$0xff]
        %v4601 = vld [vmem:[%s4518 + $0xd9] sm:$0xff]
        %v4602 = vld [vmem:[%s4518 + $0xe1] sm:$0xff]
        %v4603 = vld [vmem:[%s4518 + $0xf9] sm:$0xff]
        %v4604 = vld [vmem:[%s4518 + $0x101] sm:$0xff]
        %v4605 = vld [vmem:[%s4518 + $0x109] sm:$0xff]
        %v4606 = vld [vmem:[%s4518 + $0x111] sm:$0xff]
        %v4607 = vld [vmem:[%s4518 + $0x129] sm:$0xff]
        %v4608 = vld [vmem:[%s4518 + $0x131] sm:$0xff]
        %v4609 = vld [vmem:[%s4518 + $0x139] sm:$0xff]
        %v4610 = vld [vmem:[%s4518 + $0x141] sm:$0xff]
        %v4611 = vld [vmem:[%s4518 + $0x159] sm:$0xff]
        %v4612 = vld [vmem:[%s4518 + $0x161] sm:$0xff]
        %v4613 = vld [vmem:[%s4518 + $0x169] sm:$0xff]
        %v4614 = vld [vmem:[%s4518 + $0x171] sm:$0xff]
        %s4615 = scalar_lea.vmem [#allocation2], 816
        %v4616 = vld [vmem:[%s4615 + $0x7] sm:$0xff]
        %v4617 = vld [vmem:[%s4615 + $0xf] sm:$0xff]
        %v4618 = vld [vmem:[%s4615 + $0x17] sm:$0xff]
        %v4619 = vld [vmem:[%s4615 + $0x1f] sm:$0xff]
        %v4620 = vld [vmem:[%s4615 + $0x37] sm:$0xff]
        %v4621 = vld [vmem:[%s4615 + $0x3f] sm:$0xff]
        %v4622 = vld [vmem:[%s4615 + $0x47] sm:$0xff]
        %v4623 = vld [vmem:[%s4615 + $0x4f] sm:$0xff]
        %v4624 = vld [vmem:[%s4615 + $0x67] sm:$0xff]
        %v4625 = vld [vmem:[%s4615 + $0x6f] sm:$0xff]
        %v4626 = vld [vmem:[%s4615 + $0x77] sm:$0xff]
        %v4627 = vld [vmem:[%s4615 + $0x7f] sm:$0xff]
        %v4628 = vld [vmem:[%s4615 + $0x97] sm:$0xff]
        %v4629 = vld [vmem:[%s4615 + $0x9f] sm:$0xff]
        %v4630 = vld [vmem:[%s4615 + $0xa7] sm:$0xff]
        %v4631 = vld [vmem:[%s4615 + $0xaf] sm:$0xff]
        %v4632 = vld [vmem:[%s4615 + $0xc7] sm:$0xff]
        %v4633 = vld [vmem:[%s4615 + $0xcf] sm:$0xff]
        %v4634 = vld [vmem:[%s4615 + $0xd7] sm:$0xff]
        %v4635 = vld [vmem:[%s4615 + $0xdf] sm:$0xff]
        %v4636 = vld [vmem:[%s4615 + $0xf7] sm:$0xff]
        %v4637 = vld [vmem:[%s4615 + $0xff] sm:$0xff]
        %v4638 = vld [vmem:[%s4615 + $0x107] sm:$0xff]
        %v4639 = vld [vmem:[%s4615 + $0x10f] sm:$0xff]
        %v4640 = vld [vmem:[%s4615 + $0x127] sm:$0xff]
        %v4641 = vld [vmem:[%s4615 + $0x12f] sm:$0xff]
        %v4642 = vld [vmem:[%s4615 + $0x137] sm:$0xff]
        %v4643 = vld [vmem:[%s4615 + $0x13f] sm:$0xff]
        %v4644 = vld [vmem:[%s4615 + $0x157] sm:$0xff]
        %v4645 = vld [vmem:[%s4615 + $0x15f] sm:$0xff]
        %v4646 = vld [vmem:[%s4615 + $0x167] sm:$0xff]
        %v4647 = vld [vmem:[%s4615 + $0x16f] sm:$0xff]
        %v4648 = vld [vmem:[%s4615 + $0x8] sm:$0xff]
        %v4649 = vld [vmem:[%s4615 + $0x10] sm:$0xff]
        %v4650 = vld [vmem:[%s4615 + $0x18] sm:$0xff]
        %v4651 = vld [vmem:[%s4615 + $0x20] sm:$0xff]
        %v4652 = vld [vmem:[%s4615 + $0x38] sm:$0xff]
        %v4653 = vld [vmem:[%s4615 + $0x40] sm:$0xff]
        %v4654 = vld [vmem:[%s4615 + $0x48] sm:$0xff]
        %v4655 = vld [vmem:[%s4615 + $0x50] sm:$0xff]
        %v4656 = vld [vmem:[%s4615 + $0x68] sm:$0xff]
        %v4657 = vld [vmem:[%s4615 + $0x70] sm:$0xff]
        %v4658 = vld [vmem:[%s4615 + $0x78] sm:$0xff]
        %v4659 = vld [vmem:[%s4615 + $0x80] sm:$0xff]
        %v4660 = vld [vmem:[%s4615 + $0x98] sm:$0xff]
        %v4661 = vld [vmem:[%s4615 + $0xa0] sm:$0xff]
        %v4662 = vld [vmem:[%s4615 + $0xa8] sm:$0xff]
        %v4663 = vld [vmem:[%s4615 + $0xb0] sm:$0xff]
        %v4664 = vld [vmem:[%s4615 + $0xc8] sm:$0xff]
        %v4665 = vld [vmem:[%s4615 + $0xd0] sm:$0xff]
        %v4666 = vld [vmem:[%s4615 + $0xd8] sm:$0xff]
        %v4667 = vld [vmem:[%s4615 + $0xe0] sm:$0xff]
        %v4668 = vld [vmem:[%s4615 + $0xf8] sm:$0xff]
        %v4669 = vld [vmem:[%s4615 + $0x100] sm:$0xff]
        %v4670 = vld [vmem:[%s4615 + $0x108] sm:$0xff]
        %v4671 = vld [vmem:[%s4615 + $0x110] sm:$0xff]
        %v4672 = vld [vmem:[%s4615 + $0x128] sm:$0xff]
        %v4673 = vld [vmem:[%s4615 + $0x130] sm:$0xff]
        %v4674 = vld [vmem:[%s4615 + $0x138] sm:$0xff]
        %v4675 = vld [vmem:[%s4615 + $0x140] sm:$0xff]
        %v4676 = vld [vmem:[%s4615 + $0x158] sm:$0xff]
        %v4677 = vld [vmem:[%s4615 + $0x160] sm:$0xff]
        %v4678 = vld [vmem:[%s4615 + $0x168] sm:$0xff]
        %v4679 = vld [vmem:[%s4615 + $0x170] sm:$0xff]
        %v4680 = vld [vmem:[%s4615 + $0x9] sm:$0xff]
        %v4681 = vld [vmem:[%s4615 + $0x11] sm:$0xff]
        %v4682 = vld [vmem:[%s4615 + $0x19] sm:$0xff]
        %v4683 = vld [vmem:[%s4615 + $0x21] sm:$0xff]
        %v4684 = vld [vmem:[%s4615 + $0x39] sm:$0xff]
        %v4685 = vld [vmem:[%s4615 + $0x41] sm:$0xff]
        %v4686 = vld [vmem:[%s4615 + $0x49] sm:$0xff]
        %v4687 = vld [vmem:[%s4615 + $0x51] sm:$0xff]
        %v4688 = vld [vmem:[%s4615 + $0x69] sm:$0xff]
        %v4689 = vld [vmem:[%s4615 + $0x71] sm:$0xff]
        %v4690 = vld [vmem:[%s4615 + $0x79] sm:$0xff]
        %v4691 = vld [vmem:[%s4615 + $0x81] sm:$0xff]
        %v4692 = vld [vmem:[%s4615 + $0x99] sm:$0xff]
        %v4693 = vld [vmem:[%s4615 + $0xa1] sm:$0xff]
        %v4694 = vld [vmem:[%s4615 + $0xa9] sm:$0xff]
        %v4695 = vld [vmem:[%s4615 + $0xb1] sm:$0xff]
        %v4696 = vld [vmem:[%s4615 + $0xc9] sm:$0xff]
        %v4697 = vld [vmem:[%s4615 + $0xd1] sm:$0xff]
        %v4698 = vld [vmem:[%s4615 + $0xd9] sm:$0xff]
        %v4699 = vld [vmem:[%s4615 + $0xe1] sm:$0xff]
        %v4700 = vld [vmem:[%s4615 + $0xf9] sm:$0xff]
        %v4701 = vld [vmem:[%s4615 + $0x101] sm:$0xff]
        %v4702 = vld [vmem:[%s4615 + $0x109] sm:$0xff]
        %v4703 = vld [vmem:[%s4615 + $0x111] sm:$0xff]
        %v4704 = vld [vmem:[%s4615 + $0x129] sm:$0xff]
        %v4705 = vld [vmem:[%s4615 + $0x131] sm:$0xff]
        %v4706 = vld [vmem:[%s4615 + $0x139] sm:$0xff]
        %v4707 = vld [vmem:[%s4615 + $0x141] sm:$0xff]
        %v4708 = vld [vmem:[%s4615 + $0x159] sm:$0xff]
        %v4709 = vld [vmem:[%s4615 + $0x161] sm:$0xff]
        %v4710 = vld [vmem:[%s4615 + $0x169] sm:$0xff]
        %v4711 = vld [vmem:[%s4615 + $0x171] sm:$0xff]
        %s4712 = scalar_lea.vmem [#allocation2], 864
        %v4713 = vld [vmem:[%s4712 + $0x7] sm:$0xff]
        %v4714 = vld [vmem:[%s4712 + $0xf] sm:$0xff]
        %v4715 = vld [vmem:[%s4712 + $0x17] sm:$0xff]
        %v4716 = vld [vmem:[%s4712 + $0x1f] sm:$0xff]
        %v4717 = vld [vmem:[%s4712 + $0x37] sm:$0xff]
        %v4718 = vld [vmem:[%s4712 + $0x3f] sm:$0xff]
        %v4719 = vld [vmem:[%s4712 + $0x47] sm:$0xff]
        %v4720 = vld [vmem:[%s4712 + $0x4f] sm:$0xff]
        %v4721 = vld [vmem:[%s4712 + $0x67] sm:$0xff]
        %v4722 = vld [vmem:[%s4712 + $0x6f] sm:$0xff]
        %v4723 = vld [vmem:[%s4712 + $0x77] sm:$0xff]
        %v4724 = vld [vmem:[%s4712 + $0x7f] sm:$0xff]
        %v4725 = vld [vmem:[%s4712 + $0x97] sm:$0xff]
        %v4726 = vld [vmem:[%s4712 + $0x9f] sm:$0xff]
        %v4727 = vld [vmem:[%s4712 + $0xa7] sm:$0xff]
        %v4728 = vld [vmem:[%s4712 + $0xaf] sm:$0xff]
        %v4729 = vld [vmem:[%s4712 + $0xc7] sm:$0xff]
        %v4730 = vld [vmem:[%s4712 + $0xcf] sm:$0xff]
        %v4731 = vld [vmem:[%s4712 + $0xd7] sm:$0xff]
        %v4732 = vld [vmem:[%s4712 + $0xdf] sm:$0xff]
        %v4733 = vld [vmem:[%s4712 + $0xf7] sm:$0xff]
        %v4734 = vld [vmem:[%s4712 + $0xff] sm:$0xff]
        %v4735 = vld [vmem:[%s4712 + $0x107] sm:$0xff]
        %v4736 = vld [vmem:[%s4712 + $0x10f] sm:$0xff]
        %v4737 = vld [vmem:[%s4712 + $0x127] sm:$0xff]
        %v4738 = vld [vmem:[%s4712 + $0x12f] sm:$0xff]
        %v4739 = vld [vmem:[%s4712 + $0x137] sm:$0xff]
        %v4740 = vld [vmem:[%s4712 + $0x13f] sm:$0xff]
        %v4741 = vld [vmem:[%s4712 + $0x157] sm:$0xff]
        %v4742 = vld [vmem:[%s4712 + $0x15f] sm:$0xff]
        %v4743 = vld [vmem:[%s4712 + $0x167] sm:$0xff]
        %v4744 = vld [vmem:[%s4712 + $0x16f] sm:$0xff]
        %v4745 = vld [vmem:[%s4712 + $0x8] sm:$0xff]
        %v4746 = vld [vmem:[%s4712 + $0x10] sm:$0xff]
        %v4747 = vld [vmem:[%s4712 + $0x18] sm:$0xff]
        %v4748 = vld [vmem:[%s4712 + $0x20] sm:$0xff]
        %v4749 = vld [vmem:[%s4712 + $0x38] sm:$0xff]
        %v4750 = vld [vmem:[%s4712 + $0x40] sm:$0xff]
        %v4751 = vld [vmem:[%s4712 + $0x48] sm:$0xff]
        %v4752 = vld [vmem:[%s4712 + $0x50] sm:$0xff]
        %v4753 = vld [vmem:[%s4712 + $0x68] sm:$0xff]
        %v4754 = vld [vmem:[%s4712 + $0x70] sm:$0xff]
        %v4755 = vld [vmem:[%s4712 + $0x78] sm:$0xff]
        %v4756 = vld [vmem:[%s4712 + $0x80] sm:$0xff]
        %v4757 = vld [vmem:[%s4712 + $0x98] sm:$0xff]
        %v4758 = vld [vmem:[%s4712 + $0xa0] sm:$0xff]
        %v4759 = vld [vmem:[%s4712 + $0xa8] sm:$0xff]
        %v4760 = vld [vmem:[%s4712 + $0xb0] sm:$0xff]
        %v4761 = vld [vmem:[%s4712 + $0xc8] sm:$0xff]
        %v4762 = vld [vmem:[%s4712 + $0xd0] sm:$0xff]
        %v4763 = vld [vmem:[%s4712 + $0xd8] sm:$0xff]
        %v4764 = vld [vmem:[%s4712 + $0xe0] sm:$0xff]
        %v4765 = vld [vmem:[%s4712 + $0xf8] sm:$0xff]
        %v4766 = vld [vmem:[%s4712 + $0x100] sm:$0xff]
        %v4767 = vld [vmem:[%s4712 + $0x108] sm:$0xff]
        %v4768 = vld [vmem:[%s4712 + $0x110] sm:$0xff]
        %v4769 = vld [vmem:[%s4712 + $0x128] sm:$0xff]
        %v4770 = vld [vmem:[%s4712 + $0x130] sm:$0xff]
        %v4771 = vld [vmem:[%s4712 + $0x138] sm:$0xff]
        %v4772 = vld [vmem:[%s4712 + $0x140] sm:$0xff]
        %v4773 = vld [vmem:[%s4712 + $0x158] sm:$0xff]
        %v4774 = vld [vmem:[%s4712 + $0x160] sm:$0xff]
        %v4775 = vld [vmem:[%s4712 + $0x168] sm:$0xff]
        %v4776 = vld [vmem:[%s4712 + $0x170] sm:$0xff]
        %v4777 = vld [vmem:[%s4712 + $0x9] sm:$0xff]
        %v4778 = vld [vmem:[%s4712 + $0x11] sm:$0xff]
        %v4779 = vld [vmem:[%s4712 + $0x19] sm:$0xff]
        %v4780 = vld [vmem:[%s4712 + $0x21] sm:$0xff]
        %v4781 = vld [vmem:[%s4712 + $0x39] sm:$0xff]
        %v4782 = vld [vmem:[%s4712 + $0x41] sm:$0xff]
        %v4783 = vld [vmem:[%s4712 + $0x49] sm:$0xff]
        %v4784 = vld [vmem:[%s4712 + $0x51] sm:$0xff]
        %v4785 = vld [vmem:[%s4712 + $0x69] sm:$0xff]
        %v4786 = vld [vmem:[%s4712 + $0x71] sm:$0xff]
        %v4787 = vld [vmem:[%s4712 + $0x79] sm:$0xff]
        %v4788 = vld [vmem:[%s4712 + $0x81] sm:$0xff]
        %v4789 = vld [vmem:[%s4712 + $0x99] sm:$0xff]
        %v4790 = vld [vmem:[%s4712 + $0xa1] sm:$0xff]
        %v4791 = vld [vmem:[%s4712 + $0xa9] sm:$0xff]
        %v4792 = vld [vmem:[%s4712 + $0xb1] sm:$0xff]
        %v4793 = vld [vmem:[%s4712 + $0xc9] sm:$0xff]
        %v4794 = vld [vmem:[%s4712 + $0xd1] sm:$0xff]
        %v4795 = vld [vmem:[%s4712 + $0xd9] sm:$0xff]
        %v4796 = vld [vmem:[%s4712 + $0xe1] sm:$0xff]
        %v4797 = vld [vmem:[%s4712 + $0xf9] sm:$0xff]
        %v4798 = vld [vmem:[%s4712 + $0x101] sm:$0xff]
        %v4799 = vld [vmem:[%s4712 + $0x109] sm:$0xff]
        %v4800 = vld [vmem:[%s4712 + $0x111] sm:$0xff]
        %v4801 = vld [vmem:[%s4712 + $0x129] sm:$0xff]
        %v4802 = vld [vmem:[%s4712 + $0x131] sm:$0xff]
        %v4803 = vld [vmem:[%s4712 + $0x139] sm:$0xff]
        %v4804 = vld [vmem:[%s4712 + $0x141] sm:$0xff]
        %v4805 = vld [vmem:[%s4712 + $0x159] sm:$0xff]
        %v4806 = vld [vmem:[%s4712 + $0x161] sm:$0xff]
        %v4807 = vld [vmem:[%s4712 + $0x169] sm:$0xff]
        %v4808 = vld [vmem:[%s4712 + $0x171] sm:$0xff]
        %4841 = vrot.lane.b32.xlu0 %v4551, 3
        %v4842 = vpop.permute.xlu0 %4841
        %4843 = vrot.lane.b32.xlu0 %v4552, 3
        %v4844 = vpop.permute.xlu0 %4843
        %4845 = vrot.lane.b32.xlu0 %v4553, 3
        %v4846 = vpop.permute.xlu0 %4845
        %4847 = vrot.lane.b32.xlu0 %v4554, 3
        %v4848 = vpop.permute.xlu0 %4847
        %4849 = vrot.lane.b32.xlu0 %v4555, 3
        %v4850 = vpop.permute.xlu0 %4849
        %4851 = vrot.lane.b32.xlu0 %v4556, 3
        %v4852 = vpop.permute.xlu0 %4851
        %4853 = vrot.lane.b32.xlu0 %v4557, 3
        %v4854 = vpop.permute.xlu0 %4853
        %4855 = vrot.lane.b32.xlu0 %v4558, 3
        %v4856 = vpop.permute.xlu0 %4855
        %4857 = vrot.lane.b32.xlu0 %v4559, 3
        %v4858 = vpop.permute.xlu0 %4857
        %4859 = vrot.lane.b32.xlu0 %v4560, 3
        %v4860 = vpop.permute.xlu0 %4859
        %4861 = vrot.lane.b32.xlu0 %v4561, 3
        %v4862 = vpop.permute.xlu0 %4861
        %4863 = vrot.lane.b32.xlu0 %v4562, 3
        %v4864 = vpop.permute.xlu0 %4863
        %4865 = vrot.lane.b32.xlu0 %v4563, 3
        %v4866 = vpop.permute.xlu0 %4865
        %4867 = vrot.lane.b32.xlu0 %v4564, 3
        %v4868 = vpop.permute.xlu0 %4867
        %4869 = vrot.lane.b32.xlu0 %v4565, 3
        %v4870 = vpop.permute.xlu0 %4869
        %4871 = vrot.lane.b32.xlu0 %v4566, 3
        %v4872 = vpop.permute.xlu0 %4871
        %4873 = vrot.lane.b32.xlu0 %v4567, 3
        %v4874 = vpop.permute.xlu0 %4873
        %4875 = vrot.lane.b32.xlu0 %v4568, 3
        %v4876 = vpop.permute.xlu0 %4875
        %4877 = vrot.lane.b32.xlu0 %v4569, 3
        %v4878 = vpop.permute.xlu0 %4877
        %4879 = vrot.lane.b32.xlu0 %v4570, 3
        %v4880 = vpop.permute.xlu0 %4879
        %4881 = vrot.lane.b32.xlu0 %v4571, 3
        %v4882 = vpop.permute.xlu0 %4881
        %4883 = vrot.lane.b32.xlu0 %v4572, 3
        %v4884 = vpop.permute.xlu0 %4883
        %4885 = vrot.lane.b32.xlu0 %v4573, 3
        %v4886 = vpop.permute.xlu0 %4885
        %4887 = vrot.lane.b32.xlu0 %v4574, 3
        %v4888 = vpop.permute.xlu0 %4887
        %4889 = vrot.lane.b32.xlu0 %v4575, 3
        %v4890 = vpop.permute.xlu0 %4889
        %4891 = vrot.lane.b32.xlu0 %v4576, 3
        %v4892 = vpop.permute.xlu0 %4891
        %4893 = vrot.lane.b32.xlu0 %v4577, 3
        %v4894 = vpop.permute.xlu0 %4893
        %4895 = vrot.lane.b32.xlu0 %v4578, 3
        %v4896 = vpop.permute.xlu0 %4895
        %4897 = vrot.lane.b32.xlu0 %v4579, 3
        %v4898 = vpop.permute.xlu0 %4897
        %4899 = vrot.lane.b32.xlu0 %v4580, 3
        %v4900 = vpop.permute.xlu0 %4899
        %4901 = vrot.lane.b32.xlu0 %v4581, 3
        %v4902 = vpop.permute.xlu0 %4901
        %4903 = vrot.lane.b32.xlu0 %v4582, 3
        %v4904 = vpop.permute.xlu0 %4903
        %4969 = vrot.lane.b32.xlu0 %v4583, 6
        %v4970 = vpop.permute.xlu0 %4969
        %4971 = vrot.lane.b32.xlu0 %v4584, 6
        %v4972 = vpop.permute.xlu0 %4971
        %4973 = vrot.lane.b32.xlu0 %v4585, 6
        %v4974 = vpop.permute.xlu0 %4973
        %4975 = vrot.lane.b32.xlu0 %v4586, 6
        %v4976 = vpop.permute.xlu0 %4975
        %4977 = vrot.lane.b32.xlu0 %v4587, 6
        %v4978 = vpop.permute.xlu0 %4977
        %4979 = vrot.lane.b32.xlu0 %v4588, 6
        %v4980 = vpop.permute.xlu0 %4979
        %4981 = vrot.lane.b32.xlu0 %v4589, 6
        %v4982 = vpop.permute.xlu0 %4981
        %4983 = vrot.lane.b32.xlu0 %v4590, 6
        %v4984 = vpop.permute.xlu0 %4983
        %4985 = vrot.lane.b32.xlu0 %v4591, 6
        %v4986 = vpop.permute.xlu0 %4985
        %4987 = vrot.lane.b32.xlu0 %v4592, 6
        %v4988 = vpop.permute.xlu0 %4987
        %4989 = vrot.lane.b32.xlu0 %v4593, 6
        %v4990 = vpop.permute.xlu0 %4989
        %4991 = vrot.lane.b32.xlu0 %v4594, 6
        %v4992 = vpop.permute.xlu0 %4991
        %4993 = vrot.lane.b32.xlu0 %v4595, 6
        %v4994 = vpop.permute.xlu0 %4993
        %4995 = vrot.lane.b32.xlu0 %v4596, 6
        %v4996 = vpop.permute.xlu0 %4995
        %4997 = vrot.lane.b32.xlu0 %v4597, 6
        %v4998 = vpop.permute.xlu0 %4997
        %4999 = vrot.lane.b32.xlu0 %v4598, 6
        %v5000 = vpop.permute.xlu0 %4999
        %5001 = vrot.lane.b32.xlu0 %v4599, 6
        %v5002 = vpop.permute.xlu0 %5001
        %5003 = vrot.lane.b32.xlu0 %v4600, 6
        %v5004 = vpop.permute.xlu0 %5003
        %5005 = vrot.lane.b32.xlu0 %v4601, 6
        %v5006 = vpop.permute.xlu0 %5005
        %5007 = vrot.lane.b32.xlu0 %v4602, 6
        %v5008 = vpop.permute.xlu0 %5007
        %5009 = vrot.lane.b32.xlu0 %v4603, 6
        %v5010 = vpop.permute.xlu0 %5009
        %5011 = vrot.lane.b32.xlu0 %v4604, 6
        %v5012 = vpop.permute.xlu0 %5011
        %5013 = vrot.lane.b32.xlu0 %v4605, 6
        %v5014 = vpop.permute.xlu0 %5013
        %5015 = vrot.lane.b32.xlu0 %v4606, 6
        %v5016 = vpop.permute.xlu0 %5015
        %5017 = vrot.lane.b32.xlu0 %v4607, 6
        %v5018 = vpop.permute.xlu0 %5017
        %5019 = vrot.lane.b32.xlu0 %v4608, 6
        %v5020 = vpop.permute.xlu0 %5019
        %5021 = vrot.lane.b32.xlu0 %v4609, 6
        %v5022 = vpop.permute.xlu0 %5021
        %5023 = vrot.lane.b32.xlu0 %v4610, 6
        %v5024 = vpop.permute.xlu0 %5023
        %5025 = vrot.lane.b32.xlu0 %v4611, 6
        %v5026 = vpop.permute.xlu0 %5025
        %5027 = vrot.lane.b32.xlu0 %v4612, 6
        %v5028 = vpop.permute.xlu0 %5027
        %5029 = vrot.lane.b32.xlu0 %v4613, 6
        %v5030 = vpop.permute.xlu0 %5029
        %5031 = vrot.lane.b32.xlu0 %v4614, 6
        %v5032 = vpop.permute.xlu0 %5031
        %5097 = vrot.lane.b32.xlu0 %v4616, 9
        %v5098 = vpop.permute.xlu0 %5097
        %5099 = vrot.lane.b32.xlu0 %v4617, 9
        %v5100 = vpop.permute.xlu0 %5099
        %5101 = vrot.lane.b32.xlu0 %v4618, 9
        %v5102 = vpop.permute.xlu0 %5101
        %5103 = vrot.lane.b32.xlu0 %v4619, 9
        %v5104 = vpop.permute.xlu0 %5103
        %5105 = vrot.lane.b32.xlu0 %v4620, 9
        %v5106 = vpop.permute.xlu0 %5105
        %5107 = vrot.lane.b32.xlu0 %v4621, 9
        %v5108 = vpop.permute.xlu0 %5107
        %5109 = vrot.lane.b32.xlu0 %v4622, 9
        %v5110 = vpop.permute.xlu0 %5109
        %5111 = vrot.lane.b32.xlu0 %v4623, 9
        %v5112 = vpop.permute.xlu0 %5111
        %5113 = vrot.lane.b32.xlu0 %v4624, 9
        %v5114 = vpop.permute.xlu0 %5113
        %5115 = vrot.lane.b32.xlu0 %v4625, 9
        %v5116 = vpop.permute.xlu0 %5115
        %5117 = vrot.lane.b32.xlu0 %v4626, 9
        %v5118 = vpop.permute.xlu0 %5117
        %5119 = vrot.lane.b32.xlu0 %v4627, 9
        %v5120 = vpop.permute.xlu0 %5119
        %5121 = vrot.lane.b32.xlu0 %v4628, 9
        %v5122 = vpop.permute.xlu0 %5121
        %5123 = vrot.lane.b32.xlu0 %v4629, 9
        %v5124 = vpop.permute.xlu0 %5123
        %5125 = vrot.lane.b32.xlu0 %v4630, 9
        %v5126 = vpop.permute.xlu0 %5125
        %5127 = vrot.lane.b32.xlu0 %v4631, 9
        %v5128 = vpop.permute.xlu0 %5127
        %5129 = vrot.lane.b32.xlu0 %v4632, 9
        %v5130 = vpop.permute.xlu0 %5129
        %5131 = vrot.lane.b32.xlu0 %v4633, 9
        %v5132 = vpop.permute.xlu0 %5131
        %5133 = vrot.lane.b32.xlu0 %v4634, 9
        %v5134 = vpop.permute.xlu0 %5133
        %5135 = vrot.lane.b32.xlu0 %v4635, 9
        %v5136 = vpop.permute.xlu0 %5135
        %5137 = vrot.lane.b32.xlu0 %v4636, 9
        %v5138 = vpop.permute.xlu0 %5137
        %5139 = vrot.lane.b32.xlu0 %v4637, 9
        %v5140 = vpop.permute.xlu0 %5139
        %5141 = vrot.lane.b32.xlu0 %v4638, 9
        %v5142 = vpop.permute.xlu0 %5141
        %5143 = vrot.lane.b32.xlu0 %v4639, 9
        %v5144 = vpop.permute.xlu0 %5143
        %5145 = vrot.lane.b32.xlu0 %v4640, 9
        %v5146 = vpop.permute.xlu0 %5145
        %5147 = vrot.lane.b32.xlu0 %v4641, 9
        %v5148 = vpop.permute.xlu0 %5147
        %5149 = vrot.lane.b32.xlu0 %v4642, 9
        %v5150 = vpop.permute.xlu0 %5149
        %5151 = vrot.lane.b32.xlu0 %v4643, 9
        %v5152 = vpop.permute.xlu0 %5151
        %5153 = vrot.lane.b32.xlu0 %v4644, 9
        %v5154 = vpop.permute.xlu0 %5153
        %5155 = vrot.lane.b32.xlu0 %v4645, 9
        %v5156 = vpop.permute.xlu0 %5155
        %5157 = vrot.lane.b32.xlu0 %v4646, 9
        %v5158 = vpop.permute.xlu0 %5157
        %5159 = vrot.lane.b32.xlu0 %v4647, 9
        %v5160 = vpop.permute.xlu0 %5159
        %5225 = vrot.lane.b32.xlu0 %v4648, 12
        %v5226 = vpop.permute.xlu0 %5225
        %5227 = vrot.lane.b32.xlu0 %v4649, 12
        %v5228 = vpop.permute.xlu0 %5227
        %5229 = vrot.lane.b32.xlu0 %v4650, 12
        %v5230 = vpop.permute.xlu0 %5229
        %5231 = vrot.lane.b32.xlu0 %v4651, 12
        %v5232 = vpop.permute.xlu0 %5231
        %5233 = vrot.lane.b32.xlu0 %v4652, 12
        %v5234 = vpop.permute.xlu0 %5233
        %5235 = vrot.lane.b32.xlu0 %v4653, 12
        %v5236 = vpop.permute.xlu0 %5235
        %5237 = vrot.lane.b32.xlu0 %v4654, 12
        %v5238 = vpop.permute.xlu0 %5237
        %5239 = vrot.lane.b32.xlu0 %v4655, 12
        %v5240 = vpop.permute.xlu0 %5239
        %5241 = vrot.lane.b32.xlu0 %v4656, 12
        %v5242 = vpop.permute.xlu0 %5241
        %5243 = vrot.lane.b32.xlu0 %v4657, 12
        %v5244 = vpop.permute.xlu0 %5243
        %5245 = vrot.lane.b32.xlu0 %v4658, 12
        %v5246 = vpop.permute.xlu0 %5245
        %5247 = vrot.lane.b32.xlu0 %v4659, 12
        %v5248 = vpop.permute.xlu0 %5247
        %5249 = vrot.lane.b32.xlu0 %v4660, 12
        %v5250 = vpop.permute.xlu0 %5249
        %5251 = vrot.lane.b32.xlu0 %v4661, 12
        %v5252 = vpop.permute.xlu0 %5251
        %5253 = vrot.lane.b32.xlu0 %v4662, 12
        %v5254 = vpop.permute.xlu0 %5253
        %5255 = vrot.lane.b32.xlu0 %v4663, 12
        %v5256 = vpop.permute.xlu0 %5255
        %5257 = vrot.lane.b32.xlu0 %v4664, 12
        %v5258 = vpop.permute.xlu0 %5257
        %5259 = vrot.lane.b32.xlu0 %v4665, 12
        %v5260 = vpop.permute.xlu0 %5259
        %5261 = vrot.lane.b32.xlu0 %v4666, 12
        %v5262 = vpop.permute.xlu0 %5261
        %5263 = vrot.lane.b32.xlu0 %v4667, 12
        %v5264 = vpop.permute.xlu0 %5263
        %5265 = vrot.lane.b32.xlu0 %v4668, 12
        %v5266 = vpop.permute.xlu0 %5265
        %5267 = vrot.lane.b32.xlu0 %v4669, 12
        %v5268 = vpop.permute.xlu0 %5267
        %5269 = vrot.lane.b32.xlu0 %v4670, 12
        %v5270 = vpop.permute.xlu0 %5269
        %5271 = vrot.lane.b32.xlu0 %v4671, 12
        %v5272 = vpop.permute.xlu0 %5271
        %5273 = vrot.lane.b32.xlu0 %v4672, 12
        %v5274 = vpop.permute.xlu0 %5273
        %5275 = vrot.lane.b32.xlu0 %v4673, 12
        %v5276 = vpop.permute.xlu0 %5275
        %5277 = vrot.lane.b32.xlu0 %v4674, 12
        %v5278 = vpop.permute.xlu0 %5277
        %5279 = vrot.lane.b32.xlu0 %v4675, 12
        %v5280 = vpop.permute.xlu0 %5279
        %5281 = vrot.lane.b32.xlu0 %v4676, 12
        %v5282 = vpop.permute.xlu0 %5281
        %5283 = vrot.lane.b32.xlu0 %v4677, 12
        %v5284 = vpop.permute.xlu0 %5283
        %5285 = vrot.lane.b32.xlu0 %v4678, 12
        %v5286 = vpop.permute.xlu0 %5285
        %5287 = vrot.lane.b32.xlu0 %v4679, 12
        %v5288 = vpop.permute.xlu0 %5287
        %5353 = vrot.lane.b32.xlu0 %v4680, 15
        %v5354 = vpop.permute.xlu0 %5353
        %5355 = vrot.lane.b32.xlu0 %v4681, 15
        %v5356 = vpop.permute.xlu0 %5355
        %5357 = vrot.lane.b32.xlu0 %v4682, 15
        %v5358 = vpop.permute.xlu0 %5357
        %5359 = vrot.lane.b32.xlu0 %v4683, 15
        %v5360 = vpop.permute.xlu0 %5359
        %5361 = vrot.lane.b32.xlu0 %v4684, 15
        %v5362 = vpop.permute.xlu0 %5361
        %5363 = vrot.lane.b32.xlu0 %v4685, 15
        %v5364 = vpop.permute.xlu0 %5363
        %5365 = vrot.lane.b32.xlu0 %v4686, 15
        %v5366 = vpop.permute.xlu0 %5365
        %5367 = vrot.lane.b32.xlu0 %v4687, 15
        %v5368 = vpop.permute.xlu0 %5367
        %5369 = vrot.lane.b32.xlu0 %v4688, 15
        %v5370 = vpop.permute.xlu0 %5369
        %5371 = vrot.lane.b32.xlu0 %v4689, 15
        %v5372 = vpop.permute.xlu0 %5371
        %5373 = vrot.lane.b32.xlu0 %v4690, 15
        %v5374 = vpop.permute.xlu0 %5373
        %5375 = vrot.lane.b32.xlu0 %v4691, 15
        %v5376 = vpop.permute.xlu0 %5375
        %5377 = vrot.lane.b32.xlu0 %v4692, 15
        %v5378 = vpop.permute.xlu0 %5377
        %5379 = vrot.lane.b32.xlu0 %v4693, 15
        %v5380 = vpop.permute.xlu0 %5379
        %5381 = vrot.lane.b32.xlu0 %v4694, 15
        %v5382 = vpop.permute.xlu0 %5381
        %5383 = vrot.lane.b32.xlu0 %v4695, 15
        %v5384 = vpop.permute.xlu0 %5383
        %5385 = vrot.lane.b32.xlu0 %v4696, 15
        %v5386 = vpop.permute.xlu0 %5385
        %5387 = vrot.lane.b32.xlu0 %v4697, 15
        %v5388 = vpop.permute.xlu0 %5387
        %5389 = vrot.lane.b32.xlu0 %v4698, 15
        %v5390 = vpop.permute.xlu0 %5389
        %5391 = vrot.lane.b32.xlu0 %v4699, 15
        %v5392 = vpop.permute.xlu0 %5391
        %5393 = vrot.lane.b32.xlu0 %v4700, 15
        %v5394 = vpop.permute.xlu0 %5393
        %5395 = vrot.lane.b32.xlu0 %v4701, 15
        %v5396 = vpop.permute.xlu0 %5395
        %5397 = vrot.lane.b32.xlu0 %v4702, 15
        %v5398 = vpop.permute.xlu0 %5397
        %5399 = vrot.lane.b32.xlu0 %v4703, 15
        %v5400 = vpop.permute.xlu0 %5399
        %5401 = vrot.lane.b32.xlu0 %v4704, 15
        %v5402 = vpop.permute.xlu0 %5401
        %5403 = vrot.lane.b32.xlu0 %v4705, 15
        %v5404 = vpop.permute.xlu0 %5403
        %5405 = vrot.lane.b32.xlu0 %v4706, 15
        %v5406 = vpop.permute.xlu0 %5405
        %5407 = vrot.lane.b32.xlu0 %v4707, 15
        %v5408 = vpop.permute.xlu0 %5407
        %5409 = vrot.lane.b32.xlu0 %v4708, 15
        %v5410 = vpop.permute.xlu0 %5409
        %5411 = vrot.lane.b32.xlu0 %v4709, 15
        %v5412 = vpop.permute.xlu0 %5411
        %5413 = vrot.lane.b32.xlu0 %v4710, 15
        %v5414 = vpop.permute.xlu0 %5413
        %5415 = vrot.lane.b32.xlu0 %v4711, 15
        %v5416 = vpop.permute.xlu0 %5415
        %5481 = vrot.lane.b32.xlu0 %v4713, 18
        %v5482 = vpop.permute.xlu0 %5481
        %5483 = vrot.lane.b32.xlu0 %v4714, 18
        %v5484 = vpop.permute.xlu0 %5483
        %5485 = vrot.lane.b32.xlu0 %v4715, 18
        %v5486 = vpop.permute.xlu0 %5485
        %5487 = vrot.lane.b32.xlu0 %v4716, 18
        %v5488 = vpop.permute.xlu0 %5487
        %5489 = vrot.lane.b32.xlu0 %v4717, 18
        %v5490 = vpop.permute.xlu0 %5489
        %5491 = vrot.lane.b32.xlu0 %v4718, 18
        %v5492 = vpop.permute.xlu0 %5491
        %5493 = vrot.lane.b32.xlu0 %v4719, 18
        %v5494 = vpop.permute.xlu0 %5493
        %5495 = vrot.lane.b32.xlu0 %v4720, 18
        %v5496 = vpop.permute.xlu0 %5495
        %5497 = vrot.lane.b32.xlu0 %v4721, 18
        %v5498 = vpop.permute.xlu0 %5497
        %5499 = vrot.lane.b32.xlu0 %v4722, 18
        %v5500 = vpop.permute.xlu0 %5499
        %5501 = vrot.lane.b32.xlu0 %v4723, 18
        %v5502 = vpop.permute.xlu0 %5501
        %5503 = vrot.lane.b32.xlu0 %v4724, 18
        %v5504 = vpop.permute.xlu0 %5503
        %5505 = vrot.lane.b32.xlu0 %v4725, 18
        %v5506 = vpop.permute.xlu0 %5505
        %5507 = vrot.lane.b32.xlu0 %v4726, 18
        %v5508 = vpop.permute.xlu0 %5507
        %5509 = vrot.lane.b32.xlu0 %v4727, 18
        %v5510 = vpop.permute.xlu0 %5509
        %5511 = vrot.lane.b32.xlu0 %v4728, 18
        %v5512 = vpop.permute.xlu0 %5511
        %5513 = vrot.lane.b32.xlu0 %v4729, 18
        %v5514 = vpop.permute.xlu0 %5513
        %5515 = vrot.lane.b32.xlu0 %v4730, 18
        %v5516 = vpop.permute.xlu0 %5515
        %5517 = vrot.lane.b32.xlu0 %v4731, 18
        %v5518 = vpop.permute.xlu0 %5517
        %5519 = vrot.lane.b32.xlu0 %v4732, 18
        %v5520 = vpop.permute.xlu0 %5519
        %5521 = vrot.lane.b32.xlu0 %v4733, 18
        %v5522 = vpop.permute.xlu0 %5521
        %5523 = vrot.lane.b32.xlu0 %v4734, 18
        %v5524 = vpop.permute.xlu0 %5523
        %5525 = vrot.lane.b32.xlu0 %v4735, 18
        %v5526 = vpop.permute.xlu0 %5525
        %5527 = vrot.lane.b32.xlu0 %v4736, 18
        %v5528 = vpop.permute.xlu0 %5527
        %5529 = vrot.lane.b32.xlu0 %v4737, 18
        %v5530 = vpop.permute.xlu0 %5529
        %5531 = vrot.lane.b32.xlu0 %v4738, 18
        %v5532 = vpop.permute.xlu0 %5531
        %5533 = vrot.lane.b32.xlu0 %v4739, 18
        %v5534 = vpop.permute.xlu0 %5533
        %5535 = vrot.lane.b32.xlu0 %v4740, 18
        %v5536 = vpop.permute.xlu0 %5535
        %5537 = vrot.lane.b32.xlu0 %v4741, 18
        %v5538 = vpop.permute.xlu0 %5537
        %5539 = vrot.lane.b32.xlu0 %v4742, 18
        %v5540 = vpop.permute.xlu0 %5539
        %5541 = vrot.lane.b32.xlu0 %v4743, 18
        %v5542 = vpop.permute.xlu0 %5541
        %5543 = vrot.lane.b32.xlu0 %v4744, 18
        %v5544 = vpop.permute.xlu0 %5543
        %5609 = vrot.lane.b32.xlu0 %v4745, 21
        %v5610 = vpop.permute.xlu0 %5609
        %5611 = vrot.lane.b32.xlu0 %v4746, 21
        %v5612 = vpop.permute.xlu0 %5611
        %5613 = vrot.lane.b32.xlu0 %v4747, 21
        %v5614 = vpop.permute.xlu0 %5613
        %5615 = vrot.lane.b32.xlu0 %v4748, 21
        %v5616 = vpop.permute.xlu0 %5615
        %5617 = vrot.lane.b32.xlu0 %v4749, 21
        %v5618 = vpop.permute.xlu0 %5617
        %5619 = vrot.lane.b32.xlu0 %v4750, 21
        %v5620 = vpop.permute.xlu0 %5619
        %5621 = vrot.lane.b32.xlu0 %v4751, 21
        %v5622 = vpop.permute.xlu0 %5621
        %5623 = vrot.lane.b32.xlu0 %v4752, 21
        %v5624 = vpop.permute.xlu0 %5623
        %5625 = vrot.lane.b32.xlu0 %v4753, 21
        %v5626 = vpop.permute.xlu0 %5625
        %5627 = vrot.lane.b32.xlu0 %v4754, 21
        %v5628 = vpop.permute.xlu0 %5627
        %5629 = vrot.lane.b32.xlu0 %v4755, 21
        %v5630 = vpop.permute.xlu0 %5629
        %5631 = vrot.lane.b32.xlu0 %v4756, 21
        %v5632 = vpop.permute.xlu0 %5631
        %5633 = vrot.lane.b32.xlu0 %v4757, 21
        %v5634 = vpop.permute.xlu0 %5633
        %5635 = vrot.lane.b32.xlu0 %v4758, 21
        %v5636 = vpop.permute.xlu0 %5635
        %5637 = vrot.lane.b32.xlu0 %v4759, 21
        %v5638 = vpop.permute.xlu0 %5637
        %5639 = vrot.lane.b32.xlu0 %v4760, 21
        %v5640 = vpop.permute.xlu0 %5639
        %5641 = vrot.lane.b32.xlu0 %v4761, 21
        %v5642 = vpop.permute.xlu0 %5641
        %5643 = vrot.lane.b32.xlu0 %v4762, 21
        %v5644 = vpop.permute.xlu0 %5643
        %5645 = vrot.lane.b32.xlu0 %v4763, 21
        %v5646 = vpop.permute.xlu0 %5645
        %5647 = vrot.lane.b32.xlu0 %v4764, 21
        %v5648 = vpop.permute.xlu0 %5647
        %5649 = vrot.lane.b32.xlu0 %v4765, 21
        %v5650 = vpop.permute.xlu0 %5649
        %5651 = vrot.lane.b32.xlu0 %v4766, 21
        %v5652 = vpop.permute.xlu0 %5651
        %5653 = vrot.lane.b32.xlu0 %v4767, 21
        %v5654 = vpop.permute.xlu0 %5653
        %5655 = vrot.lane.b32.xlu0 %v4768, 21
        %v5656 = vpop.permute.xlu0 %5655
        %5657 = vrot.lane.b32.xlu0 %v4769, 21
        %v5658 = vpop.permute.xlu0 %5657
        %5659 = vrot.lane.b32.xlu0 %v4770, 21
        %v5660 = vpop.permute.xlu0 %5659
        %5661 = vrot.lane.b32.xlu0 %v4771, 21
        %v5662 = vpop.permute.xlu0 %5661
        %5663 = vrot.lane.b32.xlu0 %v4772, 21
        %v5664 = vpop.permute.xlu0 %5663
        %5665 = vrot.lane.b32.xlu0 %v4773, 21
        %v5666 = vpop.permute.xlu0 %5665
        %5667 = vrot.lane.b32.xlu0 %v4774, 21
        %v5668 = vpop.permute.xlu0 %5667
        %5669 = vrot.lane.b32.xlu0 %v4775, 21
        %v5670 = vpop.permute.xlu0 %5669
        %5671 = vrot.lane.b32.xlu0 %v4776, 21
        %v5672 = vpop.permute.xlu0 %5671
        %5737 = vrot.lane.b32.xlu0 %v4777, 24
        %v5738 = vpop.permute.xlu0 %5737
        %5739 = vrot.lane.b32.xlu0 %v4778, 24
        %v5740 = vpop.permute.xlu0 %5739
        %5741 = vrot.lane.b32.xlu0 %v4779, 24
        %v5742 = vpop.permute.xlu0 %5741
        %5743 = vrot.lane.b32.xlu0 %v4780, 24
        %v5744 = vpop.permute.xlu0 %5743
        %5745 = vrot.lane.b32.xlu0 %v4781, 24
        %v5746 = vpop.permute.xlu0 %5745
        %5747 = vrot.lane.b32.xlu0 %v4782, 24
        %v5748 = vpop.permute.xlu0 %5747
        %5749 = vrot.lane.b32.xlu0 %v4783, 24
        %v5750 = vpop.permute.xlu0 %5749
        %5751 = vrot.lane.b32.xlu0 %v4784, 24
        %v5752 = vpop.permute.xlu0 %5751
        %5753 = vrot.lane.b32.xlu0 %v4785, 24
        %v5754 = vpop.permute.xlu0 %5753
        %5755 = vrot.lane.b32.xlu0 %v4786, 24
        %v5756 = vpop.permute.xlu0 %5755
        %5757 = vrot.lane.b32.xlu0 %v4787, 24
        %v5758 = vpop.permute.xlu0 %5757
        %5759 = vrot.lane.b32.xlu0 %v4788, 24
        %v5760 = vpop.permute.xlu0 %5759
        %5761 = vrot.lane.b32.xlu0 %v4789, 24
        %v5762 = vpop.permute.xlu0 %5761
        %5763 = vrot.lane.b32.xlu0 %v4790, 24
        %v5764 = vpop.permute.xlu0 %5763
        %5765 = vrot.lane.b32.xlu0 %v4791, 24
        %v5766 = vpop.permute.xlu0 %5765
        %5767 = vrot.lane.b32.xlu0 %v4792, 24
        %v5768 = vpop.permute.xlu0 %5767
        %5769 = vrot.lane.b32.xlu0 %v4793, 24
        %v5770 = vpop.permute.xlu0 %5769
        %5771 = vrot.lane.b32.xlu0 %v4794, 24
        %v5772 = vpop.permute.xlu0 %5771
        %5773 = vrot.lane.b32.xlu0 %v4795, 24
        %v5774 = vpop.permute.xlu0 %5773
        %5775 = vrot.lane.b32.xlu0 %v4796, 24
        %v5776 = vpop.permute.xlu0 %5775
        %5777 = vrot.lane.b32.xlu0 %v4797, 24
        %v5778 = vpop.permute.xlu0 %5777
        %5779 = vrot.lane.b32.xlu0 %v4798, 24
        %v5780 = vpop.permute.xlu0 %5779
        %5781 = vrot.lane.b32.xlu0 %v4799, 24
        %v5782 = vpop.permute.xlu0 %5781
        %5783 = vrot.lane.b32.xlu0 %v4800, 24
        %v5784 = vpop.permute.xlu0 %5783
        %5785 = vrot.lane.b32.xlu0 %v4801, 24
        %v5786 = vpop.permute.xlu0 %5785
        %5787 = vrot.lane.b32.xlu0 %v4802, 24
        %v5788 = vpop.permute.xlu0 %5787
        %5789 = vrot.lane.b32.xlu0 %v4803, 24
        %v5790 = vpop.permute.xlu0 %5789
        %5791 = vrot.lane.b32.xlu0 %v4804, 24
        %v5792 = vpop.permute.xlu0 %5791
        %5793 = vrot.lane.b32.xlu0 %v4805, 24
        %v5794 = vpop.permute.xlu0 %5793
        %5795 = vrot.lane.b32.xlu0 %v4806, 24
        %v5796 = vpop.permute.xlu0 %5795
        %5797 = vrot.lane.b32.xlu0 %v4807, 24
        %v5798 = vpop.permute.xlu0 %5797
        %5799 = vrot.lane.b32.xlu0 %v4808, 24
        %v5800 = vpop.permute.xlu0 %5799
        %v5833 = vsel %vm276, %v4519, %v4842
        %v5834 = vsel %vm276, %v4520, %v4844
        %v5835 = vsel %vm276, %v4521, %v4846
        %v5836 = vsel %vm276, %v4522, %v4848
        %v5837 = vsel %vm276, %v4523, %v4850
        %v5838 = vsel %vm276, %v4524, %v4852
        %v5839 = vsel %vm276, %v4525, %v4854
        %v5840 = vsel %vm276, %v4526, %v4856
        %v5841 = vsel %vm276, %v4527, %v4858
        %v5842 = vsel %vm276, %v4528, %v4860
        %v5843 = vsel %vm276, %v4529, %v4862
        %v5844 = vsel %vm276, %v4530, %v4864
        %v5845 = vsel %vm276, %v4531, %v4866
        %v5846 = vsel %vm276, %v4532, %v4868
        %v5847 = vsel %vm276, %v4533, %v4870
        %v5848 = vsel %vm276, %v4534, %v4872
        %v5849 = vsel %vm276, %v4535, %v4874
        %v5850 = vsel %vm276, %v4536, %v4876
        %v5851 = vsel %vm276, %v4537, %v4878
        %v5852 = vsel %vm276, %v4538, %v4880
        %v5853 = vsel %vm276, %v4539, %v4882
        %v5854 = vsel %vm276, %v4540, %v4884
        %v5855 = vsel %vm276, %v4541, %v4886
        %v5856 = vsel %vm276, %v4542, %v4888
        %v5857 = vsel %vm276, %v4543, %v4890
        %v5858 = vsel %vm276, %v4544, %v4892
        %v5859 = vsel %vm276, %v4545, %v4894
        %v5860 = vsel %vm276, %v4546, %v4896
        %v5861 = vsel %vm276, %v4547, %v4898
        %v5862 = vsel %vm276, %v4548, %v4900
        %v5863 = vsel %vm276, %v4549, %v4902
        %v5864 = vsel %vm276, %v4550, %v4904
        %v5865 = vsel %vm2161, %v5833, %v4970
        %v5866 = vsel %vm2161, %v5834, %v4972
        %v5867 = vsel %vm2161, %v5835, %v4974
        %v5868 = vsel %vm2161, %v5836, %v4976
        %v5869 = vsel %vm2161, %v5837, %v4978
        %v5870 = vsel %vm2161, %v5838, %v4980
        %v5871 = vsel %vm2161, %v5839, %v4982
        %v5872 = vsel %vm2161, %v5840, %v4984
        %v5873 = vsel %vm2161, %v5841, %v4986
        %v5874 = vsel %vm2161, %v5842, %v4988
        %v5875 = vsel %vm2161, %v5843, %v4990
        %v5876 = vsel %vm2161, %v5844, %v4992
        %v5877 = vsel %vm2161, %v5845, %v4994
        %v5878 = vsel %vm2161, %v5846, %v4996
        %v5879 = vsel %vm2161, %v5847, %v4998
        %v5880 = vsel %vm2161, %v5848, %v5000
        %v5881 = vsel %vm2161, %v5849, %v5002
        %v5882 = vsel %vm2161, %v5850, %v5004
        %v5883 = vsel %vm2161, %v5851, %v5006
        %v5884 = vsel %vm2161, %v5852, %v5008
        %v5885 = vsel %vm2161, %v5853, %v5010
        %v5886 = vsel %vm2161, %v5854, %v5012
        %v5887 = vsel %vm2161, %v5855, %v5014
        %v5888 = vsel %vm2161, %v5856, %v5016
        %v5889 = vsel %vm2161, %v5857, %v5018
        %v5890 = vsel %vm2161, %v5858, %v5020
        %v5891 = vsel %vm2161, %v5859, %v5022
        %v5892 = vsel %vm2161, %v5860, %v5024
        %v5893 = vsel %vm2161, %v5861, %v5026
        %v5894 = vsel %vm2161, %v5862, %v5028
        %v5895 = vsel %vm2161, %v5863, %v5030
        %v5896 = vsel %vm2161, %v5864, %v5032
        %v5897 = vsel %vm2194, %v5865, %v5098
        %v5898 = vsel %vm2194, %v5866, %v5100
        %v5899 = vsel %vm2194, %v5867, %v5102
        %v5900 = vsel %vm2194, %v5868, %v5104
        %v5901 = vsel %vm2194, %v5869, %v5106
        %v5902 = vsel %vm2194, %v5870, %v5108
        %v5903 = vsel %vm2194, %v5871, %v5110
        %v5904 = vsel %vm2194, %v5872, %v5112
        %v5905 = vsel %vm2194, %v5873, %v5114
        %v5906 = vsel %vm2194, %v5874, %v5116
        %v5907 = vsel %vm2194, %v5875, %v5118
        %v5908 = vsel %vm2194, %v5876, %v5120
        %v5909 = vsel %vm2194, %v5877, %v5122
        %v5910 = vsel %vm2194, %v5878, %v5124
        %v5911 = vsel %vm2194, %v5879, %v5126
        %v5912 = vsel %vm2194, %v5880, %v5128
        %v5913 = vsel %vm2194, %v5881, %v5130
        %v5914 = vsel %vm2194, %v5882, %v5132
        %v5915 = vsel %vm2194, %v5883, %v5134
        %v5916 = vsel %vm2194, %v5884, %v5136
        %v5917 = vsel %vm2194, %v5885, %v5138
        %v5918 = vsel %vm2194, %v5886, %v5140
        %v5919 = vsel %vm2194, %v5887, %v5142
        %v5920 = vsel %vm2194, %v5888, %v5144
        %v5921 = vsel %vm2194, %v5889, %v5146
        %v5922 = vsel %vm2194, %v5890, %v5148
        %v5923 = vsel %vm2194, %v5891, %v5150
        %v5924 = vsel %vm2194, %v5892, %v5152
        %v5925 = vsel %vm2194, %v5893, %v5154
        %v5926 = vsel %vm2194, %v5894, %v5156
        %v5927 = vsel %vm2194, %v5895, %v5158
        %v5928 = vsel %vm2194, %v5896, %v5160
        %v5929 = vsel %vm2227, %v5897, %v5226
        %v5930 = vsel %vm2227, %v5898, %v5228
        %v5931 = vsel %vm2227, %v5899, %v5230
        %v5932 = vsel %vm2227, %v5900, %v5232
        %v5933 = vsel %vm2227, %v5901, %v5234
        %v5934 = vsel %vm2227, %v5902, %v5236
        %v5935 = vsel %vm2227, %v5903, %v5238
        %v5936 = vsel %vm2227, %v5904, %v5240
        %v5937 = vsel %vm2227, %v5905, %v5242
        %v5938 = vsel %vm2227, %v5906, %v5244
        %v5939 = vsel %vm2227, %v5907, %v5246
        %v5940 = vsel %vm2227, %v5908, %v5248
        %v5941 = vsel %vm2227, %v5909, %v5250
        %v5942 = vsel %vm2227, %v5910, %v5252
        %v5943 = vsel %vm2227, %v5911, %v5254
        %v5944 = vsel %vm2227, %v5912, %v5256
        %v5945 = vsel %vm2227, %v5913, %v5258
        %v5946 = vsel %vm2227, %v5914, %v5260
        %v5947 = vsel %vm2227, %v5915, %v5262
        %v5948 = vsel %vm2227, %v5916, %v5264
        %v5949 = vsel %vm2227, %v5917, %v5266
        %v5950 = vsel %vm2227, %v5918, %v5268
        %v5951 = vsel %vm2227, %v5919, %v5270
        %v5952 = vsel %vm2227, %v5920, %v5272
        %v5953 = vsel %vm2227, %v5921, %v5274
        %v5954 = vsel %vm2227, %v5922, %v5276
        %v5955 = vsel %vm2227, %v5923, %v5278
        %v5956 = vsel %vm2227, %v5924, %v5280
        %v5957 = vsel %vm2227, %v5925, %v5282
        %v5958 = vsel %vm2227, %v5926, %v5284
        %v5959 = vsel %vm2227, %v5927, %v5286
        %v5960 = vsel %vm2227, %v5928, %v5288
        %v5961 = vsel %vm2260, %v5929, %v5354
        %v5962 = vsel %vm2260, %v5930, %v5356
        %v5963 = vsel %vm2260, %v5931, %v5358
        %v5964 = vsel %vm2260, %v5932, %v5360
        %v5965 = vsel %vm2260, %v5933, %v5362
        %v5966 = vsel %vm2260, %v5934, %v5364
        %v5967 = vsel %vm2260, %v5935, %v5366
        %v5968 = vsel %vm2260, %v5936, %v5368
        %v5969 = vsel %vm2260, %v5937, %v5370
        %v5970 = vsel %vm2260, %v5938, %v5372
        %v5971 = vsel %vm2260, %v5939, %v5374
        %v5972 = vsel %vm2260, %v5940, %v5376
        %v5973 = vsel %vm2260, %v5941, %v5378
        %v5974 = vsel %vm2260, %v5942, %v5380
        %v5975 = vsel %vm2260, %v5943, %v5382
        %v5976 = vsel %vm2260, %v5944, %v5384
        %v5977 = vsel %vm2260, %v5945, %v5386
        %v5978 = vsel %vm2260, %v5946, %v5388
        %v5979 = vsel %vm2260, %v5947, %v5390
        %v5980 = vsel %vm2260, %v5948, %v5392
        %v5981 = vsel %vm2260, %v5949, %v5394
        %v5982 = vsel %vm2260, %v5950, %v5396
        %v5983 = vsel %vm2260, %v5951, %v5398
        %v5984 = vsel %vm2260, %v5952, %v5400
        %v5985 = vsel %vm2260, %v5953, %v5402
        %v5986 = vsel %vm2260, %v5954, %v5404
        %v5987 = vsel %vm2260, %v5955, %v5406
        %v5988 = vsel %vm2260, %v5956, %v5408
        %v5989 = vsel %vm2260, %v5957, %v5410
        %v5990 = vsel %vm2260, %v5958, %v5412
        %v5991 = vsel %vm2260, %v5959, %v5414
        %v5992 = vsel %vm2260, %v5960, %v5416
        %v5993 = vsel %vm2293, %v5961, %v5482
        %v5994 = vsel %vm2293, %v5962, %v5484
        %v5995 = vsel %vm2293, %v5963, %v5486
        %v5996 = vsel %vm2293, %v5964, %v5488
        %v5997 = vsel %vm2293, %v5965, %v5490
        %v5998 = vsel %vm2293, %v5966, %v5492
        %v5999 = vsel %vm2293, %v5967, %v5494
        %v6000 = vsel %vm2293, %v5968, %v5496
        %v6001 = vsel %vm2293, %v5969, %v5498
        %v6002 = vsel %vm2293, %v5970, %v5500
        %v6003 = vsel %vm2293, %v5971, %v5502
        %v6004 = vsel %vm2293, %v5972, %v5504
        %v6005 = vsel %vm2293, %v5973, %v5506
        %v6006 = vsel %vm2293, %v5974, %v5508
        %v6007 = vsel %vm2293, %v5975, %v5510
        %v6008 = vsel %vm2293, %v5976, %v5512
        %v6009 = vsel %vm2293, %v5977, %v5514
        %v6010 = vsel %vm2293, %v5978, %v5516
        %v6011 = vsel %vm2293, %v5979, %v5518
        %v6012 = vsel %vm2293, %v5980, %v5520
        %v6013 = vsel %vm2293, %v5981, %v5522
        %v6014 = vsel %vm2293, %v5982, %v5524
        %v6015 = vsel %vm2293, %v5983, %v5526
        %v6016 = vsel %vm2293, %v5984, %v5528
        %v6017 = vsel %vm2293, %v5985, %v5530
        %v6018 = vsel %vm2293, %v5986, %v5532
        %v6019 = vsel %vm2293, %v5987, %v5534
        %v6020 = vsel %vm2293, %v5988, %v5536
        %v6021 = vsel %vm2293, %v5989, %v5538
        %v6022 = vsel %vm2293, %v5990, %v5540
        %v6023 = vsel %vm2293, %v5991, %v5542
        %v6024 = vsel %vm2293, %v5992, %v5544
        %v6025 = vsel %vm2326, %v5993, %v5610
        %v6026 = vsel %vm2326, %v5994, %v5612
        %v6027 = vsel %vm2326, %v5995, %v5614
        %v6028 = vsel %vm2326, %v5996, %v5616
        %v6029 = vsel %vm2326, %v5997, %v5618
        %v6030 = vsel %vm2326, %v5998, %v5620
        %v6031 = vsel %vm2326, %v5999, %v5622
        %v6032 = vsel %vm2326, %v6000, %v5624
        %v6033 = vsel %vm2326, %v6001, %v5626
        %v6034 = vsel %vm2326, %v6002, %v5628
        %v6035 = vsel %vm2326, %v6003, %v5630
        %v6036 = vsel %vm2326, %v6004, %v5632
        %v6037 = vsel %vm2326, %v6005, %v5634
        %v6038 = vsel %vm2326, %v6006, %v5636
        %v6039 = vsel %vm2326, %v6007, %v5638
        %v6040 = vsel %vm2326, %v6008, %v5640
        %v6041 = vsel %vm2326, %v6009, %v5642
        %v6042 = vsel %vm2326, %v6010, %v5644
        %v6043 = vsel %vm2326, %v6011, %v5646
        %v6044 = vsel %vm2326, %v6012, %v5648
        %v6045 = vsel %vm2326, %v6013, %v5650
        %v6046 = vsel %vm2326, %v6014, %v5652
        %v6047 = vsel %vm2326, %v6015, %v5654
        %v6048 = vsel %vm2326, %v6016, %v5656
        %v6049 = vsel %vm2326, %v6017, %v5658
        %v6050 = vsel %vm2326, %v6018, %v5660
        %v6051 = vsel %vm2326, %v6019, %v5662
        %v6052 = vsel %vm2326, %v6020, %v5664
        %v6053 = vsel %vm2326, %v6021, %v5666
        %v6054 = vsel %vm2326, %v6022, %v5668
        %v6055 = vsel %vm2326, %v6023, %v5670
        %v6056 = vsel %vm2326, %v6024, %v5672
        %v6057 = vsel %vm2359, %v6025, %v5738
        %v6058 = vsel %vm2359, %v6026, %v5740
        %v6059 = vsel %vm2359, %v6027, %v5742
        %v6060 = vsel %vm2359, %v6028, %v5744
        %v6061 = vsel %vm2359, %v6029, %v5746
        %v6062 = vsel %vm2359, %v6030, %v5748
        %v6063 = vsel %vm2359, %v6031, %v5750
        %v6064 = vsel %vm2359, %v6032, %v5752
        %v6065 = vsel %vm2359, %v6033, %v5754
        %v6066 = vsel %vm2359, %v6034, %v5756
        %v6067 = vsel %vm2359, %v6035, %v5758
        %v6068 = vsel %vm2359, %v6036, %v5760
        %v6069 = vsel %vm2359, %v6037, %v5762
        %v6070 = vsel %vm2359, %v6038, %v5764
        %v6071 = vsel %vm2359, %v6039, %v5766
        %v6072 = vsel %vm2359, %v6040, %v5768
        %v6073 = vsel %vm2359, %v6041, %v5770
        %v6074 = vsel %vm2359, %v6042, %v5772
        %v6075 = vsel %vm2359, %v6043, %v5774
        %v6076 = vsel %vm2359, %v6044, %v5776
        %v6077 = vsel %vm2359, %v6045, %v5778
        %v6078 = vsel %vm2359, %v6046, %v5780
        %v6079 = vsel %vm2359, %v6047, %v5782
        %v6080 = vsel %vm2359, %v6048, %v5784
        %v6081 = vsel %vm2359, %v6049, %v5786
        %v6082 = vsel %vm2359, %v6050, %v5788
        %v6083 = vsel %vm2359, %v6051, %v5790
        %v6084 = vsel %vm2359, %v6052, %v5792
        %v6085 = vsel %vm2359, %v6053, %v5794
        %v6086 = vsel %vm2359, %v6054, %v5796
        %v6087 = vsel %vm2359, %v6055, %v5798
        %v6088 = vsel %vm2359, %v6056, %v5800
        %v6090 = vsel %vm2395, %v6057, 0
        %v6093 = vsel %vm2395, %v6058, 0
        %v6096 = vsel %vm2395, %v6059, 0
        %v6099 = vsel %vm2395, %v6060, 0
        %v6102 = vsel %vm2395, %v6061, 0
        %v6105 = vsel %vm2395, %v6062, 0
        %v6108 = vsel %vm2395, %v6063, 0
        %v6111 = vsel %vm2395, %v6064, 0
        %v6114 = vsel %vm2395, %v6065, 0
        %v6117 = vsel %vm2395, %v6066, 0
        %v6120 = vsel %vm2395, %v6067, 0
        %v6123 = vsel %vm2395, %v6068, 0
        %v6126 = vsel %vm2395, %v6069, 0
        %v6129 = vsel %vm2395, %v6070, 0
        %v6132 = vsel %vm2395, %v6071, 0
        %v6135 = vsel %vm2395, %v6072, 0
        %v6138 = vsel %vm2395, %v6073, 0
        %v6141 = vsel %vm2395, %v6074, 0
        %v6144 = vsel %vm2395, %v6075, 0
        %v6147 = vsel %vm2395, %v6076, 0
        %v6150 = vsel %vm2395, %v6077, 0
        %v6153 = vsel %vm2395, %v6078, 0
        %v6156 = vsel %vm2395, %v6079, 0
        %v6159 = vsel %vm2395, %v6080, 0
        %v6162 = vsel %vm2395, %v6081, 0
        %v6165 = vsel %vm2395, %v6082, 0
        %v6168 = vsel %vm2395, %v6083, 0
        %v6171 = vsel %vm2395, %v6084, 0
        %v6174 = vsel %vm2395, %v6085, 0
        %v6177 = vsel %vm2395, %v6086, 0
        %v6180 = vsel %vm2395, %v6087, 0
        %v6183 = vsel %vm2395, %v6088, 0
        %6185 = vmatpush.msra.mxu0 0.0
        %6186 = vmatpush.msra.mxu0 0.0
        %6187 = vmatpush.msra.mxu0 0.0
        %6188 = vmatpush.msra.mxu0 0.0
        %6189 = vmatpush.msra.mxu0 0.0
        %6190 = vmatpush.msra.mxu0 0.0
        %6191 = vmatpush.msra.mxu0 0.0
        %6192 = vmatpush.msra.mxu0 0.0
        %6193 = vmatpush.msra.mxu0 0.0
        %6194 = vmatpush.msra.mxu0 0.0
        %6195 = vmatpush.msra.mxu0 0.0
        %6196 = vmatpush.msra.mxu0 0.0
        %6197 = vmatpush.msra.mxu0 %v2494
        %6198 = vmatpush.msra.mxu0 %v813
        %6199 = vmatpush.msra.mxu0 %v812
        %6200 = vmatpush.msra.mxu0 %v811
        %6201 = vmatmul.f32.gmra.mxu0 %v6090
        %v6202 = vpop.f32.mrf.mxu0
        %v6203 = vadd.f32 %v2393, %v6202
        %6204 = vmatmul.f32.gmra.mxu0 %v6093
        %v6205 = vpop.f32.mrf.mxu0
        %v6206 = vadd.f32 %v2393, %v6205
        %6207 = vmatmul.f32.gmra.mxu0 %v6096
        %v6208 = vpop.f32.mrf.mxu0
        %v6209 = vadd.f32 %v2393, %v6208
        %6210 = vmatmul.f32.gmra.mxu0 %v6099
        %v6211 = vpop.f32.mrf.mxu0
        %v6212 = vadd.f32 %v2393, %v6211
        %6213 = vmatmul.f32.gmra.mxu0 %v6102
        %v6214 = vpop.f32.mrf.mxu0
        %v6215 = vadd.f32 %v2393, %v6214
        %6216 = vmatmul.f32.gmra.mxu0 %v6105
        %v6217 = vpop.f32.mrf.mxu0
        %v6218 = vadd.f32 %v2393, %v6217
        %6219 = vmatmul.f32.gmra.mxu0 %v6108
        %v6220 = vpop.f32.mrf.mxu0
        %v6221 = vadd.f32 %v2393, %v6220
        %6222 = vmatmul.f32.gmra.mxu0 %v6111
        %v6223 = vpop.f32.mrf.mxu0
        %v6224 = vadd.f32 %v2393, %v6223
        %6225 = vmatmul.f32.gmra.mxu0 %v6114
        %v6226 = vpop.f32.mrf.mxu0
        %v6227 = vadd.f32 %v2393, %v6226
        %6228 = vmatmul.f32.gmra.mxu0 %v6117
        %v6229 = vpop.f32.mrf.mxu0
        %v6230 = vadd.f32 %v2393, %v6229
        %6231 = vmatmul.f32.gmra.mxu0 %v6120
        %v6232 = vpop.f32.mrf.mxu0
        %v6233 = vadd.f32 %v2393, %v6232
        %6234 = vmatmul.f32.gmra.mxu0 %v6123
        %v6235 = vpop.f32.mrf.mxu0
        %v6236 = vadd.f32 %v2393, %v6235
        %6237 = vmatmul.f32.gmra.mxu0 %v6126
        %v6238 = vpop.f32.mrf.mxu0
        %v6239 = vadd.f32 %v2393, %v6238
        %6240 = vmatmul.f32.gmra.mxu0 %v6129
        %v6241 = vpop.f32.mrf.mxu0
        %v6242 = vadd.f32 %v2393, %v6241
        %6243 = vmatmul.f32.gmra.mxu0 %v6132
        %v6244 = vpop.f32.mrf.mxu0
        %v6245 = vadd.f32 %v2393, %v6244
        %6246 = vmatmul.f32.gmra.mxu0 %v6135
        %v6247 = vpop.f32.mrf.mxu0
        %v6248 = vadd.f32 %v2393, %v6247
        %6249 = vmatmul.f32.gmra.mxu0 %v6138
        %v6250 = vpop.f32.mrf.mxu0
        %v6251 = vadd.f32 %v2393, %v6250
        %6252 = vmatmul.f32.gmra.mxu0 %v6141
        %v6253 = vpop.f32.mrf.mxu0
        %v6254 = vadd.f32 %v2393, %v6253
        %6255 = vmatmul.f32.gmra.mxu0 %v6144
        %v6256 = vpop.f32.mrf.mxu0
        %v6257 = vadd.f32 %v2393, %v6256
        %6258 = vmatmul.f32.gmra.mxu0 %v6147
        %v6259 = vpop.f32.mrf.mxu0
        %v6260 = vadd.f32 %v2393, %v6259
        %6261 = vmatmul.f32.gmra.mxu0 %v6150
        %v6262 = vpop.f32.mrf.mxu0
        %v6263 = vadd.f32 %v2393, %v6262
        %6264 = vmatmul.f32.gmra.mxu0 %v6153
        %v6265 = vpop.f32.mrf.mxu0
        %v6266 = vadd.f32 %v2393, %v6265
        %6267 = vmatmul.f32.gmra.mxu0 %v6156
        %v6268 = vpop.f32.mrf.mxu0
        %v6269 = vadd.f32 %v2393, %v6268
        %6270 = vmatmul.f32.gmra.mxu0 %v6159
        %v6271 = vpop.f32.mrf.mxu0
        %v6272 = vadd.f32 %v2393, %v6271
        %6273 = vmatmul.f32.gmra.mxu0 %v6162
        %v6274 = vpop.f32.mrf.mxu0
        %v6275 = vadd.f32 %v2393, %v6274
        %6276 = vmatmul.f32.gmra.mxu0 %v6165
        %v6277 = vpop.f32.mrf.mxu0
        %v6278 = vadd.f32 %v2393, %v6277
        %6279 = vmatmul.f32.gmra.mxu0 %v6168
        %v6280 = vpop.f32.mrf.mxu0
        %v6281 = vadd.f32 %v2393, %v6280
        %6282 = vmatmul.f32.gmra.mxu0 %v6171
        %v6283 = vpop.f32.mrf.mxu0
        %v6284 = vadd.f32 %v2393, %v6283
        %6285 = vmatmul.f32.gmra.mxu0 %v6174
        %v6286 = vpop.f32.mrf.mxu0
        %v6287 = vadd.f32 %v2393, %v6286
        %6288 = vmatmul.f32.gmra.mxu0 %v6177
        %v6289 = vpop.f32.mrf.mxu0
        %v6290 = vadd.f32 %v2393, %v6289
        %6291 = vmatmul.f32.gmra.mxu0 %v6180
        %v6292 = vpop.f32.mrf.mxu0
        %v6293 = vadd.f32 %v2393, %v6292
        %6294 = vmatmul.f32.gmra.mxu0 %v6183
        %v6295 = vpop.f32.mrf.mxu0
        %v6296 = vadd.f32 %v2393, %v6295
        %6297 = vdwg.mxu0
        %v6298 = vmax.f32 %v6203, 0.0
        %v6299 = vmax.f32 %v6206, 0.0
        %v6300 = vmax.f32 %v6209, 0.0
        %v6301 = vmax.f32 %v6212, 0.0
        %v6302 = vmax.f32 %v6215, 0.0
        %v6303 = vmax.f32 %v6218, 0.0
        %v6304 = vmax.f32 %v6221, 0.0
        %v6305 = vmax.f32 %v6224, 0.0
        %v6306 = vmax.f32 %v6227, 0.0
        %v6307 = vmax.f32 %v6230, 0.0
        %v6308 = vmax.f32 %v6233, 0.0
        %v6309 = vmax.f32 %v6236, 0.0
        %v6310 = vmax.f32 %v6239, 0.0
        %v6311 = vmax.f32 %v6242, 0.0
        %v6312 = vmax.f32 %v6245, 0.0
        %v6313 = vmax.f32 %v6248, 0.0
        %v6314 = vmax.f32 %v6251, 0.0
        %v6315 = vmax.f32 %v6254, 0.0
        %v6316 = vmax.f32 %v6257, 0.0
        %v6317 = vmax.f32 %v6260, 0.0
        %v6318 = vmax.f32 %v6263, 0.0
        %v6319 = vmax.f32 %v6266, 0.0
        %v6320 = vmax.f32 %v6269, 0.0
        %v6321 = vmax.f32 %v6272, 0.0
        %v6322 = vmax.f32 %v6275, 0.0
        %v6323 = vmax.f32 %v6278, 0.0
        %v6324 = vmax.f32 %v6281, 0.0
        %v6325 = vmax.f32 %v6284, 0.0
        %v6326 = vmax.f32 %v6287, 0.0
        %v6327 = vmax.f32 %v6290, 0.0
        %v6328 = vmax.f32 %v6293, 0.0
        %v6329 = vmax.f32 %v6296, 0.0
        %s6330 = scalar_lea.vmem [#allocation3], 512
        %6331 = vst.msk [vmem:[%s6330] sm:$0xff] %vm481, %v6298
        %6332 = vst.msk [vmem:[%s6330 + $0x8] sm:$0xff] %vm481, %v6299
        %6333 = vst.msk [vmem:[%s6330 + $0x10] sm:$0xff] %vm481, %v6300
        %6334 = vst.msk [vmem:[%s6330 + $0x18] sm:$0xff] %vm481, %v6301
        %6335 = vst.msk [vmem:[%s6330 + $0x20] sm:$0xff] %vm481, %v6302
        %6336 = vst.msk [vmem:[%s6330 + $0x28] sm:$0xff] %vm481, %v6303
        %6337 = vst.msk [vmem:[%s6330 + $0x30] sm:$0xff] %vm481, %v6304
        %6338 = vst.msk [vmem:[%s6330 + $0x38] sm:$0xff] %vm481, %v6305
        %6339 = vst.msk [vmem:[%s6330 + $0x40] sm:$0xff] %vm481, %v6306
        %6340 = vst.msk [vmem:[%s6330 + $0x48] sm:$0xff] %vm481, %v6307
        %6341 = vst.msk [vmem:[%s6330 + $0x50] sm:$0xff] %vm481, %v6308
        %6342 = vst.msk [vmem:[%s6330 + $0x58] sm:$0xff] %vm481, %v6309
        %6343 = vst.msk [vmem:[%s6330 + $0x60] sm:$0xff] %vm481, %v6310
        %6344 = vst.msk [vmem:[%s6330 + $0x68] sm:$0xff] %vm481, %v6311
        %6345 = vst.msk [vmem:[%s6330 + $0x70] sm:$0xff] %vm481, %v6312
        %6346 = vst.msk [vmem:[%s6330 + $0x78] sm:$0xff] %vm481, %v6313
        %6347 = vst.msk [vmem:[%s6330 + $0x80] sm:$0xff] %vm481, %v6314
        %6348 = vst.msk [vmem:[%s6330 + $0x88] sm:$0xff] %vm481, %v6315
        %6349 = vst.msk [vmem:[%s6330 + $0x90] sm:$0xff] %vm481, %v6316
        %6350 = vst.msk [vmem:[%s6330 + $0x98] sm:$0xff] %vm481, %v6317
        %6351 = vst.msk [vmem:[%s6330 + $0xa0] sm:$0xff] %vm481, %v6318
        %6352 = vst.msk [vmem:[%s6330 + $0xa8] sm:$0xff] %vm481, %v6319
        %6353 = vst.msk [vmem:[%s6330 + $0xb0] sm:$0xff] %vm481, %v6320
        %6354 = vst.msk [vmem:[%s6330 + $0xb8] sm:$0xff] %vm481, %v6321
        %6355 = vst.msk [vmem:[%s6330 + $0xc0] sm:$0xff] %vm481, %v6322
        %6356 = vst.msk [vmem:[%s6330 + $0xc8] sm:$0xff] %vm481, %v6323
        %6357 = vst.msk [vmem:[%s6330 + $0xd0] sm:$0xff] %vm481, %v6324
        %6358 = vst.msk [vmem:[%s6330 + $0xd8] sm:$0xff] %vm481, %v6325
        %6359 = vst.msk [vmem:[%s6330 + $0xe0] sm:$0xff] %vm481, %v6326
        %6360 = vst.msk [vmem:[%s6330 + $0xe8] sm:$0xff] %vm481, %v6327
        %6361 = vst.msk [vmem:[%s6330 + $0xf0] sm:$0xff] %vm481, %v6328
        %6362 = vst.msk [vmem:[%s6330 + $0xf8] sm:$0xff] %vm481, %v6329
        %s6363 = scalar_lea.vmem [#allocation2], 1152
        %v6364 = vld [vmem:[%s6363 + $0x7] sm:$0xff]
        %v6365 = vld [vmem:[%s6363 + $0xf] sm:$0xff]
        %v6366 = vld [vmem:[%s6363 + $0x17] sm:$0xff]
        %v6367 = vld [vmem:[%s6363 + $0x1f] sm:$0xff]
        %v6368 = vld [vmem:[%s6363 + $0x37] sm:$0xff]
        %v6369 = vld [vmem:[%s6363 + $0x3f] sm:$0xff]
        %v6370 = vld [vmem:[%s6363 + $0x47] sm:$0xff]
        %v6371 = vld [vmem:[%s6363 + $0x4f] sm:$0xff]
        %v6372 = vld [vmem:[%s6363 + $0x67] sm:$0xff]
        %v6373 = vld [vmem:[%s6363 + $0x6f] sm:$0xff]
        %v6374 = vld [vmem:[%s6363 + $0x77] sm:$0xff]
        %v6375 = vld [vmem:[%s6363 + $0x7f] sm:$0xff]
        %v6376 = vld [vmem:[%s6363 + $0x97] sm:$0xff]
        %v6377 = vld [vmem:[%s6363 + $0x9f] sm:$0xff]
        %v6378 = vld [vmem:[%s6363 + $0xa7] sm:$0xff]
        %v6379 = vld [vmem:[%s6363 + $0xaf] sm:$0xff]
        %v6380 = vld [vmem:[%s6363 + $0xc7] sm:$0xff]
        %v6381 = vld [vmem:[%s6363 + $0xcf] sm:$0xff]
        %v6382 = vld [vmem:[%s6363 + $0xd7] sm:$0xff]
        %v6383 = vld [vmem:[%s6363 + $0xdf] sm:$0xff]
        %v6384 = vld [vmem:[%s6363 + $0xf7] sm:$0xff]
        %v6385 = vld [vmem:[%s6363 + $0xff] sm:$0xff]
        %v6386 = vld [vmem:[%s6363 + $0x107] sm:$0xff]
        %v6387 = vld [vmem:[%s6363 + $0x10f] sm:$0xff]
        %v6388 = vld [vmem:[%s6363 + $0x127] sm:$0xff]
        %v6389 = vld [vmem:[%s6363 + $0x12f] sm:$0xff]
        %v6390 = vld [vmem:[%s6363 + $0x137] sm:$0xff]
        %v6391 = vld [vmem:[%s6363 + $0x13f] sm:$0xff]
        %v6392 = vld [vmem:[%s6363 + $0x157] sm:$0xff]
        %v6393 = vld [vmem:[%s6363 + $0x15f] sm:$0xff]
        %v6394 = vld [vmem:[%s6363 + $0x167] sm:$0xff]
        %v6395 = vld [vmem:[%s6363 + $0x16f] sm:$0xff]
        %v6396 = vld [vmem:[%s6363 + $0x8] sm:$0xff]
        %v6397 = vld [vmem:[%s6363 + $0x10] sm:$0xff]
        %v6398 = vld [vmem:[%s6363 + $0x18] sm:$0xff]
        %v6399 = vld [vmem:[%s6363 + $0x20] sm:$0xff]
        %v6400 = vld [vmem:[%s6363 + $0x38] sm:$0xff]
        %v6401 = vld [vmem:[%s6363 + $0x40] sm:$0xff]
        %v6402 = vld [vmem:[%s6363 + $0x48] sm:$0xff]
        %v6403 = vld [vmem:[%s6363 + $0x50] sm:$0xff]
        %v6404 = vld [vmem:[%s6363 + $0x68] sm:$0xff]
        %v6405 = vld [vmem:[%s6363 + $0x70] sm:$0xff]
        %v6406 = vld [vmem:[%s6363 + $0x78] sm:$0xff]
        %v6407 = vld [vmem:[%s6363 + $0x80] sm:$0xff]
        %v6408 = vld [vmem:[%s6363 + $0x98] sm:$0xff]
        %v6409 = vld [vmem:[%s6363 + $0xa0] sm:$0xff]
        %v6410 = vld [vmem:[%s6363 + $0xa8] sm:$0xff]
        %v6411 = vld [vmem:[%s6363 + $0xb0] sm:$0xff]
        %v6412 = vld [vmem:[%s6363 + $0xc8] sm:$0xff]
        %v6413 = vld [vmem:[%s6363 + $0xd0] sm:$0xff]
        %v6414 = vld [vmem:[%s6363 + $0xd8] sm:$0xff]
        %v6415 = vld [vmem:[%s6363 + $0xe0] sm:$0xff]
        %v6416 = vld [vmem:[%s6363 + $0xf8] sm:$0xff]
        %v6417 = vld [vmem:[%s6363 + $0x100] sm:$0xff]
        %v6418 = vld [vmem:[%s6363 + $0x108] sm:$0xff]
        %v6419 = vld [vmem:[%s6363 + $0x110] sm:$0xff]
        %v6420 = vld [vmem:[%s6363 + $0x128] sm:$0xff]
        %v6421 = vld [vmem:[%s6363 + $0x130] sm:$0xff]
        %v6422 = vld [vmem:[%s6363 + $0x138] sm:$0xff]
        %v6423 = vld [vmem:[%s6363 + $0x140] sm:$0xff]
        %v6424 = vld [vmem:[%s6363 + $0x158] sm:$0xff]
        %v6425 = vld [vmem:[%s6363 + $0x160] sm:$0xff]
        %v6426 = vld [vmem:[%s6363 + $0x168] sm:$0xff]
        %v6427 = vld [vmem:[%s6363 + $0x170] sm:$0xff]
        %v6428 = vld [vmem:[%s6363 + $0x9] sm:$0xff]
        %v6429 = vld [vmem:[%s6363 + $0x11] sm:$0xff]
        %v6430 = vld [vmem:[%s6363 + $0x19] sm:$0xff]
        %v6431 = vld [vmem:[%s6363 + $0x21] sm:$0xff]
        %v6432 = vld [vmem:[%s6363 + $0x39] sm:$0xff]
        %v6433 = vld [vmem:[%s6363 + $0x41] sm:$0xff]
        %v6434 = vld [vmem:[%s6363 + $0x49] sm:$0xff]
        %v6435 = vld [vmem:[%s6363 + $0x51] sm:$0xff]
        %v6436 = vld [vmem:[%s6363 + $0x69] sm:$0xff]
        %v6437 = vld [vmem:[%s6363 + $0x71] sm:$0xff]
        %v6438 = vld [vmem:[%s6363 + $0x79] sm:$0xff]
        %v6439 = vld [vmem:[%s6363 + $0x81] sm:$0xff]
        %v6440 = vld [vmem:[%s6363 + $0x99] sm:$0xff]
        %v6441 = vld [vmem:[%s6363 + $0xa1] sm:$0xff]
        %v6442 = vld [vmem:[%s6363 + $0xa9] sm:$0xff]
        %v6443 = vld [vmem:[%s6363 + $0xb1] sm:$0xff]
        %v6444 = vld [vmem:[%s6363 + $0xc9] sm:$0xff]
        %v6445 = vld [vmem:[%s6363 + $0xd1] sm:$0xff]
        %v6446 = vld [vmem:[%s6363 + $0xd9] sm:$0xff]
        %v6447 = vld [vmem:[%s6363 + $0xe1] sm:$0xff]
        %v6448 = vld [vmem:[%s6363 + $0xf9] sm:$0xff]
        %v6449 = vld [vmem:[%s6363 + $0x101] sm:$0xff]
        %v6450 = vld [vmem:[%s6363 + $0x109] sm:$0xff]
        %v6451 = vld [vmem:[%s6363 + $0x111] sm:$0xff]
        %v6452 = vld [vmem:[%s6363 + $0x129] sm:$0xff]
        %v6453 = vld [vmem:[%s6363 + $0x131] sm:$0xff]
        %v6454 = vld [vmem:[%s6363 + $0x139] sm:$0xff]
        %v6455 = vld [vmem:[%s6363 + $0x141] sm:$0xff]
        %v6456 = vld [vmem:[%s6363 + $0x159] sm:$0xff]
        %v6457 = vld [vmem:[%s6363 + $0x161] sm:$0xff]
        %v6458 = vld [vmem:[%s6363 + $0x169] sm:$0xff]
        %v6459 = vld [vmem:[%s6363 + $0x171] sm:$0xff]
        %s6460 = scalar_lea.vmem [#allocation2], 1200
        %v6461 = vld [vmem:[%s6460 + $0x7] sm:$0xff]
        %v6462 = vld [vmem:[%s6460 + $0xf] sm:$0xff]
        %v6463 = vld [vmem:[%s6460 + $0x17] sm:$0xff]
        %v6464 = vld [vmem:[%s6460 + $0x1f] sm:$0xff]
        %v6465 = vld [vmem:[%s6460 + $0x37] sm:$0xff]
        %v6466 = vld [vmem:[%s6460 + $0x3f] sm:$0xff]
        %v6467 = vld [vmem:[%s6460 + $0x47] sm:$0xff]
        %v6468 = vld [vmem:[%s6460 + $0x4f] sm:$0xff]
        %v6469 = vld [vmem:[%s6460 + $0x67] sm:$0xff]
        %v6470 = vld [vmem:[%s6460 + $0x6f] sm:$0xff]
        %v6471 = vld [vmem:[%s6460 + $0x77] sm:$0xff]
        %v6472 = vld [vmem:[%s6460 + $0x7f] sm:$0xff]
        %v6473 = vld [vmem:[%s6460 + $0x97] sm:$0xff]
        %v6474 = vld [vmem:[%s6460 + $0x9f] sm:$0xff]
        %v6475 = vld [vmem:[%s6460 + $0xa7] sm:$0xff]
        %v6476 = vld [vmem:[%s6460 + $0xaf] sm:$0xff]
        %v6477 = vld [vmem:[%s6460 + $0xc7] sm:$0xff]
        %v6478 = vld [vmem:[%s6460 + $0xcf] sm:$0xff]
        %v6479 = vld [vmem:[%s6460 + $0xd7] sm:$0xff]
        %v6480 = vld [vmem:[%s6460 + $0xdf] sm:$0xff]
        %v6481 = vld [vmem:[%s6460 + $0xf7] sm:$0xff]
        %v6482 = vld [vmem:[%s6460 + $0xff] sm:$0xff]
        %v6483 = vld [vmem:[%s6460 + $0x107] sm:$0xff]
        %v6484 = vld [vmem:[%s6460 + $0x10f] sm:$0xff]
        %v6485 = vld [vmem:[%s6460 + $0x127] sm:$0xff]
        %v6486 = vld [vmem:[%s6460 + $0x12f] sm:$0xff]
        %v6487 = vld [vmem:[%s6460 + $0x137] sm:$0xff]
        %v6488 = vld [vmem:[%s6460 + $0x13f] sm:$0xff]
        %v6489 = vld [vmem:[%s6460 + $0x157] sm:$0xff]
        %v6490 = vld [vmem:[%s6460 + $0x15f] sm:$0xff]
        %v6491 = vld [vmem:[%s6460 + $0x167] sm:$0xff]
        %v6492 = vld [vmem:[%s6460 + $0x16f] sm:$0xff]
        %v6493 = vld [vmem:[%s6460 + $0x8] sm:$0xff]
        %v6494 = vld [vmem:[%s6460 + $0x10] sm:$0xff]
        %v6495 = vld [vmem:[%s6460 + $0x18] sm:$0xff]
        %v6496 = vld [vmem:[%s6460 + $0x20] sm:$0xff]
        %v6497 = vld [vmem:[%s6460 + $0x38] sm:$0xff]
        %v6498 = vld [vmem:[%s6460 + $0x40] sm:$0xff]
        %v6499 = vld [vmem:[%s6460 + $0x48] sm:$0xff]
        %v6500 = vld [vmem:[%s6460 + $0x50] sm:$0xff]
        %v6501 = vld [vmem:[%s6460 + $0x68] sm:$0xff]
        %v6502 = vld [vmem:[%s6460 + $0x70] sm:$0xff]
        %v6503 = vld [vmem:[%s6460 + $0x78] sm:$0xff]
        %v6504 = vld [vmem:[%s6460 + $0x80] sm:$0xff]
        %v6505 = vld [vmem:[%s6460 + $0x98] sm:$0xff]
        %v6506 = vld [vmem:[%s6460 + $0xa0] sm:$0xff]
        %v6507 = vld [vmem:[%s6460 + $0xa8] sm:$0xff]
        %v6508 = vld [vmem:[%s6460 + $0xb0] sm:$0xff]
        %v6509 = vld [vmem:[%s6460 + $0xc8] sm:$0xff]
        %v6510 = vld [vmem:[%s6460 + $0xd0] sm:$0xff]
        %v6511 = vld [vmem:[%s6460 + $0xd8] sm:$0xff]
        %v6512 = vld [vmem:[%s6460 + $0xe0] sm:$0xff]
        %v6513 = vld [vmem:[%s6460 + $0xf8] sm:$0xff]
        %v6514 = vld [vmem:[%s6460 + $0x100] sm:$0xff]
        %v6515 = vld [vmem:[%s6460 + $0x108] sm:$0xff]
        %v6516 = vld [vmem:[%s6460 + $0x110] sm:$0xff]
        %v6517 = vld [vmem:[%s6460 + $0x128] sm:$0xff]
        %v6518 = vld [vmem:[%s6460 + $0x130] sm:$0xff]
        %v6519 = vld [vmem:[%s6460 + $0x138] sm:$0xff]
        %v6520 = vld [vmem:[%s6460 + $0x140] sm:$0xff]
        %v6521 = vld [vmem:[%s6460 + $0x158] sm:$0xff]
        %v6522 = vld [vmem:[%s6460 + $0x160] sm:$0xff]
        %v6523 = vld [vmem:[%s6460 + $0x168] sm:$0xff]
        %v6524 = vld [vmem:[%s6460 + $0x170] sm:$0xff]
        %v6525 = vld [vmem:[%s6460 + $0x9] sm:$0xff]
        %v6526 = vld [vmem:[%s6460 + $0x11] sm:$0xff]
        %v6527 = vld [vmem:[%s6460 + $0x19] sm:$0xff]
        %v6528 = vld [vmem:[%s6460 + $0x21] sm:$0xff]
        %v6529 = vld [vmem:[%s6460 + $0x39] sm:$0xff]
        %v6530 = vld [vmem:[%s6460 + $0x41] sm:$0xff]
        %v6531 = vld [vmem:[%s6460 + $0x49] sm:$0xff]
        %v6532 = vld [vmem:[%s6460 + $0x51] sm:$0xff]
        %v6533 = vld [vmem:[%s6460 + $0x69] sm:$0xff]
        %v6534 = vld [vmem:[%s6460 + $0x71] sm:$0xff]
        %v6535 = vld [vmem:[%s6460 + $0x79] sm:$0xff]
        %v6536 = vld [vmem:[%s6460 + $0x81] sm:$0xff]
        %v6537 = vld [vmem:[%s6460 + $0x99] sm:$0xff]
        %v6538 = vld [vmem:[%s6460 + $0xa1] sm:$0xff]
        %v6539 = vld [vmem:[%s6460 + $0xa9] sm:$0xff]
        %v6540 = vld [vmem:[%s6460 + $0xb1] sm:$0xff]
        %v6541 = vld [vmem:[%s6460 + $0xc9] sm:$0xff]
        %v6542 = vld [vmem:[%s6460 + $0xd1] sm:$0xff]
        %v6543 = vld [vmem:[%s6460 + $0xd9] sm:$0xff]
        %v6544 = vld [vmem:[%s6460 + $0xe1] sm:$0xff]
        %v6545 = vld [vmem:[%s6460 + $0xf9] sm:$0xff]
        %v6546 = vld [vmem:[%s6460 + $0x101] sm:$0xff]
        %v6547 = vld [vmem:[%s6460 + $0x109] sm:$0xff]
        %v6548 = vld [vmem:[%s6460 + $0x111] sm:$0xff]
        %v6549 = vld [vmem:[%s6460 + $0x129] sm:$0xff]
        %v6550 = vld [vmem:[%s6460 + $0x131] sm:$0xff]
        %v6551 = vld [vmem:[%s6460 + $0x139] sm:$0xff]
        %v6552 = vld [vmem:[%s6460 + $0x141] sm:$0xff]
        %v6553 = vld [vmem:[%s6460 + $0x159] sm:$0xff]
        %v6554 = vld [vmem:[%s6460 + $0x161] sm:$0xff]
        %v6555 = vld [vmem:[%s6460 + $0x169] sm:$0xff]
        %v6556 = vld [vmem:[%s6460 + $0x171] sm:$0xff]
        %s6557 = scalar_lea.vmem [#allocation2], 1248
        %v6558 = vld [vmem:[%s6557 + $0x7] sm:$0xff]
        %v6559 = vld [vmem:[%s6557 + $0xf] sm:$0xff]
        %v6560 = vld [vmem:[%s6557 + $0x17] sm:$0xff]
        %v6561 = vld [vmem:[%s6557 + $0x1f] sm:$0xff]
        %v6562 = vld [vmem:[%s6557 + $0x37] sm:$0xff]
        %v6563 = vld [vmem:[%s6557 + $0x3f] sm:$0xff]
        %v6564 = vld [vmem:[%s6557 + $0x47] sm:$0xff]
        %v6565 = vld [vmem:[%s6557 + $0x4f] sm:$0xff]
        %v6566 = vld [vmem:[%s6557 + $0x67] sm:$0xff]
        %v6567 = vld [vmem:[%s6557 + $0x6f] sm:$0xff]
        %v6568 = vld [vmem:[%s6557 + $0x77] sm:$0xff]
        %v6569 = vld [vmem:[%s6557 + $0x7f] sm:$0xff]
        %v6570 = vld [vmem:[%s6557 + $0x97] sm:$0xff]
        %v6571 = vld [vmem:[%s6557 + $0x9f] sm:$0xff]
        %v6572 = vld [vmem:[%s6557 + $0xa7] sm:$0xff]
        %v6573 = vld [vmem:[%s6557 + $0xaf] sm:$0xff]
        %v6574 = vld [vmem:[%s6557 + $0xc7] sm:$0xff]
        %v6575 = vld [vmem:[%s6557 + $0xcf] sm:$0xff]
        %v6576 = vld [vmem:[%s6557 + $0xd7] sm:$0xff]
        %v6577 = vld [vmem:[%s6557 + $0xdf] sm:$0xff]
        %v6578 = vld [vmem:[%s6557 + $0xf7] sm:$0xff]
        %v6579 = vld [vmem:[%s6557 + $0xff] sm:$0xff]
        %v6580 = vld [vmem:[%s6557 + $0x107] sm:$0xff]
        %v6581 = vld [vmem:[%s6557 + $0x10f] sm:$0xff]
        %v6582 = vld [vmem:[%s6557 + $0x127] sm:$0xff]
        %v6583 = vld [vmem:[%s6557 + $0x12f] sm:$0xff]
        %v6584 = vld [vmem:[%s6557 + $0x137] sm:$0xff]
        %v6585 = vld [vmem:[%s6557 + $0x13f] sm:$0xff]
        %v6586 = vld [vmem:[%s6557 + $0x157] sm:$0xff]
        %v6587 = vld [vmem:[%s6557 + $0x15f] sm:$0xff]
        %v6588 = vld [vmem:[%s6557 + $0x167] sm:$0xff]
        %v6589 = vld [vmem:[%s6557 + $0x16f] sm:$0xff]
        %v6590 = vld [vmem:[%s6557 + $0x8] sm:$0xff]
        %v6591 = vld [vmem:[%s6557 + $0x10] sm:$0xff]
        %v6592 = vld [vmem:[%s6557 + $0x18] sm:$0xff]
        %v6593 = vld [vmem:[%s6557 + $0x20] sm:$0xff]
        %v6594 = vld [vmem:[%s6557 + $0x38] sm:$0xff]
        %v6595 = vld [vmem:[%s6557 + $0x40] sm:$0xff]
        %v6596 = vld [vmem:[%s6557 + $0x48] sm:$0xff]
        %v6597 = vld [vmem:[%s6557 + $0x50] sm:$0xff]
        %v6598 = vld [vmem:[%s6557 + $0x68] sm:$0xff]
        %v6599 = vld [vmem:[%s6557 + $0x70] sm:$0xff]
        %v6600 = vld [vmem:[%s6557 + $0x78] sm:$0xff]
        %v6601 = vld [vmem:[%s6557 + $0x80] sm:$0xff]
        %v6602 = vld [vmem:[%s6557 + $0x98] sm:$0xff]
        %v6603 = vld [vmem:[%s6557 + $0xa0] sm:$0xff]
        %v6604 = vld [vmem:[%s6557 + $0xa8] sm:$0xff]
        %v6605 = vld [vmem:[%s6557 + $0xb0] sm:$0xff]
        %v6606 = vld [vmem:[%s6557 + $0xc8] sm:$0xff]
        %v6607 = vld [vmem:[%s6557 + $0xd0] sm:$0xff]
        %v6608 = vld [vmem:[%s6557 + $0xd8] sm:$0xff]
        %v6609 = vld [vmem:[%s6557 + $0xe0] sm:$0xff]
        %v6610 = vld [vmem:[%s6557 + $0xf8] sm:$0xff]
        %v6611 = vld [vmem:[%s6557 + $0x100] sm:$0xff]
        %v6612 = vld [vmem:[%s6557 + $0x108] sm:$0xff]
        %v6613 = vld [vmem:[%s6557 + $0x110] sm:$0xff]
        %v6614 = vld [vmem:[%s6557 + $0x128] sm:$0xff]
        %v6615 = vld [vmem:[%s6557 + $0x130] sm:$0xff]
        %v6616 = vld [vmem:[%s6557 + $0x138] sm:$0xff]
        %v6617 = vld [vmem:[%s6557 + $0x140] sm:$0xff]
        %v6618 = vld [vmem:[%s6557 + $0x158] sm:$0xff]
        %v6619 = vld [vmem:[%s6557 + $0x160] sm:$0xff]
        %v6620 = vld [vmem:[%s6557 + $0x168] sm:$0xff]
        %v6621 = vld [vmem:[%s6557 + $0x170] sm:$0xff]
        %v6622 = vld [vmem:[%s6557 + $0x9] sm:$0xff]
        %v6623 = vld [vmem:[%s6557 + $0x11] sm:$0xff]
        %v6624 = vld [vmem:[%s6557 + $0x19] sm:$0xff]
        %v6625 = vld [vmem:[%s6557 + $0x21] sm:$0xff]
        %v6626 = vld [vmem:[%s6557 + $0x39] sm:$0xff]
        %v6627 = vld [vmem:[%s6557 + $0x41] sm:$0xff]
        %v6628 = vld [vmem:[%s6557 + $0x49] sm:$0xff]
        %v6629 = vld [vmem:[%s6557 + $0x51] sm:$0xff]
        %v6630 = vld [vmem:[%s6557 + $0x69] sm:$0xff]
        %v6631 = vld [vmem:[%s6557 + $0x71] sm:$0xff]
        %v6632 = vld [vmem:[%s6557 + $0x79] sm:$0xff]
        %v6633 = vld [vmem:[%s6557 + $0x81] sm:$0xff]
        %v6634 = vld [vmem:[%s6557 + $0x99] sm:$0xff]
        %v6635 = vld [vmem:[%s6557 + $0xa1] sm:$0xff]
        %v6636 = vld [vmem:[%s6557 + $0xa9] sm:$0xff]
        %v6637 = vld [vmem:[%s6557 + $0xb1] sm:$0xff]
        %v6638 = vld [vmem:[%s6557 + $0xc9] sm:$0xff]
        %v6639 = vld [vmem:[%s6557 + $0xd1] sm:$0xff]
        %v6640 = vld [vmem:[%s6557 + $0xd9] sm:$0xff]
        %v6641 = vld [vmem:[%s6557 + $0xe1] sm:$0xff]
        %v6642 = vld [vmem:[%s6557 + $0xf9] sm:$0xff]
        %v6643 = vld [vmem:[%s6557 + $0x101] sm:$0xff]
        %v6644 = vld [vmem:[%s6557 + $0x109] sm:$0xff]
        %v6645 = vld [vmem:[%s6557 + $0x111] sm:$0xff]
        %v6646 = vld [vmem:[%s6557 + $0x129] sm:$0xff]
        %v6647 = vld [vmem:[%s6557 + $0x131] sm:$0xff]
        %v6648 = vld [vmem:[%s6557 + $0x139] sm:$0xff]
        %v6649 = vld [vmem:[%s6557 + $0x141] sm:$0xff]
        %v6650 = vld [vmem:[%s6557 + $0x159] sm:$0xff]
        %v6651 = vld [vmem:[%s6557 + $0x161] sm:$0xff]
        %v6652 = vld [vmem:[%s6557 + $0x169] sm:$0xff]
        %v6653 = vld [vmem:[%s6557 + $0x171] sm:$0xff]
        %6686 = vrot.lane.b32.xlu0 %v6396, 3
        %v6687 = vpop.permute.xlu0 %6686
        %6688 = vrot.lane.b32.xlu0 %v6397, 3
        %v6689 = vpop.permute.xlu0 %6688
        %6690 = vrot.lane.b32.xlu0 %v6398, 3
        %v6691 = vpop.permute.xlu0 %6690
        %6692 = vrot.lane.b32.xlu0 %v6399, 3
        %v6693 = vpop.permute.xlu0 %6692
        %6694 = vrot.lane.b32.xlu0 %v6400, 3
        %v6695 = vpop.permute.xlu0 %6694
        %6696 = vrot.lane.b32.xlu0 %v6401, 3
        %v6697 = vpop.permute.xlu0 %6696
        %6698 = vrot.lane.b32.xlu0 %v6402, 3
        %v6699 = vpop.permute.xlu0 %6698
        %6700 = vrot.lane.b32.xlu0 %v6403, 3
        %v6701 = vpop.permute.xlu0 %6700
        %6702 = vrot.lane.b32.xlu0 %v6404, 3
        %v6703 = vpop.permute.xlu0 %6702
        %6704 = vrot.lane.b32.xlu0 %v6405, 3
        %v6705 = vpop.permute.xlu0 %6704
        %6706 = vrot.lane.b32.xlu0 %v6406, 3
        %v6707 = vpop.permute.xlu0 %6706
        %6708 = vrot.lane.b32.xlu0 %v6407, 3
        %v6709 = vpop.permute.xlu0 %6708
        %6710 = vrot.lane.b32.xlu0 %v6408, 3
        %v6711 = vpop.permute.xlu0 %6710
        %6712 = vrot.lane.b32.xlu0 %v6409, 3
        %v6713 = vpop.permute.xlu0 %6712
        %6714 = vrot.lane.b32.xlu0 %v6410, 3
        %v6715 = vpop.permute.xlu0 %6714
        %6716 = vrot.lane.b32.xlu0 %v6411, 3
        %v6717 = vpop.permute.xlu0 %6716
        %6718 = vrot.lane.b32.xlu0 %v6412, 3
        %v6719 = vpop.permute.xlu0 %6718
        %6720 = vrot.lane.b32.xlu0 %v6413, 3
        %v6721 = vpop.permute.xlu0 %6720
        %6722 = vrot.lane.b32.xlu0 %v6414, 3
        %v6723 = vpop.permute.xlu0 %6722
        %6724 = vrot.lane.b32.xlu0 %v6415, 3
        %v6725 = vpop.permute.xlu0 %6724
        %6726 = vrot.lane.b32.xlu0 %v6416, 3
        %v6727 = vpop.permute.xlu0 %6726
        %6728 = vrot.lane.b32.xlu0 %v6417, 3
        %v6729 = vpop.permute.xlu0 %6728
        %6730 = vrot.lane.b32.xlu0 %v6418, 3
        %v6731 = vpop.permute.xlu0 %6730
        %6732 = vrot.lane.b32.xlu0 %v6419, 3
        %v6733 = vpop.permute.xlu0 %6732
        %6734 = vrot.lane.b32.xlu0 %v6420, 3
        %v6735 = vpop.permute.xlu0 %6734
        %6736 = vrot.lane.b32.xlu0 %v6421, 3
        %v6737 = vpop.permute.xlu0 %6736
        %6738 = vrot.lane.b32.xlu0 %v6422, 3
        %v6739 = vpop.permute.xlu0 %6738
        %6740 = vrot.lane.b32.xlu0 %v6423, 3
        %v6741 = vpop.permute.xlu0 %6740
        %6742 = vrot.lane.b32.xlu0 %v6424, 3
        %v6743 = vpop.permute.xlu0 %6742
        %6744 = vrot.lane.b32.xlu0 %v6425, 3
        %v6745 = vpop.permute.xlu0 %6744
        %6746 = vrot.lane.b32.xlu0 %v6426, 3
        %v6747 = vpop.permute.xlu0 %6746
        %6748 = vrot.lane.b32.xlu0 %v6427, 3
        %v6749 = vpop.permute.xlu0 %6748
        %6814 = vrot.lane.b32.xlu0 %v6428, 6
        %v6815 = vpop.permute.xlu0 %6814
        %6816 = vrot.lane.b32.xlu0 %v6429, 6
        %v6817 = vpop.permute.xlu0 %6816
        %6818 = vrot.lane.b32.xlu0 %v6430, 6
        %v6819 = vpop.permute.xlu0 %6818
        %6820 = vrot.lane.b32.xlu0 %v6431, 6
        %v6821 = vpop.permute.xlu0 %6820
        %6822 = vrot.lane.b32.xlu0 %v6432, 6
        %v6823 = vpop.permute.xlu0 %6822
        %6824 = vrot.lane.b32.xlu0 %v6433, 6
        %v6825 = vpop.permute.xlu0 %6824
        %6826 = vrot.lane.b32.xlu0 %v6434, 6
        %v6827 = vpop.permute.xlu0 %6826
        %6828 = vrot.lane.b32.xlu0 %v6435, 6
        %v6829 = vpop.permute.xlu0 %6828
        %6830 = vrot.lane.b32.xlu0 %v6436, 6
        %v6831 = vpop.permute.xlu0 %6830
        %6832 = vrot.lane.b32.xlu0 %v6437, 6
        %v6833 = vpop.permute.xlu0 %6832
        %6834 = vrot.lane.b32.xlu0 %v6438, 6
        %v6835 = vpop.permute.xlu0 %6834
        %6836 = vrot.lane.b32.xlu0 %v6439, 6
        %v6837 = vpop.permute.xlu0 %6836
        %6838 = vrot.lane.b32.xlu0 %v6440, 6
        %v6839 = vpop.permute.xlu0 %6838
        %6840 = vrot.lane.b32.xlu0 %v6441, 6
        %v6841 = vpop.permute.xlu0 %6840
        %6842 = vrot.lane.b32.xlu0 %v6442, 6
        %v6843 = vpop.permute.xlu0 %6842
        %6844 = vrot.lane.b32.xlu0 %v6443, 6
        %v6845 = vpop.permute.xlu0 %6844
        %6846 = vrot.lane.b32.xlu0 %v6444, 6
        %v6847 = vpop.permute.xlu0 %6846
        %6848 = vrot.lane.b32.xlu0 %v6445, 6
        %v6849 = vpop.permute.xlu0 %6848
        %6850 = vrot.lane.b32.xlu0 %v6446, 6
        %v6851 = vpop.permute.xlu0 %6850
        %6852 = vrot.lane.b32.xlu0 %v6447, 6
        %v6853 = vpop.permute.xlu0 %6852
        %6854 = vrot.lane.b32.xlu0 %v6448, 6
        %v6855 = vpop.permute.xlu0 %6854
        %6856 = vrot.lane.b32.xlu0 %v6449, 6
        %v6857 = vpop.permute.xlu0 %6856
        %6858 = vrot.lane.b32.xlu0 %v6450, 6
        %v6859 = vpop.permute.xlu0 %6858
        %6860 = vrot.lane.b32.xlu0 %v6451, 6
        %v6861 = vpop.permute.xlu0 %6860
        %6862 = vrot.lane.b32.xlu0 %v6452, 6
        %v6863 = vpop.permute.xlu0 %6862
        %6864 = vrot.lane.b32.xlu0 %v6453, 6
        %v6865 = vpop.permute.xlu0 %6864
        %6866 = vrot.lane.b32.xlu0 %v6454, 6
        %v6867 = vpop.permute.xlu0 %6866
        %6868 = vrot.lane.b32.xlu0 %v6455, 6
        %v6869 = vpop.permute.xlu0 %6868
        %6870 = vrot.lane.b32.xlu0 %v6456, 6
        %v6871 = vpop.permute.xlu0 %6870
        %6872 = vrot.lane.b32.xlu0 %v6457, 6
        %v6873 = vpop.permute.xlu0 %6872
        %6874 = vrot.lane.b32.xlu0 %v6458, 6
        %v6875 = vpop.permute.xlu0 %6874
        %6876 = vrot.lane.b32.xlu0 %v6459, 6
        %v6877 = vpop.permute.xlu0 %6876
        %6942 = vrot.lane.b32.xlu0 %v6461, 9
        %v6943 = vpop.permute.xlu0 %6942
        %6944 = vrot.lane.b32.xlu0 %v6462, 9
        %v6945 = vpop.permute.xlu0 %6944
        %6946 = vrot.lane.b32.xlu0 %v6463, 9
        %v6947 = vpop.permute.xlu0 %6946
        %6948 = vrot.lane.b32.xlu0 %v6464, 9
        %v6949 = vpop.permute.xlu0 %6948
        %6950 = vrot.lane.b32.xlu0 %v6465, 9
        %v6951 = vpop.permute.xlu0 %6950
        %6952 = vrot.lane.b32.xlu0 %v6466, 9
        %v6953 = vpop.permute.xlu0 %6952
        %6954 = vrot.lane.b32.xlu0 %v6467, 9
        %v6955 = vpop.permute.xlu0 %6954
        %6956 = vrot.lane.b32.xlu0 %v6468, 9
        %v6957 = vpop.permute.xlu0 %6956
        %6958 = vrot.lane.b32.xlu0 %v6469, 9
        %v6959 = vpop.permute.xlu0 %6958
        %6960 = vrot.lane.b32.xlu0 %v6470, 9
        %v6961 = vpop.permute.xlu0 %6960
        %6962 = vrot.lane.b32.xlu0 %v6471, 9
        %v6963 = vpop.permute.xlu0 %6962
        %6964 = vrot.lane.b32.xlu0 %v6472, 9
        %v6965 = vpop.permute.xlu0 %6964
        %6966 = vrot.lane.b32.xlu0 %v6473, 9
        %v6967 = vpop.permute.xlu0 %6966
        %6968 = vrot.lane.b32.xlu0 %v6474, 9
        %v6969 = vpop.permute.xlu0 %6968
        %6970 = vrot.lane.b32.xlu0 %v6475, 9
        %v6971 = vpop.permute.xlu0 %6970
        %6972 = vrot.lane.b32.xlu0 %v6476, 9
        %v6973 = vpop.permute.xlu0 %6972
        %6974 = vrot.lane.b32.xlu0 %v6477, 9
        %v6975 = vpop.permute.xlu0 %6974
        %6976 = vrot.lane.b32.xlu0 %v6478, 9
        %v6977 = vpop.permute.xlu0 %6976
        %6978 = vrot.lane.b32.xlu0 %v6479, 9
        %v6979 = vpop.permute.xlu0 %6978
        %6980 = vrot.lane.b32.xlu0 %v6480, 9
        %v6981 = vpop.permute.xlu0 %6980
        %6982 = vrot.lane.b32.xlu0 %v6481, 9
        %v6983 = vpop.permute.xlu0 %6982
        %6984 = vrot.lane.b32.xlu0 %v6482, 9
        %v6985 = vpop.permute.xlu0 %6984
        %6986 = vrot.lane.b32.xlu0 %v6483, 9
        %v6987 = vpop.permute.xlu0 %6986
        %6988 = vrot.lane.b32.xlu0 %v6484, 9
        %v6989 = vpop.permute.xlu0 %6988
        %6990 = vrot.lane.b32.xlu0 %v6485, 9
        %v6991 = vpop.permute.xlu0 %6990
        %6992 = vrot.lane.b32.xlu0 %v6486, 9
        %v6993 = vpop.permute.xlu0 %6992
        %6994 = vrot.lane.b32.xlu0 %v6487, 9
        %v6995 = vpop.permute.xlu0 %6994
        %6996 = vrot.lane.b32.xlu0 %v6488, 9
        %v6997 = vpop.permute.xlu0 %6996
        %6998 = vrot.lane.b32.xlu0 %v6489, 9
        %v6999 = vpop.permute.xlu0 %6998
        %7000 = vrot.lane.b32.xlu0 %v6490, 9
        %v7001 = vpop.permute.xlu0 %7000
        %7002 = vrot.lane.b32.xlu0 %v6491, 9
        %v7003 = vpop.permute.xlu0 %7002
        %7004 = vrot.lane.b32.xlu0 %v6492, 9
        %v7005 = vpop.permute.xlu0 %7004
        %7070 = vrot.lane.b32.xlu0 %v6493, 12
        %v7071 = vpop.permute.xlu0 %7070
        %7072 = vrot.lane.b32.xlu0 %v6494, 12
        %v7073 = vpop.permute.xlu0 %7072
        %7074 = vrot.lane.b32.xlu0 %v6495, 12
        %v7075 = vpop.permute.xlu0 %7074
        %7076 = vrot.lane.b32.xlu0 %v6496, 12
        %v7077 = vpop.permute.xlu0 %7076
        %7078 = vrot.lane.b32.xlu0 %v6497, 12
        %v7079 = vpop.permute.xlu0 %7078
        %7080 = vrot.lane.b32.xlu0 %v6498, 12
        %v7081 = vpop.permute.xlu0 %7080
        %7082 = vrot.lane.b32.xlu0 %v6499, 12
        %v7083 = vpop.permute.xlu0 %7082
        %7084 = vrot.lane.b32.xlu0 %v6500, 12
        %v7085 = vpop.permute.xlu0 %7084
        %7086 = vrot.lane.b32.xlu0 %v6501, 12
        %v7087 = vpop.permute.xlu0 %7086
        %7088 = vrot.lane.b32.xlu0 %v6502, 12
        %v7089 = vpop.permute.xlu0 %7088
        %7090 = vrot.lane.b32.xlu0 %v6503, 12
        %v7091 = vpop.permute.xlu0 %7090
        %7092 = vrot.lane.b32.xlu0 %v6504, 12
        %v7093 = vpop.permute.xlu0 %7092
        %7094 = vrot.lane.b32.xlu0 %v6505, 12
        %v7095 = vpop.permute.xlu0 %7094
        %7096 = vrot.lane.b32.xlu0 %v6506, 12
        %v7097 = vpop.permute.xlu0 %7096
        %7098 = vrot.lane.b32.xlu0 %v6507, 12
        %v7099 = vpop.permute.xlu0 %7098
        %7100 = vrot.lane.b32.xlu0 %v6508, 12
        %v7101 = vpop.permute.xlu0 %7100
        %7102 = vrot.lane.b32.xlu0 %v6509, 12
        %v7103 = vpop.permute.xlu0 %7102
        %7104 = vrot.lane.b32.xlu0 %v6510, 12
        %v7105 = vpop.permute.xlu0 %7104
        %7106 = vrot.lane.b32.xlu0 %v6511, 12
        %v7107 = vpop.permute.xlu0 %7106
        %7108 = vrot.lane.b32.xlu0 %v6512, 12
        %v7109 = vpop.permute.xlu0 %7108
        %7110 = vrot.lane.b32.xlu0 %v6513, 12
        %v7111 = vpop.permute.xlu0 %7110
        %7112 = vrot.lane.b32.xlu0 %v6514, 12
        %v7113 = vpop.permute.xlu0 %7112
        %7114 = vrot.lane.b32.xlu0 %v6515, 12
        %v7115 = vpop.permute.xlu0 %7114
        %7116 = vrot.lane.b32.xlu0 %v6516, 12
        %v7117 = vpop.permute.xlu0 %7116
        %7118 = vrot.lane.b32.xlu0 %v6517, 12
        %v7119 = vpop.permute.xlu0 %7118
        %7120 = vrot.lane.b32.xlu0 %v6518, 12
        %v7121 = vpop.permute.xlu0 %7120
        %7122 = vrot.lane.b32.xlu0 %v6519, 12
        %v7123 = vpop.permute.xlu0 %7122
        %7124 = vrot.lane.b32.xlu0 %v6520, 12
        %v7125 = vpop.permute.xlu0 %7124
        %7126 = vrot.lane.b32.xlu0 %v6521, 12
        %v7127 = vpop.permute.xlu0 %7126
        %7128 = vrot.lane.b32.xlu0 %v6522, 12
        %v7129 = vpop.permute.xlu0 %7128
        %7130 = vrot.lane.b32.xlu0 %v6523, 12
        %v7131 = vpop.permute.xlu0 %7130
        %7132 = vrot.lane.b32.xlu0 %v6524, 12
        %v7133 = vpop.permute.xlu0 %7132
        %7198 = vrot.lane.b32.xlu0 %v6525, 15
        %v7199 = vpop.permute.xlu0 %7198
        %7200 = vrot.lane.b32.xlu0 %v6526, 15
        %v7201 = vpop.permute.xlu0 %7200
        %7202 = vrot.lane.b32.xlu0 %v6527, 15
        %v7203 = vpop.permute.xlu0 %7202
        %7204 = vrot.lane.b32.xlu0 %v6528, 15
        %v7205 = vpop.permute.xlu0 %7204
        %7206 = vrot.lane.b32.xlu0 %v6529, 15
        %v7207 = vpop.permute.xlu0 %7206
        %7208 = vrot.lane.b32.xlu0 %v6530, 15
        %v7209 = vpop.permute.xlu0 %7208
        %7210 = vrot.lane.b32.xlu0 %v6531, 15
        %v7211 = vpop.permute.xlu0 %7210
        %7212 = vrot.lane.b32.xlu0 %v6532, 15
        %v7213 = vpop.permute.xlu0 %7212
        %7214 = vrot.lane.b32.xlu0 %v6533, 15
        %v7215 = vpop.permute.xlu0 %7214
        %7216 = vrot.lane.b32.xlu0 %v6534, 15
        %v7217 = vpop.permute.xlu0 %7216
        %7218 = vrot.lane.b32.xlu0 %v6535, 15
        %v7219 = vpop.permute.xlu0 %7218
        %7220 = vrot.lane.b32.xlu0 %v6536, 15
        %v7221 = vpop.permute.xlu0 %7220
        %7222 = vrot.lane.b32.xlu0 %v6537, 15
        %v7223 = vpop.permute.xlu0 %7222
        %7224 = vrot.lane.b32.xlu0 %v6538, 15
        %v7225 = vpop.permute.xlu0 %7224
        %7226 = vrot.lane.b32.xlu0 %v6539, 15
        %v7227 = vpop.permute.xlu0 %7226
        %7228 = vrot.lane.b32.xlu0 %v6540, 15
        %v7229 = vpop.permute.xlu0 %7228
        %7230 = vrot.lane.b32.xlu0 %v6541, 15
        %v7231 = vpop.permute.xlu0 %7230
        %7232 = vrot.lane.b32.xlu0 %v6542, 15
        %v7233 = vpop.permute.xlu0 %7232
        %7234 = vrot.lane.b32.xlu0 %v6543, 15
        %v7235 = vpop.permute.xlu0 %7234
        %7236 = vrot.lane.b32.xlu0 %v6544, 15
        %v7237 = vpop.permute.xlu0 %7236
        %7238 = vrot.lane.b32.xlu0 %v6545, 15
        %v7239 = vpop.permute.xlu0 %7238
        %7240 = vrot.lane.b32.xlu0 %v6546, 15
        %v7241 = vpop.permute.xlu0 %7240
        %7242 = vrot.lane.b32.xlu0 %v6547, 15
        %v7243 = vpop.permute.xlu0 %7242
        %7244 = vrot.lane.b32.xlu0 %v6548, 15
        %v7245 = vpop.permute.xlu0 %7244
        %7246 = vrot.lane.b32.xlu0 %v6549, 15
        %v7247 = vpop.permute.xlu0 %7246
        %7248 = vrot.lane.b32.xlu0 %v6550, 15
        %v7249 = vpop.permute.xlu0 %7248
        %7250 = vrot.lane.b32.xlu0 %v6551, 15
        %v7251 = vpop.permute.xlu0 %7250
        %7252 = vrot.lane.b32.xlu0 %v6552, 15
        %v7253 = vpop.permute.xlu0 %7252
        %7254 = vrot.lane.b32.xlu0 %v6553, 15
        %v7255 = vpop.permute.xlu0 %7254
        %7256 = vrot.lane.b32.xlu0 %v6554, 15
        %v7257 = vpop.permute.xlu0 %7256
        %7258 = vrot.lane.b32.xlu0 %v6555, 15
        %v7259 = vpop.permute.xlu0 %7258
        %7260 = vrot.lane.b32.xlu0 %v6556, 15
        %v7261 = vpop.permute.xlu0 %7260
        %7326 = vrot.lane.b32.xlu0 %v6558, 18
        %v7327 = vpop.permute.xlu0 %7326
        %7328 = vrot.lane.b32.xlu0 %v6559, 18
        %v7329 = vpop.permute.xlu0 %7328
        %7330 = vrot.lane.b32.xlu0 %v6560, 18
        %v7331 = vpop.permute.xlu0 %7330
        %7332 = vrot.lane.b32.xlu0 %v6561, 18
        %v7333 = vpop.permute.xlu0 %7332
        %7334 = vrot.lane.b32.xlu0 %v6562, 18
        %v7335 = vpop.permute.xlu0 %7334
        %7336 = vrot.lane.b32.xlu0 %v6563, 18
        %v7337 = vpop.permute.xlu0 %7336
        %7338 = vrot.lane.b32.xlu0 %v6564, 18
        %v7339 = vpop.permute.xlu0 %7338
        %7340 = vrot.lane.b32.xlu0 %v6565, 18
        %v7341 = vpop.permute.xlu0 %7340
        %7342 = vrot.lane.b32.xlu0 %v6566, 18
        %v7343 = vpop.permute.xlu0 %7342
        %7344 = vrot.lane.b32.xlu0 %v6567, 18
        %v7345 = vpop.permute.xlu0 %7344
        %7346 = vrot.lane.b32.xlu0 %v6568, 18
        %v7347 = vpop.permute.xlu0 %7346
        %7348 = vrot.lane.b32.xlu0 %v6569, 18
        %v7349 = vpop.permute.xlu0 %7348
        %7350 = vrot.lane.b32.xlu0 %v6570, 18
        %v7351 = vpop.permute.xlu0 %7350
        %7352 = vrot.lane.b32.xlu0 %v6571, 18
        %v7353 = vpop.permute.xlu0 %7352
        %7354 = vrot.lane.b32.xlu0 %v6572, 18
        %v7355 = vpop.permute.xlu0 %7354
        %7356 = vrot.lane.b32.xlu0 %v6573, 18
        %v7357 = vpop.permute.xlu0 %7356
        %7358 = vrot.lane.b32.xlu0 %v6574, 18
        %v7359 = vpop.permute.xlu0 %7358
        %7360 = vrot.lane.b32.xlu0 %v6575, 18
        %v7361 = vpop.permute.xlu0 %7360
        %7362 = vrot.lane.b32.xlu0 %v6576, 18
        %v7363 = vpop.permute.xlu0 %7362
        %7364 = vrot.lane.b32.xlu0 %v6577, 18
        %v7365 = vpop.permute.xlu0 %7364
        %7366 = vrot.lane.b32.xlu0 %v6578, 18
        %v7367 = vpop.permute.xlu0 %7366
        %7368 = vrot.lane.b32.xlu0 %v6579, 18
        %v7369 = vpop.permute.xlu0 %7368
        %7370 = vrot.lane.b32.xlu0 %v6580, 18
        %v7371 = vpop.permute.xlu0 %7370
        %7372 = vrot.lane.b32.xlu0 %v6581, 18
        %v7373 = vpop.permute.xlu0 %7372
        %7374 = vrot.lane.b32.xlu0 %v6582, 18
        %v7375 = vpop.permute.xlu0 %7374
        %7376 = vrot.lane.b32.xlu0 %v6583, 18
        %v7377 = vpop.permute.xlu0 %7376
        %7378 = vrot.lane.b32.xlu0 %v6584, 18
        %v7379 = vpop.permute.xlu0 %7378
        %7380 = vrot.lane.b32.xlu0 %v6585, 18
        %v7381 = vpop.permute.xlu0 %7380
        %7382 = vrot.lane.b32.xlu0 %v6586, 18
        %v7383 = vpop.permute.xlu0 %7382
        %7384 = vrot.lane.b32.xlu0 %v6587, 18
        %v7385 = vpop.permute.xlu0 %7384
        %7386 = vrot.lane.b32.xlu0 %v6588, 18
        %v7387 = vpop.permute.xlu0 %7386
        %7388 = vrot.lane.b32.xlu0 %v6589, 18
        %v7389 = vpop.permute.xlu0 %7388
        %7454 = vrot.lane.b32.xlu0 %v6590, 21
        %v7455 = vpop.permute.xlu0 %7454
        %7456 = vrot.lane.b32.xlu0 %v6591, 21
        %v7457 = vpop.permute.xlu0 %7456
        %7458 = vrot.lane.b32.xlu0 %v6592, 21
        %v7459 = vpop.permute.xlu0 %7458
        %7460 = vrot.lane.b32.xlu0 %v6593, 21
        %v7461 = vpop.permute.xlu0 %7460
        %7462 = vrot.lane.b32.xlu0 %v6594, 21
        %v7463 = vpop.permute.xlu0 %7462
        %7464 = vrot.lane.b32.xlu0 %v6595, 21
        %v7465 = vpop.permute.xlu0 %7464
        %7466 = vrot.lane.b32.xlu0 %v6596, 21
        %v7467 = vpop.permute.xlu0 %7466
        %7468 = vrot.lane.b32.xlu0 %v6597, 21
        %v7469 = vpop.permute.xlu0 %7468
        %7470 = vrot.lane.b32.xlu0 %v6598, 21
        %v7471 = vpop.permute.xlu0 %7470
        %7472 = vrot.lane.b32.xlu0 %v6599, 21
        %v7473 = vpop.permute.xlu0 %7472
        %7474 = vrot.lane.b32.xlu0 %v6600, 21
        %v7475 = vpop.permute.xlu0 %7474
        %7476 = vrot.lane.b32.xlu0 %v6601, 21
        %v7477 = vpop.permute.xlu0 %7476
        %7478 = vrot.lane.b32.xlu0 %v6602, 21
        %v7479 = vpop.permute.xlu0 %7478
        %7480 = vrot.lane.b32.xlu0 %v6603, 21
        %v7481 = vpop.permute.xlu0 %7480
        %7482 = vrot.lane.b32.xlu0 %v6604, 21
        %v7483 = vpop.permute.xlu0 %7482
        %7484 = vrot.lane.b32.xlu0 %v6605, 21
        %v7485 = vpop.permute.xlu0 %7484
        %7486 = vrot.lane.b32.xlu0 %v6606, 21
        %v7487 = vpop.permute.xlu0 %7486
        %7488 = vrot.lane.b32.xlu0 %v6607, 21
        %v7489 = vpop.permute.xlu0 %7488
        %7490 = vrot.lane.b32.xlu0 %v6608, 21
        %v7491 = vpop.permute.xlu0 %7490
        %7492 = vrot.lane.b32.xlu0 %v6609, 21
        %v7493 = vpop.permute.xlu0 %7492
        %7494 = vrot.lane.b32.xlu0 %v6610, 21
        %v7495 = vpop.permute.xlu0 %7494
        %7496 = vrot.lane.b32.xlu0 %v6611, 21
        %v7497 = vpop.permute.xlu0 %7496
        %7498 = vrot.lane.b32.xlu0 %v6612, 21
        %v7499 = vpop.permute.xlu0 %7498
        %7500 = vrot.lane.b32.xlu0 %v6613, 21
        %v7501 = vpop.permute.xlu0 %7500
        %7502 = vrot.lane.b32.xlu0 %v6614, 21
        %v7503 = vpop.permute.xlu0 %7502
        %7504 = vrot.lane.b32.xlu0 %v6615, 21
        %v7505 = vpop.permute.xlu0 %7504
        %7506 = vrot.lane.b32.xlu0 %v6616, 21
        %v7507 = vpop.permute.xlu0 %7506
        %7508 = vrot.lane.b32.xlu0 %v6617, 21
        %v7509 = vpop.permute.xlu0 %7508
        %7510 = vrot.lane.b32.xlu0 %v6618, 21
        %v7511 = vpop.permute.xlu0 %7510
        %7512 = vrot.lane.b32.xlu0 %v6619, 21
        %v7513 = vpop.permute.xlu0 %7512
        %7514 = vrot.lane.b32.xlu0 %v6620, 21
        %v7515 = vpop.permute.xlu0 %7514
        %7516 = vrot.lane.b32.xlu0 %v6621, 21
        %v7517 = vpop.permute.xlu0 %7516
        %7582 = vrot.lane.b32.xlu0 %v6622, 24
        %v7583 = vpop.permute.xlu0 %7582
        %7584 = vrot.lane.b32.xlu0 %v6623, 24
        %v7585 = vpop.permute.xlu0 %7584
        %7586 = vrot.lane.b32.xlu0 %v6624, 24
        %v7587 = vpop.permute.xlu0 %7586
        %7588 = vrot.lane.b32.xlu0 %v6625, 24
        %v7589 = vpop.permute.xlu0 %7588
        %7590 = vrot.lane.b32.xlu0 %v6626, 24
        %v7591 = vpop.permute.xlu0 %7590
        %7592 = vrot.lane.b32.xlu0 %v6627, 24
        %v7593 = vpop.permute.xlu0 %7592
        %7594 = vrot.lane.b32.xlu0 %v6628, 24
        %v7595 = vpop.permute.xlu0 %7594
        %7596 = vrot.lane.b32.xlu0 %v6629, 24
        %v7597 = vpop.permute.xlu0 %7596
        %7598 = vrot.lane.b32.xlu0 %v6630, 24
        %v7599 = vpop.permute.xlu0 %7598
        %7600 = vrot.lane.b32.xlu0 %v6631, 24
        %v7601 = vpop.permute.xlu0 %7600
        %7602 = vrot.lane.b32.xlu0 %v6632, 24
        %v7603 = vpop.permute.xlu0 %7602
        %7604 = vrot.lane.b32.xlu0 %v6633, 24
        %v7605 = vpop.permute.xlu0 %7604
        %7606 = vrot.lane.b32.xlu0 %v6634, 24
        %v7607 = vpop.permute.xlu0 %7606
        %7608 = vrot.lane.b32.xlu0 %v6635, 24
        %v7609 = vpop.permute.xlu0 %7608
        %7610 = vrot.lane.b32.xlu0 %v6636, 24
        %v7611 = vpop.permute.xlu0 %7610
        %7612 = vrot.lane.b32.xlu0 %v6637, 24
        %v7613 = vpop.permute.xlu0 %7612
        %7614 = vrot.lane.b32.xlu0 %v6638, 24
        %v7615 = vpop.permute.xlu0 %7614
        %7616 = vrot.lane.b32.xlu0 %v6639, 24
        %v7617 = vpop.permute.xlu0 %7616
        %7618 = vrot.lane.b32.xlu0 %v6640, 24
        %v7619 = vpop.permute.xlu0 %7618
        %7620 = vrot.lane.b32.xlu0 %v6641, 24
        %v7621 = vpop.permute.xlu0 %7620
        %7622 = vrot.lane.b32.xlu0 %v6642, 24
        %v7623 = vpop.permute.xlu0 %7622
        %7624 = vrot.lane.b32.xlu0 %v6643, 24
        %v7625 = vpop.permute.xlu0 %7624
        %7626 = vrot.lane.b32.xlu0 %v6644, 24
        %v7627 = vpop.permute.xlu0 %7626
        %7628 = vrot.lane.b32.xlu0 %v6645, 24
        %v7629 = vpop.permute.xlu0 %7628
        %7630 = vrot.lane.b32.xlu0 %v6646, 24
        %v7631 = vpop.permute.xlu0 %7630
        %7632 = vrot.lane.b32.xlu0 %v6647, 24
        %v7633 = vpop.permute.xlu0 %7632
        %7634 = vrot.lane.b32.xlu0 %v6648, 24
        %v7635 = vpop.permute.xlu0 %7634
        %7636 = vrot.lane.b32.xlu0 %v6649, 24
        %v7637 = vpop.permute.xlu0 %7636
        %7638 = vrot.lane.b32.xlu0 %v6650, 24
        %v7639 = vpop.permute.xlu0 %7638
        %7640 = vrot.lane.b32.xlu0 %v6651, 24
        %v7641 = vpop.permute.xlu0 %7640
        %7642 = vrot.lane.b32.xlu0 %v6652, 24
        %v7643 = vpop.permute.xlu0 %7642
        %7644 = vrot.lane.b32.xlu0 %v6653, 24
        %v7645 = vpop.permute.xlu0 %7644
        %v7678 = vsel %vm276, %v6364, %v6687
        %v7679 = vsel %vm276, %v6365, %v6689
        %v7680 = vsel %vm276, %v6366, %v6691
        %v7681 = vsel %vm276, %v6367, %v6693
        %v7682 = vsel %vm276, %v6368, %v6695
        %v7683 = vsel %vm276, %v6369, %v6697
        %v7684 = vsel %vm276, %v6370, %v6699
        %v7685 = vsel %vm276, %v6371, %v6701
        %v7686 = vsel %vm276, %v6372, %v6703
        %v7687 = vsel %vm276, %v6373, %v6705
        %v7688 = vsel %vm276, %v6374, %v6707
        %v7689 = vsel %vm276, %v6375, %v6709
        %v7690 = vsel %vm276, %v6376, %v6711
        %v7691 = vsel %vm276, %v6377, %v6713
        %v7692 = vsel %vm276, %v6378, %v6715
        %v7693 = vsel %vm276, %v6379, %v6717
        %v7694 = vsel %vm276, %v6380, %v6719
        %v7695 = vsel %vm276, %v6381, %v6721
        %v7696 = vsel %vm276, %v6382, %v6723
        %v7697 = vsel %vm276, %v6383, %v6725
        %v7698 = vsel %vm276, %v6384, %v6727
        %v7699 = vsel %vm276, %v6385, %v6729
        %v7700 = vsel %vm276, %v6386, %v6731
        %v7701 = vsel %vm276, %v6387, %v6733
        %v7702 = vsel %vm276, %v6388, %v6735
        %v7703 = vsel %vm276, %v6389, %v6737
        %v7704 = vsel %vm276, %v6390, %v6739
        %v7705 = vsel %vm276, %v6391, %v6741
        %v7706 = vsel %vm276, %v6392, %v6743
        %v7707 = vsel %vm276, %v6393, %v6745
        %v7708 = vsel %vm276, %v6394, %v6747
        %v7709 = vsel %vm276, %v6395, %v6749
        %v7710 = vsel %vm2161, %v7678, %v6815
        %v7711 = vsel %vm2161, %v7679, %v6817
        %v7712 = vsel %vm2161, %v7680, %v6819
        %v7713 = vsel %vm2161, %v7681, %v6821
        %v7714 = vsel %vm2161, %v7682, %v6823
        %v7715 = vsel %vm2161, %v7683, %v6825
        %v7716 = vsel %vm2161, %v7684, %v6827
        %v7717 = vsel %vm2161, %v7685, %v6829
        %v7718 = vsel %vm2161, %v7686, %v6831
        %v7719 = vsel %vm2161, %v7687, %v6833
        %v7720 = vsel %vm2161, %v7688, %v6835
        %v7721 = vsel %vm2161, %v7689, %v6837
        %v7722 = vsel %vm2161, %v7690, %v6839
        %v7723 = vsel %vm2161, %v7691, %v6841
        %v7724 = vsel %vm2161, %v7692, %v6843
        %v7725 = vsel %vm2161, %v7693, %v6845
        %v7726 = vsel %vm2161, %v7694, %v6847
        %v7727 = vsel %vm2161, %v7695, %v6849
        %v7728 = vsel %vm2161, %v7696, %v6851
        %v7729 = vsel %vm2161, %v7697, %v6853
        %v7730 = vsel %vm2161, %v7698, %v6855
        %v7731 = vsel %vm2161, %v7699, %v6857
        %v7732 = vsel %vm2161, %v7700, %v6859
        %v7733 = vsel %vm2161, %v7701, %v6861
        %v7734 = vsel %vm2161, %v7702, %v6863
        %v7735 = vsel %vm2161, %v7703, %v6865
        %v7736 = vsel %vm2161, %v7704, %v6867
        %v7737 = vsel %vm2161, %v7705, %v6869
        %v7738 = vsel %vm2161, %v7706, %v6871
        %v7739 = vsel %vm2161, %v7707, %v6873
        %v7740 = vsel %vm2161, %v7708, %v6875
        %v7741 = vsel %vm2161, %v7709, %v6877
        %v7742 = vsel %vm2194, %v7710, %v6943
        %v7743 = vsel %vm2194, %v7711, %v6945
        %v7744 = vsel %vm2194, %v7712, %v6947
        %v7745 = vsel %vm2194, %v7713, %v6949
        %v7746 = vsel %vm2194, %v7714, %v6951
        %v7747 = vsel %vm2194, %v7715, %v6953
        %v7748 = vsel %vm2194, %v7716, %v6955
        %v7749 = vsel %vm2194, %v7717, %v6957
        %v7750 = vsel %vm2194, %v7718, %v6959
        %v7751 = vsel %vm2194, %v7719, %v6961
        %v7752 = vsel %vm2194, %v7720, %v6963
        %v7753 = vsel %vm2194, %v7721, %v6965
        %v7754 = vsel %vm2194, %v7722, %v6967
        %v7755 = vsel %vm2194, %v7723, %v6969
        %v7756 = vsel %vm2194, %v7724, %v6971
        %v7757 = vsel %vm2194, %v7725, %v6973
        %v7758 = vsel %vm2194, %v7726, %v6975
        %v7759 = vsel %vm2194, %v7727, %v6977
        %v7760 = vsel %vm2194, %v7728, %v6979
        %v7761 = vsel %vm2194, %v7729, %v6981
        %v7762 = vsel %vm2194, %v7730, %v6983
        %v7763 = vsel %vm2194, %v7731, %v6985
        %v7764 = vsel %vm2194, %v7732, %v6987
        %v7765 = vsel %vm2194, %v7733, %v6989
        %v7766 = vsel %vm2194, %v7734, %v6991
        %v7767 = vsel %vm2194, %v7735, %v6993
        %v7768 = vsel %vm2194, %v7736, %v6995
        %v7769 = vsel %vm2194, %v7737, %v6997
        %v7770 = vsel %vm2194, %v7738, %v6999
        %v7771 = vsel %vm2194, %v7739, %v7001
        %v7772 = vsel %vm2194, %v7740, %v7003
        %v7773 = vsel %vm2194, %v7741, %v7005
        %v7774 = vsel %vm2227, %v7742, %v7071
        %v7775 = vsel %vm2227, %v7743, %v7073
        %v7776 = vsel %vm2227, %v7744, %v7075
        %v7777 = vsel %vm2227, %v7745, %v7077
        %v7778 = vsel %vm2227, %v7746, %v7079
        %v7779 = vsel %vm2227, %v7747, %v7081
        %v7780 = vsel %vm2227, %v7748, %v7083
        %v7781 = vsel %vm2227, %v7749, %v7085
        %v7782 = vsel %vm2227, %v7750, %v7087
        %v7783 = vsel %vm2227, %v7751, %v7089
        %v7784 = vsel %vm2227, %v7752, %v7091
        %v7785 = vsel %vm2227, %v7753, %v7093
        %v7786 = vsel %vm2227, %v7754, %v7095
        %v7787 = vsel %vm2227, %v7755, %v7097
        %v7788 = vsel %vm2227, %v7756, %v7099
        %v7789 = vsel %vm2227, %v7757, %v7101
        %v7790 = vsel %vm2227, %v7758, %v7103
        %v7791 = vsel %vm2227, %v7759, %v7105
        %v7792 = vsel %vm2227, %v7760, %v7107
        %v7793 = vsel %vm2227, %v7761, %v7109
        %v7794 = vsel %vm2227, %v7762, %v7111
        %v7795 = vsel %vm2227, %v7763, %v7113
        %v7796 = vsel %vm2227, %v7764, %v7115
        %v7797 = vsel %vm2227, %v7765, %v7117
        %v7798 = vsel %vm2227, %v7766, %v7119
        %v7799 = vsel %vm2227, %v7767, %v7121
        %v7800 = vsel %vm2227, %v7768, %v7123
        %v7801 = vsel %vm2227, %v7769, %v7125
        %v7802 = vsel %vm2227, %v7770, %v7127
        %v7803 = vsel %vm2227, %v7771, %v7129
        %v7804 = vsel %vm2227, %v7772, %v7131
        %v7805 = vsel %vm2227, %v7773, %v7133
        %v7806 = vsel %vm2260, %v7774, %v7199
        %v7807 = vsel %vm2260, %v7775, %v7201
        %v7808 = vsel %vm2260, %v7776, %v7203
        %v7809 = vsel %vm2260, %v7777, %v7205
        %v7810 = vsel %vm2260, %v7778, %v7207
        %v7811 = vsel %vm2260, %v7779, %v7209
        %v7812 = vsel %vm2260, %v7780, %v7211
        %v7813 = vsel %vm2260, %v7781, %v7213
        %v7814 = vsel %vm2260, %v7782, %v7215
        %v7815 = vsel %vm2260, %v7783, %v7217
        %v7816 = vsel %vm2260, %v7784, %v7219
        %v7817 = vsel %vm2260, %v7785, %v7221
        %v7818 = vsel %vm2260, %v7786, %v7223
        %v7819 = vsel %vm2260, %v7787, %v7225
        %v7820 = vsel %vm2260, %v7788, %v7227
        %v7821 = vsel %vm2260, %v7789, %v7229
        %v7822 = vsel %vm2260, %v7790, %v7231
        %v7823 = vsel %vm2260, %v7791, %v7233
        %v7824 = vsel %vm2260, %v7792, %v7235
        %v7825 = vsel %vm2260, %v7793, %v7237
        %v7826 = vsel %vm2260, %v7794, %v7239
        %v7827 = vsel %vm2260, %v7795, %v7241
        %v7828 = vsel %vm2260, %v7796, %v7243
        %v7829 = vsel %vm2260, %v7797, %v7245
        %v7830 = vsel %vm2260, %v7798, %v7247
        %v7831 = vsel %vm2260, %v7799, %v7249
        %v7832 = vsel %vm2260, %v7800, %v7251
        %v7833 = vsel %vm2260, %v7801, %v7253
        %v7834 = vsel %vm2260, %v7802, %v7255
        %v7835 = vsel %vm2260, %v7803, %v7257
        %v7836 = vsel %vm2260, %v7804, %v7259
        %v7837 = vsel %vm2260, %v7805, %v7261
        %v7838 = vsel %vm2293, %v7806, %v7327
        %v7839 = vsel %vm2293, %v7807, %v7329
        %v7840 = vsel %vm2293, %v7808, %v7331
        %v7841 = vsel %vm2293, %v7809, %v7333
        %v7842 = vsel %vm2293, %v7810, %v7335
        %v7843 = vsel %vm2293, %v7811, %v7337
        %v7844 = vsel %vm2293, %v7812, %v7339
        %v7845 = vsel %vm2293, %v7813, %v7341
        %v7846 = vsel %vm2293, %v7814, %v7343
        %v7847 = vsel %vm2293, %v7815, %v7345
        %v7848 = vsel %vm2293, %v7816, %v7347
        %v7849 = vsel %vm2293, %v7817, %v7349
        %v7850 = vsel %vm2293, %v7818, %v7351
        %v7851 = vsel %vm2293, %v7819, %v7353
        %v7852 = vsel %vm2293, %v7820, %v7355
        %v7853 = vsel %vm2293, %v7821, %v7357
        %v7854 = vsel %vm2293, %v7822, %v7359
        %v7855 = vsel %vm2293, %v7823, %v7361
        %v7856 = vsel %vm2293, %v7824, %v7363
        %v7857 = vsel %vm2293, %v7825, %v7365
        %v7858 = vsel %vm2293, %v7826, %v7367
        %v7859 = vsel %vm2293, %v7827, %v7369
        %v7860 = vsel %vm2293, %v7828, %v7371
        %v7861 = vsel %vm2293, %v7829, %v7373
        %v7862 = vsel %vm2293, %v7830, %v7375
        %v7863 = vsel %vm2293, %v7831, %v7377
        %v7864 = vsel %vm2293, %v7832, %v7379
        %v7865 = vsel %vm2293, %v7833, %v7381
        %v7866 = vsel %vm2293, %v7834, %v7383
        %v7867 = vsel %vm2293, %v7835, %v7385
        %v7868 = vsel %vm2293, %v7836, %v7387
        %v7869 = vsel %vm2293, %v7837, %v7389
        %v7870 = vsel %vm2326, %v7838, %v7455
        %v7871 = vsel %vm2326, %v7839, %v7457
        %v7872 = vsel %vm2326, %v7840, %v7459
        %v7873 = vsel %vm2326, %v7841, %v7461
        %v7874 = vsel %vm2326, %v7842, %v7463
        %v7875 = vsel %vm2326, %v7843, %v7465
        %v7876 = vsel %vm2326, %v7844, %v7467
        %v7877 = vsel %vm2326, %v7845, %v7469
        %v7878 = vsel %vm2326, %v7846, %v7471
        %v7879 = vsel %vm2326, %v7847, %v7473
        %v7880 = vsel %vm2326, %v7848, %v7475
        %v7881 = vsel %vm2326, %v7849, %v7477
        %v7882 = vsel %vm2326, %v7850, %v7479
        %v7883 = vsel %vm2326, %v7851, %v7481
        %v7884 = vsel %vm2326, %v7852, %v7483
        %v7885 = vsel %vm2326, %v7853, %v7485
        %v7886 = vsel %vm2326, %v7854, %v7487
        %v7887 = vsel %vm2326, %v7855, %v7489
        %v7888 = vsel %vm2326, %v7856, %v7491
        %v7889 = vsel %vm2326, %v7857, %v7493
        %v7890 = vsel %vm2326, %v7858, %v7495
        %v7891 = vsel %vm2326, %v7859, %v7497
        %v7892 = vsel %vm2326, %v7860, %v7499
        %v7893 = vsel %vm2326, %v7861, %v7501
        %v7894 = vsel %vm2326, %v7862, %v7503
        %v7895 = vsel %vm2326, %v7863, %v7505
        %v7896 = vsel %vm2326, %v7864, %v7507
        %v7897 = vsel %vm2326, %v7865, %v7509
        %v7898 = vsel %vm2326, %v7866, %v7511
        %v7899 = vsel %vm2326, %v7867, %v7513
        %v7900 = vsel %vm2326, %v7868, %v7515
        %v7901 = vsel %vm2326, %v7869, %v7517
        %v7902 = vsel %vm2359, %v7870, %v7583
        %v7903 = vsel %vm2359, %v7871, %v7585
        %v7904 = vsel %vm2359, %v7872, %v7587
        %v7905 = vsel %vm2359, %v7873, %v7589
        %v7906 = vsel %vm2359, %v7874, %v7591
        %v7907 = vsel %vm2359, %v7875, %v7593
        %v7908 = vsel %vm2359, %v7876, %v7595
        %v7909 = vsel %vm2359, %v7877, %v7597
        %v7910 = vsel %vm2359, %v7878, %v7599
        %v7911 = vsel %vm2359, %v7879, %v7601
        %v7912 = vsel %vm2359, %v7880, %v7603
        %v7913 = vsel %vm2359, %v7881, %v7605
        %v7914 = vsel %vm2359, %v7882, %v7607
        %v7915 = vsel %vm2359, %v7883, %v7609
        %v7916 = vsel %vm2359, %v7884, %v7611
        %v7917 = vsel %vm2359, %v7885, %v7613
        %v7918 = vsel %vm2359, %v7886, %v7615
        %v7919 = vsel %vm2359, %v7887, %v7617
        %v7920 = vsel %vm2359, %v7888, %v7619
        %v7921 = vsel %vm2359, %v7889, %v7621
        %v7922 = vsel %vm2359, %v7890, %v7623
        %v7923 = vsel %vm2359, %v7891, %v7625
        %v7924 = vsel %vm2359, %v7892, %v7627
        %v7925 = vsel %vm2359, %v7893, %v7629
        %v7926 = vsel %vm2359, %v7894, %v7631
        %v7927 = vsel %vm2359, %v7895, %v7633
        %v7928 = vsel %vm2359, %v7896, %v7635
        %v7929 = vsel %vm2359, %v7897, %v7637
        %v7930 = vsel %vm2359, %v7898, %v7639
        %v7931 = vsel %vm2359, %v7899, %v7641
        %v7932 = vsel %vm2359, %v7900, %v7643
        %v7933 = vsel %vm2359, %v7901, %v7645
        %v7935 = vsel %vm2395, %v7902, 0
        %v7938 = vsel %vm2395, %v7903, 0
        %v7941 = vsel %vm2395, %v7904, 0
        %v7944 = vsel %vm2395, %v7905, 0
        %v7947 = vsel %vm2395, %v7906, 0
        %v7950 = vsel %vm2395, %v7907, 0
        %v7953 = vsel %vm2395, %v7908, 0
        %v7956 = vsel %vm2395, %v7909, 0
        %v7959 = vsel %vm2395, %v7910, 0
        %v7962 = vsel %vm2395, %v7911, 0
        %v7965 = vsel %vm2395, %v7912, 0
        %v7968 = vsel %vm2395, %v7913, 0
        %v7971 = vsel %vm2395, %v7914, 0
        %v7974 = vsel %vm2395, %v7915, 0
        %v7977 = vsel %vm2395, %v7916, 0
        %v7980 = vsel %vm2395, %v7917, 0
        %v7983 = vsel %vm2395, %v7918, 0
        %v7986 = vsel %vm2395, %v7919, 0
        %v7989 = vsel %vm2395, %v7920, 0
        %v7992 = vsel %vm2395, %v7921, 0
        %v7995 = vsel %vm2395, %v7922, 0
        %v7998 = vsel %vm2395, %v7923, 0
        %v8001 = vsel %vm2395, %v7924, 0
        %v8004 = vsel %vm2395, %v7925, 0
        %v8007 = vsel %vm2395, %v7926, 0
        %v8010 = vsel %vm2395, %v7927, 0
        %v8013 = vsel %vm2395, %v7928, 0
        %v8016 = vsel %vm2395, %v7929, 0
        %v8019 = vsel %vm2395, %v7930, 0
        %v8022 = vsel %vm2395, %v7931, 0
        %v8025 = vsel %vm2395, %v7932, 0
        %v8028 = vsel %vm2395, %v7933, 0
        %8030 = vmatpush.msra.mxu0 0.0
        %8031 = vmatpush.msra.mxu0 0.0
        %8032 = vmatpush.msra.mxu0 0.0
        %8033 = vmatpush.msra.mxu0 0.0
        %8034 = vmatpush.msra.mxu0 0.0
        %8035 = vmatpush.msra.mxu0 0.0
        %8036 = vmatpush.msra.mxu0 0.0
        %8037 = vmatpush.msra.mxu0 0.0
        %8038 = vmatpush.msra.mxu0 0.0
        %8039 = vmatpush.msra.mxu0 0.0
        %8040 = vmatpush.msra.mxu0 0.0
        %8041 = vmatpush.msra.mxu0 0.0
        %8042 = vmatpush.msra.mxu0 %v2494
        %8043 = vmatpush.msra.mxu0 %v813
        %8044 = vmatpush.msra.mxu0 %v812
        %8045 = vmatpush.msra.mxu0 %v811
        %8046 = vmatmul.f32.gmra.mxu0 %v7935
        %v8047 = vpop.f32.mrf.mxu0
        %v8048 = vadd.f32 %v2393, %v8047
        %8049 = vmatmul.f32.gmra.mxu0 %v7938
        %v8050 = vpop.f32.mrf.mxu0
        %v8051 = vadd.f32 %v2393, %v8050
        %8052 = vmatmul.f32.gmra.mxu0 %v7941
        %v8053 = vpop.f32.mrf.mxu0
        %v8054 = vadd.f32 %v2393, %v8053
        %8055 = vmatmul.f32.gmra.mxu0 %v7944
        %v8056 = vpop.f32.mrf.mxu0
        %v8057 = vadd.f32 %v2393, %v8056
        %8058 = vmatmul.f32.gmra.mxu0 %v7947
        %v8059 = vpop.f32.mrf.mxu0
        %v8060 = vadd.f32 %v2393, %v8059
        %8061 = vmatmul.f32.gmra.mxu0 %v7950
        %v8062 = vpop.f32.mrf.mxu0
        %v8063 = vadd.f32 %v2393, %v8062
        %8064 = vmatmul.f32.gmra.mxu0 %v7953
        %v8065 = vpop.f32.mrf.mxu0
        %v8066 = vadd.f32 %v2393, %v8065
        %8067 = vmatmul.f32.gmra.mxu0 %v7956
        %v8068 = vpop.f32.mrf.mxu0
        %v8069 = vadd.f32 %v2393, %v8068
        %8070 = vmatmul.f32.gmra.mxu0 %v7959
        %v8071 = vpop.f32.mrf.mxu0
        %v8072 = vadd.f32 %v2393, %v8071
        %8073 = vmatmul.f32.gmra.mxu0 %v7962
        %v8074 = vpop.f32.mrf.mxu0
        %v8075 = vadd.f32 %v2393, %v8074
        %8076 = vmatmul.f32.gmra.mxu0 %v7965
        %v8077 = vpop.f32.mrf.mxu0
        %v8078 = vadd.f32 %v2393, %v8077
        %8079 = vmatmul.f32.gmra.mxu0 %v7968
        %v8080 = vpop.f32.mrf.mxu0
        %v8081 = vadd.f32 %v2393, %v8080
        %8082 = vmatmul.f32.gmra.mxu0 %v7971
        %v8083 = vpop.f32.mrf.mxu0
        %v8084 = vadd.f32 %v2393, %v8083
        %8085 = vmatmul.f32.gmra.mxu0 %v7974
        %v8086 = vpop.f32.mrf.mxu0
        %v8087 = vadd.f32 %v2393, %v8086
        %8088 = vmatmul.f32.gmra.mxu0 %v7977
        %v8089 = vpop.f32.mrf.mxu0
        %v8090 = vadd.f32 %v2393, %v8089
        %8091 = vmatmul.f32.gmra.mxu0 %v7980
        %v8092 = vpop.f32.mrf.mxu0
        %v8093 = vadd.f32 %v2393, %v8092
        %8094 = vmatmul.f32.gmra.mxu0 %v7983
        %v8095 = vpop.f32.mrf.mxu0
        %v8096 = vadd.f32 %v2393, %v8095
        %8097 = vmatmul.f32.gmra.mxu0 %v7986
        %v8098 = vpop.f32.mrf.mxu0
        %v8099 = vadd.f32 %v2393, %v8098
        %8100 = vmatmul.f32.gmra.mxu0 %v7989
        %v8101 = vpop.f32.mrf.mxu0
        %v8102 = vadd.f32 %v2393, %v8101
        %8103 = vmatmul.f32.gmra.mxu0 %v7992
        %v8104 = vpop.f32.mrf.mxu0
        %v8105 = vadd.f32 %v2393, %v8104
        %8106 = vmatmul.f32.gmra.mxu0 %v7995
        %v8107 = vpop.f32.mrf.mxu0
        %v8108 = vadd.f32 %v2393, %v8107
        %8109 = vmatmul.f32.gmra.mxu0 %v7998
        %v8110 = vpop.f32.mrf.mxu0
        %v8111 = vadd.f32 %v2393, %v8110
        %8112 = vmatmul.f32.gmra.mxu0 %v8001
        %v8113 = vpop.f32.mrf.mxu0
        %v8114 = vadd.f32 %v2393, %v8113
        %8115 = vmatmul.f32.gmra.mxu0 %v8004
        %v8116 = vpop.f32.mrf.mxu0
        %v8117 = vadd.f32 %v2393, %v8116
        %8118 = vmatmul.f32.gmra.mxu0 %v8007
        %v8119 = vpop.f32.mrf.mxu0
        %v8120 = vadd.f32 %v2393, %v8119
        %8121 = vmatmul.f32.gmra.mxu0 %v8010
        %v8122 = vpop.f32.mrf.mxu0
        %v8123 = vadd.f32 %v2393, %v8122
        %8124 = vmatmul.f32.gmra.mxu0 %v8013
        %v8125 = vpop.f32.mrf.mxu0
        %v8126 = vadd.f32 %v2393, %v8125
        %8127 = vmatmul.f32.gmra.mxu0 %v8016
        %v8128 = vpop.f32.mrf.mxu0
        %v8129 = vadd.f32 %v2393, %v8128
        %8130 = vmatmul.f32.gmra.mxu0 %v8019
        %v8131 = vpop.f32.mrf.mxu0
        %v8132 = vadd.f32 %v2393, %v8131
        %8133 = vmatmul.f32.gmra.mxu0 %v8022
        %v8134 = vpop.f32.mrf.mxu0
        %v8135 = vadd.f32 %v2393, %v8134
        %8136 = vmatmul.f32.gmra.mxu0 %v8025
        %v8137 = vpop.f32.mrf.mxu0
        %v8138 = vadd.f32 %v2393, %v8137
        %8139 = vmatmul.f32.gmra.mxu0 %v8028
        %v8140 = vpop.f32.mrf.mxu0
        %v8141 = vadd.f32 %v2393, %v8140
        %8142 = vdwg.mxu0
        %v8143 = vmax.f32 %v8048, 0.0
        %v8144 = vmax.f32 %v8051, 0.0
        %v8145 = vmax.f32 %v8054, 0.0
        %v8146 = vmax.f32 %v8057, 0.0
        %v8147 = vmax.f32 %v8060, 0.0
        %v8148 = vmax.f32 %v8063, 0.0
        %v8149 = vmax.f32 %v8066, 0.0
        %v8150 = vmax.f32 %v8069, 0.0
        %v8151 = vmax.f32 %v8072, 0.0
        %v8152 = vmax.f32 %v8075, 0.0
        %v8153 = vmax.f32 %v8078, 0.0
        %v8154 = vmax.f32 %v8081, 0.0
        %v8155 = vmax.f32 %v8084, 0.0
        %v8156 = vmax.f32 %v8087, 0.0
        %v8157 = vmax.f32 %v8090, 0.0
        %v8158 = vmax.f32 %v8093, 0.0
        %v8159 = vmax.f32 %v8096, 0.0
        %v8160 = vmax.f32 %v8099, 0.0
        %v8161 = vmax.f32 %v8102, 0.0
        %v8162 = vmax.f32 %v8105, 0.0
        %v8163 = vmax.f32 %v8108, 0.0
        %v8164 = vmax.f32 %v8111, 0.0
        %v8165 = vmax.f32 %v8114, 0.0
        %v8166 = vmax.f32 %v8117, 0.0
        %v8167 = vmax.f32 %v8120, 0.0
        %v8168 = vmax.f32 %v8123, 0.0
        %v8169 = vmax.f32 %v8126, 0.0
        %v8170 = vmax.f32 %v8129, 0.0
        %v8171 = vmax.f32 %v8132, 0.0
        %v8172 = vmax.f32 %v8135, 0.0
        %v8173 = vmax.f32 %v8138, 0.0
        %v8174 = vmax.f32 %v8141, 0.0
        %s8175 = scalar_lea.vmem [#allocation3], 768
        %8176 = vst.msk [vmem:[%s8175] sm:$0xff] %vm481, %v8143
        %8177 = vst.msk [vmem:[%s8175 + $0x8] sm:$0xff] %vm481, %v8144
        %8178 = vst.msk [vmem:[%s8175 + $0x10] sm:$0xff] %vm481, %v8145
        %8179 = vst.msk [vmem:[%s8175 + $0x18] sm:$0xff] %vm481, %v8146
        %8180 = vst.msk [vmem:[%s8175 + $0x20] sm:$0xff] %vm481, %v8147
        %8181 = vst.msk [vmem:[%s8175 + $0x28] sm:$0xff] %vm481, %v8148
        %8182 = vst.msk [vmem:[%s8175 + $0x30] sm:$0xff] %vm481, %v8149
        %8183 = vst.msk [vmem:[%s8175 + $0x38] sm:$0xff] %vm481, %v8150
        %8184 = vst.msk [vmem:[%s8175 + $0x40] sm:$0xff] %vm481, %v8151
        %8185 = vst.msk [vmem:[%s8175 + $0x48] sm:$0xff] %vm481, %v8152
        %8186 = vst.msk [vmem:[%s8175 + $0x50] sm:$0xff] %vm481, %v8153
        %8187 = vst.msk [vmem:[%s8175 + $0x58] sm:$0xff] %vm481, %v8154
        %8188 = vst.msk [vmem:[%s8175 + $0x60] sm:$0xff] %vm481, %v8155
        %8189 = vst.msk [vmem:[%s8175 + $0x68] sm:$0xff] %vm481, %v8156
        %8190 = vst.msk [vmem:[%s8175 + $0x70] sm:$0xff] %vm481, %v8157
        %8191 = vst.msk [vmem:[%s8175 + $0x78] sm:$0xff] %vm481, %v8158
        %8192 = vst.msk [vmem:[%s8175 + $0x80] sm:$0xff] %vm481, %v8159
        %8193 = vst.msk [vmem:[%s8175 + $0x88] sm:$0xff] %vm481, %v8160
        %8194 = vst.msk [vmem:[%s8175 + $0x90] sm:$0xff] %vm481, %v8161
        %8195 = vst.msk [vmem:[%s8175 + $0x98] sm:$0xff] %vm481, %v8162
        %8196 = vst.msk [vmem:[%s8175 + $0xa0] sm:$0xff] %vm481, %v8163
        %8197 = vst.msk [vmem:[%s8175 + $0xa8] sm:$0xff] %vm481, %v8164
        %8198 = vst.msk [vmem:[%s8175 + $0xb0] sm:$0xff] %vm481, %v8165
        %8199 = vst.msk [vmem:[%s8175 + $0xb8] sm:$0xff] %vm481, %v8166
        %8200 = vst.msk [vmem:[%s8175 + $0xc0] sm:$0xff] %vm481, %v8167
        %8201 = vst.msk [vmem:[%s8175 + $0xc8] sm:$0xff] %vm481, %v8168
        %8202 = vst.msk [vmem:[%s8175 + $0xd0] sm:$0xff] %vm481, %v8169
        %8203 = vst.msk [vmem:[%s8175 + $0xd8] sm:$0xff] %vm481, %v8170
        %8204 = vst.msk [vmem:[%s8175 + $0xe0] sm:$0xff] %vm481, %v8171
        %8205 = vst.msk [vmem:[%s8175 + $0xe8] sm:$0xff] %vm481, %v8172
        %8206 = vst.msk [vmem:[%s8175 + $0xf0] sm:$0xff] %vm481, %v8173
        %8207 = vst.msk [vmem:[%s8175 + $0xf8] sm:$0xff] %vm481, %v8174
        %v8208 = vld [vmem:[#allocation3] ss:$2 sm:$0xff]
        %s8209 = scalar_lea.vmem [#allocation3], 16
        %v8210 = vld [vmem:[%s8209] ss:$2 sm:$0xff]
        %s8211 = scalar_lea.vmem [#allocation3], 32
        %v8212 = vld [vmem:[%s8211] ss:$2 sm:$0xff]
        %s8213 = scalar_lea.vmem [#allocation3], 48
        %v8214 = vld [vmem:[%s8213] ss:$2 sm:$0xff]
        %s8215 = scalar_lea.vmem [#allocation3], 64
        %v8216 = vld [vmem:[%s8215] ss:$2 sm:$0xff]
        %s8217 = scalar_lea.vmem [#allocation3], 80
        %v8218 = vld [vmem:[%s8217] ss:$2 sm:$0xff]
        %s8219 = scalar_lea.vmem [#allocation3], 96
        %v8220 = vld [vmem:[%s8219] ss:$2 sm:$0xff]
        %s8221 = scalar_lea.vmem [#allocation3], 112
        %v8222 = vld [vmem:[%s8221] ss:$2 sm:$0xff]
        %s8223 = scalar_lea.vmem [#allocation3], 128
        %v8224 = vld [vmem:[%s8223] ss:$2 sm:$0xff]
        %s8225 = scalar_lea.vmem [#allocation3], 144
        %v8226 = vld [vmem:[%s8225] ss:$2 sm:$0xff]
        %s8227 = scalar_lea.vmem [#allocation3], 160
        %v8228 = vld [vmem:[%s8227] ss:$2 sm:$0xff]
        %s8229 = scalar_lea.vmem [#allocation3], 176
        %v8230 = vld [vmem:[%s8229] ss:$2 sm:$0xff]
        %s8231 = scalar_lea.vmem [#allocation3], 192
        %v8232 = vld [vmem:[%s8231] ss:$2 sm:$0xff]
        %s8233 = scalar_lea.vmem [#allocation3], 208
        %v8234 = vld [vmem:[%s8233] ss:$2 sm:$0xff]
        %s8235 = scalar_lea.vmem [#allocation3], 224
        %v8236 = vld [vmem:[%s8235] ss:$2 sm:$0xff]
        %s8237 = scalar_lea.vmem [#allocation3], 240
        %v8238 = vld [vmem:[%s8237] ss:$2 sm:$0xff]
        %s8239 = scalar_lea.vmem [#allocation3], 256
        %v8240 = vld [vmem:[%s8239] ss:$2 sm:$0xff]
        %s8241 = scalar_lea.vmem [#allocation3], 272
        %v8242 = vld [vmem:[%s8241] ss:$2 sm:$0xff]
        %s8243 = scalar_lea.vmem [#allocation3], 288
        %v8244 = vld [vmem:[%s8243] ss:$2 sm:$0xff]
        %s8245 = scalar_lea.vmem [#allocation3], 304
        %v8246 = vld [vmem:[%s8245] ss:$2 sm:$0xff]
        %s8247 = scalar_lea.vmem [#allocation3], 320
        %v8248 = vld [vmem:[%s8247] ss:$2 sm:$0xff]
        %s8249 = scalar_lea.vmem [#allocation3], 336
        %v8250 = vld [vmem:[%s8249] ss:$2 sm:$0xff]
        %s8251 = scalar_lea.vmem [#allocation3], 352
        %v8252 = vld [vmem:[%s8251] ss:$2 sm:$0xff]
        %s8253 = scalar_lea.vmem [#allocation3], 368
        %v8254 = vld [vmem:[%s8253] ss:$2 sm:$0xff]
        %s8255 = scalar_lea.vmem [#allocation3], 384
        %v8256 = vld [vmem:[%s8255] ss:$2 sm:$0xff]
        %s8257 = scalar_lea.vmem [#allocation3], 400
        %v8258 = vld [vmem:[%s8257] ss:$2 sm:$0xff]
        %s8259 = scalar_lea.vmem [#allocation3], 416
        %v8260 = vld [vmem:[%s8259] ss:$2 sm:$0xff]
        %s8261 = scalar_lea.vmem [#allocation3], 432
        %v8262 = vld [vmem:[%s8261] ss:$2 sm:$0xff]
        %s8263 = scalar_lea.vmem [#allocation3], 448
        %v8264 = vld [vmem:[%s8263] ss:$2 sm:$0xff]
        %s8265 = scalar_lea.vmem [#allocation3], 464
        %v8266 = vld [vmem:[%s8265] ss:$2 sm:$0xff]
        %s8267 = scalar_lea.vmem [#allocation3], 480
        %v8268 = vld [vmem:[%s8267] ss:$2 sm:$0xff]
        %s8269 = scalar_lea.vmem [#allocation3], 496
        %v8270 = vld [vmem:[%s8269] ss:$2 sm:$0xff]
        %s8271 = scalar_lea.vmem [#allocation3], 512
        %v8272 = vld [vmem:[%s8271] ss:$2 sm:$0xff]
        %s8273 = scalar_lea.vmem [#allocation3], 528
        %v8274 = vld [vmem:[%s8273] ss:$2 sm:$0xff]
        %s8275 = scalar_lea.vmem [#allocation3], 544
        %v8276 = vld [vmem:[%s8275] ss:$2 sm:$0xff]
        %s8277 = scalar_lea.vmem [#allocation3], 560
        %v8278 = vld [vmem:[%s8277] ss:$2 sm:$0xff]
        %s8279 = scalar_lea.vmem [#allocation3], 576
        %v8280 = vld [vmem:[%s8279] ss:$2 sm:$0xff]
        %s8281 = scalar_lea.vmem [#allocation3], 592
        %v8282 = vld [vmem:[%s8281] ss:$2 sm:$0xff]
        %s8283 = scalar_lea.vmem [#allocation3], 608
        %v8284 = vld [vmem:[%s8283] ss:$2 sm:$0xff]
        %s8285 = scalar_lea.vmem [#allocation3], 624
        %v8286 = vld [vmem:[%s8285] ss:$2 sm:$0xff]
        %s8287 = scalar_lea.vmem [#allocation3], 640
        %v8288 = vld [vmem:[%s8287] ss:$2 sm:$0xff]
        %s8289 = scalar_lea.vmem [#allocation3], 656
        %v8290 = vld [vmem:[%s8289] ss:$2 sm:$0xff]
        %s8291 = scalar_lea.vmem [#allocation3], 672
        %v8292 = vld [vmem:[%s8291] ss:$2 sm:$0xff]
        %s8293 = scalar_lea.vmem [#allocation3], 688
        %v8294 = vld [vmem:[%s8293] ss:$2 sm:$0xff]
        %s8295 = scalar_lea.vmem [#allocation3], 704
        %v8296 = vld [vmem:[%s8295] ss:$2 sm:$0xff]
        %s8297 = scalar_lea.vmem [#allocation3], 720
        %v8298 = vld [vmem:[%s8297] ss:$2 sm:$0xff]
        %s8299 = scalar_lea.vmem [#allocation3], 736
        %v8300 = vld [vmem:[%s8299] ss:$2 sm:$0xff]
        %s8301 = scalar_lea.vmem [#allocation3], 752
        %v8302 = vld [vmem:[%s8301] ss:$2 sm:$0xff]
        %s8303 = scalar_lea.vmem [#allocation3], 768
        %v8304 = vld [vmem:[%s8303] ss:$2 sm:$0xff]
        %s8305 = scalar_lea.vmem [#allocation3], 784
        %v8306 = vld [vmem:[%s8305] ss:$2 sm:$0xff]
        %s8307 = scalar_lea.vmem [#allocation3], 800
        %v8308 = vld [vmem:[%s8307] ss:$2 sm:$0xff]
        %s8309 = scalar_lea.vmem [#allocation3], 816
        %v8310 = vld [vmem:[%s8309] ss:$2 sm:$0xff]
        %s8311 = scalar_lea.vmem [#allocation3], 832
        %v8312 = vld [vmem:[%s8311] ss:$2 sm:$0xff]
        %s8313 = scalar_lea.vmem [#allocation3], 848
        %v8314 = vld [vmem:[%s8313] ss:$2 sm:$0xff]
        %s8315 = scalar_lea.vmem [#allocation3], 864
        %v8316 = vld [vmem:[%s8315] ss:$2 sm:$0xff]
        %s8317 = scalar_lea.vmem [#allocation3], 880
        %v8318 = vld [vmem:[%s8317] ss:$2 sm:$0xff]
        %s8319 = scalar_lea.vmem [#allocation3], 896
        %v8320 = vld [vmem:[%s8319] ss:$2 sm:$0xff]
        %s8321 = scalar_lea.vmem [#allocation3], 912
        %v8322 = vld [vmem:[%s8321] ss:$2 sm:$0xff]
        %s8323 = scalar_lea.vmem [#allocation3], 928
        %v8324 = vld [vmem:[%s8323] ss:$2 sm:$0xff]
        %s8325 = scalar_lea.vmem [#allocation3], 944
        %v8326 = vld [vmem:[%s8325] ss:$2 sm:$0xff]
        %s8327 = scalar_lea.vmem [#allocation3], 960
        %v8328 = vld [vmem:[%s8327] ss:$2 sm:$0xff]
        %s8329 = scalar_lea.vmem [#allocation3], 976
        %v8330 = vld [vmem:[%s8329] ss:$2 sm:$0xff]
        %s8331 = scalar_lea.vmem [#allocation3], 992
        %v8332 = vld [vmem:[%s8331] ss:$2 sm:$0xff]
        %s8333 = scalar_lea.vmem [#allocation3], 1008
        %v8334 = vld [vmem:[%s8333] ss:$2 sm:$0xff]
        %s8335 = scalar_lea.vmem [#allocation3], 1
        %v8336 = vld [vmem:[%s8335] ss:$2 sm:$0xff]
        %s8337 = scalar_lea.vmem [#allocation3], 17
        %v8338 = vld [vmem:[%s8337] ss:$2 sm:$0xff]
        %s8339 = scalar_lea.vmem [#allocation3], 33
        %v8340 = vld [vmem:[%s8339] ss:$2 sm:$0xff]
        %s8341 = scalar_lea.vmem [#allocation3], 49
        %v8342 = vld [vmem:[%s8341] ss:$2 sm:$0xff]
        %s8343 = scalar_lea.vmem [#allocation3], 65
        %v8344 = vld [vmem:[%s8343] ss:$2 sm:$0xff]
        %s8345 = scalar_lea.vmem [#allocation3], 81
        %v8346 = vld [vmem:[%s8345] ss:$2 sm:$0xff]
        %s8347 = scalar_lea.vmem [#allocation3], 97
        %v8348 = vld [vmem:[%s8347] ss:$2 sm:$0xff]
        %s8349 = scalar_lea.vmem [#allocation3], 113
        %v8350 = vld [vmem:[%s8349] ss:$2 sm:$0xff]
        %s8351 = scalar_lea.vmem [#allocation3], 129
        %v8352 = vld [vmem:[%s8351] ss:$2 sm:$0xff]
        %s8353 = scalar_lea.vmem [#allocation3], 145
        %v8354 = vld [vmem:[%s8353] ss:$2 sm:$0xff]
        %s8355 = scalar_lea.vmem [#allocation3], 161
        %v8356 = vld [vmem:[%s8355] ss:$2 sm:$0xff]
        %s8357 = scalar_lea.vmem [#allocation3], 177
        %v8358 = vld [vmem:[%s8357] ss:$2 sm:$0xff]
        %s8359 = scalar_lea.vmem [#allocation3], 193
        %v8360 = vld [vmem:[%s8359] ss:$2 sm:$0xff]
        %s8361 = scalar_lea.vmem [#allocation3], 209
        %v8362 = vld [vmem:[%s8361] ss:$2 sm:$0xff]
        %s8363 = scalar_lea.vmem [#allocation3], 225
        %v8364 = vld [vmem:[%s8363] ss:$2 sm:$0xff]
        %s8365 = scalar_lea.vmem [#allocation3], 241
        %v8366 = vld [vmem:[%s8365] ss:$2 sm:$0xff]
        %s8367 = scalar_lea.vmem [#allocation3], 257
        %v8368 = vld [vmem:[%s8367] ss:$2 sm:$0xff]
        %s8369 = scalar_lea.vmem [#allocation3], 273
        %v8370 = vld [vmem:[%s8369] ss:$2 sm:$0xff]
        %s8371 = scalar_lea.vmem [#allocation3], 289
        %v8372 = vld [vmem:[%s8371] ss:$2 sm:$0xff]
        %s8373 = scalar_lea.vmem [#allocation3], 305
        %v8374 = vld [vmem:[%s8373] ss:$2 sm:$0xff]
        %s8375 = scalar_lea.vmem [#allocation3], 321
        %v8376 = vld [vmem:[%s8375] ss:$2 sm:$0xff]
        %s8377 = scalar_lea.vmem [#allocation3], 337
        %v8378 = vld [vmem:[%s8377] ss:$2 sm:$0xff]
        %s8379 = scalar_lea.vmem [#allocation3], 353
        %v8380 = vld [vmem:[%s8379] ss:$2 sm:$0xff]
        %s8381 = scalar_lea.vmem [#allocation3], 369
        %v8382 = vld [vmem:[%s8381] ss:$2 sm:$0xff]
        %s8383 = scalar_lea.vmem [#allocation3], 385
        %v8384 = vld [vmem:[%s8383] ss:$2 sm:$0xff]
        %s8385 = scalar_lea.vmem [#allocation3], 401
        %v8386 = vld [vmem:[%s8385] ss:$2 sm:$0xff]
        %s8387 = scalar_lea.vmem [#allocation3], 417
        %v8388 = vld [vmem:[%s8387] ss:$2 sm:$0xff]
        %s8389 = scalar_lea.vmem [#allocation3], 433
        %v8390 = vld [vmem:[%s8389] ss:$2 sm:$0xff]
        %s8391 = scalar_lea.vmem [#allocation3], 449
        %v8392 = vld [vmem:[%s8391] ss:$2 sm:$0xff]
        %s8393 = scalar_lea.vmem [#allocation3], 465
        %v8394 = vld [vmem:[%s8393] ss:$2 sm:$0xff]
        %s8395 = scalar_lea.vmem [#allocation3], 481
        %v8396 = vld [vmem:[%s8395] ss:$2 sm:$0xff]
        %s8397 = scalar_lea.vmem [#allocation3], 497
        %v8398 = vld [vmem:[%s8397] ss:$2 sm:$0xff]
        %s8399 = scalar_lea.vmem [#allocation3], 513
        %v8400 = vld [vmem:[%s8399] ss:$2 sm:$0xff]
        %s8401 = scalar_lea.vmem [#allocation3], 529
        %v8402 = vld [vmem:[%s8401] ss:$2 sm:$0xff]
        %s8403 = scalar_lea.vmem [#allocation3], 545
        %v8404 = vld [vmem:[%s8403] ss:$2 sm:$0xff]
        %s8405 = scalar_lea.vmem [#allocation3], 561
        %v8406 = vld [vmem:[%s8405] ss:$2 sm:$0xff]
        %s8407 = scalar_lea.vmem [#allocation3], 577
        %v8408 = vld [vmem:[%s8407] ss:$2 sm:$0xff]
        %s8409 = scalar_lea.vmem [#allocation3], 593
        %v8410 = vld [vmem:[%s8409] ss:$2 sm:$0xff]
        %s8411 = scalar_lea.vmem [#allocation3], 609
        %v8412 = vld [vmem:[%s8411] ss:$2 sm:$0xff]
        %s8413 = scalar_lea.vmem [#allocation3], 625
        %v8414 = vld [vmem:[%s8413] ss:$2 sm:$0xff]
        %s8415 = scalar_lea.vmem [#allocation3], 641
        %v8416 = vld [vmem:[%s8415] ss:$2 sm:$0xff]
        %s8417 = scalar_lea.vmem [#allocation3], 657
        %v8418 = vld [vmem:[%s8417] ss:$2 sm:$0xff]
        %s8419 = scalar_lea.vmem [#allocation3], 673
        %v8420 = vld [vmem:[%s8419] ss:$2 sm:$0xff]
        %s8421 = scalar_lea.vmem [#allocation3], 689
        %v8422 = vld [vmem:[%s8421] ss:$2 sm:$0xff]
        %s8423 = scalar_lea.vmem [#allocation3], 705
        %v8424 = vld [vmem:[%s8423] ss:$2 sm:$0xff]
        %s8425 = scalar_lea.vmem [#allocation3], 721
        %v8426 = vld [vmem:[%s8425] ss:$2 sm:$0xff]
        %s8427 = scalar_lea.vmem [#allocation3], 737
        %v8428 = vld [vmem:[%s8427] ss:$2 sm:$0xff]
        %s8429 = scalar_lea.vmem [#allocation3], 753
        %v8430 = vld [vmem:[%s8429] ss:$2 sm:$0xff]
        %s8431 = scalar_lea.vmem [#allocation3], 769
        %v8432 = vld [vmem:[%s8431] ss:$2 sm:$0xff]
        %s8433 = scalar_lea.vmem [#allocation3], 785
        %v8434 = vld [vmem:[%s8433] ss:$2 sm:$0xff]
        %s8435 = scalar_lea.vmem [#allocation3], 801
        %v8436 = vld [vmem:[%s8435] ss:$2 sm:$0xff]
        %s8437 = scalar_lea.vmem [#allocation3], 817
        %v8438 = vld [vmem:[%s8437] ss:$2 sm:$0xff]
        %s8439 = scalar_lea.vmem [#allocation3], 833
        %v8440 = vld [vmem:[%s8439] ss:$2 sm:$0xff]
        %s8441 = scalar_lea.vmem [#allocation3], 849
        %v8442 = vld [vmem:[%s8441] ss:$2 sm:$0xff]
        %s8443 = scalar_lea.vmem [#allocation3], 865
        %v8444 = vld [vmem:[%s8443] ss:$2 sm:$0xff]
        %s8445 = scalar_lea.vmem [#allocation3], 881
        %v8446 = vld [vmem:[%s8445] ss:$2 sm:$0xff]
        %s8447 = scalar_lea.vmem [#allocation3], 897
        %v8448 = vld [vmem:[%s8447] ss:$2 sm:$0xff]
        %s8449 = scalar_lea.vmem [#allocation3], 913
        %v8450 = vld [vmem:[%s8449] ss:$2 sm:$0xff]
        %s8451 = scalar_lea.vmem [#allocation3], 929
        %v8452 = vld [vmem:[%s8451] ss:$2 sm:$0xff]
        %s8453 = scalar_lea.vmem [#allocation3], 945
        %v8454 = vld [vmem:[%s8453] ss:$2 sm:$0xff]
        %s8455 = scalar_lea.vmem [#allocation3], 961
        %v8456 = vld [vmem:[%s8455] ss:$2 sm:$0xff]
        %s8457 = scalar_lea.vmem [#allocation3], 977
        %v8458 = vld [vmem:[%s8457] ss:$2 sm:$0xff]
        %s8459 = scalar_lea.vmem [#allocation3], 993
        %v8460 = vld [vmem:[%s8459] ss:$2 sm:$0xff]
        %s8461 = scalar_lea.vmem [#allocation3], 1009
        %v8462 = vld [vmem:[%s8461] ss:$2 sm:$0xff]
        %v8463 = vmax.f32 %v8208, %v8336
        %v8464 = vmax.f32 %v8210, %v8338
        %v8465 = vmax.f32 %v8212, %v8340
        %v8466 = vmax.f32 %v8214, %v8342
        %v8467 = vmax.f32 %v8216, %v8344
        %v8468 = vmax.f32 %v8218, %v8346
        %v8469 = vmax.f32 %v8220, %v8348
        %v8470 = vmax.f32 %v8222, %v8350
        %v8471 = vmax.f32 %v8224, %v8352
        %v8472 = vmax.f32 %v8226, %v8354
        %v8473 = vmax.f32 %v8228, %v8356
        %v8474 = vmax.f32 %v8230, %v8358
        %v8475 = vmax.f32 %v8232, %v8360
        %v8476 = vmax.f32 %v8234, %v8362
        %v8477 = vmax.f32 %v8236, %v8364
        %v8478 = vmax.f32 %v8238, %v8366
        %v8479 = vmax.f32 %v8240, %v8368
        %v8480 = vmax.f32 %v8242, %v8370
        %v8481 = vmax.f32 %v8244, %v8372
        %v8482 = vmax.f32 %v8246, %v8374
        %v8483 = vmax.f32 %v8248, %v8376
        %v8484 = vmax.f32 %v8250, %v8378
        %v8485 = vmax.f32 %v8252, %v8380
        %v8486 = vmax.f32 %v8254, %v8382
        %v8487 = vmax.f32 %v8256, %v8384
        %v8488 = vmax.f32 %v8258, %v8386
        %v8489 = vmax.f32 %v8260, %v8388
        %v8490 = vmax.f32 %v8262, %v8390
        %v8491 = vmax.f32 %v8264, %v8392
        %v8492 = vmax.f32 %v8266, %v8394
        %v8493 = vmax.f32 %v8268, %v8396
        %v8494 = vmax.f32 %v8270, %v8398
        %v8495 = vmax.f32 %v8272, %v8400
        %v8496 = vmax.f32 %v8274, %v8402
        %v8497 = vmax.f32 %v8276, %v8404
        %v8498 = vmax.f32 %v8278, %v8406
        %v8499 = vmax.f32 %v8280, %v8408
        %v8500 = vmax.f32 %v8282, %v8410
        %v8501 = vmax.f32 %v8284, %v8412
        %v8502 = vmax.f32 %v8286, %v8414
        %v8503 = vmax.f32 %v8288, %v8416
        %v8504 = vmax.f32 %v8290, %v8418
        %v8505 = vmax.f32 %v8292, %v8420
        %v8506 = vmax.f32 %v8294, %v8422
        %v8507 = vmax.f32 %v8296, %v8424
        %v8508 = vmax.f32 %v8298, %v8426
        %v8509 = vmax.f32 %v8300, %v8428
        %v8510 = vmax.f32 %v8302, %v8430
        %v8511 = vmax.f32 %v8304, %v8432
        %v8512 = vmax.f32 %v8306, %v8434
        %v8513 = vmax.f32 %v8308, %v8436
        %v8514 = vmax.f32 %v8310, %v8438
        %v8515 = vmax.f32 %v8312, %v8440
        %v8516 = vmax.f32 %v8314, %v8442
        %v8517 = vmax.f32 %v8316, %v8444
        %v8518 = vmax.f32 %v8318, %v8446
        %v8519 = vmax.f32 %v8320, %v8448
        %v8520 = vmax.f32 %v8322, %v8450
        %v8521 = vmax.f32 %v8324, %v8452
        %v8522 = vmax.f32 %v8326, %v8454
        %v8523 = vmax.f32 %v8328, %v8456
        %v8524 = vmax.f32 %v8330, %v8458
        %v8525 = vmax.f32 %v8332, %v8460
        %v8526 = vmax.f32 %v8334, %v8462
        %8527 = vst.msk [vmem:[#allocation4] sm:$0xff] %vm481, %v8463
        %8528 = vst.msk [vmem:[#allocation4 + $0x8] sm:$0xff] %vm481, %v8464
        %8529 = vst.msk [vmem:[#allocation4 + $0x10] sm:$0xff] %vm481, %v8465
        %8530 = vst.msk [vmem:[#allocation4 + $0x18] sm:$0xff] %vm481, %v8466
        %8531 = vst.msk [vmem:[#allocation4 + $0x20] sm:$0xff] %vm481, %v8467
        %8532 = vst.msk [vmem:[#allocation4 + $0x28] sm:$0xff] %vm481, %v8468
        %8533 = vst.msk [vmem:[#allocation4 + $0x30] sm:$0xff] %vm481, %v8469
        %8534 = vst.msk [vmem:[#allocation4 + $0x38] sm:$0xff] %vm481, %v8470
        %8535 = vst.msk [vmem:[#allocation4 + $0x40] sm:$0xff] %vm481, %v8471
        %8536 = vst.msk [vmem:[#allocation4 + $0x48] sm:$0xff] %vm481, %v8472
        %8537 = vst.msk [vmem:[#allocation4 + $0x50] sm:$0xff] %vm481, %v8473
        %8538 = vst.msk [vmem:[#allocation4 + $0x58] sm:$0xff] %vm481, %v8474
        %8539 = vst.msk [vmem:[#allocation4 + $0x60] sm:$0xff] %vm481, %v8475
        %8540 = vst.msk [vmem:[#allocation4 + $0x68] sm:$0xff] %vm481, %v8476
        %8541 = vst.msk [vmem:[#allocation4 + $0x70] sm:$0xff] %vm481, %v8477
        %8542 = vst.msk [vmem:[#allocation4 + $0x78] sm:$0xff] %vm481, %v8478
        %8543 = vst.msk [vmem:[#allocation4 + $0x80] sm:$0xff] %vm481, %v8479
        %8544 = vst.msk [vmem:[#allocation4 + $0x88] sm:$0xff] %vm481, %v8480
        %8545 = vst.msk [vmem:[#allocation4 + $0x90] sm:$0xff] %vm481, %v8481
        %8546 = vst.msk [vmem:[#allocation4 + $0x98] sm:$0xff] %vm481, %v8482
        %8547 = vst.msk [vmem:[#allocation4 + $0xa0] sm:$0xff] %vm481, %v8483
        %8548 = vst.msk [vmem:[#allocation4 + $0xa8] sm:$0xff] %vm481, %v8484
        %8549 = vst.msk [vmem:[#allocation4 + $0xb0] sm:$0xff] %vm481, %v8485
        %8550 = vst.msk [vmem:[#allocation4 + $0xb8] sm:$0xff] %vm481, %v8486
        %8551 = vst.msk [vmem:[#allocation4 + $0xc0] sm:$0xff] %vm481, %v8487
        %8552 = vst.msk [vmem:[#allocation4 + $0xc8] sm:$0xff] %vm481, %v8488
        %8553 = vst.msk [vmem:[#allocation4 + $0xd0] sm:$0xff] %vm481, %v8489
        %8554 = vst.msk [vmem:[#allocation4 + $0xd8] sm:$0xff] %vm481, %v8490
        %8555 = vst.msk [vmem:[#allocation4 + $0xe0] sm:$0xff] %vm481, %v8491
        %8556 = vst.msk [vmem:[#allocation4 + $0xe8] sm:$0xff] %vm481, %v8492
        %8557 = vst.msk [vmem:[#allocation4 + $0xf0] sm:$0xff] %vm481, %v8493
        %8558 = vst.msk [vmem:[#allocation4 + $0xf8] sm:$0xff] %vm481, %v8494
        %8559 = vst.msk [vmem:[#allocation4 + $0x100] sm:$0xff] %vm481, %v8495
        %8560 = vst.msk [vmem:[#allocation4 + $0x108] sm:$0xff] %vm481, %v8496
        %8561 = vst.msk [vmem:[#allocation4 + $0x110] sm:$0xff] %vm481, %v8497
        %8562 = vst.msk [vmem:[#allocation4 + $0x118] sm:$0xff] %vm481, %v8498
        %8563 = vst.msk [vmem:[#allocation4 + $0x120] sm:$0xff] %vm481, %v8499
        %8564 = vst.msk [vmem:[#allocation4 + $0x128] sm:$0xff] %vm481, %v8500
        %8565 = vst.msk [vmem:[#allocation4 + $0x130] sm:$0xff] %vm481, %v8501
        %8566 = vst.msk [vmem:[#allocation4 + $0x138] sm:$0xff] %vm481, %v8502
        %8567 = vst.msk [vmem:[#allocation4 + $0x140] sm:$0xff] %vm481, %v8503
        %8568 = vst.msk [vmem:[#allocation4 + $0x148] sm:$0xff] %vm481, %v8504
        %8569 = vst.msk [vmem:[#allocation4 + $0x150] sm:$0xff] %vm481, %v8505
        %8570 = vst.msk [vmem:[#allocation4 + $0x158] sm:$0xff] %vm481, %v8506
        %8571 = vst.msk [vmem:[#allocation4 + $0x160] sm:$0xff] %vm481, %v8507
        %8572 = vst.msk [vmem:[#allocation4 + $0x168] sm:$0xff] %vm481, %v8508
        %8573 = vst.msk [vmem:[#allocation4 + $0x170] sm:$0xff] %vm481, %v8509
        %8574 = vst.msk [vmem:[#allocation4 + $0x178] sm:$0xff] %vm481, %v8510
        %8575 = vst.msk [vmem:[#allocation4 + $0x180] sm:$0xff] %vm481, %v8511
        %8576 = vst.msk [vmem:[#allocation4 + $0x188] sm:$0xff] %vm481, %v8512
        %8577 = vst.msk [vmem:[#allocation4 + $0x190] sm:$0xff] %vm481, %v8513
        %8578 = vst.msk [vmem:[#allocation4 + $0x198] sm:$0xff] %vm481, %v8514
        %8579 = vst.msk [vmem:[#allocation4 + $0x1a0] sm:$0xff] %vm481, %v8515
        %8580 = vst.msk [vmem:[#allocation4 + $0x1a8] sm:$0xff] %vm481, %v8516
        %8581 = vst.msk [vmem:[#allocation4 + $0x1b0] sm:$0xff] %vm481, %v8517
        %8582 = vst.msk [vmem:[#allocation4 + $0x1b8] sm:$0xff] %vm481, %v8518
        %8583 = vst.msk [vmem:[#allocation4 + $0x1c0] sm:$0xff] %vm481, %v8519
        %8584 = vst.msk [vmem:[#allocation4 + $0x1c8] sm:$0xff] %vm481, %v8520
        %8585 = vst.msk [vmem:[#allocation4 + $0x1d0] sm:$0xff] %vm481, %v8521
        %8586 = vst.msk [vmem:[#allocation4 + $0x1d8] sm:$0xff] %vm481, %v8522
        %8587 = vst.msk [vmem:[#allocation4 + $0x1e0] sm:$0xff] %vm481, %v8523
        %8588 = vst.msk [vmem:[#allocation4 + $0x1e8] sm:$0xff] %vm481, %v8524
        %8589 = vst.msk [vmem:[#allocation4 + $0x1f0] sm:$0xff] %vm481, %v8525
        %8590 = vst.msk [vmem:[#allocation4 + $0x1f8] sm:$0xff] %vm481, %v8526
        %v8591 = vld [vmem:[#allocation4] sm:$0xff]
        %v8592 = vld [vmem:[#allocation4 + $0x8] sm:$0xff]
        %v8593 = vld [vmem:[#allocation4 + $0x20] sm:$0xff]
        %v8594 = vld [vmem:[#allocation4 + $0x28] sm:$0xff]
        %v8595 = vld [vmem:[#allocation4 + $0x40] sm:$0xff]
        %v8596 = vld [vmem:[#allocation4 + $0x48] sm:$0xff]
        %v8597 = vld [vmem:[#allocation4 + $0x60] sm:$0xff]
        %v8598 = vld [vmem:[#allocation4 + $0x68] sm:$0xff]
        %v8599 = vld [vmem:[#allocation4 + $0x80] sm:$0xff]
        %v8600 = vld [vmem:[#allocation4 + $0x88] sm:$0xff]
        %v8601 = vld [vmem:[#allocation4 + $0xa0] sm:$0xff]
        %v8602 = vld [vmem:[#allocation4 + $0xa8] sm:$0xff]
        %v8603 = vld [vmem:[#allocation4 + $0xc0] sm:$0xff]
        %v8604 = vld [vmem:[#allocation4 + $0xc8] sm:$0xff]
        %v8605 = vld [vmem:[#allocation4 + $0xe0] sm:$0xff]
        %v8606 = vld [vmem:[#allocation4 + $0xe8] sm:$0xff]
        %v8607 = vld [vmem:[#allocation4 + $0x100] sm:$0xff]
        %v8608 = vld [vmem:[#allocation4 + $0x108] sm:$0xff]
        %v8609 = vld [vmem:[#allocation4 + $0x120] sm:$0xff]
        %v8610 = vld [vmem:[#allocation4 + $0x128] sm:$0xff]
        %v8611 = vld [vmem:[#allocation4 + $0x140] sm:$0xff]
        %v8612 = vld [vmem:[#allocation4 + $0x148] sm:$0xff]
        %v8613 = vld [vmem:[#allocation4 + $0x160] sm:$0xff]
        %v8614 = vld [vmem:[#allocation4 + $0x168] sm:$0xff]
        %v8615 = vld [vmem:[#allocation4 + $0x180] sm:$0xff]
        %v8616 = vld [vmem:[#allocation4 + $0x188] sm:$0xff]
        %v8617 = vld [vmem:[#allocation4 + $0x1a0] sm:$0xff]
        %v8618 = vld [vmem:[#allocation4 + $0x1a8] sm:$0xff]
        %v8619 = vld [vmem:[#allocation4 + $0x1c0] sm:$0xff]
        %v8620 = vld [vmem:[#allocation4 + $0x1c8] sm:$0xff]
        %v8621 = vld [vmem:[#allocation4 + $0x1e0] sm:$0xff]
        %v8622 = vld [vmem:[#allocation4 + $0x1e8] sm:$0xff]
        %s8623 = scalar_lea.vmem [#allocation4], 16
        %v8624 = vld [vmem:[%s8623] sm:$0xff]
        %v8625 = vld [vmem:[%s8623 + $0x8] sm:$0xff]
        %v8626 = vld [vmem:[%s8623 + $0x20] sm:$0xff]
        %v8627 = vld [vmem:[%s8623 + $0x28] sm:$0xff]
        %v8628 = vld [vmem:[%s8623 + $0x40] sm:$0xff]
        %v8629 = vld [vmem:[%s8623 + $0x48] sm:$0xff]
        %v8630 = vld [vmem:[%s8623 + $0x60] sm:$0xff]
        %v8631 = vld [vmem:[%s8623 + $0x68] sm:$0xff]
        %v8632 = vld [vmem:[%s8623 + $0x80] sm:$0xff]
        %v8633 = vld [vmem:[%s8623 + $0x88] sm:$0xff]
        %v8634 = vld [vmem:[%s8623 + $0xa0] sm:$0xff]
        %v8635 = vld [vmem:[%s8623 + $0xa8] sm:$0xff]
        %v8636 = vld [vmem:[%s8623 + $0xc0] sm:$0xff]
        %v8637 = vld [vmem:[%s8623 + $0xc8] sm:$0xff]
        %v8638 = vld [vmem:[%s8623 + $0xe0] sm:$0xff]
        %v8639 = vld [vmem:[%s8623 + $0xe8] sm:$0xff]
        %v8640 = vld [vmem:[%s8623 + $0x100] sm:$0xff]
        %v8641 = vld [vmem:[%s8623 + $0x108] sm:$0xff]
        %v8642 = vld [vmem:[%s8623 + $0x120] sm:$0xff]
        %v8643 = vld [vmem:[%s8623 + $0x128] sm:$0xff]
        %v8644 = vld [vmem:[%s8623 + $0x140] sm:$0xff]
        %v8645 = vld [vmem:[%s8623 + $0x148] sm:$0xff]
        %v8646 = vld [vmem:[%s8623 + $0x160] sm:$0xff]
        %v8647 = vld [vmem:[%s8623 + $0x168] sm:$0xff]
        %v8648 = vld [vmem:[%s8623 + $0x180] sm:$0xff]
        %v8649 = vld [vmem:[%s8623 + $0x188] sm:$0xff]
        %v8650 = vld [vmem:[%s8623 + $0x1a0] sm:$0xff]
        %v8651 = vld [vmem:[%s8623 + $0x1a8] sm:$0xff]
        %v8652 = vld [vmem:[%s8623 + $0x1c0] sm:$0xff]
        %v8653 = vld [vmem:[%s8623 + $0x1c8] sm:$0xff]
        %v8654 = vld [vmem:[%s8623 + $0x1e0] sm:$0xff]
        %v8655 = vld [vmem:[%s8623 + $0x1e8] sm:$0xff]
        %v8656 = vmax.f32 %v8591, %v8624
        %v8657 = vmax.f32 %v8592, %v8625
        %v8658 = vmax.f32 %v8593, %v8626
        %v8659 = vmax.f32 %v8594, %v8627
        %v8660 = vmax.f32 %v8595, %v8628
        %v8661 = vmax.f32 %v8596, %v8629
        %v8662 = vmax.f32 %v8597, %v8630
        %v8663 = vmax.f32 %v8598, %v8631
        %v8664 = vmax.f32 %v8599, %v8632
        %v8665 = vmax.f32 %v8600, %v8633
        %v8666 = vmax.f32 %v8601, %v8634
        %v8667 = vmax.f32 %v8602, %v8635
        %v8668 = vmax.f32 %v8603, %v8636
        %v8669 = vmax.f32 %v8604, %v8637
        %v8670 = vmax.f32 %v8605, %v8638
        %v8671 = vmax.f32 %v8606, %v8639
        %v8672 = vmax.f32 %v8607, %v8640
        %v8673 = vmax.f32 %v8608, %v8641
        %v8674 = vmax.f32 %v8609, %v8642
        %v8675 = vmax.f32 %v8610, %v8643
        %v8676 = vmax.f32 %v8611, %v8644
        %v8677 = vmax.f32 %v8612, %v8645
        %v8678 = vmax.f32 %v8613, %v8646
        %v8679 = vmax.f32 %v8614, %v8647
        %v8680 = vmax.f32 %v8615, %v8648
        %v8681 = vmax.f32 %v8616, %v8649
        %v8682 = vmax.f32 %v8617, %v8650
        %v8683 = vmax.f32 %v8618, %v8651
        %v8684 = vmax.f32 %v8619, %v8652
        %v8685 = vmax.f32 %v8620, %v8653
        %v8686 = vmax.f32 %v8621, %v8654
        %v8687 = vmax.f32 %v8622, %v8655
        %s8688 = scalar_lea.vmem [#allocation5], 32
        %8689 = vst.msk [vmem:[%s8688 + $0x8] sm:$0xff] %vm481, %v8656
        %8690 = vst.msk [vmem:[%s8688 + $0x10] sm:$0xff] %vm481, %v8657
        %8691 = vst.msk [vmem:[%s8688 + $0x28] sm:$0xff] %vm481, %v8658
        %8692 = vst.msk [vmem:[%s8688 + $0x30] sm:$0xff] %vm481, %v8659
        %8693 = vst.msk [vmem:[%s8688 + $0x48] sm:$0xff] %vm481, %v8660
        %8694 = vst.msk [vmem:[%s8688 + $0x50] sm:$0xff] %vm481, %v8661
        %8695 = vst.msk [vmem:[%s8688 + $0x68] sm:$0xff] %vm481, %v8662
        %8696 = vst.msk [vmem:[%s8688 + $0x70] sm:$0xff] %vm481, %v8663
        %8697 = vst.msk [vmem:[%s8688 + $0x88] sm:$0xff] %vm481, %v8664
        %8698 = vst.msk [vmem:[%s8688 + $0x90] sm:$0xff] %vm481, %v8665
        %8699 = vst.msk [vmem:[%s8688 + $0xa8] sm:$0xff] %vm481, %v8666
        %8700 = vst.msk [vmem:[%s8688 + $0xb0] sm:$0xff] %vm481, %v8667
        %8701 = vst.msk [vmem:[%s8688 + $0xc8] sm:$0xff] %vm481, %v8668
        %8702 = vst.msk [vmem:[%s8688 + $0xd0] sm:$0xff] %vm481, %v8669
        %8703 = vst.msk [vmem:[%s8688 + $0xe8] sm:$0xff] %vm481, %v8670
        %8704 = vst.msk [vmem:[%s8688 + $0xf0] sm:$0xff] %vm481, %v8671
        %8705 = vst.msk [vmem:[%s8688 + $0x108] sm:$0xff] %vm481, %v8672
        %8706 = vst.msk [vmem:[%s8688 + $0x110] sm:$0xff] %vm481, %v8673
        %8707 = vst.msk [vmem:[%s8688 + $0x128] sm:$0xff] %vm481, %v8674
        %8708 = vst.msk [vmem:[%s8688 + $0x130] sm:$0xff] %vm481, %v8675
        %8709 = vst.msk [vmem:[%s8688 + $0x148] sm:$0xff] %vm481, %v8676
        %8710 = vst.msk [vmem:[%s8688 + $0x150] sm:$0xff] %vm481, %v8677
        %8711 = vst.msk [vmem:[%s8688 + $0x168] sm:$0xff] %vm481, %v8678
        %8712 = vst.msk [vmem:[%s8688 + $0x170] sm:$0xff] %vm481, %v8679
        %8713 = vst.msk [vmem:[%s8688 + $0x188] sm:$0xff] %vm481, %v8680
        %8714 = vst.msk [vmem:[%s8688 + $0x190] sm:$0xff] %vm481, %v8681
        %8715 = vst.msk [vmem:[%s8688 + $0x1a8] sm:$0xff] %vm481, %v8682
        %8716 = vst.msk [vmem:[%s8688 + $0x1b0] sm:$0xff] %vm481, %v8683
        %8717 = vst.msk [vmem:[%s8688 + $0x1c8] sm:$0xff] %vm481, %v8684
        %8718 = vst.msk [vmem:[%s8688 + $0x1d0] sm:$0xff] %vm481, %v8685
        %8719 = vst.msk [vmem:[%s8688 + $0x1e8] sm:$0xff] %vm481, %v8686
        %8720 = vst.msk [vmem:[%s8688 + $0x1f0] sm:$0xff] %vm481, %v8687
        %v8721 = vld [vmem:[%s3] sm:$0xff]
        %v8722 = vld [vmem:[%s3 + $0x8] sm:$0xff]
        %v8723 = vld [vmem:[%s3 + $0x10] sm:$0xff]
        %v8724 = vld [vmem:[%s3 + $0x18] sm:$0xff]
        %v8725 = vld [vmem:[%s3 + $0x20] sm:$0xff]
        %v8726 = vld [vmem:[%s3 + $0x28] sm:$0xff]
        %v8727 = vld [vmem:[%s3 + $0x30] sm:$0xff]
        %v8728 = vld [vmem:[%s3 + $0x38] sm:$0xff]
        %v8729 = vld [vmem:[%s3 + $0x40] sm:$0xff]
        %v8730 = vld [vmem:[%s3 + $0x48] sm:$0xff]
        %v8731 = vld [vmem:[%s3 + $0x50] sm:$0xff]
        %v8732 = vld [vmem:[%s3 + $0x58] sm:$0xff]
        %v8733 = vld [vmem:[%s3 + $0x60] sm:$0xff]
        %v8734 = vld [vmem:[%s3 + $0x68] sm:$0xff]
        %v8735 = vld [vmem:[%s3 + $0x70] sm:$0xff]
        %v8736 = vld [vmem:[%s3 + $0x78] sm:$0xff]
        %v8737 = vld [vmem:[%s3 + $0x80] sm:$0xff]
        %v8738 = vld [vmem:[%s3 + $0x88] sm:$0xff]
        %v8739 = vld [vmem:[%s4] sm:$0x1]
        %v8740 = vld [vmem:[#allocation5 + $0x7] sm:$0xff]
        %v8741 = vld [vmem:[#allocation5 + $0xf] sm:$0xff]
        %v8742 = vld [vmem:[#allocation5 + $0x27] sm:$0xff]
        %v8743 = vld [vmem:[#allocation5 + $0x2f] sm:$0xff]
        %v8744 = vld [vmem:[#allocation5 + $0x47] sm:$0xff]
        %v8745 = vld [vmem:[#allocation5 + $0x4f] sm:$0xff]
        %v8746 = vld [vmem:[#allocation5 + $0x67] sm:$0xff]
        %v8747 = vld [vmem:[#allocation5 + $0x6f] sm:$0xff]
        %v8748 = vld [vmem:[#allocation5 + $0x87] sm:$0xff]
        %v8749 = vld [vmem:[#allocation5 + $0x8f] sm:$0xff]
        %v8750 = vld [vmem:[#allocation5 + $0xa7] sm:$0xff]
        %v8751 = vld [vmem:[#allocation5 + $0xaf] sm:$0xff]
        %v8752 = vld [vmem:[#allocation5 + $0xc7] sm:$0xff]
        %v8753 = vld [vmem:[#allocation5 + $0xcf] sm:$0xff]
        %v8754 = vld [vmem:[#allocation5 + $0xe7] sm:$0xff]
        %v8755 = vld [vmem:[#allocation5 + $0xef] sm:$0xff]
        %v8756 = vld [vmem:[#allocation5 + $0x107] sm:$0xff]
        %v8757 = vld [vmem:[#allocation5 + $0x10f] sm:$0xff]
        %v8758 = vld [vmem:[#allocation5 + $0x127] sm:$0xff]
        %v8759 = vld [vmem:[#allocation5 + $0x12f] sm:$0xff]
        %v8760 = vld [vmem:[#allocation5 + $0x147] sm:$0xff]
        %v8761 = vld [vmem:[#allocation5 + $0x14f] sm:$0xff]
        %v8762 = vld [vmem:[#allocation5 + $0x167] sm:$0xff]
        %v8763 = vld [vmem:[#allocation5 + $0x16f] sm:$0xff]
        %v8764 = vld [vmem:[#allocation5 + $0x187] sm:$0xff]
        %v8765 = vld [vmem:[#allocation5 + $0x18f] sm:$0xff]
        %v8766 = vld [vmem:[#allocation5 + $0x1a7] sm:$0xff]
        %v8767 = vld [vmem:[#allocation5 + $0x1af] sm:$0xff]
        %v8768 = vld [vmem:[#allocation5 + $0x1c7] sm:$0xff]
        %v8769 = vld [vmem:[#allocation5 + $0x1cf] sm:$0xff]
        %v8770 = vld [vmem:[#allocation5 + $0x1e7] sm:$0xff]
        %v8771 = vld [vmem:[#allocation5 + $0x1ef] sm:$0xff]
        %v8772 = vld [vmem:[#allocation5 + $0x8] sm:$0xff]
        %v8773 = vld [vmem:[#allocation5 + $0x10] sm:$0xff]
        %v8774 = vld [vmem:[#allocation5 + $0x28] sm:$0xff]
        %v8775 = vld [vmem:[#allocation5 + $0x30] sm:$0xff]
        %v8776 = vld [vmem:[#allocation5 + $0x48] sm:$0xff]
        %v8777 = vld [vmem:[#allocation5 + $0x50] sm:$0xff]
        %v8778 = vld [vmem:[#allocation5 + $0x68] sm:$0xff]
        %v8779 = vld [vmem:[#allocation5 + $0x70] sm:$0xff]
        %v8780 = vld [vmem:[#allocation5 + $0x88] sm:$0xff]
        %v8781 = vld [vmem:[#allocation5 + $0x90] sm:$0xff]
        %v8782 = vld [vmem:[#allocation5 + $0xa8] sm:$0xff]
        %v8783 = vld [vmem:[#allocation5 + $0xb0] sm:$0xff]
        %v8784 = vld [vmem:[#allocation5 + $0xc8] sm:$0xff]
        %v8785 = vld [vmem:[#allocation5 + $0xd0] sm:$0xff]
        %v8786 = vld [vmem:[#allocation5 + $0xe8] sm:$0xff]
        %v8787 = vld [vmem:[#allocation5 + $0xf0] sm:$0xff]
        %v8788 = vld [vmem:[#allocation5 + $0x108] sm:$0xff]
        %v8789 = vld [vmem:[#allocation5 + $0x110] sm:$0xff]
        %v8790 = vld [vmem:[#allocation5 + $0x128] sm:$0xff]
        %v8791 = vld [vmem:[#allocation5 + $0x130] sm:$0xff]
        %v8792 = vld [vmem:[#allocation5 + $0x148] sm:$0xff]
        %v8793 = vld [vmem:[#allocation5 + $0x150] sm:$0xff]
        %v8794 = vld [vmem:[#allocation5 + $0x168] sm:$0xff]
        %v8795 = vld [vmem:[#allocation5 + $0x170] sm:$0xff]
        %v8796 = vld [vmem:[#allocation5 + $0x188] sm:$0xff]
        %v8797 = vld [vmem:[#allocation5 + $0x190] sm:$0xff]
        %v8798 = vld [vmem:[#allocation5 + $0x1a8] sm:$0xff]
        %v8799 = vld [vmem:[#allocation5 + $0x1b0] sm:$0xff]
        %v8800 = vld [vmem:[#allocation5 + $0x1c8] sm:$0xff]
        %v8801 = vld [vmem:[#allocation5 + $0x1d0] sm:$0xff]
        %v8802 = vld [vmem:[#allocation5 + $0x1e8] sm:$0xff]
        %v8803 = vld [vmem:[#allocation5 + $0x1f0] sm:$0xff]
        %v8804 = vld [vmem:[#allocation5 + $0x9] sm:$0xff]
        %v8805 = vld [vmem:[#allocation5 + $0x11] sm:$0xff]
        %v8806 = vld [vmem:[#allocation5 + $0x29] sm:$0xff]
        %v8807 = vld [vmem:[#allocation5 + $0x31] sm:$0xff]
        %v8808 = vld [vmem:[#allocation5 + $0x49] sm:$0xff]
        %v8809 = vld [vmem:[#allocation5 + $0x51] sm:$0xff]
        %v8810 = vld [vmem:[#allocation5 + $0x69] sm:$0xff]
        %v8811 = vld [vmem:[#allocation5 + $0x71] sm:$0xff]
        %v8812 = vld [vmem:[#allocation5 + $0x89] sm:$0xff]
        %v8813 = vld [vmem:[#allocation5 + $0x91] sm:$0xff]
        %v8814 = vld [vmem:[#allocation5 + $0xa9] sm:$0xff]
        %v8815 = vld [vmem:[#allocation5 + $0xb1] sm:$0xff]
        %v8816 = vld [vmem:[#allocation5 + $0xc9] sm:$0xff]
        %v8817 = vld [vmem:[#allocation5 + $0xd1] sm:$0xff]
        %v8818 = vld [vmem:[#allocation5 + $0xe9] sm:$0xff]
        %v8819 = vld [vmem:[#allocation5 + $0xf1] sm:$0xff]
        %v8820 = vld [vmem:[#allocation5 + $0x109] sm:$0xff]
        %v8821 = vld [vmem:[#allocation5 + $0x111] sm:$0xff]
        %v8822 = vld [vmem:[#allocation5 + $0x129] sm:$0xff]
        %v8823 = vld [vmem:[#allocation5 + $0x131] sm:$0xff]
        %v8824 = vld [vmem:[#allocation5 + $0x149] sm:$0xff]
        %v8825 = vld [vmem:[#allocation5 + $0x151] sm:$0xff]
        %v8826 = vld [vmem:[#allocation5 + $0x169] sm:$0xff]
        %v8827 = vld [vmem:[#allocation5 + $0x171] sm:$0xff]
        %v8828 = vld [vmem:[#allocation5 + $0x189] sm:$0xff]
        %v8829 = vld [vmem:[#allocation5 + $0x191] sm:$0xff]
        %v8830 = vld [vmem:[#allocation5 + $0x1a9] sm:$0xff]
        %v8831 = vld [vmem:[#allocation5 + $0x1b1] sm:$0xff]
        %v8832 = vld [vmem:[#allocation5 + $0x1c9] sm:$0xff]
        %v8833 = vld [vmem:[#allocation5 + $0x1d1] sm:$0xff]
        %v8834 = vld [vmem:[#allocation5 + $0x1e9] sm:$0xff]
        %v8835 = vld [vmem:[#allocation5 + $0x1f1] sm:$0xff]
        %v8836 = vld [vmem:[%s8688 + $0x7] sm:$0xff]
        %v8837 = vld [vmem:[%s8688 + $0xf] sm:$0xff]
        %v8838 = vld [vmem:[%s8688 + $0x27] sm:$0xff]
        %v8839 = vld [vmem:[%s8688 + $0x2f] sm:$0xff]
        %v8840 = vld [vmem:[%s8688 + $0x47] sm:$0xff]
        %v8841 = vld [vmem:[%s8688 + $0x4f] sm:$0xff]
        %v8842 = vld [vmem:[%s8688 + $0x67] sm:$0xff]
        %v8843 = vld [vmem:[%s8688 + $0x6f] sm:$0xff]
        %v8844 = vld [vmem:[%s8688 + $0x87] sm:$0xff]
        %v8845 = vld [vmem:[%s8688 + $0x8f] sm:$0xff]
        %v8846 = vld [vmem:[%s8688 + $0xa7] sm:$0xff]
        %v8847 = vld [vmem:[%s8688 + $0xaf] sm:$0xff]
        %v8848 = vld [vmem:[%s8688 + $0xc7] sm:$0xff]
        %v8849 = vld [vmem:[%s8688 + $0xcf] sm:$0xff]
        %v8850 = vld [vmem:[%s8688 + $0xe7] sm:$0xff]
        %v8851 = vld [vmem:[%s8688 + $0xef] sm:$0xff]
        %v8852 = vld [vmem:[%s8688 + $0x107] sm:$0xff]
        %v8853 = vld [vmem:[%s8688 + $0x10f] sm:$0xff]
        %v8854 = vld [vmem:[%s8688 + $0x127] sm:$0xff]
        %v8855 = vld [vmem:[%s8688 + $0x12f] sm:$0xff]
        %v8856 = vld [vmem:[%s8688 + $0x147] sm:$0xff]
        %v8857 = vld [vmem:[%s8688 + $0x14f] sm:$0xff]
        %v8858 = vld [vmem:[%s8688 + $0x167] sm:$0xff]
        %v8859 = vld [vmem:[%s8688 + $0x16f] sm:$0xff]
        %v8860 = vld [vmem:[%s8688 + $0x187] sm:$0xff]
        %v8861 = vld [vmem:[%s8688 + $0x18f] sm:$0xff]
        %v8862 = vld [vmem:[%s8688 + $0x1a7] sm:$0xff]
        %v8863 = vld [vmem:[%s8688 + $0x1af] sm:$0xff]
        %v8864 = vld [vmem:[%s8688 + $0x1c7] sm:$0xff]
        %v8865 = vld [vmem:[%s8688 + $0x1cf] sm:$0xff]
        %v8866 = vld [vmem:[%s8688 + $0x1e7] sm:$0xff]
        %v8867 = vld [vmem:[%s8688 + $0x1ef] sm:$0xff]
        %v8868 = vld [vmem:[%s8688 + $0x8] sm:$0xff]
        %v8869 = vld [vmem:[%s8688 + $0x10] sm:$0xff]
        %v8870 = vld [vmem:[%s8688 + $0x28] sm:$0xff]
        %v8871 = vld [vmem:[%s8688 + $0x30] sm:$0xff]
        %v8872 = vld [vmem:[%s8688 + $0x48] sm:$0xff]
        %v8873 = vld [vmem:[%s8688 + $0x50] sm:$0xff]
        %v8874 = vld [vmem:[%s8688 + $0x68] sm:$0xff]
        %v8875 = vld [vmem:[%s8688 + $0x70] sm:$0xff]
        %v8876 = vld [vmem:[%s8688 + $0x88] sm:$0xff]
        %v8877 = vld [vmem:[%s8688 + $0x90] sm:$0xff]
        %v8878 = vld [vmem:[%s8688 + $0xa8] sm:$0xff]
        %v8879 = vld [vmem:[%s8688 + $0xb0] sm:$0xff]
        %v8880 = vld [vmem:[%s8688 + $0xc8] sm:$0xff]
        %v8881 = vld [vmem:[%s8688 + $0xd0] sm:$0xff]
        %v8882 = vld [vmem:[%s8688 + $0xe8] sm:$0xff]
        %v8883 = vld [vmem:[%s8688 + $0xf0] sm:$0xff]
        %v8884 = vld [vmem:[%s8688 + $0x108] sm:$0xff]
        %v8885 = vld [vmem:[%s8688 + $0x110] sm:$0xff]
        %v8886 = vld [vmem:[%s8688 + $0x128] sm:$0xff]
        %v8887 = vld [vmem:[%s8688 + $0x130] sm:$0xff]
        %v8888 = vld [vmem:[%s8688 + $0x148] sm:$0xff]
        %v8889 = vld [vmem:[%s8688 + $0x150] sm:$0xff]
        %v8890 = vld [vmem:[%s8688 + $0x168] sm:$0xff]
        %v8891 = vld [vmem:[%s8688 + $0x170] sm:$0xff]
        %v8892 = vld [vmem:[%s8688 + $0x188] sm:$0xff]
        %v8893 = vld [vmem:[%s8688 + $0x190] sm:$0xff]
        %v8894 = vld [vmem:[%s8688 + $0x1a8] sm:$0xff]
        %v8895 = vld [vmem:[%s8688 + $0x1b0] sm:$0xff]
        %v8896 = vld [vmem:[%s8688 + $0x1c8] sm:$0xff]
        %v8897 = vld [vmem:[%s8688 + $0x1d0] sm:$0xff]
        %v8898 = vld [vmem:[%s8688 + $0x1e8] sm:$0xff]
        %v8899 = vld [vmem:[%s8688 + $0x1f0] sm:$0xff]
        %v8900 = vld [vmem:[%s8688 + $0x9] sm:$0xff]
        %v8901 = vld [vmem:[%s8688 + $0x11] sm:$0xff]
        %v8902 = vld [vmem:[%s8688 + $0x29] sm:$0xff]
        %v8903 = vld [vmem:[%s8688 + $0x31] sm:$0xff]
        %v8904 = vld [vmem:[%s8688 + $0x49] sm:$0xff]
        %v8905 = vld [vmem:[%s8688 + $0x51] sm:$0xff]
        %v8906 = vld [vmem:[%s8688 + $0x69] sm:$0xff]
        %v8907 = vld [vmem:[%s8688 + $0x71] sm:$0xff]
        %v8908 = vld [vmem:[%s8688 + $0x89] sm:$0xff]
        %v8909 = vld [vmem:[%s8688 + $0x91] sm:$0xff]
        %v8910 = vld [vmem:[%s8688 + $0xa9] sm:$0xff]
        %v8911 = vld [vmem:[%s8688 + $0xb1] sm:$0xff]
        %v8912 = vld [vmem:[%s8688 + $0xc9] sm:$0xff]
        %v8913 = vld [vmem:[%s8688 + $0xd1] sm:$0xff]
        %v8914 = vld [vmem:[%s8688 + $0xe9] sm:$0xff]
        %v8915 = vld [vmem:[%s8688 + $0xf1] sm:$0xff]
        %v8916 = vld [vmem:[%s8688 + $0x109] sm:$0xff]
        %v8917 = vld [vmem:[%s8688 + $0x111] sm:$0xff]
        %v8918 = vld [vmem:[%s8688 + $0x129] sm:$0xff]
        %v8919 = vld [vmem:[%s8688 + $0x131] sm:$0xff]
        %v8920 = vld [vmem:[%s8688 + $0x149] sm:$0xff]
        %v8921 = vld [vmem:[%s8688 + $0x151] sm:$0xff]
        %v8922 = vld [vmem:[%s8688 + $0x169] sm:$0xff]
        %v8923 = vld [vmem:[%s8688 + $0x171] sm:$0xff]
        %v8924 = vld [vmem:[%s8688 + $0x189] sm:$0xff]
        %v8925 = vld [vmem:[%s8688 + $0x191] sm:$0xff]
        %v8926 = vld [vmem:[%s8688 + $0x1a9] sm:$0xff]
        %v8927 = vld [vmem:[%s8688 + $0x1b1] sm:$0xff]
        %v8928 = vld [vmem:[%s8688 + $0x1c9] sm:$0xff]
        %v8929 = vld [vmem:[%s8688 + $0x1d1] sm:$0xff]
        %v8930 = vld [vmem:[%s8688 + $0x1e9] sm:$0xff]
        %v8931 = vld [vmem:[%s8688 + $0x1f1] sm:$0xff]
        %s8932 = scalar_lea.vmem [#allocation5], 64
        %v8933 = vld [vmem:[%s8932 + $0x7] sm:$0xff]
        %v8934 = vld [vmem:[%s8932 + $0xf] sm:$0xff]
        %v8935 = vld [vmem:[%s8932 + $0x27] sm:$0xff]
        %v8936 = vld [vmem:[%s8932 + $0x2f] sm:$0xff]
        %v8937 = vld [vmem:[%s8932 + $0x47] sm:$0xff]
        %v8938 = vld [vmem:[%s8932 + $0x4f] sm:$0xff]
        %v8939 = vld [vmem:[%s8932 + $0x67] sm:$0xff]
        %v8940 = vld [vmem:[%s8932 + $0x6f] sm:$0xff]
        %v8941 = vld [vmem:[%s8932 + $0x87] sm:$0xff]
        %v8942 = vld [vmem:[%s8932 + $0x8f] sm:$0xff]
        %v8943 = vld [vmem:[%s8932 + $0xa7] sm:$0xff]
        %v8944 = vld [vmem:[%s8932 + $0xaf] sm:$0xff]
        %v8945 = vld [vmem:[%s8932 + $0xc7] sm:$0xff]
        %v8946 = vld [vmem:[%s8932 + $0xcf] sm:$0xff]
        %v8947 = vld [vmem:[%s8932 + $0xe7] sm:$0xff]
        %v8948 = vld [vmem:[%s8932 + $0xef] sm:$0xff]
        %v8949 = vld [vmem:[%s8932 + $0x107] sm:$0xff]
        %v8950 = vld [vmem:[%s8932 + $0x10f] sm:$0xff]
        %v8951 = vld [vmem:[%s8932 + $0x127] sm:$0xff]
        %v8952 = vld [vmem:[%s8932 + $0x12f] sm:$0xff]
        %v8953 = vld [vmem:[%s8932 + $0x147] sm:$0xff]
        %v8954 = vld [vmem:[%s8932 + $0x14f] sm:$0xff]
        %v8955 = vld [vmem:[%s8932 + $0x167] sm:$0xff]
        %v8956 = vld [vmem:[%s8932 + $0x16f] sm:$0xff]
        %v8957 = vld [vmem:[%s8932 + $0x187] sm:$0xff]
        %v8958 = vld [vmem:[%s8932 + $0x18f] sm:$0xff]
        %v8959 = vld [vmem:[%s8932 + $0x1a7] sm:$0xff]
        %v8960 = vld [vmem:[%s8932 + $0x1af] sm:$0xff]
        %v8961 = vld [vmem:[%s8932 + $0x1c7] sm:$0xff]
        %v8962 = vld [vmem:[%s8932 + $0x1cf] sm:$0xff]
        %v8963 = vld [vmem:[%s8932 + $0x1e7] sm:$0xff]
        %v8964 = vld [vmem:[%s8932 + $0x1ef] sm:$0xff]
        %v8965 = vld [vmem:[%s8932 + $0x8] sm:$0xff]
        %v8966 = vld [vmem:[%s8932 + $0x10] sm:$0xff]
        %v8967 = vld [vmem:[%s8932 + $0x28] sm:$0xff]
        %v8968 = vld [vmem:[%s8932 + $0x30] sm:$0xff]
        %v8969 = vld [vmem:[%s8932 + $0x48] sm:$0xff]
        %v8970 = vld [vmem:[%s8932 + $0x50] sm:$0xff]
        %v8971 = vld [vmem:[%s8932 + $0x68] sm:$0xff]
        %v8972 = vld [vmem:[%s8932 + $0x70] sm:$0xff]
        %v8973 = vld [vmem:[%s8932 + $0x88] sm:$0xff]
        %v8974 = vld [vmem:[%s8932 + $0x90] sm:$0xff]
        %v8975 = vld [vmem:[%s8932 + $0xa8] sm:$0xff]
        %v8976 = vld [vmem:[%s8932 + $0xb0] sm:$0xff]
        %v8977 = vld [vmem:[%s8932 + $0xc8] sm:$0xff]
        %v8978 = vld [vmem:[%s8932 + $0xd0] sm:$0xff]
        %v8979 = vld [vmem:[%s8932 + $0xe8] sm:$0xff]
        %v8980 = vld [vmem:[%s8932 + $0xf0] sm:$0xff]
        %v8981 = vld [vmem:[%s8932 + $0x108] sm:$0xff]
        %v8982 = vld [vmem:[%s8932 + $0x110] sm:$0xff]
        %v8983 = vld [vmem:[%s8932 + $0x128] sm:$0xff]
        %v8984 = vld [vmem:[%s8932 + $0x130] sm:$0xff]
        %v8985 = vld [vmem:[%s8932 + $0x148] sm:$0xff]
        %v8986 = vld [vmem:[%s8932 + $0x150] sm:$0xff]
        %v8987 = vld [vmem:[%s8932 + $0x168] sm:$0xff]
        %v8988 = vld [vmem:[%s8932 + $0x170] sm:$0xff]
        %v8989 = vld [vmem:[%s8932 + $0x188] sm:$0xff]
        %v8990 = vld [vmem:[%s8932 + $0x190] sm:$0xff]
        %v8991 = vld [vmem:[%s8932 + $0x1a8] sm:$0xff]
        %v8992 = vld [vmem:[%s8932 + $0x1b0] sm:$0xff]
        %v8993 = vld [vmem:[%s8932 + $0x1c8] sm:$0xff]
        %v8994 = vld [vmem:[%s8932 + $0x1d0] sm:$0xff]
        %v8995 = vld [vmem:[%s8932 + $0x1e8] sm:$0xff]
        %v8996 = vld [vmem:[%s8932 + $0x1f0] sm:$0xff]
        %v8997 = vld [vmem:[%s8932 + $0x9] sm:$0xff]
        %v8998 = vld [vmem:[%s8932 + $0x11] sm:$0xff]
        %v8999 = vld [vmem:[%s8932 + $0x29] sm:$0xff]
        %v9000 = vld [vmem:[%s8932 + $0x31] sm:$0xff]
        %v9001 = vld [vmem:[%s8932 + $0x49] sm:$0xff]
        %v9002 = vld [vmem:[%s8932 + $0x51] sm:$0xff]
        %v9003 = vld [vmem:[%s8932 + $0x69] sm:$0xff]
        %v9004 = vld [vmem:[%s8932 + $0x71] sm:$0xff]
        %v9005 = vld [vmem:[%s8932 + $0x89] sm:$0xff]
        %v9006 = vld [vmem:[%s8932 + $0x91] sm:$0xff]
        %v9007 = vld [vmem:[%s8932 + $0xa9] sm:$0xff]
        %v9008 = vld [vmem:[%s8932 + $0xb1] sm:$0xff]
        %v9009 = vld [vmem:[%s8932 + $0xc9] sm:$0xff]
        %v9010 = vld [vmem:[%s8932 + $0xd1] sm:$0xff]
        %v9011 = vld [vmem:[%s8932 + $0xe9] sm:$0xff]
        %v9012 = vld [vmem:[%s8932 + $0xf1] sm:$0xff]
        %v9013 = vld [vmem:[%s8932 + $0x109] sm:$0xff]
        %v9014 = vld [vmem:[%s8932 + $0x111] sm:$0xff]
        %v9015 = vld [vmem:[%s8932 + $0x129] sm:$0xff]
        %v9016 = vld [vmem:[%s8932 + $0x131] sm:$0xff]
        %v9017 = vld [vmem:[%s8932 + $0x149] sm:$0xff]
        %v9018 = vld [vmem:[%s8932 + $0x151] sm:$0xff]
        %v9019 = vld [vmem:[%s8932 + $0x169] sm:$0xff]
        %v9020 = vld [vmem:[%s8932 + $0x171] sm:$0xff]
        %v9021 = vld [vmem:[%s8932 + $0x189] sm:$0xff]
        %v9022 = vld [vmem:[%s8932 + $0x191] sm:$0xff]
        %v9023 = vld [vmem:[%s8932 + $0x1a9] sm:$0xff]
        %v9024 = vld [vmem:[%s8932 + $0x1b1] sm:$0xff]
        %v9025 = vld [vmem:[%s8932 + $0x1c9] sm:$0xff]
        %v9026 = vld [vmem:[%s8932 + $0x1d1] sm:$0xff]
        %v9027 = vld [vmem:[%s8932 + $0x1e9] sm:$0xff]
        %v9028 = vld [vmem:[%s8932 + $0x1f1] sm:$0xff]
        %9061 = vrot.lane.b32.xlu0 %v8772, 16
        %v9062 = vpop.permute.xlu0 %9061
        %9063 = vrot.lane.b32.xlu0 %v8773, 16
        %v9064 = vpop.permute.xlu0 %9063
        %9065 = vrot.lane.b32.xlu0 %v8774, 16
        %v9066 = vpop.permute.xlu0 %9065
        %9067 = vrot.lane.b32.xlu0 %v8775, 16
        %v9068 = vpop.permute.xlu0 %9067
        %9069 = vrot.lane.b32.xlu0 %v8776, 16
        %v9070 = vpop.permute.xlu0 %9069
        %9071 = vrot.lane.b32.xlu0 %v8777, 16
        %v9072 = vpop.permute.xlu0 %9071
        %9073 = vrot.lane.b32.xlu0 %v8778, 16
        %v9074 = vpop.permute.xlu0 %9073
        %9075 = vrot.lane.b32.xlu0 %v8779, 16
        %v9076 = vpop.permute.xlu0 %9075
        %9077 = vrot.lane.b32.xlu0 %v8780, 16
        %v9078 = vpop.permute.xlu0 %9077
        %9079 = vrot.lane.b32.xlu0 %v8781, 16
        %v9080 = vpop.permute.xlu0 %9079
        %9081 = vrot.lane.b32.xlu0 %v8782, 16
        %v9082 = vpop.permute.xlu0 %9081
        %9083 = vrot.lane.b32.xlu0 %v8783, 16
        %v9084 = vpop.permute.xlu0 %9083
        %9085 = vrot.lane.b32.xlu0 %v8784, 16
        %v9086 = vpop.permute.xlu0 %9085
        %9087 = vrot.lane.b32.xlu0 %v8785, 16
        %v9088 = vpop.permute.xlu0 %9087
        %9089 = vrot.lane.b32.xlu0 %v8786, 16
        %v9090 = vpop.permute.xlu0 %9089
        %9091 = vrot.lane.b32.xlu0 %v8787, 16
        %v9092 = vpop.permute.xlu0 %9091
        %9093 = vrot.lane.b32.xlu0 %v8788, 16
        %v9094 = vpop.permute.xlu0 %9093
        %9095 = vrot.lane.b32.xlu0 %v8789, 16
        %v9096 = vpop.permute.xlu0 %9095
        %9097 = vrot.lane.b32.xlu0 %v8790, 16
        %v9098 = vpop.permute.xlu0 %9097
        %9099 = vrot.lane.b32.xlu0 %v8791, 16
        %v9100 = vpop.permute.xlu0 %9099
        %9101 = vrot.lane.b32.xlu0 %v8792, 16
        %v9102 = vpop.permute.xlu0 %9101
        %9103 = vrot.lane.b32.xlu0 %v8793, 16
        %v9104 = vpop.permute.xlu0 %9103
        %9105 = vrot.lane.b32.xlu0 %v8794, 16
        %v9106 = vpop.permute.xlu0 %9105
        %9107 = vrot.lane.b32.xlu0 %v8795, 16
        %v9108 = vpop.permute.xlu0 %9107
        %9109 = vrot.lane.b32.xlu0 %v8796, 16
        %v9110 = vpop.permute.xlu0 %9109
        %9111 = vrot.lane.b32.xlu0 %v8797, 16
        %v9112 = vpop.permute.xlu0 %9111
        %9113 = vrot.lane.b32.xlu0 %v8798, 16
        %v9114 = vpop.permute.xlu0 %9113
        %9115 = vrot.lane.b32.xlu0 %v8799, 16
        %v9116 = vpop.permute.xlu0 %9115
        %9117 = vrot.lane.b32.xlu0 %v8800, 16
        %v9118 = vpop.permute.xlu0 %9117
        %9119 = vrot.lane.b32.xlu0 %v8801, 16
        %v9120 = vpop.permute.xlu0 %9119
        %9121 = vrot.lane.b32.xlu0 %v8802, 16
        %v9122 = vpop.permute.xlu0 %9121
        %9123 = vrot.lane.b32.xlu0 %v8803, 16
        %v9124 = vpop.permute.xlu0 %9123
        %9189 = vrot.lane.b32.xlu0 %v8804, 32
        %v9190 = vpop.permute.xlu0 %9189
        %9191 = vrot.lane.b32.xlu0 %v8805, 32
        %v9192 = vpop.permute.xlu0 %9191
        %9193 = vrot.lane.b32.xlu0 %v8806, 32
        %v9194 = vpop.permute.xlu0 %9193
        %9195 = vrot.lane.b32.xlu0 %v8807, 32
        %v9196 = vpop.permute.xlu0 %9195
        %9197 = vrot.lane.b32.xlu0 %v8808, 32
        %v9198 = vpop.permute.xlu0 %9197
        %9199 = vrot.lane.b32.xlu0 %v8809, 32
        %v9200 = vpop.permute.xlu0 %9199
        %9201 = vrot.lane.b32.xlu0 %v8810, 32
        %v9202 = vpop.permute.xlu0 %9201
        %9203 = vrot.lane.b32.xlu0 %v8811, 32
        %v9204 = vpop.permute.xlu0 %9203
        %9205 = vrot.lane.b32.xlu0 %v8812, 32
        %v9206 = vpop.permute.xlu0 %9205
        %9207 = vrot.lane.b32.xlu0 %v8813, 32
        %v9208 = vpop.permute.xlu0 %9207
        %9209 = vrot.lane.b32.xlu0 %v8814, 32
        %v9210 = vpop.permute.xlu0 %9209
        %9211 = vrot.lane.b32.xlu0 %v8815, 32
        %v9212 = vpop.permute.xlu0 %9211
        %9213 = vrot.lane.b32.xlu0 %v8816, 32
        %v9214 = vpop.permute.xlu0 %9213
        %9215 = vrot.lane.b32.xlu0 %v8817, 32
        %v9216 = vpop.permute.xlu0 %9215
        %9217 = vrot.lane.b32.xlu0 %v8818, 32
        %v9218 = vpop.permute.xlu0 %9217
        %9219 = vrot.lane.b32.xlu0 %v8819, 32
        %v9220 = vpop.permute.xlu0 %9219
        %9221 = vrot.lane.b32.xlu0 %v8820, 32
        %v9222 = vpop.permute.xlu0 %9221
        %9223 = vrot.lane.b32.xlu0 %v8821, 32
        %v9224 = vpop.permute.xlu0 %9223
        %9225 = vrot.lane.b32.xlu0 %v8822, 32
        %v9226 = vpop.permute.xlu0 %9225
        %9227 = vrot.lane.b32.xlu0 %v8823, 32
        %v9228 = vpop.permute.xlu0 %9227
        %9229 = vrot.lane.b32.xlu0 %v8824, 32
        %v9230 = vpop.permute.xlu0 %9229
        %9231 = vrot.lane.b32.xlu0 %v8825, 32
        %v9232 = vpop.permute.xlu0 %9231
        %9233 = vrot.lane.b32.xlu0 %v8826, 32
        %v9234 = vpop.permute.xlu0 %9233
        %9235 = vrot.lane.b32.xlu0 %v8827, 32
        %v9236 = vpop.permute.xlu0 %9235
        %9237 = vrot.lane.b32.xlu0 %v8828, 32
        %v9238 = vpop.permute.xlu0 %9237
        %9239 = vrot.lane.b32.xlu0 %v8829, 32
        %v9240 = vpop.permute.xlu0 %9239
        %9241 = vrot.lane.b32.xlu0 %v8830, 32
        %v9242 = vpop.permute.xlu0 %9241
        %9243 = vrot.lane.b32.xlu0 %v8831, 32
        %v9244 = vpop.permute.xlu0 %9243
        %9245 = vrot.lane.b32.xlu0 %v8832, 32
        %v9246 = vpop.permute.xlu0 %9245
        %9247 = vrot.lane.b32.xlu0 %v8833, 32
        %v9248 = vpop.permute.xlu0 %9247
        %9249 = vrot.lane.b32.xlu0 %v8834, 32
        %v9250 = vpop.permute.xlu0 %9249
        %9251 = vrot.lane.b32.xlu0 %v8835, 32
        %v9252 = vpop.permute.xlu0 %9251
        %9317 = vrot.lane.b32.xlu0 %v8836, 48
        %v9318 = vpop.permute.xlu0 %9317
        %9319 = vrot.lane.b32.xlu0 %v8837, 48
        %v9320 = vpop.permute.xlu0 %9319
        %9321 = vrot.lane.b32.xlu0 %v8838, 48
        %v9322 = vpop.permute.xlu0 %9321
        %9323 = vrot.lane.b32.xlu0 %v8839, 48
        %v9324 = vpop.permute.xlu0 %9323
        %9325 = vrot.lane.b32.xlu0 %v8840, 48
        %v9326 = vpop.permute.xlu0 %9325
        %9327 = vrot.lane.b32.xlu0 %v8841, 48
        %v9328 = vpop.permute.xlu0 %9327
        %9329 = vrot.lane.b32.xlu0 %v8842, 48
        %v9330 = vpop.permute.xlu0 %9329
        %9331 = vrot.lane.b32.xlu0 %v8843, 48
        %v9332 = vpop.permute.xlu0 %9331
        %9333 = vrot.lane.b32.xlu0 %v8844, 48
        %v9334 = vpop.permute.xlu0 %9333
        %9335 = vrot.lane.b32.xlu0 %v8845, 48
        %v9336 = vpop.permute.xlu0 %9335
        %9337 = vrot.lane.b32.xlu0 %v8846, 48
        %v9338 = vpop.permute.xlu0 %9337
        %9339 = vrot.lane.b32.xlu0 %v8847, 48
        %v9340 = vpop.permute.xlu0 %9339
        %9341 = vrot.lane.b32.xlu0 %v8848, 48
        %v9342 = vpop.permute.xlu0 %9341
        %9343 = vrot.lane.b32.xlu0 %v8849, 48
        %v9344 = vpop.permute.xlu0 %9343
        %9345 = vrot.lane.b32.xlu0 %v8850, 48
        %v9346 = vpop.permute.xlu0 %9345
        %9347 = vrot.lane.b32.xlu0 %v8851, 48
        %v9348 = vpop.permute.xlu0 %9347
        %9349 = vrot.lane.b32.xlu0 %v8852, 48
        %v9350 = vpop.permute.xlu0 %9349
        %9351 = vrot.lane.b32.xlu0 %v8853, 48
        %v9352 = vpop.permute.xlu0 %9351
        %9353 = vrot.lane.b32.xlu0 %v8854, 48
        %v9354 = vpop.permute.xlu0 %9353
        %9355 = vrot.lane.b32.xlu0 %v8855, 48
        %v9356 = vpop.permute.xlu0 %9355
        %9357 = vrot.lane.b32.xlu0 %v8856, 48
        %v9358 = vpop.permute.xlu0 %9357
        %9359 = vrot.lane.b32.xlu0 %v8857, 48
        %v9360 = vpop.permute.xlu0 %9359
        %9361 = vrot.lane.b32.xlu0 %v8858, 48
        %v9362 = vpop.permute.xlu0 %9361
        %9363 = vrot.lane.b32.xlu0 %v8859, 48
        %v9364 = vpop.permute.xlu0 %9363
        %9365 = vrot.lane.b32.xlu0 %v8860, 48
        %v9366 = vpop.permute.xlu0 %9365
        %9367 = vrot.lane.b32.xlu0 %v8861, 48
        %v9368 = vpop.permute.xlu0 %9367
        %9369 = vrot.lane.b32.xlu0 %v8862, 48
        %v9370 = vpop.permute.xlu0 %9369
        %9371 = vrot.lane.b32.xlu0 %v8863, 48
        %v9372 = vpop.permute.xlu0 %9371
        %9373 = vrot.lane.b32.xlu0 %v8864, 48
        %v9374 = vpop.permute.xlu0 %9373
        %9375 = vrot.lane.b32.xlu0 %v8865, 48
        %v9376 = vpop.permute.xlu0 %9375
        %9377 = vrot.lane.b32.xlu0 %v8866, 48
        %v9378 = vpop.permute.xlu0 %9377
        %9379 = vrot.lane.b32.xlu0 %v8867, 48
        %v9380 = vpop.permute.xlu0 %9379
        %9445 = vrot.lane.b32.xlu0 %v8868, 64
        %v9446 = vpop.permute.xlu0 %9445
        %9447 = vrot.lane.b32.xlu0 %v8869, 64
        %v9448 = vpop.permute.xlu0 %9447
        %9449 = vrot.lane.b32.xlu0 %v8870, 64
        %v9450 = vpop.permute.xlu0 %9449
        %9451 = vrot.lane.b32.xlu0 %v8871, 64
        %v9452 = vpop.permute.xlu0 %9451
        %9453 = vrot.lane.b32.xlu0 %v8872, 64
        %v9454 = vpop.permute.xlu0 %9453
        %9455 = vrot.lane.b32.xlu0 %v8873, 64
        %v9456 = vpop.permute.xlu0 %9455
        %9457 = vrot.lane.b32.xlu0 %v8874, 64
        %v9458 = vpop.permute.xlu0 %9457
        %9459 = vrot.lane.b32.xlu0 %v8875, 64
        %v9460 = vpop.permute.xlu0 %9459
        %9461 = vrot.lane.b32.xlu0 %v8876, 64
        %v9462 = vpop.permute.xlu0 %9461
        %9463 = vrot.lane.b32.xlu0 %v8877, 64
        %v9464 = vpop.permute.xlu0 %9463
        %9465 = vrot.lane.b32.xlu0 %v8878, 64
        %v9466 = vpop.permute.xlu0 %9465
        %9467 = vrot.lane.b32.xlu0 %v8879, 64
        %v9468 = vpop.permute.xlu0 %9467
        %9469 = vrot.lane.b32.xlu0 %v8880, 64
        %v9470 = vpop.permute.xlu0 %9469
        %9471 = vrot.lane.b32.xlu0 %v8881, 64
        %v9472 = vpop.permute.xlu0 %9471
        %9473 = vrot.lane.b32.xlu0 %v8882, 64
        %v9474 = vpop.permute.xlu0 %9473
        %9475 = vrot.lane.b32.xlu0 %v8883, 64
        %v9476 = vpop.permute.xlu0 %9475
        %9477 = vrot.lane.b32.xlu0 %v8884, 64
        %v9478 = vpop.permute.xlu0 %9477
        %9479 = vrot.lane.b32.xlu0 %v8885, 64
        %v9480 = vpop.permute.xlu0 %9479
        %9481 = vrot.lane.b32.xlu0 %v8886, 64
        %v9482 = vpop.permute.xlu0 %9481
        %9483 = vrot.lane.b32.xlu0 %v8887, 64
        %v9484 = vpop.permute.xlu0 %9483
        %9485 = vrot.lane.b32.xlu0 %v8888, 64
        %v9486 = vpop.permute.xlu0 %9485
        %9487 = vrot.lane.b32.xlu0 %v8889, 64
        %v9488 = vpop.permute.xlu0 %9487
        %9489 = vrot.lane.b32.xlu0 %v8890, 64
        %v9490 = vpop.permute.xlu0 %9489
        %9491 = vrot.lane.b32.xlu0 %v8891, 64
        %v9492 = vpop.permute.xlu0 %9491
        %9493 = vrot.lane.b32.xlu0 %v8892, 64
        %v9494 = vpop.permute.xlu0 %9493
        %9495 = vrot.lane.b32.xlu0 %v8893, 64
        %v9496 = vpop.permute.xlu0 %9495
        %9497 = vrot.lane.b32.xlu0 %v8894, 64
        %v9498 = vpop.permute.xlu0 %9497
        %9499 = vrot.lane.b32.xlu0 %v8895, 64
        %v9500 = vpop.permute.xlu0 %9499
        %9501 = vrot.lane.b32.xlu0 %v8896, 64
        %v9502 = vpop.permute.xlu0 %9501
        %9503 = vrot.lane.b32.xlu0 %v8897, 64
        %v9504 = vpop.permute.xlu0 %9503
        %9505 = vrot.lane.b32.xlu0 %v8898, 64
        %v9506 = vpop.permute.xlu0 %9505
        %9507 = vrot.lane.b32.xlu0 %v8899, 64
        %v9508 = vpop.permute.xlu0 %9507
        %9573 = vrot.lane.b32.xlu0 %v8900, 80
        %v9574 = vpop.permute.xlu0 %9573
        %9575 = vrot.lane.b32.xlu0 %v8901, 80
        %v9576 = vpop.permute.xlu0 %9575
        %9577 = vrot.lane.b32.xlu0 %v8902, 80
        %v9578 = vpop.permute.xlu0 %9577
        %9579 = vrot.lane.b32.xlu0 %v8903, 80
        %v9580 = vpop.permute.xlu0 %9579
        %9581 = vrot.lane.b32.xlu0 %v8904, 80
        %v9582 = vpop.permute.xlu0 %9581
        %9583 = vrot.lane.b32.xlu0 %v8905, 80
        %v9584 = vpop.permute.xlu0 %9583
        %9585 = vrot.lane.b32.xlu0 %v8906, 80
        %v9586 = vpop.permute.xlu0 %9585
        %9587 = vrot.lane.b32.xlu0 %v8907, 80
        %v9588 = vpop.permute.xlu0 %9587
        %9589 = vrot.lane.b32.xlu0 %v8908, 80
        %v9590 = vpop.permute.xlu0 %9589
        %9591 = vrot.lane.b32.xlu0 %v8909, 80
        %v9592 = vpop.permute.xlu0 %9591
        %9593 = vrot.lane.b32.xlu0 %v8910, 80
        %v9594 = vpop.permute.xlu0 %9593
        %9595 = vrot.lane.b32.xlu0 %v8911, 80
        %v9596 = vpop.permute.xlu0 %9595
        %9597 = vrot.lane.b32.xlu0 %v8912, 80
        %v9598 = vpop.permute.xlu0 %9597
        %9599 = vrot.lane.b32.xlu0 %v8913, 80
        %v9600 = vpop.permute.xlu0 %9599
        %9601 = vrot.lane.b32.xlu0 %v8914, 80
        %v9602 = vpop.permute.xlu0 %9601
        %9603 = vrot.lane.b32.xlu0 %v8915, 80
        %v9604 = vpop.permute.xlu0 %9603
        %9605 = vrot.lane.b32.xlu0 %v8916, 80
        %v9606 = vpop.permute.xlu0 %9605
        %9607 = vrot.lane.b32.xlu0 %v8917, 80
        %v9608 = vpop.permute.xlu0 %9607
        %9609 = vrot.lane.b32.xlu0 %v8918, 80
        %v9610 = vpop.permute.xlu0 %9609
        %9611 = vrot.lane.b32.xlu0 %v8919, 80
        %v9612 = vpop.permute.xlu0 %9611
        %9613 = vrot.lane.b32.xlu0 %v8920, 80
        %v9614 = vpop.permute.xlu0 %9613
        %9615 = vrot.lane.b32.xlu0 %v8921, 80
        %v9616 = vpop.permute.xlu0 %9615
        %9617 = vrot.lane.b32.xlu0 %v8922, 80
        %v9618 = vpop.permute.xlu0 %9617
        %9619 = vrot.lane.b32.xlu0 %v8923, 80
        %v9620 = vpop.permute.xlu0 %9619
        %9621 = vrot.lane.b32.xlu0 %v8924, 80
        %v9622 = vpop.permute.xlu0 %9621
        %9623 = vrot.lane.b32.xlu0 %v8925, 80
        %v9624 = vpop.permute.xlu0 %9623
        %9625 = vrot.lane.b32.xlu0 %v8926, 80
        %v9626 = vpop.permute.xlu0 %9625
        %9627 = vrot.lane.b32.xlu0 %v8927, 80
        %v9628 = vpop.permute.xlu0 %9627
        %9629 = vrot.lane.b32.xlu0 %v8928, 80
        %v9630 = vpop.permute.xlu0 %9629
        %9631 = vrot.lane.b32.xlu0 %v8929, 80
        %v9632 = vpop.permute.xlu0 %9631
        %9633 = vrot.lane.b32.xlu0 %v8930, 80
        %v9634 = vpop.permute.xlu0 %9633
        %9635 = vrot.lane.b32.xlu0 %v8931, 80
        %v9636 = vpop.permute.xlu0 %9635
        %9701 = vrot.lane.b32.xlu0 %v8933, 96
        %v9702 = vpop.permute.xlu0 %9701
        %9703 = vrot.lane.b32.xlu0 %v8934, 96
        %v9704 = vpop.permute.xlu0 %9703
        %9705 = vrot.lane.b32.xlu0 %v8935, 96
        %v9706 = vpop.permute.xlu0 %9705
        %9707 = vrot.lane.b32.xlu0 %v8936, 96
        %v9708 = vpop.permute.xlu0 %9707
        %9709 = vrot.lane.b32.xlu0 %v8937, 96
        %v9710 = vpop.permute.xlu0 %9709
        %9711 = vrot.lane.b32.xlu0 %v8938, 96
        %v9712 = vpop.permute.xlu0 %9711
        %9713 = vrot.lane.b32.xlu0 %v8939, 96
        %v9714 = vpop.permute.xlu0 %9713
        %9715 = vrot.lane.b32.xlu0 %v8940, 96
        %v9716 = vpop.permute.xlu0 %9715
        %9717 = vrot.lane.b32.xlu0 %v8941, 96
        %v9718 = vpop.permute.xlu0 %9717
        %9719 = vrot.lane.b32.xlu0 %v8942, 96
        %v9720 = vpop.permute.xlu0 %9719
        %9721 = vrot.lane.b32.xlu0 %v8943, 96
        %v9722 = vpop.permute.xlu0 %9721
        %9723 = vrot.lane.b32.xlu0 %v8944, 96
        %v9724 = vpop.permute.xlu0 %9723
        %9725 = vrot.lane.b32.xlu0 %v8945, 96
        %v9726 = vpop.permute.xlu0 %9725
        %9727 = vrot.lane.b32.xlu0 %v8946, 96
        %v9728 = vpop.permute.xlu0 %9727
        %9729 = vrot.lane.b32.xlu0 %v8947, 96
        %v9730 = vpop.permute.xlu0 %9729
        %9731 = vrot.lane.b32.xlu0 %v8948, 96
        %v9732 = vpop.permute.xlu0 %9731
        %9733 = vrot.lane.b32.xlu0 %v8949, 96
        %v9734 = vpop.permute.xlu0 %9733
        %9735 = vrot.lane.b32.xlu0 %v8950, 96
        %v9736 = vpop.permute.xlu0 %9735
        %9737 = vrot.lane.b32.xlu0 %v8951, 96
        %v9738 = vpop.permute.xlu0 %9737
        %9739 = vrot.lane.b32.xlu0 %v8952, 96
        %v9740 = vpop.permute.xlu0 %9739
        %9741 = vrot.lane.b32.xlu0 %v8953, 96
        %v9742 = vpop.permute.xlu0 %9741
        %9743 = vrot.lane.b32.xlu0 %v8954, 96
        %v9744 = vpop.permute.xlu0 %9743
        %9745 = vrot.lane.b32.xlu0 %v8955, 96
        %v9746 = vpop.permute.xlu0 %9745
        %9747 = vrot.lane.b32.xlu0 %v8956, 96
        %v9748 = vpop.permute.xlu0 %9747
        %9749 = vrot.lane.b32.xlu0 %v8957, 96
        %v9750 = vpop.permute.xlu0 %9749
        %9751 = vrot.lane.b32.xlu0 %v8958, 96
        %v9752 = vpop.permute.xlu0 %9751
        %9753 = vrot.lane.b32.xlu0 %v8959, 96
        %v9754 = vpop.permute.xlu0 %9753
        %9755 = vrot.lane.b32.xlu0 %v8960, 96
        %v9756 = vpop.permute.xlu0 %9755
        %9757 = vrot.lane.b32.xlu0 %v8961, 96
        %v9758 = vpop.permute.xlu0 %9757
        %9759 = vrot.lane.b32.xlu0 %v8962, 96
        %v9760 = vpop.permute.xlu0 %9759
        %9761 = vrot.lane.b32.xlu0 %v8963, 96
        %v9762 = vpop.permute.xlu0 %9761
        %9763 = vrot.lane.b32.xlu0 %v8964, 96
        %v9764 = vpop.permute.xlu0 %9763
        %9829 = vrot.lane.b32.xlu0 %v8965, 112
        %v9830 = vpop.permute.xlu0 %9829
        %9831 = vrot.lane.b32.xlu0 %v8966, 112
        %v9832 = vpop.permute.xlu0 %9831
        %9833 = vrot.lane.b32.xlu0 %v8967, 112
        %v9834 = vpop.permute.xlu0 %9833
        %9835 = vrot.lane.b32.xlu0 %v8968, 112
        %v9836 = vpop.permute.xlu0 %9835
        %9837 = vrot.lane.b32.xlu0 %v8969, 112
        %v9838 = vpop.permute.xlu0 %9837
        %9839 = vrot.lane.b32.xlu0 %v8970, 112
        %v9840 = vpop.permute.xlu0 %9839
        %9841 = vrot.lane.b32.xlu0 %v8971, 112
        %v9842 = vpop.permute.xlu0 %9841
        %9843 = vrot.lane.b32.xlu0 %v8972, 112
        %v9844 = vpop.permute.xlu0 %9843
        %9845 = vrot.lane.b32.xlu0 %v8973, 112
        %v9846 = vpop.permute.xlu0 %9845
        %9847 = vrot.lane.b32.xlu0 %v8974, 112
        %v9848 = vpop.permute.xlu0 %9847
        %9849 = vrot.lane.b32.xlu0 %v8975, 112
        %v9850 = vpop.permute.xlu0 %9849
        %9851 = vrot.lane.b32.xlu0 %v8976, 112
        %v9852 = vpop.permute.xlu0 %9851
        %9853 = vrot.lane.b32.xlu0 %v8977, 112
        %v9854 = vpop.permute.xlu0 %9853
        %9855 = vrot.lane.b32.xlu0 %v8978, 112
        %v9856 = vpop.permute.xlu0 %9855
        %9857 = vrot.lane.b32.xlu0 %v8979, 112
        %v9858 = vpop.permute.xlu0 %9857
        %9859 = vrot.lane.b32.xlu0 %v8980, 112
        %v9860 = vpop.permute.xlu0 %9859
        %9861 = vrot.lane.b32.xlu0 %v8981, 112
        %v9862 = vpop.permute.xlu0 %9861
        %9863 = vrot.lane.b32.xlu0 %v8982, 112
        %v9864 = vpop.permute.xlu0 %9863
        %9865 = vrot.lane.b32.xlu0 %v8983, 112
        %v9866 = vpop.permute.xlu0 %9865
        %9867 = vrot.lane.b32.xlu0 %v8984, 112
        %v9868 = vpop.permute.xlu0 %9867
        %9869 = vrot.lane.b32.xlu0 %v8985, 112
        %v9870 = vpop.permute.xlu0 %9869
        %9871 = vrot.lane.b32.xlu0 %v8986, 112
        %v9872 = vpop.permute.xlu0 %9871
        %9873 = vrot.lane.b32.xlu0 %v8987, 112
        %v9874 = vpop.permute.xlu0 %9873
        %9875 = vrot.lane.b32.xlu0 %v8988, 112
        %v9876 = vpop.permute.xlu0 %9875
        %9877 = vrot.lane.b32.xlu0 %v8989, 112
        %v9878 = vpop.permute.xlu0 %9877
        %9879 = vrot.lane.b32.xlu0 %v8990, 112
        %v9880 = vpop.permute.xlu0 %9879
        %9881 = vrot.lane.b32.xlu0 %v8991, 112
        %v9882 = vpop.permute.xlu0 %9881
        %9883 = vrot.lane.b32.xlu0 %v8992, 112
        %v9884 = vpop.permute.xlu0 %9883
        %9885 = vrot.lane.b32.xlu0 %v8993, 112
        %v9886 = vpop.permute.xlu0 %9885
        %9887 = vrot.lane.b32.xlu0 %v8994, 112
        %v9888 = vpop.permute.xlu0 %9887
        %9889 = vrot.lane.b32.xlu0 %v8995, 112
        %v9890 = vpop.permute.xlu0 %9889
        %9891 = vrot.lane.b32.xlu0 %v8996, 112
        %v9892 = vpop.permute.xlu0 %9891
        %v9925 = vsel %vm481, %v8740, %v9062
        %v9926 = vsel %vm481, %v8741, %v9064
        %v9927 = vsel %vm481, %v8742, %v9066
        %v9928 = vsel %vm481, %v8743, %v9068
        %v9929 = vsel %vm481, %v8744, %v9070
        %v9930 = vsel %vm481, %v8745, %v9072
        %v9931 = vsel %vm481, %v8746, %v9074
        %v9932 = vsel %vm481, %v8747, %v9076
        %v9933 = vsel %vm481, %v8748, %v9078
        %v9934 = vsel %vm481, %v8749, %v9080
        %v9935 = vsel %vm481, %v8750, %v9082
        %v9936 = vsel %vm481, %v8751, %v9084
        %v9937 = vsel %vm481, %v8752, %v9086
        %v9938 = vsel %vm481, %v8753, %v9088
        %v9939 = vsel %vm481, %v8754, %v9090
        %v9940 = vsel %vm481, %v8755, %v9092
        %v9941 = vsel %vm481, %v8756, %v9094
        %v9942 = vsel %vm481, %v8757, %v9096
        %v9943 = vsel %vm481, %v8758, %v9098
        %v9944 = vsel %vm481, %v8759, %v9100
        %v9945 = vsel %vm481, %v8760, %v9102
        %v9946 = vsel %vm481, %v8761, %v9104
        %v9947 = vsel %vm481, %v8762, %v9106
        %v9948 = vsel %vm481, %v8763, %v9108
        %v9949 = vsel %vm481, %v8764, %v9110
        %v9950 = vsel %vm481, %v8765, %v9112
        %v9951 = vsel %vm481, %v8766, %v9114
        %v9952 = vsel %vm481, %v8767, %v9116
        %v9953 = vsel %vm481, %v8768, %v9118
        %v9954 = vsel %vm481, %v8769, %v9120
        %v9955 = vsel %vm481, %v8770, %v9122
        %v9956 = vsel %vm481, %v8771, %v9124
        %vm9957 = vcmask 261120
        %v9958 = vsel %vm9957, %v9925, %v9190
        %v9959 = vsel %vm9957, %v9926, %v9192
        %v9960 = vsel %vm9957, %v9927, %v9194
        %v9961 = vsel %vm9957, %v9928, %v9196
        %v9962 = vsel %vm9957, %v9929, %v9198
        %v9963 = vsel %vm9957, %v9930, %v9200
        %v9964 = vsel %vm9957, %v9931, %v9202
        %v9965 = vsel %vm9957, %v9932, %v9204
        %v9966 = vsel %vm9957, %v9933, %v9206
        %v9967 = vsel %vm9957, %v9934, %v9208
        %v9968 = vsel %vm9957, %v9935, %v9210
        %v9969 = vsel %vm9957, %v9936, %v9212
        %v9970 = vsel %vm9957, %v9937, %v9214
        %v9971 = vsel %vm9957, %v9938, %v9216
        %v9972 = vsel %vm9957, %v9939, %v9218
        %v9973 = vsel %vm9957, %v9940, %v9220
        %v9974 = vsel %vm9957, %v9941, %v9222
        %v9975 = vsel %vm9957, %v9942, %v9224
        %v9976 = vsel %vm9957, %v9943, %v9226
        %v9977 = vsel %vm9957, %v9944, %v9228
        %v9978 = vsel %vm9957, %v9945, %v9230
        %v9979 = vsel %vm9957, %v9946, %v9232
        %v9980 = vsel %vm9957, %v9947, %v9234
        %v9981 = vsel %vm9957, %v9948, %v9236
        %v9982 = vsel %vm9957, %v9949, %v9238
        %v9983 = vsel %vm9957, %v9950, %v9240
        %v9984 = vsel %vm9957, %v9951, %v9242
        %v9985 = vsel %vm9957, %v9952, %v9244
        %v9986 = vsel %vm9957, %v9953, %v9246
        %v9987 = vsel %vm9957, %v9954, %v9248
        %v9988 = vsel %vm9957, %v9955, %v9250
        %v9989 = vsel %vm9957, %v9956, %v9252
        %vm9990 = vcmask 392192
        %v9991 = vsel %vm9990, %v9958, %v9318
        %v9992 = vsel %vm9990, %v9959, %v9320
        %v9993 = vsel %vm9990, %v9960, %v9322
        %v9994 = vsel %vm9990, %v9961, %v9324
        %v9995 = vsel %vm9990, %v9962, %v9326
        %v9996 = vsel %vm9990, %v9963, %v9328
        %v9997 = vsel %vm9990, %v9964, %v9330
        %v9998 = vsel %vm9990, %v9965, %v9332
        %v9999 = vsel %vm9990, %v9966, %v9334
        %v10000 = vsel %vm9990, %v9967, %v9336
        %v10001 = vsel %vm9990, %v9968, %v9338
        %v10002 = vsel %vm9990, %v9969, %v9340
        %v10003 = vsel %vm9990, %v9970, %v9342
        %v10004 = vsel %vm9990, %v9971, %v9344
        %v10005 = vsel %vm9990, %v9972, %v9346
        %v10006 = vsel %vm9990, %v9973, %v9348
        %v10007 = vsel %vm9990, %v9974, %v9350
        %v10008 = vsel %vm9990, %v9975, %v9352
        %v10009 = vsel %vm9990, %v9976, %v9354
        %v10010 = vsel %vm9990, %v9977, %v9356
        %v10011 = vsel %vm9990, %v9978, %v9358
        %v10012 = vsel %vm9990, %v9979, %v9360
        %v10013 = vsel %vm9990, %v9980, %v9362
        %v10014 = vsel %vm9990, %v9981, %v9364
        %v10015 = vsel %vm9990, %v9982, %v9366
        %v10016 = vsel %vm9990, %v9983, %v9368
        %v10017 = vsel %vm9990, %v9984, %v9370
        %v10018 = vsel %vm9990, %v9985, %v9372
        %v10019 = vsel %vm9990, %v9986, %v9374
        %v10020 = vsel %vm9990, %v9987, %v9376
        %v10021 = vsel %vm9990, %v9988, %v9378
        %v10022 = vsel %vm9990, %v9989, %v9380
        %vm10023 = vcmask 523264
        %v10024 = vsel %vm10023, %v9991, %v9446
        %v10025 = vsel %vm10023, %v9992, %v9448
        %v10026 = vsel %vm10023, %v9993, %v9450
        %v10027 = vsel %vm10023, %v9994, %v9452
        %v10028 = vsel %vm10023, %v9995, %v9454
        %v10029 = vsel %vm10023, %v9996, %v9456
        %v10030 = vsel %vm10023, %v9997, %v9458
        %v10031 = vsel %vm10023, %v9998, %v9460
        %v10032 = vsel %vm10023, %v9999, %v9462
        %v10033 = vsel %vm10023, %v10000, %v9464
        %v10034 = vsel %vm10023, %v10001, %v9466
        %v10035 = vsel %vm10023, %v10002, %v9468
        %v10036 = vsel %vm10023, %v10003, %v9470
        %v10037 = vsel %vm10023, %v10004, %v9472
        %v10038 = vsel %vm10023, %v10005, %v9474
        %v10039 = vsel %vm10023, %v10006, %v9476
        %v10040 = vsel %vm10023, %v10007, %v9478
        %v10041 = vsel %vm10023, %v10008, %v9480
        %v10042 = vsel %vm10023, %v10009, %v9482
        %v10043 = vsel %vm10023, %v10010, %v9484
        %v10044 = vsel %vm10023, %v10011, %v9486
        %v10045 = vsel %vm10023, %v10012, %v9488
        %v10046 = vsel %vm10023, %v10013, %v9490
        %v10047 = vsel %vm10023, %v10014, %v9492
        %v10048 = vsel %vm10023, %v10015, %v9494
        %v10049 = vsel %vm10023, %v10016, %v9496
        %v10050 = vsel %vm10023, %v10017, %v9498
        %v10051 = vsel %vm10023, %v10018, %v9500
        %v10052 = vsel %vm10023, %v10019, %v9502
        %v10053 = vsel %vm10023, %v10020, %v9504
        %v10054 = vsel %vm10023, %v10021, %v9506
        %v10055 = vsel %vm10023, %v10022, %v9508
        %vm10056 = vcmask 654336
        %v10057 = vsel %vm10056, %v10024, %v9574
        %v10058 = vsel %vm10056, %v10025, %v9576
        %v10059 = vsel %vm10056, %v10026, %v9578
        %v10060 = vsel %vm10056, %v10027, %v9580
        %v10061 = vsel %vm10056, %v10028, %v9582
        %v10062 = vsel %vm10056, %v10029, %v9584
        %v10063 = vsel %vm10056, %v10030, %v9586
        %v10064 = vsel %vm10056, %v10031, %v9588
        %v10065 = vsel %vm10056, %v10032, %v9590
        %v10066 = vsel %vm10056, %v10033, %v9592
        %v10067 = vsel %vm10056, %v10034, %v9594
        %v10068 = vsel %vm10056, %v10035, %v9596
        %v10069 = vsel %vm10056, %v10036, %v9598
        %v10070 = vsel %vm10056, %v10037, %v9600
        %v10071 = vsel %vm10056, %v10038, %v9602
        %v10072 = vsel %vm10056, %v10039, %v9604
        %v10073 = vsel %vm10056, %v10040, %v9606
        %v10074 = vsel %vm10056, %v10041, %v9608
        %v10075 = vsel %vm10056, %v10042, %v9610
        %v10076 = vsel %vm10056, %v10043, %v9612
        %v10077 = vsel %vm10056, %v10044, %v9614
        %v10078 = vsel %vm10056, %v10045, %v9616
        %v10079 = vsel %vm10056, %v10046, %v9618
        %v10080 = vsel %vm10056, %v10047, %v9620
        %v10081 = vsel %vm10056, %v10048, %v9622
        %v10082 = vsel %vm10056, %v10049, %v9624
        %v10083 = vsel %vm10056, %v10050, %v9626
        %v10084 = vsel %vm10056, %v10051, %v9628
        %v10085 = vsel %vm10056, %v10052, %v9630
        %v10086 = vsel %vm10056, %v10053, %v9632
        %v10087 = vsel %vm10056, %v10054, %v9634
        %v10088 = vsel %vm10056, %v10055, %v9636
        %vm10089 = vcmask 785408
        %v10090 = vsel %vm10089, %v10057, %v9702
        %v10091 = vsel %vm10089, %v10058, %v9704
        %v10092 = vsel %vm10089, %v10059, %v9706
        %v10093 = vsel %vm10089, %v10060, %v9708
        %v10094 = vsel %vm10089, %v10061, %v9710
        %v10095 = vsel %vm10089, %v10062, %v9712
        %v10096 = vsel %vm10089, %v10063, %v9714
        %v10097 = vsel %vm10089, %v10064, %v9716
        %v10098 = vsel %vm10089, %v10065, %v9718
        %v10099 = vsel %vm10089, %v10066, %v9720
        %v10100 = vsel %vm10089, %v10067, %v9722
        %v10101 = vsel %vm10089, %v10068, %v9724
        %v10102 = vsel %vm10089, %v10069, %v9726
        %v10103 = vsel %vm10089, %v10070, %v9728
        %v10104 = vsel %vm10089, %v10071, %v9730
        %v10105 = vsel %vm10089, %v10072, %v9732
        %v10106 = vsel %vm10089, %v10073, %v9734
        %v10107 = vsel %vm10089, %v10074, %v9736
        %v10108 = vsel %vm10089, %v10075, %v9738
        %v10109 = vsel %vm10089, %v10076, %v9740
        %v10110 = vsel %vm10089, %v10077, %v9742
        %v10111 = vsel %vm10089, %v10078, %v9744
        %v10112 = vsel %vm10089, %v10079, %v9746
        %v10113 = vsel %vm10089, %v10080, %v9748
        %v10114 = vsel %vm10089, %v10081, %v9750
        %v10115 = vsel %vm10089, %v10082, %v9752
        %v10116 = vsel %vm10089, %v10083, %v9754
        %v10117 = vsel %vm10089, %v10084, %v9756
        %v10118 = vsel %vm10089, %v10085, %v9758
        %v10119 = vsel %vm10089, %v10086, %v9760
        %v10120 = vsel %vm10089, %v10087, %v9762
        %v10121 = vsel %vm10089, %v10088, %v9764
        %vm10122 = vcmask 916480
        %v10123 = vsel %vm10122, %v10090, %v9830
        %v10124 = vsel %vm10122, %v10091, %v9832
        %v10125 = vsel %vm10122, %v10092, %v9834
        %v10126 = vsel %vm10122, %v10093, %v9836
        %v10127 = vsel %vm10122, %v10094, %v9838
        %v10128 = vsel %vm10122, %v10095, %v9840
        %v10129 = vsel %vm10122, %v10096, %v9842
        %v10130 = vsel %vm10122, %v10097, %v9844
        %v10131 = vsel %vm10122, %v10098, %v9846
        %v10132 = vsel %vm10122, %v10099, %v9848
        %v10133 = vsel %vm10122, %v10100, %v9850
        %v10134 = vsel %vm10122, %v10101, %v9852
        %v10135 = vsel %vm10122, %v10102, %v9854
        %v10136 = vsel %vm10122, %v10103, %v9856
        %v10137 = vsel %vm10122, %v10104, %v9858
        %v10138 = vsel %vm10122, %v10105, %v9860
        %v10139 = vsel %vm10122, %v10106, %v9862
        %v10140 = vsel %vm10122, %v10107, %v9864
        %v10141 = vsel %vm10122, %v10108, %v9866
        %v10142 = vsel %vm10122, %v10109, %v9868
        %v10143 = vsel %vm10122, %v10110, %v9870
        %v10144 = vsel %vm10122, %v10111, %v9872
        %v10145 = vsel %vm10122, %v10112, %v9874
        %v10146 = vsel %vm10122, %v10113, %v9876
        %v10147 = vsel %vm10122, %v10114, %v9878
        %v10148 = vsel %vm10122, %v10115, %v9880
        %v10149 = vsel %vm10122, %v10116, %v9882
        %v10150 = vsel %vm10122, %v10117, %v9884
        %v10151 = vsel %vm10122, %v10118, %v9886
        %v10152 = vsel %vm10122, %v10119, %v9888
        %v10153 = vsel %vm10122, %v10120, %v9890
        %v10154 = vsel %vm10122, %v10121, %v9892
        %v10156 = vperm.slane %v8739, 0
        %v10159 = vsel %vm481, %v8997, 0
        %v10162 = vsel %vm481, %v8998, 0
        %v10165 = vsel %vm481, %v8999, 0
        %v10168 = vsel %vm481, %v9000, 0
        %v10171 = vsel %vm481, %v9001, 0
        %v10174 = vsel %vm481, %v9002, 0
        %v10177 = vsel %vm481, %v9003, 0
        %v10180 = vsel %vm481, %v9004, 0
        %v10183 = vsel %vm481, %v9005, 0
        %v10186 = vsel %vm481, %v9006, 0
        %v10189 = vsel %vm481, %v9007, 0
        %v10192 = vsel %vm481, %v9008, 0
        %v10195 = vsel %vm481, %v9009, 0
        %v10198 = vsel %vm481, %v9010, 0
        %v10201 = vsel %vm481, %v9011, 0
        %v10204 = vsel %vm481, %v9012, 0
        %v10207 = vsel %vm481, %v9013, 0
        %v10210 = vsel %vm481, %v9014, 0
        %v10213 = vsel %vm481, %v9015, 0
        %v10216 = vsel %vm481, %v9016, 0
        %v10219 = vsel %vm481, %v9017, 0
        %v10222 = vsel %vm481, %v9018, 0
        %v10225 = vsel %vm481, %v9019, 0
        %v10228 = vsel %vm481, %v9020, 0
        %v10231 = vsel %vm481, %v9021, 0
        %v10234 = vsel %vm481, %v9022, 0
        %v10237 = vsel %vm481, %v9023, 0
        %v10240 = vsel %vm481, %v9024, 0
        %v10243 = vsel %vm481, %v9025, 0
        %v10246 = vsel %vm481, %v9026, 0
        %v10249 = vsel %vm481, %v9027, 0
        %v10252 = vsel %vm481, %v9028, 0
        %10254 = vmatpush.msra.mxu0 %v8736
        %10255 = vmatpush.msra.mxu0 %v8735
        %10256 = vmatpush.msra.mxu0 %v8734
        %10257 = vmatpush.msra.mxu0 %v8733
        %10258 = vmatpush.msra.mxu0 %v8732
        %10259 = vmatpush.msra.mxu0 %v8731
        %10260 = vmatpush.msra.mxu0 %v8730
        %10261 = vmatpush.msra.mxu0 %v8729
        %10262 = vmatpush.msra.mxu0 %v8728
        %10263 = vmatpush.msra.mxu0 %v8727
        %10264 = vmatpush.msra.mxu0 %v8726
        %10265 = vmatpush.msra.mxu0 %v8725
        %10266 = vmatpush.msra.mxu0 %v8724
        %10267 = vmatpush.msra.mxu0 %v8723
        %10268 = vmatpush.msra.mxu0 %v8722
        %10269 = vmatpush.msra.mxu0 %v8721
        %10270 = vmatmul.f32.gmra.mxu0 %v10123
        %v10271 = vpop.f32.mrf.mxu0
        %v10272 = vadd.f32 %v10156, %v10271
        %10273 = vmatmul.f32.gmra.mxu0 %v10124
        %v10274 = vpop.f32.mrf.mxu0
        %v10275 = vadd.f32 %v10156, %v10274
        %10276 = vmatmul.f32.gmra.mxu0 %v10125
        %v10277 = vpop.f32.mrf.mxu0
        %v10278 = vadd.f32 %v10156, %v10277
        %10279 = vmatmul.f32.gmra.mxu0 %v10126
        %v10280 = vpop.f32.mrf.mxu0
        %v10281 = vadd.f32 %v10156, %v10280
        %10282 = vmatmul.f32.gmra.mxu0 %v10127
        %v10283 = vpop.f32.mrf.mxu0
        %v10284 = vadd.f32 %v10156, %v10283
        %10285 = vmatmul.f32.gmra.mxu0 %v10128
        %v10286 = vpop.f32.mrf.mxu0
        %v10287 = vadd.f32 %v10156, %v10286
        %10288 = vmatmul.f32.gmra.mxu0 %v10129
        %v10289 = vpop.f32.mrf.mxu0
        %v10290 = vadd.f32 %v10156, %v10289
        %10291 = vmatmul.f32.gmra.mxu0 %v10130
        %v10292 = vpop.f32.mrf.mxu0
        %v10293 = vadd.f32 %v10156, %v10292
        %10294 = vmatmul.f32.gmra.mxu0 %v10131
        %v10295 = vpop.f32.mrf.mxu0
        %v10296 = vadd.f32 %v10156, %v10295
        %10297 = vmatmul.f32.gmra.mxu0 %v10132
        %v10298 = vpop.f32.mrf.mxu0
        %v10299 = vadd.f32 %v10156, %v10298
        %10300 = vmatmul.f32.gmra.mxu0 %v10133
        %v10301 = vpop.f32.mrf.mxu0
        %v10302 = vadd.f32 %v10156, %v10301
        %10303 = vmatmul.f32.gmra.mxu0 %v10134
        %v10304 = vpop.f32.mrf.mxu0
        %v10305 = vadd.f32 %v10156, %v10304
        %10306 = vmatmul.f32.gmra.mxu0 %v10135
        %v10307 = vpop.f32.mrf.mxu0
        %v10308 = vadd.f32 %v10156, %v10307
        %10309 = vmatmul.f32.gmra.mxu0 %v10136
        %v10310 = vpop.f32.mrf.mxu0
        %v10311 = vadd.f32 %v10156, %v10310
        %10312 = vmatmul.f32.gmra.mxu0 %v10137
        %v10313 = vpop.f32.mrf.mxu0
        %v10314 = vadd.f32 %v10156, %v10313
        %10315 = vmatmul.f32.gmra.mxu0 %v10138
        %v10316 = vpop.f32.mrf.mxu0
        %v10317 = vadd.f32 %v10156, %v10316
        %10318 = vmatmul.f32.gmra.mxu0 %v10139
        %v10319 = vpop.f32.mrf.mxu0
        %v10320 = vadd.f32 %v10156, %v10319
        %10321 = vmatmul.f32.gmra.mxu0 %v10140
        %v10322 = vpop.f32.mrf.mxu0
        %v10323 = vadd.f32 %v10156, %v10322
        %10324 = vmatmul.f32.gmra.mxu0 %v10141
        %v10325 = vpop.f32.mrf.mxu0
        %v10326 = vadd.f32 %v10156, %v10325
        %10327 = vmatmul.f32.gmra.mxu0 %v10142
        %v10328 = vpop.f32.mrf.mxu0
        %v10329 = vadd.f32 %v10156, %v10328
        %10330 = vmatmul.f32.gmra.mxu0 %v10143
        %v10331 = vpop.f32.mrf.mxu0
        %v10332 = vadd.f32 %v10156, %v10331
        %10333 = vmatmul.f32.gmra.mxu0 %v10144
        %v10334 = vpop.f32.mrf.mxu0
        %v10335 = vadd.f32 %v10156, %v10334
        %10336 = vmatmul.f32.gmra.mxu0 %v10145
        %v10337 = vpop.f32.mrf.mxu0
        %v10338 = vadd.f32 %v10156, %v10337
        %10339 = vmatmul.f32.gmra.mxu0 %v10146
        %v10340 = vpop.f32.mrf.mxu0
        %v10341 = vadd.f32 %v10156, %v10340
        %10342 = vmatmul.f32.gmra.mxu0 %v10147
        %v10343 = vpop.f32.mrf.mxu0
        %v10344 = vadd.f32 %v10156, %v10343
        %10345 = vmatmul.f32.gmra.mxu0 %v10148
        %v10346 = vpop.f32.mrf.mxu0
        %v10347 = vadd.f32 %v10156, %v10346
        %10348 = vmatmul.f32.gmra.mxu0 %v10149
        %v10349 = vpop.f32.mrf.mxu0
        %v10350 = vadd.f32 %v10156, %v10349
        %10351 = vmatmul.f32.gmra.mxu0 %v10150
        %v10352 = vpop.f32.mrf.mxu0
        %v10353 = vadd.f32 %v10156, %v10352
        %10354 = vmatmul.f32.gmra.mxu0 %v10151
        %v10355 = vpop.f32.mrf.mxu0
        %v10356 = vadd.f32 %v10156, %v10355
        %10357 = vmatmul.f32.gmra.mxu0 %v10152
        %v10358 = vpop.f32.mrf.mxu0
        %v10359 = vadd.f32 %v10156, %v10358
        %10360 = vmatmul.f32.gmra.mxu0 %v10153
        %v10361 = vpop.f32.mrf.mxu0
        %v10362 = vadd.f32 %v10156, %v10361
        %10363 = vmatmul.f32.gmra.mxu0 %v10154
        %v10364 = vpop.f32.mrf.mxu0
        %v10365 = vadd.f32 %v10156, %v10364
        %10366 = vdwg.mxu0
        %10367 = vmatpush.msra.mxu0 0.0
        %10368 = vmatpush.msra.mxu0 0.0
        %10369 = vmatpush.msra.mxu0 0.0
        %10370 = vmatpush.msra.mxu0 0.0
        %10371 = vmatpush.msra.mxu0 0.0
        %10372 = vmatpush.msra.mxu0 0.0
        %10373 = vmatpush.msra.mxu0 0.0
        %10374 = vmatpush.msra.mxu0 0.0
        %10375 = vmatpush.msra.mxu0 0.0
        %10376 = vmatpush.msra.mxu0 0.0
        %10377 = vmatpush.msra.mxu0 0.0
        %10378 = vmatpush.msra.mxu0 0.0
        %10379 = vmatpush.msra.mxu0 0.0
        %10380 = vmatpush.msra.mxu0 0.0
        %10381 = vmatpush.msra.mxu0 %v8738
        %10382 = vmatpush.msra.mxu0 %v8737
        %10383 = vmatmul.f32.gmra.mxu0 %v10159
        %v10384 = vpop.f32.mrf.mxu0
        %v10385 = vadd.f32 %v10272, %v10384
        %10386 = vmatmul.f32.gmra.mxu0 %v10162
        %v10387 = vpop.f32.mrf.mxu0
        %v10388 = vadd.f32 %v10275, %v10387
        %10389 = vmatmul.f32.gmra.mxu0 %v10165
        %v10390 = vpop.f32.mrf.mxu0
        %v10391 = vadd.f32 %v10278, %v10390
        %10392 = vmatmul.f32.gmra.mxu0 %v10168
        %v10393 = vpop.f32.mrf.mxu0
        %v10394 = vadd.f32 %v10281, %v10393
        %10395 = vmatmul.f32.gmra.mxu0 %v10171
        %v10396 = vpop.f32.mrf.mxu0
        %v10397 = vadd.f32 %v10284, %v10396
        %10398 = vmatmul.f32.gmra.mxu0 %v10174
        %v10399 = vpop.f32.mrf.mxu0
        %v10400 = vadd.f32 %v10287, %v10399
        %10401 = vmatmul.f32.gmra.mxu0 %v10177
        %v10402 = vpop.f32.mrf.mxu0
        %v10403 = vadd.f32 %v10290, %v10402
        %10404 = vmatmul.f32.gmra.mxu0 %v10180
        %v10405 = vpop.f32.mrf.mxu0
        %v10406 = vadd.f32 %v10293, %v10405
        %10407 = vmatmul.f32.gmra.mxu0 %v10183
        %v10408 = vpop.f32.mrf.mxu0
        %v10409 = vadd.f32 %v10296, %v10408
        %10410 = vmatmul.f32.gmra.mxu0 %v10186
        %v10411 = vpop.f32.mrf.mxu0
        %v10412 = vadd.f32 %v10299, %v10411
        %10413 = vmatmul.f32.gmra.mxu0 %v10189
        %v10414 = vpop.f32.mrf.mxu0
        %v10415 = vadd.f32 %v10302, %v10414
        %10416 = vmatmul.f32.gmra.mxu0 %v10192
        %v10417 = vpop.f32.mrf.mxu0
        %v10418 = vadd.f32 %v10305, %v10417
        %10419 = vmatmul.f32.gmra.mxu0 %v10195
        %v10420 = vpop.f32.mrf.mxu0
        %v10421 = vadd.f32 %v10308, %v10420
        %10422 = vmatmul.f32.gmra.mxu0 %v10198
        %v10423 = vpop.f32.mrf.mxu0
        %v10424 = vadd.f32 %v10311, %v10423
        %10425 = vmatmul.f32.gmra.mxu0 %v10201
        %v10426 = vpop.f32.mrf.mxu0
        %v10427 = vadd.f32 %v10314, %v10426
        %10428 = vmatmul.f32.gmra.mxu0 %v10204
        %v10429 = vpop.f32.mrf.mxu0
        %v10430 = vadd.f32 %v10317, %v10429
        %10431 = vmatmul.f32.gmra.mxu0 %v10207
        %v10432 = vpop.f32.mrf.mxu0
        %v10433 = vadd.f32 %v10320, %v10432
        %10434 = vmatmul.f32.gmra.mxu0 %v10210
        %v10435 = vpop.f32.mrf.mxu0
        %v10436 = vadd.f32 %v10323, %v10435
        %10437 = vmatmul.f32.gmra.mxu0 %v10213
        %v10438 = vpop.f32.mrf.mxu0
        %v10439 = vadd.f32 %v10326, %v10438
        %10440 = vmatmul.f32.gmra.mxu0 %v10216
        %v10441 = vpop.f32.mrf.mxu0
        %v10442 = vadd.f32 %v10329, %v10441
        %10443 = vmatmul.f32.gmra.mxu0 %v10219
        %v10444 = vpop.f32.mrf.mxu0
        %v10445 = vadd.f32 %v10332, %v10444
        %10446 = vmatmul.f32.gmra.mxu0 %v10222
        %v10447 = vpop.f32.mrf.mxu0
        %v10448 = vadd.f32 %v10335, %v10447
        %10449 = vmatmul.f32.gmra.mxu0 %v10225
        %v10450 = vpop.f32.mrf.mxu0
        %v10451 = vadd.f32 %v10338, %v10450
        %10452 = vmatmul.f32.gmra.mxu0 %v10228
        %v10453 = vpop.f32.mrf.mxu0
        %v10454 = vadd.f32 %v10341, %v10453
        %10455 = vmatmul.f32.gmra.mxu0 %v10231
        %v10456 = vpop.f32.mrf.mxu0
        %v10457 = vadd.f32 %v10344, %v10456
        %10458 = vmatmul.f32.gmra.mxu0 %v10234
        %v10459 = vpop.f32.mrf.mxu0
        %v10460 = vadd.f32 %v10347, %v10459
        %10461 = vmatmul.f32.gmra.mxu0 %v10237
        %v10462 = vpop.f32.mrf.mxu0
        %v10463 = vadd.f32 %v10350, %v10462
        %10464 = vmatmul.f32.gmra.mxu0 %v10240
        %v10465 = vpop.f32.mrf.mxu0
        %v10466 = vadd.f32 %v10353, %v10465
        %10467 = vmatmul.f32.gmra.mxu0 %v10243
        %v10468 = vpop.f32.mrf.mxu0
        %v10469 = vadd.f32 %v10356, %v10468
        %10470 = vmatmul.f32.gmra.mxu0 %v10246
        %v10471 = vpop.f32.mrf.mxu0
        %v10472 = vadd.f32 %v10359, %v10471
        %10473 = vmatmul.f32.gmra.mxu0 %v10249
        %v10474 = vpop.f32.mrf.mxu0
        %v10475 = vadd.f32 %v10362, %v10474
        %10476 = vmatmul.f32.gmra.mxu0 %v10252
        %v10477 = vpop.f32.mrf.mxu0
        %v10478 = vadd.f32 %v10365, %v10477
        %10479 = vdwg.mxu0
        %v10480 = vmax.f32 %v10385, 0.0
        %v10481 = vmax.f32 %v10388, 0.0
        %v10482 = vmax.f32 %v10391, 0.0
        %v10483 = vmax.f32 %v10394, 0.0
        %v10484 = vmax.f32 %v10397, 0.0
        %v10485 = vmax.f32 %v10400, 0.0
        %v10486 = vmax.f32 %v10403, 0.0
        %v10487 = vmax.f32 %v10406, 0.0
        %v10488 = vmax.f32 %v10409, 0.0
        %v10489 = vmax.f32 %v10412, 0.0
        %v10490 = vmax.f32 %v10415, 0.0
        %v10491 = vmax.f32 %v10418, 0.0
        %v10492 = vmax.f32 %v10421, 0.0
        %v10493 = vmax.f32 %v10424, 0.0
        %v10494 = vmax.f32 %v10427, 0.0
        %v10495 = vmax.f32 %v10430, 0.0
        %v10496 = vmax.f32 %v10433, 0.0
        %v10497 = vmax.f32 %v10436, 0.0
        %v10498 = vmax.f32 %v10439, 0.0
        %v10499 = vmax.f32 %v10442, 0.0
        %v10500 = vmax.f32 %v10445, 0.0
        %v10501 = vmax.f32 %v10448, 0.0
        %v10502 = vmax.f32 %v10451, 0.0
        %v10503 = vmax.f32 %v10454, 0.0
        %v10504 = vmax.f32 %v10457, 0.0
        %v10505 = vmax.f32 %v10460, 0.0
        %v10506 = vmax.f32 %v10463, 0.0
        %v10507 = vmax.f32 %v10466, 0.0
        %v10508 = vmax.f32 %v10469, 0.0
        %v10509 = vmax.f32 %v10472, 0.0
        %v10510 = vmax.f32 %v10475, 0.0
        %v10511 = vmax.f32 %v10478, 0.0
        %10512 = vst.msk [vmem:[#allocation6] sm:$0xff] %vm9957, %v10480
        %10513 = vst.msk [vmem:[#allocation6 + $0x8] sm:$0xff] %vm9957, %v10481
        %10514 = vst.msk [vmem:[#allocation6 + $0x10] sm:$0xff] %vm9957, %v10482
        %10515 = vst.msk [vmem:[#allocation6 + $0x18] sm:$0xff] %vm9957, %v10483
        %10516 = vst.msk [vmem:[#allocation6 + $0x20] sm:$0xff] %vm9957, %v10484
        %10517 = vst.msk [vmem:[#allocation6 + $0x28] sm:$0xff] %vm9957, %v10485
        %10518 = vst.msk [vmem:[#allocation6 + $0x30] sm:$0xff] %vm9957, %v10486
        %10519 = vst.msk [vmem:[#allocation6 + $0x38] sm:$0xff] %vm9957, %v10487
        %10520 = vst.msk [vmem:[#allocation6 + $0x40] sm:$0xff] %vm9957, %v10488
        %10521 = vst.msk [vmem:[#allocation6 + $0x48] sm:$0xff] %vm9957, %v10489
        %10522 = vst.msk [vmem:[#allocation6 + $0x50] sm:$0xff] %vm9957, %v10490
        %10523 = vst.msk [vmem:[#allocation6 + $0x58] sm:$0xff] %vm9957, %v10491
        %10524 = vst.msk [vmem:[#allocation6 + $0x60] sm:$0xff] %vm9957, %v10492
        %10525 = vst.msk [vmem:[#allocation6 + $0x68] sm:$0xff] %vm9957, %v10493
        %10526 = vst.msk [vmem:[#allocation6 + $0x70] sm:$0xff] %vm9957, %v10494
        %10527 = vst.msk [vmem:[#allocation6 + $0x78] sm:$0xff] %vm9957, %v10495
        %10528 = vst.msk [vmem:[#allocation6 + $0x80] sm:$0xff] %vm9957, %v10496
        %10529 = vst.msk [vmem:[#allocation6 + $0x88] sm:$0xff] %vm9957, %v10497
        %10530 = vst.msk [vmem:[#allocation6 + $0x90] sm:$0xff] %vm9957, %v10498
        %10531 = vst.msk [vmem:[#allocation6 + $0x98] sm:$0xff] %vm9957, %v10499
        %10532 = vst.msk [vmem:[#allocation6 + $0xa0] sm:$0xff] %vm9957, %v10500
        %10533 = vst.msk [vmem:[#allocation6 + $0xa8] sm:$0xff] %vm9957, %v10501
        %10534 = vst.msk [vmem:[#allocation6 + $0xb0] sm:$0xff] %vm9957, %v10502
        %10535 = vst.msk [vmem:[#allocation6 + $0xb8] sm:$0xff] %vm9957, %v10503
        %10536 = vst.msk [vmem:[#allocation6 + $0xc0] sm:$0xff] %vm9957, %v10504
        %10537 = vst.msk [vmem:[#allocation6 + $0xc8] sm:$0xff] %vm9957, %v10505
        %10538 = vst.msk [vmem:[#allocation6 + $0xd0] sm:$0xff] %vm9957, %v10506
        %10539 = vst.msk [vmem:[#allocation6 + $0xd8] sm:$0xff] %vm9957, %v10507
        %10540 = vst.msk [vmem:[#allocation6 + $0xe0] sm:$0xff] %vm9957, %v10508
        %10541 = vst.msk [vmem:[#allocation6 + $0xe8] sm:$0xff] %vm9957, %v10509
        %10542 = vst.msk [vmem:[#allocation6 + $0xf0] sm:$0xff] %vm9957, %v10510
        %10543 = vst.msk [vmem:[#allocation6 + $0xf8] sm:$0xff] %vm9957, %v10511
        %v10544 = vld [vmem:[#allocation6] ss:$2 sm:$0xff]
        %s10545 = scalar_lea.vmem [#allocation6], 16
        %v10546 = vld [vmem:[%s10545] ss:$2 sm:$0xff]
        %s10547 = scalar_lea.vmem [#allocation6], 32
        %v10548 = vld [vmem:[%s10547] ss:$2 sm:$0xff]
        %s10549 = scalar_lea.vmem [#allocation6], 48
        %v10550 = vld [vmem:[%s10549] ss:$2 sm:$0xff]
        %s10551 = scalar_lea.vmem [#allocation6], 64
        %v10552 = vld [vmem:[%s10551] ss:$2 sm:$0xff]
        %s10553 = scalar_lea.vmem [#allocation6], 80
        %v10554 = vld [vmem:[%s10553] ss:$2 sm:$0xff]
        %s10555 = scalar_lea.vmem [#allocation6], 96
        %v10556 = vld [vmem:[%s10555] ss:$2 sm:$0xff]
        %s10557 = scalar_lea.vmem [#allocation6], 112
        %v10558 = vld [vmem:[%s10557] ss:$2 sm:$0xff]
        %s10559 = scalar_lea.vmem [#allocation6], 128
        %v10560 = vld [vmem:[%s10559] ss:$2 sm:$0xff]
        %s10561 = scalar_lea.vmem [#allocation6], 144
        %v10562 = vld [vmem:[%s10561] ss:$2 sm:$0xff]
        %s10563 = scalar_lea.vmem [#allocation6], 160
        %v10564 = vld [vmem:[%s10563] ss:$2 sm:$0xff]
        %s10565 = scalar_lea.vmem [#allocation6], 176
        %v10566 = vld [vmem:[%s10565] ss:$2 sm:$0xff]
        %s10567 = scalar_lea.vmem [#allocation6], 192
        %v10568 = vld [vmem:[%s10567] ss:$2 sm:$0xff]
        %s10569 = scalar_lea.vmem [#allocation6], 208
        %v10570 = vld [vmem:[%s10569] ss:$2 sm:$0xff]
        %s10571 = scalar_lea.vmem [#allocation6], 224
        %v10572 = vld [vmem:[%s10571] ss:$2 sm:$0xff]
        %s10573 = scalar_lea.vmem [#allocation6], 240
        %v10574 = vld [vmem:[%s10573] ss:$2 sm:$0xff]
        %s10575 = scalar_lea.vmem [#allocation6], 1
        %v10576 = vld [vmem:[%s10575] ss:$2 sm:$0xff]
        %s10577 = scalar_lea.vmem [#allocation6], 17
        %v10578 = vld [vmem:[%s10577] ss:$2 sm:$0xff]
        %s10579 = scalar_lea.vmem [#allocation6], 33
        %v10580 = vld [vmem:[%s10579] ss:$2 sm:$0xff]
        %s10581 = scalar_lea.vmem [#allocation6], 49
        %v10582 = vld [vmem:[%s10581] ss:$2 sm:$0xff]
        %s10583 = scalar_lea.vmem [#allocation6], 65
        %v10584 = vld [vmem:[%s10583] ss:$2 sm:$0xff]
        %s10585 = scalar_lea.vmem [#allocation6], 81
        %v10586 = vld [vmem:[%s10585] ss:$2 sm:$0xff]
        %s10587 = scalar_lea.vmem [#allocation6], 97
        %v10588 = vld [vmem:[%s10587] ss:$2 sm:$0xff]
        %s10589 = scalar_lea.vmem [#allocation6], 113
        %v10590 = vld [vmem:[%s10589] ss:$2 sm:$0xff]
        %s10591 = scalar_lea.vmem [#allocation6], 129
        %v10592 = vld [vmem:[%s10591] ss:$2 sm:$0xff]
        %s10593 = scalar_lea.vmem [#allocation6], 145
        %v10594 = vld [vmem:[%s10593] ss:$2 sm:$0xff]
        %s10595 = scalar_lea.vmem [#allocation6], 161
        %v10596 = vld [vmem:[%s10595] ss:$2 sm:$0xff]
        %s10597 = scalar_lea.vmem [#allocation6], 177
        %v10598 = vld [vmem:[%s10597] ss:$2 sm:$0xff]
        %s10599 = scalar_lea.vmem [#allocation6], 193
        %v10600 = vld [vmem:[%s10599] ss:$2 sm:$0xff]
        %s10601 = scalar_lea.vmem [#allocation6], 209
        %v10602 = vld [vmem:[%s10601] ss:$2 sm:$0xff]
        %s10603 = scalar_lea.vmem [#allocation6], 225
        %v10604 = vld [vmem:[%s10603] ss:$2 sm:$0xff]
        %s10605 = scalar_lea.vmem [#allocation6], 241
        %v10606 = vld [vmem:[%s10605] ss:$2 sm:$0xff]
        %v10607 = vmax.f32 %v10544, %v10576
        %v10608 = vmax.f32 %v10546, %v10578
        %v10609 = vmax.f32 %v10548, %v10580
        %v10610 = vmax.f32 %v10550, %v10582
        %v10611 = vmax.f32 %v10552, %v10584
        %v10612 = vmax.f32 %v10554, %v10586
        %v10613 = vmax.f32 %v10556, %v10588
        %v10614 = vmax.f32 %v10558, %v10590
        %v10615 = vmax.f32 %v10560, %v10592
        %v10616 = vmax.f32 %v10562, %v10594
        %v10617 = vmax.f32 %v10564, %v10596
        %v10618 = vmax.f32 %v10566, %v10598
        %v10619 = vmax.f32 %v10568, %v10600
        %v10620 = vmax.f32 %v10570, %v10602
        %v10621 = vmax.f32 %v10572, %v10604
        %v10622 = vmax.f32 %v10574, %v10606
        %10623 = vst.msk [vmem:[#allocation7] sm:$0xff] %vm9957, %v10607
        %10624 = vst.msk [vmem:[#allocation7 + $0x8] sm:$0xff] %vm9957, %v10608
        %10625 = vst.msk [vmem:[#allocation7 + $0x10] sm:$0xff] %vm9957, %v10609
        %10626 = vst.msk [vmem:[#allocation7 + $0x18] sm:$0xff] %vm9957, %v10610
        %10627 = vst.msk [vmem:[#allocation7 + $0x20] sm:$0xff] %vm9957, %v10611
        %10628 = vst.msk [vmem:[#allocation7 + $0x28] sm:$0xff] %vm9957, %v10612
        %10629 = vst.msk [vmem:[#allocation7 + $0x30] sm:$0xff] %vm9957, %v10613
        %10630 = vst.msk [vmem:[#allocation7 + $0x38] sm:$0xff] %vm9957, %v10614
        %10631 = vst.msk [vmem:[#allocation7 + $0x40] sm:$0xff] %vm9957, %v10615
        %10632 = vst.msk [vmem:[#allocation7 + $0x48] sm:$0xff] %vm9957, %v10616
        %10633 = vst.msk [vmem:[#allocation7 + $0x50] sm:$0xff] %vm9957, %v10617
        %10634 = vst.msk [vmem:[#allocation7 + $0x58] sm:$0xff] %vm9957, %v10618
        %10635 = vst.msk [vmem:[#allocation7 + $0x60] sm:$0xff] %vm9957, %v10619
        %10636 = vst.msk [vmem:[#allocation7 + $0x68] sm:$0xff] %vm9957, %v10620
        %10637 = vst.msk [vmem:[#allocation7 + $0x70] sm:$0xff] %vm9957, %v10621
        %10638 = vst.msk [vmem:[#allocation7 + $0x78] sm:$0xff] %vm9957, %v10622
        %v10639 = vld [vmem:[#allocation7] sm:$0xff]
        %v10640 = vld [vmem:[#allocation7 + $0x10] sm:$0xff]
        %v10641 = vld [vmem:[#allocation7 + $0x20] sm:$0xff]
        %v10642 = vld [vmem:[#allocation7 + $0x30] sm:$0xff]
        %v10643 = vld [vmem:[#allocation7 + $0x40] sm:$0xff]
        %v10644 = vld [vmem:[#allocation7 + $0x50] sm:$0xff]
        %v10645 = vld [vmem:[#allocation7 + $0x60] sm:$0xff]
        %v10646 = vld [vmem:[#allocation7 + $0x70] sm:$0xff]
        %s10647 = scalar_lea.vmem [#allocation7], 8
        %v10648 = vld [vmem:[%s10647] sm:$0xff]
        %v10649 = vld [vmem:[%s10647 + $0x10] sm:$0xff]
        %v10650 = vld [vmem:[%s10647 + $0x20] sm:$0xff]
        %v10651 = vld [vmem:[%s10647 + $0x30] sm:$0xff]
        %v10652 = vld [vmem:[%s10647 + $0x40] sm:$0xff]
        %v10653 = vld [vmem:[%s10647 + $0x50] sm:$0xff]
        %v10654 = vld [vmem:[%s10647 + $0x60] sm:$0xff]
        %v10655 = vld [vmem:[%s10647 + $0x70] sm:$0xff]
        %v10656 = vmax.f32 %v10639, %v10648
        %v10657 = vmax.f32 %v10640, %v10649
        %v10658 = vmax.f32 %v10641, %v10650
        %v10659 = vmax.f32 %v10642, %v10651
        %v10660 = vmax.f32 %v10643, %v10652
        %v10661 = vmax.f32 %v10644, %v10653
        %v10662 = vmax.f32 %v10645, %v10654
        %v10663 = vmax.f32 %v10646, %v10655
        %v10664 = vld [vmem:[%s5] sm:$0xff]
        %v10665 = vld [vmem:[%s5 + $0x8] sm:$0xff]
        %v10666 = vld [vmem:[%s5 + $0x10] sm:$0xff]
        %v10667 = vld [vmem:[%s5 + $0x18] sm:$0xff]
        %v10668 = vld [vmem:[%s5 + $0x20] sm:$0xff]
        %v10669 = vld [vmem:[%s5 + $0x28] sm:$0xff]
        %v10670 = vld [vmem:[%s5 + $0x30] sm:$0xff]
        %v10671 = vld [vmem:[%s5 + $0x38] sm:$0xff]
        %v10672 = vmul.f32 %v10656, %v10664
        %v10673 = vmul.f32 %v10657, %v10665
        %v10674 = vmul.f32 %v10658, %v10666
        %v10675 = vmul.f32 %v10659, %v10667
        %v10676 = vmul.f32 %v10660, %v10668
        %v10677 = vmul.f32 %v10661, %v10669
        %v10678 = vmul.f32 %v10662, %v10670
        %v10679 = vmul.f32 %v10663, %v10671
        %v10680 = vsel %vm9957, %v10672, 0.0
        %10681 = vadd.xlane.f32.xlu0 %v10680
        %v10682 = vpop.xlane.xlu0 %10681
        %v10683 = vsel %vm9957, %v10673, 0.0
        %10684 = vadd.xlane.f32.xlu0 %v10683
        %v10685 = vpop.xlane.xlu0 %10684
        %v10686 = vsel %vm9957, %v10674, 0.0
        %10687 = vadd.xlane.f32.xlu0 %v10686
        %v10688 = vpop.xlane.xlu0 %10687
        %v10689 = vsel %vm9957, %v10675, 0.0
        %10690 = vadd.xlane.f32.xlu0 %v10689
        %v10691 = vpop.xlane.xlu0 %10690
        %v10692 = vsel %vm9957, %v10676, 0.0
        %10693 = vadd.xlane.f32.xlu0 %v10692
        %v10694 = vpop.xlane.xlu0 %10693
        %v10695 = vsel %vm9957, %v10677, 0.0
        %10696 = vadd.xlane.f32.xlu0 %v10695
        %v10697 = vpop.xlane.xlu0 %10696
        %v10698 = vsel %vm9957, %v10678, 0.0
        %10699 = vadd.xlane.f32.xlu0 %v10698
        %v10700 = vpop.xlane.xlu0 %10699
        %v10701 = vsel %vm9957, %v10679, 0.0
        %10702 = vadd.xlane.f32.xlu0 %v10701
        %v10703 = vpop.xlane.xlu0 %10702
        %s10704 = scalar_lea.vmem %s5, 64
        %v10705 = vld [vmem:[%s10704] sm:$0xff]
        %v10706 = vld [vmem:[%s10704 + $0x8] sm:$0xff]
        %v10707 = vld [vmem:[%s10704 + $0x10] sm:$0xff]
        %v10708 = vld [vmem:[%s10704 + $0x18] sm:$0xff]
        %v10709 = vld [vmem:[%s10704 + $0x20] sm:$0xff]
        %v10710 = vld [vmem:[%s10704 + $0x28] sm:$0xff]
        %v10711 = vld [vmem:[%s10704 + $0x30] sm:$0xff]
        %v10712 = vld [vmem:[%s10704 + $0x38] sm:$0xff]
        %v10713 = vmul.f32 %v10656, %v10705
        %v10714 = vmul.f32 %v10657, %v10706
        %v10715 = vmul.f32 %v10658, %v10707
        %v10716 = vmul.f32 %v10659, %v10708
        %v10717 = vmul.f32 %v10660, %v10709
        %v10718 = vmul.f32 %v10661, %v10710
        %v10719 = vmul.f32 %v10662, %v10711
        %v10720 = vmul.f32 %v10663, %v10712
        %v10721 = vsel %vm9957, %v10713, 0.0
        %10722 = vadd.xlane.f32.xlu0 %v10721
        %v10723 = vpop.xlane.xlu0 %10722
        %v10724 = vsel %vm9957, %v10714, 0.0
        %10725 = vadd.xlane.f32.xlu0 %v10724
        %v10726 = vpop.xlane.xlu0 %10725
        %v10727 = vsel %vm9957, %v10715, 0.0
        %10728 = vadd.xlane.f32.xlu0 %v10727
        %v10729 = vpop.xlane.xlu0 %10728
        %v10730 = vsel %vm9957, %v10716, 0.0
        %10731 = vadd.xlane.f32.xlu0 %v10730
        %v10732 = vpop.xlane.xlu0 %10731
        %v10733 = vsel %vm9957, %v10717, 0.0
        %10734 = vadd.xlane.f32.xlu0 %v10733
        %v10735 = vpop.xlane.xlu0 %10734
        %v10736 = vsel %vm9957, %v10718, 0.0
        %10737 = vadd.xlane.f32.xlu0 %v10736
        %v10738 = vpop.xlane.xlu0 %10737
        %v10739 = vsel %vm9957, %v10719, 0.0
        %10740 = vadd.xlane.f32.xlu0 %v10739
        %v10741 = vpop.xlane.xlu0 %10740
        %v10742 = vsel %vm9957, %v10720, 0.0
        %10743 = vadd.xlane.f32.xlu0 %v10742
        %v10744 = vpop.xlane.xlu0 %10743
        %s10745 = scalar_lea.vmem %s5, 128
        %v10746 = vld [vmem:[%s10745] sm:$0xff]
        %v10747 = vld [vmem:[%s10745 + $0x8] sm:$0xff]
        %v10748 = vld [vmem:[%s10745 + $0x10] sm:$0xff]
        %v10749 = vld [vmem:[%s10745 + $0x18] sm:$0xff]
        %v10750 = vld [vmem:[%s10745 + $0x20] sm:$0xff]
        %v10751 = vld [vmem:[%s10745 + $0x28] sm:$0xff]
        %v10752 = vld [vmem:[%s10745 + $0x30] sm:$0xff]
        %v10753 = vld [vmem:[%s10745 + $0x38] sm:$0xff]
        %v10754 = vmul.f32 %v10656, %v10746
        %v10755 = vmul.f32 %v10657, %v10747
        %v10756 = vmul.f32 %v10658, %v10748
        %v10757 = vmul.f32 %v10659, %v10749
        %v10758 = vmul.f32 %v10660, %v10750
        %v10759 = vmul.f32 %v10661, %v10751
        %v10760 = vmul.f32 %v10662, %v10752
        %v10761 = vmul.f32 %v10663, %v10753
        %v10762 = vsel %vm9957, %v10754, 0.0
        %10763 = vadd.xlane.f32.xlu0 %v10762
        %v10764 = vpop.xlane.xlu0 %10763
        %v10765 = vsel %vm9957, %v10755, 0.0
        %10766 = vadd.xlane.f32.xlu0 %v10765
        %v10767 = vpop.xlane.xlu0 %10766
        %v10768 = vsel %vm9957, %v10756, 0.0
        %10769 = vadd.xlane.f32.xlu0 %v10768
        %v10770 = vpop.xlane.xlu0 %10769
        %v10771 = vsel %vm9957, %v10757, 0.0
        %10772 = vadd.xlane.f32.xlu0 %v10771
        %v10773 = vpop.xlane.xlu0 %10772
        %v10774 = vsel %vm9957, %v10758, 0.0
        %10775 = vadd.xlane.f32.xlu0 %v10774
        %v10776 = vpop.xlane.xlu0 %10775
        %v10777 = vsel %vm9957, %v10759, 0.0
        %10778 = vadd.xlane.f32.xlu0 %v10777
        %v10779 = vpop.xlane.xlu0 %10778
        %v10780 = vsel %vm9957, %v10760, 0.0
        %10781 = vadd.xlane.f32.xlu0 %v10780
        %v10782 = vpop.xlane.xlu0 %10781
        %v10783 = vsel %vm9957, %v10761, 0.0
        %10784 = vadd.xlane.f32.xlu0 %v10783
        %v10785 = vpop.xlane.xlu0 %10784
        %s10786 = scalar_lea.vmem %s5, 192
        %v10787 = vld [vmem:[%s10786] sm:$0xff]
        %v10788 = vld [vmem:[%s10786 + $0x8] sm:$0xff]
        %v10789 = vld [vmem:[%s10786 + $0x10] sm:$0xff]
        %v10790 = vld [vmem:[%s10786 + $0x18] sm:$0xff]
        %v10791 = vld [vmem:[%s10786 + $0x20] sm:$0xff]
        %v10792 = vld [vmem:[%s10786 + $0x28] sm:$0xff]
        %v10793 = vld [vmem:[%s10786 + $0x30] sm:$0xff]
        %v10794 = vld [vmem:[%s10786 + $0x38] sm:$0xff]
        %v10795 = vmul.f32 %v10656, %v10787
        %v10796 = vmul.f32 %v10657, %v10788
        %v10797 = vmul.f32 %v10658, %v10789
        %v10798 = vmul.f32 %v10659, %v10790
        %v10799 = vmul.f32 %v10660, %v10791
        %v10800 = vmul.f32 %v10661, %v10792
        %v10801 = vmul.f32 %v10662, %v10793
        %v10802 = vmul.f32 %v10663, %v10794
        %v10803 = vsel %vm9957, %v10795, 0.0
        %10804 = vadd.xlane.f32.xlu0 %v10803
        %v10805 = vpop.xlane.xlu0 %10804
        %v10806 = vsel %vm9957, %v10796, 0.0
        %10807 = vadd.xlane.f32.xlu0 %v10806
        %v10808 = vpop.xlane.xlu0 %10807
        %v10809 = vsel %vm9957, %v10797, 0.0
        %10810 = vadd.xlane.f32.xlu0 %v10809
        %v10811 = vpop.xlane.xlu0 %10810
        %v10812 = vsel %vm9957, %v10798, 0.0
        %10813 = vadd.xlane.f32.xlu0 %v10812
        %v10814 = vpop.xlane.xlu0 %10813
        %v10815 = vsel %vm9957, %v10799, 0.0
        %10816 = vadd.xlane.f32.xlu0 %v10815
        %v10817 = vpop.xlane.xlu0 %10816
        %v10818 = vsel %vm9957, %v10800, 0.0
        %10819 = vadd.xlane.f32.xlu0 %v10818
        %v10820 = vpop.xlane.xlu0 %10819
        %v10821 = vsel %vm9957, %v10801, 0.0
        %10822 = vadd.xlane.f32.xlu0 %v10821
        %v10823 = vpop.xlane.xlu0 %10822
        %v10824 = vsel %vm9957, %v10802, 0.0
        %10825 = vadd.xlane.f32.xlu0 %v10824
        %v10826 = vpop.xlane.xlu0 %10825
        %s10827 = scalar_lea.vmem %s5, 256
        %v10828 = vld [vmem:[%s10827] sm:$0xff]
        %v10829 = vld [vmem:[%s10827 + $0x8] sm:$0xff]
        %v10830 = vld [vmem:[%s10827 + $0x10] sm:$0xff]
        %v10831 = vld [vmem:[%s10827 + $0x18] sm:$0xff]
        %v10832 = vld [vmem:[%s10827 + $0x20] sm:$0xff]
        %v10833 = vld [vmem:[%s10827 + $0x28] sm:$0xff]
        %v10834 = vld [vmem:[%s10827 + $0x30] sm:$0xff]
        %v10835 = vld [vmem:[%s10827 + $0x38] sm:$0xff]
        %v10836 = vmul.f32 %v10656, %v10828
        %v10837 = vmul.f32 %v10657, %v10829
        %v10838 = vmul.f32 %v10658, %v10830
        %v10839 = vmul.f32 %v10659, %v10831
        %v10840 = vmul.f32 %v10660, %v10832
        %v10841 = vmul.f32 %v10661, %v10833
        %v10842 = vmul.f32 %v10662, %v10834
        %v10843 = vmul.f32 %v10663, %v10835
        %v10844 = vsel %vm9957, %v10836, 0.0
        %10845 = vadd.xlane.f32.xlu0 %v10844
        %v10846 = vpop.xlane.xlu0 %10845
        %v10847 = vsel %vm9957, %v10837, 0.0
        %10848 = vadd.xlane.f32.xlu0 %v10847
        %v10849 = vpop.xlane.xlu0 %10848
        %v10850 = vsel %vm9957, %v10838, 0.0
        %10851 = vadd.xlane.f32.xlu0 %v10850
        %v10852 = vpop.xlane.xlu0 %10851
        %v10853 = vsel %vm9957, %v10839, 0.0
        %10854 = vadd.xlane.f32.xlu0 %v10853
        %v10855 = vpop.xlane.xlu0 %10854
        %v10856 = vsel %vm9957, %v10840, 0.0
        %10857 = vadd.xlane.f32.xlu0 %v10856
        %v10858 = vpop.xlane.xlu0 %10857
        %v10859 = vsel %vm9957, %v10841, 0.0
        %10860 = vadd.xlane.f32.xlu0 %v10859
        %v10861 = vpop.xlane.xlu0 %10860
        %v10862 = vsel %vm9957, %v10842, 0.0
        %10863 = vadd.xlane.f32.xlu0 %v10862
        %v10864 = vpop.xlane.xlu0 %10863
        %v10865 = vsel %vm9957, %v10843, 0.0
        %10866 = vadd.xlane.f32.xlu0 %v10865
        %v10867 = vpop.xlane.xlu0 %10866
        %s10868 = scalar_lea.vmem %s5, 320
        %v10869 = vld [vmem:[%s10868] sm:$0xff]
        %v10870 = vld [vmem:[%s10868 + $0x8] sm:$0xff]
        %v10871 = vld [vmem:[%s10868 + $0x10] sm:$0xff]
        %v10872 = vld [vmem:[%s10868 + $0x18] sm:$0xff]
        %v10873 = vld [vmem:[%s10868 + $0x20] sm:$0xff]
        %v10874 = vld [vmem:[%s10868 + $0x28] sm:$0xff]
        %v10875 = vld [vmem:[%s10868 + $0x30] sm:$0xff]
        %v10876 = vld [vmem:[%s10868 + $0x38] sm:$0xff]
        %v10877 = vmul.f32 %v10656, %v10869
        %v10878 = vmul.f32 %v10657, %v10870
        %v10879 = vmul.f32 %v10658, %v10871
        %v10880 = vmul.f32 %v10659, %v10872
        %v10881 = vmul.f32 %v10660, %v10873
        %v10882 = vmul.f32 %v10661, %v10874
        %v10883 = vmul.f32 %v10662, %v10875
        %v10884 = vmul.f32 %v10663, %v10876
        %v10885 = vsel %vm9957, %v10877, 0.0
        %10886 = vadd.xlane.f32.xlu0 %v10885
        %v10887 = vpop.xlane.xlu0 %10886
        %v10888 = vsel %vm9957, %v10878, 0.0
        %10889 = vadd.xlane.f32.xlu0 %v10888
        %v10890 = vpop.xlane.xlu0 %10889
        %v10891 = vsel %vm9957, %v10879, 0.0
        %10892 = vadd.xlane.f32.xlu0 %v10891
        %v10893 = vpop.xlane.xlu0 %10892
        %v10894 = vsel %vm9957, %v10880, 0.0
        %10895 = vadd.xlane.f32.xlu0 %v10894
        %v10896 = vpop.xlane.xlu0 %10895
        %v10897 = vsel %vm9957, %v10881, 0.0
        %10898 = vadd.xlane.f32.xlu0 %v10897
        %v10899 = vpop.xlane.xlu0 %10898
        %v10900 = vsel %vm9957, %v10882, 0.0
        %10901 = vadd.xlane.f32.xlu0 %v10900
        %v10902 = vpop.xlane.xlu0 %10901
        %v10903 = vsel %vm9957, %v10883, 0.0
        %10904 = vadd.xlane.f32.xlu0 %v10903
        %v10905 = vpop.xlane.xlu0 %10904
        %v10906 = vsel %vm9957, %v10884, 0.0
        %10907 = vadd.xlane.f32.xlu0 %v10906
        %v10908 = vpop.xlane.xlu0 %10907
        %s10909 = scalar_lea.vmem %s5, 384
        %v10910 = vld [vmem:[%s10909] sm:$0xff]
        %v10911 = vld [vmem:[%s10909 + $0x8] sm:$0xff]
        %v10912 = vld [vmem:[%s10909 + $0x10] sm:$0xff]
        %v10913 = vld [vmem:[%s10909 + $0x18] sm:$0xff]
        %v10914 = vld [vmem:[%s10909 + $0x20] sm:$0xff]
        %v10915 = vld [vmem:[%s10909 + $0x28] sm:$0xff]
        %v10916 = vld [vmem:[%s10909 + $0x30] sm:$0xff]
        %v10917 = vld [vmem:[%s10909 + $0x38] sm:$0xff]
        %v10918 = vmul.f32 %v10656, %v10910
        %v10919 = vmul.f32 %v10657, %v10911
        %v10920 = vmul.f32 %v10658, %v10912
        %v10921 = vmul.f32 %v10659, %v10913
        %v10922 = vmul.f32 %v10660, %v10914
        %v10923 = vmul.f32 %v10661, %v10915
        %v10924 = vmul.f32 %v10662, %v10916
        %v10925 = vmul.f32 %v10663, %v10917
        %v10926 = vsel %vm9957, %v10918, 0.0
        %10927 = vadd.xlane.f32.xlu0 %v10926
        %v10928 = vpop.xlane.xlu0 %10927
        %v10929 = vsel %vm9957, %v10919, 0.0
        %10930 = vadd.xlane.f32.xlu0 %v10929
        %v10931 = vpop.xlane.xlu0 %10930
        %v10932 = vsel %vm9957, %v10920, 0.0
        %10933 = vadd.xlane.f32.xlu0 %v10932
        %v10934 = vpop.xlane.xlu0 %10933
        %v10935 = vsel %vm9957, %v10921, 0.0
        %10936 = vadd.xlane.f32.xlu0 %v10935
        %v10937 = vpop.xlane.xlu0 %10936
        %v10938 = vsel %vm9957, %v10922, 0.0
        %10939 = vadd.xlane.f32.xlu0 %v10938
        %v10940 = vpop.xlane.xlu0 %10939
        %v10941 = vsel %vm9957, %v10923, 0.0
        %10942 = vadd.xlane.f32.xlu0 %v10941
        %v10943 = vpop.xlane.xlu0 %10942
        %v10944 = vsel %vm9957, %v10924, 0.0
        %10945 = vadd.xlane.f32.xlu0 %v10944
        %v10946 = vpop.xlane.xlu0 %10945
        %v10947 = vsel %vm9957, %v10925, 0.0
        %10948 = vadd.xlane.f32.xlu0 %v10947
        %v10949 = vpop.xlane.xlu0 %10948
        %s10950 = scalar_lea.vmem %s5, 448
        %v10951 = vld [vmem:[%s10950] sm:$0xff]
        %v10952 = vld [vmem:[%s10950 + $0x8] sm:$0xff]
        %v10953 = vld [vmem:[%s10950 + $0x10] sm:$0xff]
        %v10954 = vld [vmem:[%s10950 + $0x18] sm:$0xff]
        %v10955 = vld [vmem:[%s10950 + $0x20] sm:$0xff]
        %v10956 = vld [vmem:[%s10950 + $0x28] sm:$0xff]
        %v10957 = vld [vmem:[%s10950 + $0x30] sm:$0xff]
        %v10958 = vld [vmem:[%s10950 + $0x38] sm:$0xff]
        %v10959 = vmul.f32 %v10656, %v10951
        %v10960 = vmul.f32 %v10657, %v10952
        %v10961 = vmul.f32 %v10658, %v10953
        %v10962 = vmul.f32 %v10659, %v10954
        %v10963 = vmul.f32 %v10660, %v10955
        %v10964 = vmul.f32 %v10661, %v10956
        %v10965 = vmul.f32 %v10662, %v10957
        %v10966 = vmul.f32 %v10663, %v10958
        %v10967 = vsel %vm9957, %v10959, 0.0
        %10968 = vadd.xlane.f32.xlu0 %v10967
        %v10969 = vpop.xlane.xlu0 %10968
        %v10970 = vsel %vm9957, %v10960, 0.0
        %10971 = vadd.xlane.f32.xlu0 %v10970
        %v10972 = vpop.xlane.xlu0 %10971
        %v10973 = vsel %vm9957, %v10961, 0.0
        %10974 = vadd.xlane.f32.xlu0 %v10973
        %v10975 = vpop.xlane.xlu0 %10974
        %v10976 = vsel %vm9957, %v10962, 0.0
        %10977 = vadd.xlane.f32.xlu0 %v10976
        %v10978 = vpop.xlane.xlu0 %10977
        %v10979 = vsel %vm9957, %v10963, 0.0
        %10980 = vadd.xlane.f32.xlu0 %v10979
        %v10981 = vpop.xlane.xlu0 %10980
        %v10982 = vsel %vm9957, %v10964, 0.0
        %10983 = vadd.xlane.f32.xlu0 %v10982
        %v10984 = vpop.xlane.xlu0 %10983
        %v10985 = vsel %vm9957, %v10965, 0.0
        %10986 = vadd.xlane.f32.xlu0 %v10985
        %v10987 = vpop.xlane.xlu0 %10986
        %v10988 = vsel %vm9957, %v10966, 0.0
        %10989 = vadd.xlane.f32.xlu0 %v10988
        %v10990 = vpop.xlane.xlu0 %10989
        %s10991 = scalar_lea.vmem %s5, 512
        %v10992 = vld [vmem:[%s10991] sm:$0xff]
        %v10993 = vld [vmem:[%s10991 + $0x8] sm:$0xff]
        %v10994 = vld [vmem:[%s10991 + $0x10] sm:$0xff]
        %v10995 = vld [vmem:[%s10991 + $0x18] sm:$0xff]
        %v10996 = vld [vmem:[%s10991 + $0x20] sm:$0xff]
        %v10997 = vld [vmem:[%s10991 + $0x28] sm:$0xff]
        %v10998 = vld [vmem:[%s10991 + $0x30] sm:$0xff]
        %v10999 = vld [vmem:[%s10991 + $0x38] sm:$0xff]
        %v11000 = vmul.f32 %v10656, %v10992
        %v11001 = vmul.f32 %v10657, %v10993
        %v11002 = vmul.f32 %v10658, %v10994
        %v11003 = vmul.f32 %v10659, %v10995
        %v11004 = vmul.f32 %v10660, %v10996
        %v11005 = vmul.f32 %v10661, %v10997
        %v11006 = vmul.f32 %v10662, %v10998
        %v11007 = vmul.f32 %v10663, %v10999
        %v11008 = vsel %vm9957, %v11000, 0.0
        %11009 = vadd.xlane.f32.xlu0 %v11008
        %v11010 = vpop.xlane.xlu0 %11009
        %v11011 = vsel %vm9957, %v11001, 0.0
        %11012 = vadd.xlane.f32.xlu0 %v11011
        %v11013 = vpop.xlane.xlu0 %11012
        %v11014 = vsel %vm9957, %v11002, 0.0
        %11015 = vadd.xlane.f32.xlu0 %v11014
        %v11016 = vpop.xlane.xlu0 %11015
        %v11017 = vsel %vm9957, %v11003, 0.0
        %11018 = vadd.xlane.f32.xlu0 %v11017
        %v11019 = vpop.xlane.xlu0 %11018
        %v11020 = vsel %vm9957, %v11004, 0.0
        %11021 = vadd.xlane.f32.xlu0 %v11020
        %v11022 = vpop.xlane.xlu0 %11021
        %v11023 = vsel %vm9957, %v11005, 0.0
        %11024 = vadd.xlane.f32.xlu0 %v11023
        %v11025 = vpop.xlane.xlu0 %11024
        %v11026 = vsel %vm9957, %v11006, 0.0
        %11027 = vadd.xlane.f32.xlu0 %v11026
        %v11028 = vpop.xlane.xlu0 %11027
        %v11029 = vsel %vm9957, %v11007, 0.0
        %11030 = vadd.xlane.f32.xlu0 %v11029
        %v11031 = vpop.xlane.xlu0 %11030
        %s11032 = scalar_lea.vmem %s5, 576
        %v11033 = vld [vmem:[%s11032] sm:$0xff]
        %v11034 = vld [vmem:[%s11032 + $0x8] sm:$0xff]
        %v11035 = vld [vmem:[%s11032 + $0x10] sm:$0xff]
        %v11036 = vld [vmem:[%s11032 + $0x18] sm:$0xff]
        %v11037 = vld [vmem:[%s11032 + $0x20] sm:$0xff]
        %v11038 = vld [vmem:[%s11032 + $0x28] sm:$0xff]
        %v11039 = vld [vmem:[%s11032 + $0x30] sm:$0xff]
        %v11040 = vld [vmem:[%s11032 + $0x38] sm:$0xff]
        %v11041 = vmul.f32 %v10656, %v11033
        %v11042 = vmul.f32 %v10657, %v11034
        %v11043 = vmul.f32 %v10658, %v11035
        %v11044 = vmul.f32 %v10659, %v11036
        %v11045 = vmul.f32 %v10660, %v11037
        %v11046 = vmul.f32 %v10661, %v11038
        %v11047 = vmul.f32 %v10662, %v11039
        %v11048 = vmul.f32 %v10663, %v11040
        %v11049 = vsel %vm9957, %v11041, 0.0
        %11050 = vadd.xlane.f32.xlu0 %v11049
        %v11051 = vpop.xlane.xlu0 %11050
        %v11052 = vsel %vm9957, %v11042, 0.0
        %11053 = vadd.xlane.f32.xlu0 %v11052
        %v11054 = vpop.xlane.xlu0 %11053
        %v11055 = vsel %vm9957, %v11043, 0.0
        %11056 = vadd.xlane.f32.xlu0 %v11055
        %v11057 = vpop.xlane.xlu0 %11056
        %v11058 = vsel %vm9957, %v11044, 0.0
        %11059 = vadd.xlane.f32.xlu0 %v11058
        %v11060 = vpop.xlane.xlu0 %11059
        %v11061 = vsel %vm9957, %v11045, 0.0
        %11062 = vadd.xlane.f32.xlu0 %v11061
        %v11063 = vpop.xlane.xlu0 %11062
        %v11064 = vsel %vm9957, %v11046, 0.0
        %11065 = vadd.xlane.f32.xlu0 %v11064
        %v11066 = vpop.xlane.xlu0 %11065
        %v11067 = vsel %vm9957, %v11047, 0.0
        %11068 = vadd.xlane.f32.xlu0 %v11067
        %v11069 = vpop.xlane.xlu0 %11068
        %v11070 = vsel %vm9957, %v11048, 0.0
        %11071 = vadd.xlane.f32.xlu0 %v11070
        %v11072 = vpop.xlane.xlu0 %11071
        %vm11073 = vcmask 7168
        %v11074 = vsel %vm11073, %v10682, %v10723
        %v11075 = vsel %vm11073, %v10685, %v10726
        %v11076 = vsel %vm11073, %v10688, %v10729
        %v11077 = vsel %vm11073, %v10691, %v10732
        %v11078 = vsel %vm11073, %v10694, %v10735
        %v11079 = vsel %vm11073, %v10697, %v10738
        %v11080 = vsel %vm11073, %v10700, %v10741
        %v11081 = vsel %vm11073, %v10703, %v10744
        %vm11082 = vcmask 15360
        %v11083 = vsel %vm11082, %v11074, %v10764
        %v11084 = vsel %vm11082, %v11075, %v10767
        %v11085 = vsel %vm11082, %v11076, %v10770
        %v11086 = vsel %vm11082, %v11077, %v10773
        %v11087 = vsel %vm11082, %v11078, %v10776
        %v11088 = vsel %vm11082, %v11079, %v10779
        %v11089 = vsel %vm11082, %v11080, %v10782
        %v11090 = vsel %vm11082, %v11081, %v10785
        %v11091 = vsel %vm276, %v11083, %v10805
        %v11092 = vsel %vm276, %v11084, %v10808
        %v11093 = vsel %vm276, %v11085, %v10811
        %v11094 = vsel %vm276, %v11086, %v10814
        %v11095 = vsel %vm276, %v11087, %v10817
        %v11096 = vsel %vm276, %v11088, %v10820
        %v11097 = vsel %vm276, %v11089, %v10823
        %v11098 = vsel %vm276, %v11090, %v10826
        %vm11099 = vcmask 31744
        %v11100 = vsel %vm11099, %v11091, %v10846
        %v11101 = vsel %vm11099, %v11092, %v10849
        %v11102 = vsel %vm11099, %v11093, %v10852
        %v11103 = vsel %vm11099, %v11094, %v10855
        %v11104 = vsel %vm11099, %v11095, %v10858
        %v11105 = vsel %vm11099, %v11096, %v10861
        %v11106 = vsel %vm11099, %v11097, %v10864
        %v11107 = vsel %vm11099, %v11098, %v10867
        %vm11108 = vcmask 39936
        %v11109 = vsel %vm11108, %v11100, %v10887
        %v11110 = vsel %vm11108, %v11101, %v10890
        %v11111 = vsel %vm11108, %v11102, %v10893
        %v11112 = vsel %vm11108, %v11103, %v10896
        %v11113 = vsel %vm11108, %v11104, %v10899
        %v11114 = vsel %vm11108, %v11105, %v10902
        %v11115 = vsel %vm11108, %v11106, %v10905
        %v11116 = vsel %vm11108, %v11107, %v10908
        %v11117 = vsel %vm2161, %v11109, %v10928
        %v11118 = vsel %vm2161, %v11110, %v10931
        %v11119 = vsel %vm2161, %v11111, %v10934
        %v11120 = vsel %vm2161, %v11112, %v10937
        %v11121 = vsel %vm2161, %v11113, %v10940
        %v11122 = vsel %vm2161, %v11114, %v10943
        %v11123 = vsel %vm2161, %v11115, %v10946
        %v11124 = vsel %vm2161, %v11116, %v10949
        %vm11125 = vcmask 56320
        %v11126 = vsel %vm11125, %v11117, %v10969
        %v11127 = vsel %vm11125, %v11118, %v10972
        %v11128 = vsel %vm11125, %v11119, %v10975
        %v11129 = vsel %vm11125, %v11120, %v10978
        %v11130 = vsel %vm11125, %v11121, %v10981
        %v11131 = vsel %vm11125, %v11122, %v10984
        %v11132 = vsel %vm11125, %v11123, %v10987
        %v11133 = vsel %vm11125, %v11124, %v10990
        %vm11134 = vcmask 64512
        %v11135 = vsel %vm11134, %v11126, %v11010
        %v11136 = vsel %vm11134, %v11127, %v11013
        %v11137 = vsel %vm11134, %v11128, %v11016
        %v11138 = vsel %vm11134, %v11129, %v11019
        %v11139 = vsel %vm11134, %v11130, %v11022
        %v11140 = vsel %vm11134, %v11131, %v11025
        %v11141 = vsel %vm11134, %v11132, %v11028
        %v11142 = vsel %vm11134, %v11133, %v11031
        %v11143 = vsel %vm2194, %v11135, %v11051
        %v11144 = vsel %vm2194, %v11136, %v11054
        %v11145 = vsel %vm2194, %v11137, %v11057
        %v11146 = vsel %vm2194, %v11138, %v11060
        %v11147 = vsel %vm2194, %v11139, %v11063
        %v11148 = vsel %vm2194, %v11140, %v11066
        %v11149 = vsel %vm2194, %v11141, %v11069
        %v11150 = vsel %vm2194, %v11142, %v11072
        %vm11151 = vcmask 80896
        %v11152 = vsel %vm11151, %v11143, 0.0
        %v11153 = vsel %vm11151, %v11144, 0.0
        %v11154 = vadd.f32 %v11152, %v11153
        %v11155 = vsel %vm11151, %v11145, 0.0
        %v11156 = vadd.f32 %v11154, %v11155
        %v11157 = vsel %vm11151, %v11146, 0.0
        %v11158 = vadd.f32 %v11156, %v11157
        %v11159 = vsel %vm11151, %v11147, 0.0
        %v11160 = vadd.f32 %v11158, %v11159
        %v11161 = vsel %vm11151, %v11148, 0.0
        %v11162 = vadd.f32 %v11160, %v11161
        %v11163 = vsel %vm11151, %v11149, 0.0
        %v11164 = vadd.f32 %v11162, %v11163
        %v11165 = vsel %vm11151, %v11150, 0.0
        %v11166 = vadd.f32 %v11164, %v11165
        %v11167 = vrot.slane %v11166, 4
        %v11168 = vadd.f32 %v11166, %v11167
        %v11169 = vrot.slane %v11168, 2
        %v11170 = vadd.f32 %v11168, %v11169
        %v11171 = vrot.slane %v11170, 1
        %v11172 = vadd.f32 %v11170, %v11171
        %v11173 = vld [vmem:[%s6] sm:$0x1]
        %v11174 = vadd.f32 %v11172, %v11173
        %vm11175 = vcmask 73728
        %11176 = vst.msk [vmem:[%s270] sm:$0x1] %vm11175, %v11174
        %s11177 = sand.u32 %s181, 1
        %s11178 = scalar_lea.sflag [#allocation9], %s11177
        %s11179 = sand.u32 %s181, 1
        %s11180 = scalar_lea.vmem [#allocation8], %s11179
        // Predicated region
        $region49: #{student_cnn_forward.1} parent=47 // pred_check
          %p11181 = pneg %p191
        $region50: #{student_cnn_forward.1} parent=47 // pred_check_branch
          %11183 = sbr.rel (%p11181) target = $region52
        $region51: #{student_cnn_forward.1} parent=47 // pred_region
          %11185 = vsyncadd %s11178, 0
          %s11186 = scalar_lea.hbm %s7, %s21
          %s11188 = sshll.u32 %s11180, 4
          %s11189 = int_to_ptr.vmem [resolvable:$true] %s11188
          %s11190 = sshll.u32 %s11186, 4
          %s11191 = int_to_ptr.hbm [resolvable:$true] %s11190
          %11193 = dma.vmem_to_hbm [thread:$0]  %s11189, 16, %s11191, %s11178
        $region52: #{student_cnn_forward.1} parent=47 // pred_fallthru
          _
      $region48: #{student_cnn_forward.1} parent=5 // pred_fallthru
        _
      %p11194 = scmp.le.s32.totalorder 2, %s16
      // Predicated region
      $region53: #{student_cnn_forward.1} parent=5 // pred_check
        %p11195 = pneg %p11194
      $region54: #{student_cnn_forward.1} parent=5 // pred_check_branch
        %11197 = sbr.rel (%p11195) target = $region56
      $region55: #{student_cnn_forward.1} parent=5 // pred_region
        %s11198 = ssub.s32 %s16, 2
        // Predicated region
        $region57: #{student_cnn_forward.1} parent=55 // pred_check
          %p11199 = pneg %p197
        $region58: #{student_cnn_forward.1} parent=55 // pred_check_branch
          %11201 = sbr.rel (%p11199) target = $region60
        $region59: #{student_cnn_forward.1} parent=55 // pred_region
          %s11202 = sand.u32 %s182, 1
          %s11203 = scalar_lea.sflag [#allocation9], %s11202
          %s11204 = sand.u32 %s182, 1
          %s11205 = scalar_lea.vmem [#allocation8], %s11204
          %11207 = dma.done %s11203, 16
        $region60: #{student_cnn_forward.1} parent=55 // pred_fallthru
          _
      $region56: #{student_cnn_forward.1} parent=5 // pred_fallthru
        _
    $region6: #{student_cnn_forward.1} parent=1 // loop_footer
      %s20 = sadd.s32 1, %s16
    $region7: #{student_cnn_forward.1} parent=1 // loop_footer_branch
      %15 = sbr.rel target = $region3
    $region8: #{student_cnn_forward.1} parent=1 // loop_exit
      _
    %11208 = vsyncpa [#allocation9], 1
    %s11209 = scalar_lea.sflag [#allocation9], 1
    %11210 = vsyncpa %s11209, 1

</llo_original>
